<compile_context>
chip_gen: v7x
topology: tpu7x:2x2x1
jax: 0.10.0
libtpu: 0.0.40
codegen_flags: <defaults>
</compile_context>

<pallas_src>
import functools

import jax
import jax.numpy as jnp
from jax import lax
from jax.experimental import pallas as pl
from jax.experimental.pallas import tpu as pltpu


def _attn_kernel(x_ref, gamma_ref, beta_ref, wq_ref, bq_ref, wk_ref, bk_ref,
                 wv_ref, bv_ref, wn_ref, bn_ref, o_ref,
                 h_scr, k_scr, v_scr, *, n_real, eps, tq):
    qi = pl.program_id(1)

    # ---- once per batch element: GroupNorm(1 group) + k/v projections -------
    @pl.when(qi == 0)
    def _():
        x = x_ref[...]                                    # (S, C) f32
        # two-pass statistics (avoids s2/n - mean^2 catastrophic cancellation)
        mean = jnp.sum(x) / n_real
        xc = x - mean
        var = jnp.sum(xc * xc) / n_real
        inv = lax.rsqrt(var + eps)
        h = (xc * inv) * gamma_ref[...] + beta_ref[...]   # (S, C) f32
        h16 = h.astype(jnp.bfloat16)
        h_scr[...] = h16
        # separate k / v projections: peak f32 temp is only (S, Cp); results
        # land directly in bf16 scratch (no (S, 3Cp) f32 qkv temporary).
        k_scr[...] = (jnp.dot(h16, wk_ref[...],
                              preferred_element_type=jnp.float32)
                      + bk_ref[...]).astype(jnp.bfloat16)
        v_scr[...] = (jnp.dot(h16, wv_ref[...],
                              preferred_element_type=jnp.float32)
                      + bv_ref[...]).astype(jnp.bfloat16)

    # ---- per q-row tile ------------------------------------------------------
    start = pl.multiple_of(qi * tq, tq)
    h_t = h_scr[pl.ds(start, tq), :]                      # (tq, C)  bf16
    # q projection per tile (softmax scale already folded into wq/bq).
    q_t = (jnp.dot(h_t, wq_ref[...], preferred_element_type=jnp.float32)
           + bq_ref[...]).astype(jnp.bfloat16)            # (tq, Cp) bf16
    # logits = q_t @ k^T, contracting the channel axis of both operands (same
    # contraction the production flash-attention kernels use; no per-tile
    # vxpose of k is emitted for this pattern).
    logits = lax.dot_general(q_t, k_scr[...], (((1,), (1,)), ((), ())),
                             preferred_element_type=jnp.float32)   # (tq, S) f32
    m = jnp.max(logits, axis=-1, keepdims=True)
    # TODO(synk): on v6e/v7x a bf16 exp would halve EUP work; kept f32 for v5e
    # compatibility and denominator accuracy.
    p = jnp.exp(logits - m)                               # unnormalized, f32
    denom = jnp.sum(p, axis=-1, keepdims=True)            # (tq, 1)
    a = jnp.dot(p.astype(jnp.bfloat16), v_scr[...],
                preferred_element_type=jnp.float32)       # (tq, Cp) unnormalized
    a = a * (1.0 / denom)                                 # deferred, exact normalization
    out_t = jnp.dot(a.astype(jnp.bfloat16), wn_ref[...],
                    preferred_element_type=jnp.float32) + bn_ref[...]  # (tq, C)
    o_ref[...] = x_ref[pl.ds(start, tq), :] + out_t


def _pick_tq(S):
    for cand in (256, 128, 64, 32, 16, 8):
        if S % cand == 0:
            return cand
    # TODO(synk): mask a ragged tail tile instead of a single full-S tile.
    return S


def _bspec(shape, index_map, pipeline_mode):
    if pipeline_mode is None:
        return pl.BlockSpec(shape, index_map)
    return pl.BlockSpec(shape, index_map, pipeline_mode=pipeline_mode)


def attention_block(x_nchw, params, *, eps=1e-6):
    """x_nchw: (B, C, H, W) float32.  Returns (B, C, H, W)."""
    B, C, H, W = x_nchw.shape
    S = H * W
    Cp = ((C + 127) // 128) * 128           # lane-dense internal channel width
    scale = float(C) ** (-0.5)
    tq = _pick_tq(S)
    n_tq = S // tq

    # NCHW -> (B, S, C), kept UNPADDED in HBM (kernel is HBM-bound for small C;
    # channel padding exists only on the weight output dims).
    # TODO(synk): keep the surrounding model in NHWC to drop this layout pass.
    x = jnp.transpose(x_nchw, (0, 2, 3, 1)).reshape(B, S, C).astype(jnp.float32)

    def pad_cols(w):   # torch (out, in) -> (C_in, Cp_out), output cols zero-padded
        return jnp.pad(w.astype(jnp.float32).T, ((0, 0), (0, Cp - C)))

    def pad_vec(v):
        return jnp.pad(v.astype(jnp.float32).reshape(1, C), ((0, 0), (0, Cp - C)))

    gamma = params["gamma"].astype(jnp.float32).reshape(1, C)
    beta = params["beta"].astype(jnp.float32).reshape(1, C)
    # softmax scale folded into the q projection (weights AND bias)
    wq = (pad_cols(params["wq"]) * scale).astype(jnp.bfloat16)   # (C, Cp)
    bq = pad_vec(params["bq"]) * scale                           # (1, Cp)
    wk = pad_cols(params["wk"]).astype(jnp.bfloat16)
    bk = pad_vec(params["bk"])
    wv = pad_cols(params["wv"]).astype(jnp.bfloat16)
    bv = pad_vec(params["bv"])
    # output projection: pad only the (padded-channel) input rows; output stays C
    wn = jnp.pad(params["wn"].astype(jnp.float32).T,
                 ((0, Cp - C), (0, 0))).astype(jnp.bfloat16)     # (Cp, C)
    bn = params["bn"].astype(jnp.float32).reshape(1, C)          # (1, C)

    # VMEM budget (worst case: default double buffering if Buffered(1) is
    # unavailable) and a per-generation cap.
    vmem_bytes = (
        2 * S * C * 4                      # x block
        + 4 * tq * C * 4                   # o blocks (double-buffered)
        + S * C * 2 + 2 * S * Cp * 2       # h / k / v bf16 scratch
        + S * Cp * 4                       # f32 projection temporary at qi == 0
        + 3 * tq * S * 4                   # logits / probs temporaries
        + 2 * (3 * C * Cp + Cp * C) * 2    # weights
        + 16 * Cp * 4                      # biases / affine params
        + (4 << 20)                        # headroom
    )
    try:
        cap = int(pltpu.get_tpu_info().vmem_capacity_bytes)
    except Exception:
        cap = 64 << 20                     # conservative if the query fails
    vmem_limit = int(min(max(vmem_bytes, 16 << 20), (cap * 3) // 4))

    cost = pl.CostEstimate(
        flops=int(B * (8 * S * C * Cp + 4 * S * S * Cp)),
        transcendentals=int(B * S * S),
        bytes_accessed=int(2 * B * S * C * 4 + 8 * C * Cp),
    )

    kernel = functools.partial(_attn_kernel, n_real=float(S * C), eps=eps, tq=tq)
    args = (x, gamma, beta, wq, bq, wk, bk, wv, bv, wn, bn)

    def build(single_buffer_invariants):
        pm = pl.Buffered(1) if single_buffer_invariants else None
        in_specs = [
            _bspec((pl.Squeezed(), S, C), lambda b, qi: (b, 0, 0), pm),   # x
            _bspec((1, C), lambda b, qi: (0, 0), pm),                     # gamma
            _bspec((1, C), lambda b, qi: (0, 0), pm),                     # beta
            _bspec((C, Cp), lambda b, qi: (0, 0), pm),                    # wq
            _bspec((1, Cp), lambda b, qi: (0, 0), pm),                    # bq
            _bspec((C, Cp), lambda b, qi: (0, 0), pm),                    # wk
            _bspec((1, Cp), lambda b, qi: (0, 0), pm),                    # bk
            _bspec((C, Cp), lambda b, qi: (0, 0), pm),                    # wv
            _bspec((1, Cp), lambda b, qi: (0, 0), pm),                    # bv
            _bspec((Cp, C), lambda b, qi: (0, 0), pm),                    # wn
            _bspec((1, C), lambda b, qi: (0, 0), pm),                     # bn
        ]
        return pl.pallas_call(
            kernel,
            out_shape=jax.ShapeDtypeStruct((B, S, C), jnp.float32),
            grid_spec=pltpu.PrefetchScalarGridSpec(
                num_scalar_prefetch=0,
                grid=(B, n_tq),
                in_specs=in_specs,
                out_specs=pl.BlockSpec((pl.Squeezed(), tq, C),
                                       lambda b, qi: (b, qi, 0)),
                scratch_shapes=[pltpu.VMEM((S, C), jnp.bfloat16),    # h (normed)
                                pltpu.VMEM((S, Cp), jnp.bfloat16),   # k
                                pltpu.VMEM((S, Cp), jnp.bfloat16)],  # v
            ),
            compiler_params=pltpu.CompilerParams(
                # TODO(synk): on v7x, also shard the q-tile axis across the two
                # TensorCores (needs per-core k/v staging).
                dimension_semantics=("parallel", "arbitrary"),
                vmem_limit_bytes=vmem_limit),
            cost_estimate=cost,
        )

    out = None
    err = None
    for single in (True, False):
        try:
            out = jax.block_until_ready(build(single)(*args))
            break
        except Exception as e:   # pl.Buffered(1) unsupported -> default buffering
            err = e
    if out is None:
        raise err

    # (B, S, C) -> NCHW
    return jnp.transpose(out.reshape(B, H, W, C), (0, 3, 1, 2))


def attention_block_ref(x_nchw, params, *, eps=1e-6):
    """Pure-JAX (f32) reference matching the PyTorch forward."""
    B, C, H, W = x_nchw.shape
    scale = float(C) ** (-0.5)
    x = x_nchw.astype(jnp.float32)
    mean = jnp.mean(x, axis=(1, 2, 3), keepdims=True)
    var = jnp.mean((x - mean) ** 2, axis=(1, 2, 3), keepdims=True)
    h = (x - mean) / jnp.sqrt(var + eps)
    h = h * params["gamma"].reshape(1, C, 1, 1) + params["beta"].reshape(1, C, 1, 1)
    h = jnp.transpose(h, (0, 2, 3, 1))                       # B,H,W,C
    q = h @ params["wq"].T + params["bq"]
    k = h @ params["wk"].T + params["bk"]
    v = h @ params["wv"].T + params["bv"]
    w = jnp.einsum("bhwc,bHWc->bhwHW", q, k) * scale
    w = w.reshape(B, H, W, H * W)
    w = jax.nn.softmax(w, axis=-1).reshape(B, H, W, H, W)
    h = jnp.einsum("bhwHW,bHWc->bhwc", w, v)
    h = h @ params["wn"].T + params["bn"]
    h = jnp.transpose(h, (0, 3, 1, 2))
    return x_nchw + h


def init_params(key, num_channels):
    """Deterministic synthetic params (shapes match the PyTorch module)."""
    C = num_channels
    keys = jax.random.split(key, 8)
    bound = 1.0 / jnp.sqrt(C)

    def u(k, shape):
        return jax.random.uniform(k, shape, jnp.float32, -bound, bound)

    return {
        "gamma": jnp.ones((C,), jnp.float32),    # GroupNorm weight
        "beta": jnp.zeros((C,), jnp.float32),    # GroupNorm bias
        "wq": u(keys[0], (C, C)), "bq": u(keys[1], (C,)),
        "wk": u(keys[2], (C, C)), "bk": u(keys[3], (C,)),
        "wv": u(keys[4], (C, C)), "bv": u(keys[5], (C,)),
        "wn": u(keys[6], (C, C)), "bn": u(keys[7], (C,)),
    }


if __name__ == "__main__":
    B, C, H, W = 2, 8, 16, 32     # S = 512 -> exercises the multi-q-tile path
    key = jax.random.PRNGKey(0)
    kx, kp = jax.random.split(key)
    x = jax.random.normal(kx, (B, C, H, W), jnp.float32)
    params = init_params(kp, C)

    out = attention_block(x, params)
    out = jax.block_until_ready(out)

    ref = attention_block_ref(x, params)
    assert out.shape == (B, C, H, W)
    # bf16 matmul operands (h, q/k/v, probs, weights) => looser tolerance than f32
    err = float(jnp.max(jnp.abs(out - ref)))
    assert jnp.allclose(out, ref, rtol=5e-2, atol=5e-2), err

    print("KERNEL_OK")
</pallas_src>

<mosaic_0001>
module attributes {stable_mosaic.version = 11 : i64} {
  func.func @_attn_kernel(%arg0: i32, %arg1: i32, %arg2: memref<1x512x8xf32, #tpu.memory_space<vmem>>, %arg3: memref<1x8xf32, #tpu.memory_space<vmem>>, %arg4: memref<1x8xf32, #tpu.memory_space<vmem>>, %arg5: memref<8x128xbf16, #tpu.memory_space<vmem>>, %arg6: memref<1x128xf32, #tpu.memory_space<vmem>>, %arg7: memref<8x128xbf16, #tpu.memory_space<vmem>>, %arg8: memref<1x128xf32, #tpu.memory_space<vmem>>, %arg9: memref<8x128xbf16, #tpu.memory_space<vmem>>, %arg10: memref<1x128xf32, #tpu.memory_space<vmem>>, %arg11: memref<128x8xbf16, #tpu.memory_space<vmem>>, %arg12: memref<1x8xf32, #tpu.memory_space<vmem>>, %arg13: memref<1x256x8xf32, #tpu.memory_space<vmem>>, %arg14: memref<512x8xbf16, #tpu.memory_space<vmem>>, %arg15: memref<512x128xbf16, #tpu.memory_space<vmem>>, %arg16: memref<512x128xbf16, #tpu.memory_space<vmem>>) attributes {dimension_semantics = [#tpu.dimension_semantics<parallel>, #tpu.dimension_semantics<arbitrary>], iteration_bounds = array<i64: 2, 2>, scalar_prefetch = 0 : i64, scratch_operands = 3 : i64, tpu.core_type = #tpu.core_type<tc>, window_params = [{pipeline_mode = #tpu.pipeline_mode<synchronous>, transform_indices = @transform_0, window_bounds = array<i64: 1, 512, 8>}, {pipeline_mode = #tpu.pipeline_mode<synchronous>, transform_indices = @transform_1, window_bounds = array<i64: 1, 8>}, {pipeline_mode = #tpu.pipeline_mode<synchronous>, transform_indices = @transform_2, window_bounds = array<i64: 1, 8>}, {pipeline_mode = #tpu.pipeline_mode<synchronous>, transform_indices = @transform_3, window_bounds = array<i64: 8, 128>}, {pipeline_mode = #tpu.pipeline_mode<synchronous>, transform_indices = @transform_4, window_bounds = array<i64: 1, 128>}, {pipeline_mode = #tpu.pipeline_mode<synchronous>, transform_indices = @transform_5, window_bounds = array<i64: 8, 128>}, {pipeline_mode = #tpu.pipeline_mode<synchronous>, transform_indices = @transform_6, window_bounds = array<i64: 1, 128>}, {pipeline_mode = #tpu.pipeline_mode<synchronous>, transform_indices = @transform_7, window_bounds = array<i64: 8, 128>}, {pipeline_mode = #tpu.pipeline_mode<synchronous>, transform_indices = @transform_8, window_bounds = array<i64: 1, 128>}, {pipeline_mode = #tpu.pipeline_mode<synchronous>, transform_indices = @transform_9, window_bounds = array<i64: 128, 8>}, {pipeline_mode = #tpu.pipeline_mode<synchronous>, transform_indices = @transform_10, window_bounds = array<i64: 1, 8>}, {transform_indices = @transform_11, window_bounds = array<i64: 1, 256, 8>}]} {
    %c0_i32 = arith.constant 0 : i32
    %0 = arith.cmpi eq, %arg1, %c0_i32 : i32
    %1 = arith.extui %0 : i1 to i32
    %c0_i32_0 = arith.constant 0 : i32
    %2 = arith.cmpi ne, %1, %c0_i32_0 : i32
    scf.if %2 {
      %c0_24 = arith.constant 0 : index
      %c0_25 = arith.constant 0 : index
      %c0_26 = arith.constant 0 : index
      %42 = vector.load %arg2[%c0_24, %c0_25, %c0_26] : memref<1x512x8xf32, #tpu.memory_space<vmem>>, vector<1x512x8xf32>
      %43 = vector.shape_cast %42 : vector<1x512x8xf32> to vector<512x8xf32>
      %44 = vector.shape_cast %43 : vector<512x8xf32> to vector<1x512x8xf32>
      %cst_27 = arith.constant dense<0.000000e+00> : vector<1xf32>
      %45 = vector.multi_reduction <add>, %44, %cst_27 [1, 2] : vector<1x512x8xf32> to vector<1xf32>
      %46 = vector.shape_cast %45 : vector<1xf32> to vector<1x1x1xf32>
      %47 = vector.extract %46[0, 0, 0] : f32 from vector<1x1x1xf32>
      %cst_28 = arith.constant 4.096000e+03 : f32
      %48 = arith.divf %47, %cst_28 : f32
      %49 = vector.broadcast %48 : f32 to vector<512x8xf32>
      %50 = arith.subf %43, %49 : vector<512x8xf32>
      %51 = arith.mulf %50, %50 : vector<512x8xf32>
      %52 = vector.shape_cast %51 : vector<512x8xf32> to vector<1x512x8xf32>
      %cst_29 = arith.constant dense<0.000000e+00> : vector<1xf32>
      %53 = vector.multi_reduction <add>, %52, %cst_29 [1, 2] : vector<1x512x8xf32> to vector<1xf32>
      %54 = vector.shape_cast %53 : vector<1xf32> to vector<1x1x1xf32>
      %55 = vector.extract %54[0, 0, 0] : f32 from vector<1x1x1xf32>
      %cst_30 = arith.constant 4.096000e+03 : f32
      %56 = arith.divf %55, %cst_30 : f32
      %cst_31 = arith.constant 9.99999997E-7 : f32
      %57 = arith.addf %56, %cst_31 : f32
      %58 = math.rsqrt %57 : f32
      %59 = vector.broadcast %58 : f32 to vector<512x8xf32>
      %60 = arith.mulf %50, %59 : vector<512x8xf32>
      %c0_32 = arith.constant 0 : index
      %c0_33 = arith.constant 0 : index
      %61 = vector.load %arg3[%c0_32, %c0_33] : memref<1x8xf32, #tpu.memory_space<vmem>>, vector<1x8xf32>
      %62 = vector.broadcast %61 : vector<1x8xf32> to vector<512x8xf32>
      %63 = arith.mulf %60, %62 : vector<512x8xf32>
      %c0_34 = arith.constant 0 : index
      %c0_35 = arith.constant 0 : index
      %64 = vector.load %arg4[%c0_34, %c0_35] : memref<1x8xf32, #tpu.memory_space<vmem>>, vector<1x8xf32>
      %65 = vector.broadcast %64 : vector<1x8xf32> to vector<512x8xf32>
      %66 = arith.addf %63, %65 : vector<512x8xf32>
      %67 = arith.truncf %66 : vector<512x8xf32> to vector<512x8xbf16>
      %c0_36 = arith.constant 0 : index
      %c0_37 = arith.constant 0 : index
      %68 = vector.load %arg14[%c0_36, %c0_37] : memref<512x8xbf16, #tpu.memory_space<vmem>>, vector<512x8xbf16>
      tpu.vector_store %arg14[%c0_36, %c0_37], %67 {strides = array<i32>} : memref<512x8xbf16, #tpu.memory_space<vmem>>, vector<512x8xbf16>,
      %c0_38 = arith.constant 0 : index
      %c0_39 = arith.constant 0 : index
      %69 = vector.load %arg7[%c0_38, %c0_39] : memref<8x128xbf16, #tpu.memory_space<vmem>>, vector<8x128xbf16>
      %cst_40 = arith.constant dense<0.000000e+00> : vector<512x128xf32>
      %70 = tpu.matmul %67, %69, %cst_40 {dimension_numbers = #tpu.dot_dimension_numbers<[1], [0], [0], [1], [0, 0, 1, 1], [], []>} : vector<512x8xbf16>, vector<8x128xbf16>, vector<512x128xf32> -> vector<512x128xf32>
      %c0_41 = arith.constant 0 : index
      %c0_42 = arith.constant 0 : index
      %71 = vector.load %arg8[%c0_41, %c0_42] : memref<1x128xf32, #tpu.memory_space<vmem>>, vector<1x128xf32>
      %72 = vector.broadcast %71 : vector<1x128xf32> to vector<512x128xf32>
      %73 = arith.addf %70, %72 : vector<512x128xf32>
      %74 = arith.truncf %73 : vector<512x128xf32> to vector<512x128xbf16>
      %c0_43 = arith.constant 0 : index
      %c0_44 = arith.constant 0 : index
      %75 = vector.load %arg15[%c0_43, %c0_44] : memref<512x128xbf16, #tpu.memory_space<vmem>>, vector<512x128xbf16>
      tpu.vector_store %arg15[%c0_43, %c0_44], %74 {strides = array<i32>} : memref<512x128xbf16, #tpu.memory_space<vmem>>, vector<512x128xbf16>,
      %c0_45 = arith.constant 0 : index
      %c0_46 = arith.constant 0 : index
      %76 = vector.load %arg9[%c0_45, %c0_46] : memref<8x128xbf16, #tpu.memory_space<vmem>>, vector<8x128xbf16>
      %cst_47 = arith.constant dense<0.000000e+00> : vector<512x128xf32>
      %77 = tpu.matmul %67, %76, %cst_47 {dimension_numbers = #tpu.dot_dimension_numbers<[1], [0], [0], [1], [0, 0, 1, 1], [], []>} : vector<512x8xbf16>, vector<8x128xbf16>, vector<512x128xf32> -> vector<512x128xf32>
      %c0_48 = arith.constant 0 : index
      %c0_49 = arith.constant 0 : index
      %78 = vector.load %arg10[%c0_48, %c0_49] : memref<1x128xf32, #tpu.memory_space<vmem>>, vector<1x128xf32>
      %79 = vector.broadcast %78 : vector<1x128xf32> to vector<512x128xf32>
      %80 = arith.addf %77, %79 : vector<512x128xf32>
      %81 = arith.truncf %80 : vector<512x128xf32> to vector<512x128xbf16>
      %c0_50 = arith.constant 0 : index
      %c0_51 = arith.constant 0 : index
      %82 = vector.load %arg16[%c0_50, %c0_51] : memref<512x128xbf16, #tpu.memory_space<vmem>>, vector<512x128xbf16>
      tpu.vector_store %arg16[%c0_50, %c0_51], %81 {strides = array<i32>} : memref<512x128xbf16, #tpu.memory_space<vmem>>, vector<512x128xbf16>,
    } else {
    }
    %c256_i32 = arith.constant 256 : i32
    %3 = arith.muli %arg1, %c256_i32 : i32
    %4 = tpu.assume_multiple %3, 256 : i32
    %5 = arith.index_cast %4 : i32 to index
    %c0 = arith.constant 0 : index
    %6 = vector.load %arg14[%5, %c0] : memref<512x8xbf16, #tpu.memory_space<vmem>>, vector<256x8xbf16>
    %c0_1 = arith.constant 0 : index
    %c0_2 = arith.constant 0 : index
    %7 = vector.load %arg5[%c0_1, %c0_2] : memref<8x128xbf16, #tpu.memory_space<vmem>>, vector<8x128xbf16>
    %cst = arith.constant dense<0.000000e+00> : vector<256x128xf32>
    %8 = tpu.matmul %6, %7, %cst {dimension_numbers = #tpu.dot_dimension_numbers<[1], [0], [0], [1], [0, 0, 1, 1], [], []>} : vector<256x8xbf16>, vector<8x128xbf16>, vector<256x128xf32> -> vector<256x128xf32>
    %c0_3 = arith.constant 0 : index
    %c0_4 = arith.constant 0 : index
    %9 = vector.load %arg6[%c0_3, %c0_4] : memref<1x128xf32, #tpu.memory_space<vmem>>, vector<1x128xf32>
    %10 = vector.broadcast %9 : vector<1x128xf32> to vector<256x128xf32>
    %11 = arith.addf %8, %10 : vector<256x128xf32>
    %12 = arith.truncf %11 : vector<256x128xf32> to vector<256x128xbf16>
    %c0_5 = arith.constant 0 : index
    %c0_6 = arith.constant 0 : index
    %13 = vector.load %arg15[%c0_5, %c0_6] : memref<512x128xbf16, #tpu.memory_space<vmem>>, vector<512x128xbf16>
    %cst_7 = arith.constant dense<0.000000e+00> : vector<256x512xf32>
    %14 = tpu.matmul %12, %13, %cst_7 {dimension_numbers = #tpu.dot_dimension_numbers<[1], [1], [0], [0], [0, 0, 1, 0], [], []>} : vector<256x128xbf16>, vector<512x128xbf16>, vector<256x512xf32> -> vector<256x512xf32>
    %cst_8 = arith.constant dense<0xFF800000> : vector<256xf32>
    %15 = vector.multi_reduction <maximumf>, %14, %cst_8 [1] : vector<256x512xf32> to vector<256xf32>
    %16 = vector.shape_cast %15 : vector<256xf32> to vector<256x1xf32>
    %17 = vector.broadcast %16 : vector<256x1xf32> to vector<256x512xf32>
    %18 = arith.subf %14, %17 : vector<256x512xf32>
    %19 = math.exp %18 : vector<256x512xf32>
    %cst_9 = arith.constant dense<0.000000e+00> : vector<256xf32>
    %20 = vector.multi_reduction <add>, %19, %cst_9 [1] : vector<256x512xf32> to vector<256xf32>
    %21 = vector.shape_cast %20 : vector<256xf32> to vector<256x1xf32>
    %22 = arith.truncf %19 : vector<256x512xf32> to vector<256x512xbf16>
    %c0_10 = arith.constant 0 : index
    %c0_11 = arith.constant 0 : index
    %23 = vector.load %arg16[%c0_10, %c0_11] : memref<512x128xbf16, #tpu.memory_space<vmem>>, vector<512x128xbf16>
    %cst_12 = arith.constant dense<0.000000e+00> : vector<256x128xf32>
    %24 = tpu.matmul %22, %23, %cst_12 {dimension_numbers = #tpu.dot_dimension_numbers<[1], [0], [0], [1], [0, 0, 1, 1], [], []>} : vector<256x512xbf16>, vector<512x128xbf16>, vector<256x128xf32> -> vector<256x128xf32>
    %cst_13 = arith.constant 1.000000e+00 : f32
    %25 = vector.broadcast %cst_13 : f32 to vector<256x1xf32>
    %26 = arith.divf %25, %21 : vector<256x1xf32>
    %27 = vector.broadcast %26 : vector<256x1xf32> to vector<256x128xf32>
    %28 = arith.mulf %24, %27 : vector<256x128xf32>
    %29 = arith.truncf %28 : vector<256x128xf32> to vector<256x128xbf16>
    %c0_14 = arith.constant 0 : index
    %c0_15 = arith.constant 0 : index
    %30 = vector.load %arg11[%c0_14, %c0_15] : memref<128x8xbf16, #tpu.memory_space<vmem>>, vector<128x8xbf16>
    %cst_16 = arith.constant dense<0.000000e+00> : vector<256x8xf32>
    %31 = tpu.matmul %29, %30, %cst_16 {dimension_numbers = #tpu.dot_dimension_numbers<[1], [0], [0], [1], [0, 0, 1, 1], [], []>} : vector<256x128xbf16>, vector<128x8xbf16>, vector<256x8xf32> -> vector<256x8xf32>
    %c0_17 = arith.constant 0 : index
    %c0_18 = arith.constant 0 : index
    %32 = vector.load %arg12[%c0_17, %c0_18] : memref<1x8xf32, #tpu.memory_space<vmem>>, vector<1x8xf32>
    %33 = vector.broadcast %32 : vector<1x8xf32> to vector<256x8xf32>
    %34 = arith.addf %31, %33 : vector<256x8xf32>
    %c0_19 = arith.constant 0 : index
    %35 = arith.index_cast %4 : i32 to index
    %c0_20 = arith.constant 0 : index
    %36 = vector.load %arg2[%c0_19, %35, %c0_20] : memref<1x512x8xf32, #tpu.memory_space<vmem>>, vector<1x256x8xf32>
    %37 = vector.shape_cast %36 : vector<1x256x8xf32> to vector<256x8xf32>
    %38 = arith.addf %37, %34 : vector<256x8xf32>
    %c0_21 = arith.constant 0 : index
    %c0_22 = arith.constant 0 : index
    %c0_23 = arith.constant 0 : index
    %39 = vector.load %arg13[%c0_21, %c0_22, %c0_23] : memref<1x256x8xf32, #tpu.memory_space<vmem>>, vector<1x256x8xf32>
    %40 = vector.shape_cast %39 : vector<1x256x8xf32> to vector<256x8xf32>
    %41 = vector.shape_cast %38 : vector<256x8xf32> to vector<1x256x8xf32>
    tpu.vector_store %arg13[%c0_21, %c0_22, %c0_23], %41 {strides = array<i32>} : memref<1x256x8xf32, #tpu.memory_space<vmem>>, vector<1x256x8xf32>,
    return
  }
  func.func @transform_0(%arg0: i32, %arg1: i32) -> (i32, i32, i32) {
    %c0_i32 = arith.constant 0 : i32
    %c0_i32_0 = arith.constant 0 : i32
    %c0_i32_1 = arith.constant 0 : i32
    return %arg0, %c0_i32, %c0_i32_0 : i32, i32, i32
  }
  func.func @transform_1(%arg0: i32, %arg1: i32) -> (i32, i32) {
    %c0_i32 = arith.constant 0 : i32
    %c0_i32_0 = arith.constant 0 : i32
    %c0_i32_1 = arith.constant 0 : i32
    return %c0_i32, %c0_i32_0 : i32, i32
  }
  func.func @transform_2(%arg0: i32, %arg1: i32) -> (i32, i32) {
    %c0_i32 = arith.constant 0 : i32
    %c0_i32_0 = arith.constant 0 : i32
    %c0_i32_1 = arith.constant 0 : i32
    return %c0_i32, %c0_i32_0 : i32, i32
  }
  func.func @transform_3(%arg0: i32, %arg1: i32) -> (i32, i32) {
    %c0_i32 = arith.constant 0 : i32
    %c0_i32_0 = arith.constant 0 : i32
    %c0_i32_1 = arith.constant 0 : i32
    return %c0_i32, %c0_i32_0 : i32, i32
  }
  func.func @transform_4(%arg0: i32, %arg1: i32) -> (i32, i32) {
    %c0_i32 = arith.constant 0 : i32
    %c0_i32_0 = arith.constant 0 : i32
    %c0_i32_1 = arith.constant 0 : i32
    return %c0_i32, %c0_i32_0 : i32, i32
  }
  func.func @transform_5(%arg0: i32, %arg1: i32) -> (i32, i32) {
    %c0_i32 = arith.constant 0 : i32
    %c0_i32_0 = arith.constant 0 : i32
    %c0_i32_1 = arith.constant 0 : i32
    return %c0_i32, %c0_i32_0 : i32, i32
  }
  func.func @transform_6(%arg0: i32, %arg1: i32) -> (i32, i32) {
    %c0_i32 = arith.constant 0 : i32
    %c0_i32_0 = arith.constant 0 : i32
    %c0_i32_1 = arith.constant 0 : i32
    return %c0_i32, %c0_i32_0 : i32, i32
  }
  func.func @transform_7(%arg0: i32, %arg1: i32) -> (i32, i32) {
    %c0_i32 = arith.constant 0 : i32
    %c0_i32_0 = arith.constant 0 : i32
    %c0_i32_1 = arith.constant 0 : i32
    return %c0_i32, %c0_i32_0 : i32, i32
  }
  func.func @transform_8(%arg0: i32, %arg1: i32) -> (i32, i32) {
    %c0_i32 = arith.constant 0 : i32
    %c0_i32_0 = arith.constant 0 : i32
    %c0_i32_1 = arith.constant 0 : i32
    return %c0_i32, %c0_i32_0 : i32, i32
  }
  func.func @transform_9(%arg0: i32, %arg1: i32) -> (i32, i32) {
    %c0_i32 = arith.constant 0 : i32
    %c0_i32_0 = arith.constant 0 : i32
    %c0_i32_1 = arith.constant 0 : i32
    return %c0_i32, %c0_i32_0 : i32, i32
  }
  func.func @transform_10(%arg0: i32, %arg1: i32) -> (i32, i32) {
    %c0_i32 = arith.constant 0 : i32
    %c0_i32_0 = arith.constant 0 : i32
    %c0_i32_1 = arith.constant 0 : i32
    return %c0_i32, %c0_i32_0 : i32, i32
  }
  func.func @transform_11(%arg0: i32, %arg1: i32) -> (i32, i32, i32) {
    %c0_i32 = arith.constant 0 : i32
    %c0_i32_0 = arith.constant 0 : i32
    return %arg0, %arg1, %c0_i32 : i32, i32, i32
  }
}

module attributes {stable_mosaic.version = 11 : i64} {
  func.func @_attn_kernel(%arg0: i32, %arg1: i32, %arg2: memref<1x512x8xf32, #tpu.memory_space<vmem>>, %arg3: memref<1x8xf32, #tpu.memory_space<vmem>>, %arg4: memref<1x8xf32, #tpu.memory_space<vmem>>, %arg5: memref<8x128xbf16, #tpu.memory_space<vmem>>, %arg6: memref<1x128xf32, #tpu.memory_space<vmem>>, %arg7: memref<8x128xbf16, #tpu.memory_space<vmem>>, %arg8: memref<1x128xf32, #tpu.memory_space<vmem>>, %arg9: memref<8x128xbf16, #tpu.memory_space<vmem>>, %arg10: memref<1x128xf32, #tpu.memory_space<vmem>>, %arg11: memref<128x8xbf16, #tpu.memory_space<vmem>>, %arg12: memref<1x8xf32, #tpu.memory_space<vmem>>, %arg13: memref<1x256x8xf32, #tpu.memory_space<vmem>>, %arg14: memref<512x8xbf16, #tpu.memory_space<vmem>>, %arg15: memref<512x128xbf16, #tpu.memory_space<vmem>>, %arg16: memref<512x128xbf16, #tpu.memory_space<vmem>>) attributes {dimension_semantics = [#tpu.dimension_semantics<parallel>, #tpu.dimension_semantics<arbitrary>], iteration_bounds = array<i64: 2, 2>, scalar_prefetch = 0 : i64, scratch_operands = 3 : i64, tpu.core_type = #tpu.core_type<tc>, window_params = [{transform_indices = @transform_0, window_bounds = array<i64: 1, 512, 8>}, {pipeline_mode = #tpu.pipeline_mode<synchronous>, transform_indices = @transform_1, window_bounds = array<i64: 1, 8>}, {pipeline_mode = #tpu.pipeline_mode<synchronous>, transform_indices = @transform_2, window_bounds = array<i64: 1, 8>}, {pipeline_mode = #tpu.pipeline_mode<synchronous>, transform_indices = @transform_3, window_bounds = array<i64: 8, 128>}, {pipeline_mode = #tpu.pipeline_mode<synchronous>, transform_indices = @transform_4, window_bounds = array<i64: 1, 128>}, {pipeline_mode = #tpu.pipeline_mode<synchronous>, transform_indices = @transform_5, window_bounds = array<i64: 8, 128>}, {pipeline_mode = #tpu.pipeline_mode<synchronous>, transform_indices = @transform_6, window_bounds = array<i64: 1, 128>}, {pipeline_mode = #tpu.pipeline_mode<synchronous>, transform_indices = @transform_7, window_bounds = array<i64: 8, 128>}, {pipeline_mode = #tpu.pipeline_mode<synchronous>, transform_indices = @transform_8, window_bounds = array<i64: 1, 128>}, {pipeline_mode = #tpu.pipeline_mode<synchronous>, transform_indices = @transform_9, window_bounds = array<i64: 128, 8>}, {pipeline_mode = #tpu.pipeline_mode<synchronous>, transform_indices = @transform_10, window_bounds = array<i64: 1, 8>}, {transform_indices = @transform_11, window_bounds = array<i64: 1, 256, 8>}]} {
    %c0_i32 = arith.constant 0 : i32
    %0 = arith.cmpi eq, %arg1, %c0_i32 : i32
    %1 = arith.extui %0 : i1 to i32
    %c0_i32_0 = arith.constant 0 : i32
    %2 = arith.cmpi ne, %1, %c0_i32_0 : i32
    scf.if %2 {
      %c0_24 = arith.constant 0 : index
      %c0_25 = arith.constant 0 : index
      %c0_26 = arith.constant 0 : index
      %42 = vector.load %arg2[%c0_24, %c0_25, %c0_26] : memref<1x512x8xf32, #tpu.memory_space<vmem>>, vector<1x512x8xf32>
      %43 = vector.shape_cast %42 : vector<1x512x8xf32> to vector<512x8xf32>
      %44 = vector.shape_cast %43 : vector<512x8xf32> to vector<1x512x8xf32>
      %cst_27 = arith.constant dense<0.000000e+00> : vector<1xf32>
      %45 = vector.multi_reduction <add>, %44, %cst_27 [1, 2] : vector<1x512x8xf32> to vector<1xf32>
      %46 = vector.shape_cast %45 : vector<1xf32> to vector<1x1x1xf32>
      %47 = vector.extract %46[0, 0, 0] : f32 from vector<1x1x1xf32>
      %cst_28 = arith.constant 4.096000e+03 : f32
      %48 = arith.divf %47, %cst_28 : f32
      %49 = vector.broadcast %48 : f32 to vector<512x8xf32>
      %50 = arith.subf %43, %49 : vector<512x8xf32>
      %51 = arith.mulf %50, %50 : vector<512x8xf32>
      %52 = vector.shape_cast %51 : vector<512x8xf32> to vector<1x512x8xf32>
      %cst_29 = arith.constant dense<0.000000e+00> : vector<1xf32>
      %53 = vector.multi_reduction <add>, %52, %cst_29 [1, 2] : vector<1x512x8xf32> to vector<1xf32>
      %54 = vector.shape_cast %53 : vector<1xf32> to vector<1x1x1xf32>
      %55 = vector.extract %54[0, 0, 0] : f32 from vector<1x1x1xf32>
      %cst_30 = arith.constant 4.096000e+03 : f32
      %56 = arith.divf %55, %cst_30 : f32
      %cst_31 = arith.constant 9.99999997E-7 : f32
      %57 = arith.addf %56, %cst_31 : f32
      %58 = math.rsqrt %57 : f32
      %59 = vector.broadcast %58 : f32 to vector<512x8xf32>
      %60 = arith.mulf %50, %59 : vector<512x8xf32>
      %c0_32 = arith.constant 0 : index
      %c0_33 = arith.constant 0 : index
      %61 = vector.load %arg3[%c0_32, %c0_33] : memref<1x8xf32, #tpu.memory_space<vmem>>, vector<1x8xf32>
      %62 = vector.broadcast %61 : vector<1x8xf32> to vector<512x8xf32>
      %63 = arith.mulf %60, %62 : vector<512x8xf32>
      %c0_34 = arith.constant 0 : index
      %c0_35 = arith.constant 0 : index
      %64 = vector.load %arg4[%c0_34, %c0_35] : memref<1x8xf32, #tpu.memory_space<vmem>>, vector<1x8xf32>
      %65 = vector.broadcast %64 : vector<1x8xf32> to vector<512x8xf32>
      %66 = arith.addf %63, %65 : vector<512x8xf32>
      %67 = arith.truncf %66 : vector<512x8xf32> to vector<512x8xbf16>
      %c0_36 = arith.constant 0 : index
      %c0_37 = arith.constant 0 : index
      %68 = vector.load %arg14[%c0_36, %c0_37] : memref<512x8xbf16, #tpu.memory_space<vmem>>, vector<512x8xbf16>
      tpu.vector_store %arg14[%c0_36, %c0_37], %67 {strides = array<i32>} : memref<512x8xbf16, #tpu.memory_space<vmem>>, vector<512x8xbf16>,
      %c0_38 = arith.constant 0 : index
      %c0_39 = arith.constant 0 : index
      %69 = vector.load %arg7[%c0_38, %c0_39] : memref<8x128xbf16, #tpu.memory_space<vmem>>, vector<8x128xbf16>
      %cst_40 = arith.constant dense<0.000000e+00> : vector<512x128xf32>
      %70 = tpu.matmul %67, %69, %cst_40 {dimension_numbers = #tpu.dot_dimension_numbers<[1], [0], [0], [1], [0, 0, 1, 1], [], []>} : vector<512x8xbf16>, vector<8x128xbf16>, vector<512x128xf32> -> vector<512x128xf32>
      %c0_41 = arith.constant 0 : index
      %c0_42 = arith.constant 0 : index
      %71 = vector.load %arg8[%c0_41, %c0_42] : memref<1x128xf32, #tpu.memory_space<vmem>>, vector<1x128xf32>
      %72 = vector.broadcast %71 : vector<1x128xf32> to vector<512x128xf32>
      %73 = arith.addf %70, %72 : vector<512x128xf32>
      %74 = arith.truncf %73 : vector<512x128xf32> to vector<512x128xbf16>
      %c0_43 = arith.constant 0 : index
      %c0_44 = arith.constant 0 : index
      %75 = vector.load %arg15[%c0_43, %c0_44] : memref<512x128xbf16, #tpu.memory_space<vmem>>, vector<512x128xbf16>
      tpu.vector_store %arg15[%c0_43, %c0_44], %74 {strides = array<i32>} : memref<512x128xbf16, #tpu.memory_space<vmem>>, vector<512x128xbf16>,
      %c0_45 = arith.constant 0 : index
      %c0_46 = arith.constant 0 : index
      %76 = vector.load %arg9[%c0_45, %c0_46] : memref<8x128xbf16, #tpu.memory_space<vmem>>, vector<8x128xbf16>
      %cst_47 = arith.constant dense<0.000000e+00> : vector<512x128xf32>
      %77 = tpu.matmul %67, %76, %cst_47 {dimension_numbers = #tpu.dot_dimension_numbers<[1], [0], [0], [1], [0, 0, 1, 1], [], []>} : vector<512x8xbf16>, vector<8x128xbf16>, vector<512x128xf32> -> vector<512x128xf32>
      %c0_48 = arith.constant 0 : index
      %c0_49 = arith.constant 0 : index
      %78 = vector.load %arg10[%c0_48, %c0_49] : memref<1x128xf32, #tpu.memory_space<vmem>>, vector<1x128xf32>
      %79 = vector.broadcast %78 : vector<1x128xf32> to vector<512x128xf32>
      %80 = arith.addf %77, %79 : vector<512x128xf32>
      %81 = arith.truncf %80 : vector<512x128xf32> to vector<512x128xbf16>
      %c0_50 = arith.constant 0 : index
      %c0_51 = arith.constant 0 : index
      %82 = vector.load %arg16[%c0_50, %c0_51] : memref<512x128xbf16, #tpu.memory_space<vmem>>, vector<512x128xbf16>
      tpu.vector_store %arg16[%c0_50, %c0_51], %81 {strides = array<i32>} : memref<512x128xbf16, #tpu.memory_space<vmem>>, vector<512x128xbf16>,
    } else {
    }
    %c256_i32 = arith.constant 256 : i32
    %3 = arith.muli %arg1, %c256_i32 : i32
    %4 = tpu.assume_multiple %3, 256 : i32
    %5 = arith.index_cast %4 : i32 to index
    %c0 = arith.constant 0 : index
    %6 = vector.load %arg14[%5, %c0] : memref<512x8xbf16, #tpu.memory_space<vmem>>, vector<256x8xbf16>
    %c0_1 = arith.constant 0 : index
    %c0_2 = arith.constant 0 : index
    %7 = vector.load %arg5[%c0_1, %c0_2] : memref<8x128xbf16, #tpu.memory_space<vmem>>, vector<8x128xbf16>
    %cst = arith.constant dense<0.000000e+00> : vector<256x128xf32>
    %8 = tpu.matmul %6, %7, %cst {dimension_numbers = #tpu.dot_dimension_numbers<[1], [0], [0], [1], [0, 0, 1, 1], [], []>} : vector<256x8xbf16>, vector<8x128xbf16>, vector<256x128xf32> -> vector<256x128xf32>
    %c0_3 = arith.constant 0 : index
    %c0_4 = arith.constant 0 : index
    %9 = vector.load %arg6[%c0_3, %c0_4] : memref<1x128xf32, #tpu.memory_space<vmem>>, vector<1x128xf32>
    %10 = vector.broadcast %9 : vector<1x128xf32> to vector<256x128xf32>
    %11 = arith.addf %8, %10 : vector<256x128xf32>
    %12 = arith.truncf %11 : vector<256x128xf32> to vector<256x128xbf16>
    %c0_5 = arith.constant 0 : index
    %c0_6 = arith.constant 0 : index
    %13 = vector.load %arg15[%c0_5, %c0_6] : memref<512x128xbf16, #tpu.memory_space<vmem>>, vector<512x128xbf16>
    %cst_7 = arith.constant dense<0.000000e+00> : vector<256x512xf32>
    %14 = tpu.matmul %12, %13, %cst_7 {dimension_numbers = #tpu.dot_dimension_numbers<[1], [1], [0], [0], [0, 0, 1, 0], [], []>} : vector<256x128xbf16>, vector<512x128xbf16>, vector<256x512xf32> -> vector<256x512xf32>
    %cst_8 = arith.constant dense<0xFF800000> : vector<256xf32>
    %15 = vector.multi_reduction <maximumf>, %14, %cst_8 [1] : vector<256x512xf32> to vector<256xf32>
    %16 = vector.shape_cast %15 : vector<256xf32> to vector<256x1xf32>
    %17 = vector.broadcast %16 : vector<256x1xf32> to vector<256x512xf32>
    %18 = arith.subf %14, %17 : vector<256x512xf32>
    %19 = math.exp %18 : vector<256x512xf32>
    %cst_9 = arith.constant dense<0.000000e+00> : vector<256xf32>
    %20 = vector.multi_reduction <add>, %19, %cst_9 [1] : vector<256x512xf32> to vector<256xf32>
    %21 = vector.shape_cast %20 : vector<256xf32> to vector<256x1xf32>
    %22 = arith.truncf %19 : vector<256x512xf32> to vector<256x512xbf16>
    %c0_10 = arith.constant 0 : index
    %c0_11 = arith.constant 0 : index
    %23 = vector.load %arg16[%c0_10, %c0_11] : memref<512x128xbf16, #tpu.memory_space<vmem>>, vector<512x128xbf16>
    %cst_12 = arith.constant dense<0.000000e+00> : vector<256x128xf32>
    %24 = tpu.matmul %22, %23, %cst_12 {dimension_numbers = #tpu.dot_dimension_numbers<[1], [0], [0], [1], [0, 0, 1, 1], [], []>} : vector<256x512xbf16>, vector<512x128xbf16>, vector<256x128xf32> -> vector<256x128xf32>
    %cst_13 = arith.constant 1.000000e+00 : f32
    %25 = vector.broadcast %cst_13 : f32 to vector<256x1xf32>
    %26 = arith.divf %25, %21 : vector<256x1xf32>
    %27 = vector.broadcast %26 : vector<256x1xf32> to vector<256x128xf32>
    %28 = arith.mulf %24, %27 : vector<256x128xf32>
    %29 = arith.truncf %28 : vector<256x128xf32> to vector<256x128xbf16>
    %c0_14 = arith.constant 0 : index
    %c0_15 = arith.constant 0 : index
    %30 = vector.load %arg11[%c0_14, %c0_15] : memref<128x8xbf16, #tpu.memory_space<vmem>>, vector<128x8xbf16>
    %cst_16 = arith.constant dense<0.000000e+00> : vector<256x8xf32>
    %31 = tpu.matmul %29, %30, %cst_16 {dimension_numbers = #tpu.dot_dimension_numbers<[1], [0], [0], [1], [0, 0, 1, 1], [], []>} : vector<256x128xbf16>, vector<128x8xbf16>, vector<256x8xf32> -> vector<256x8xf32>
    %c0_17 = arith.constant 0 : index
    %c0_18 = arith.constant 0 : index
    %32 = vector.load %arg12[%c0_17, %c0_18] : memref<1x8xf32, #tpu.memory_space<vmem>>, vector<1x8xf32>
    %33 = vector.broadcast %32 : vector<1x8xf32> to vector<256x8xf32>
    %34 = arith.addf %31, %33 : vector<256x8xf32>
    %c0_19 = arith.constant 0 : index
    %35 = arith.index_cast %4 : i32 to index
    %c0_20 = arith.constant 0 : index
    %36 = vector.load %arg2[%c0_19, %35, %c0_20] : memref<1x512x8xf32, #tpu.memory_space<vmem>>, vector<1x256x8xf32>
    %37 = vector.shape_cast %36 : vector<1x256x8xf32> to vector<256x8xf32>
    %38 = arith.addf %37, %34 : vector<256x8xf32>
    %c0_21 = arith.constant 0 : index
    %c0_22 = arith.constant 0 : index
    %c0_23 = arith.constant 0 : index
    %39 = vector.load %arg13[%c0_21, %c0_22, %c0_23] : memref<1x256x8xf32, #tpu.memory_space<vmem>>, vector<1x256x8xf32>
    %40 = vector.shape_cast %39 : vector<1x256x8xf32> to vector<256x8xf32>
    %41 = vector.shape_cast %38 : vector<256x8xf32> to vector<1x256x8xf32>
    tpu.vector_store %arg13[%c0_21, %c0_22, %c0_23], %41 {strides = array<i32>} : memref<1x256x8xf32, #tpu.memory_space<vmem>>, vector<1x256x8xf32>,
    return
  }
  func.func @transform_0(%arg0: i32, %arg1: i32) -> (i32, i32, i32) {
    %c0_i32 = arith.constant 0 : i32
    %c0_i32_0 = arith.constant 0 : i32
    %c0_i32_1 = arith.constant 0 : i32
    return %arg0, %c0_i32, %c0_i32_0 : i32, i32, i32
  }
  func.func @transform_1(%arg0: i32, %arg1: i32) -> (i32, i32) {
    %c0_i32 = arith.constant 0 : i32
    %c0_i32_0 = arith.constant 0 : i32
    %c0_i32_1 = arith.constant 0 : i32
    return %c0_i32, %c0_i32_0 : i32, i32
  }
  func.func @transform_2(%arg0: i32, %arg1: i32) -> (i32, i32) {
    %c0_i32 = arith.constant 0 : i32
    %c0_i32_0 = arith.constant 0 : i32
    %c0_i32_1 = arith.constant 0 : i32
    return %c0_i32, %c0_i32_0 : i32, i32
  }
  func.func @transform_3(%arg0: i32, %arg1: i32) -> (i32, i32) {
    %c0_i32 = arith.constant 0 : i32
    %c0_i32_0 = arith.constant 0 : i32
    %c0_i32_1 = arith.constant 0 : i32
    return %c0_i32, %c0_i32_0 : i32, i32
  }
  func.func @transform_4(%arg0: i32, %arg1: i32) -> (i32, i32) {
    %c0_i32 = arith.constant 0 : i32
    %c0_i32_0 = arith.constant 0 : i32
    %c0_i32_1 = arith.constant 0 : i32
    return %c0_i32, %c0_i32_0 : i32, i32
  }
  func.func @transform_5(%arg0: i32, %arg1: i32) -> (i32, i32) {
    %c0_i32 = arith.constant 0 : i32
    %c0_i32_0 = arith.constant 0 : i32
    %c0_i32_1 = arith.constant 0 : i32
    return %c0_i32, %c0_i32_0 : i32, i32
  }
  func.func @transform_6(%arg0: i32, %arg1: i32) -> (i32, i32) {
    %c0_i32 = arith.constant 0 : i32
    %c0_i32_0 = arith.constant 0 : i32
    %c0_i32_1 = arith.constant 0 : i32
    return %c0_i32, %c0_i32_0 : i32, i32
  }
  func.func @transform_7(%arg0: i32, %arg1: i32) -> (i32, i32) {
    %c0_i32 = arith.constant 0 : i32
    %c0_i32_0 = arith.constant 0 : i32
    %c0_i32_1 = arith.constant 0 : i32
    return %c0_i32, %c0_i32_0 : i32, i32
  }
  func.func @transform_8(%arg0: i32, %arg1: i32) -> (i32, i32) {
    %c0_i32 = arith.constant 0 : i32
    %c0_i32_0 = arith.constant 0 : i32
    %c0_i32_1 = arith.constant 0 : i32
    return %c0_i32, %c0_i32_0 : i32, i32
  }
  func.func @transform_9(%arg0: i32, %arg1: i32) -> (i32, i32) {
    %c0_i32 = arith.constant 0 : i32
    %c0_i32_0 = arith.constant 0 : i32
    %c0_i32_1 = arith.constant 0 : i32
    return %c0_i32, %c0_i32_0 : i32, i32
  }
  func.func @transform_10(%arg0: i32, %arg1: i32) -> (i32, i32) {
    %c0_i32 = arith.constant 0 : i32
    %c0_i32_0 = arith.constant 0 : i32
    %c0_i32_1 = arith.constant 0 : i32
    return %c0_i32, %c0_i32_0 : i32, i32
  }
  func.func @transform_11(%arg0: i32, %arg1: i32) -> (i32, i32, i32) {
    %c0_i32 = arith.constant 0 : i32
    %c0_i32_0 = arith.constant 0 : i32
    return %arg0, %arg1, %c0_i32 : i32, i32, i32
  }
}

</mosaic_0001>

<llo_original>
// kernel: tpu_custom_call.1
$region0: #{tpu_custom_call.1}
  #allocation0 [shape = 'u32[]', space=smem, size = 0x4, offset = 0x4, fixed_abs, tag = 'smem constant byte address 0x4 - core index']
  #allocation1 [shape = 'u32[144,128]{1,0:T(1,128)}', space=vmem, size = 0x12000, scoped, tag = 'internal scratch']
  #allocation2 [shape = 'bf16[512,8]{1,0:T(16,128)(2,1)}', space=vmem, size = 0x20000, scoped, tag = 'scratch operand']
  #allocation3 [shape = 'bf16[512,128]{1,0:T(16,128)(2,1)}', space=vmem, size = 0x20000, scoped, tag = 'scratch operand']
  #allocation4 [shape = 'bf16[512,128]{1,0:T(16,128)(2,1)}', space=vmem, size = 0x20000, scoped, tag = 'scratch operand']
  %s0 = inlined_call_operand.vmem [shape: f32[2,512,8], index: 0, kind: input, shape index: {}]
  %s1 = inlined_call_operand.vmem [shape: f32[1,8], index: 1, kind: input, shape index: {}]
  %s2 = inlined_call_operand.vmem [shape: f32[1,8], index: 2, kind: input, shape index: {}]
  %s3 = inlined_call_operand.vmem [shape: bf16[8,128], index: 3, kind: input, shape index: {}]
  %s4 = inlined_call_operand.vmem [shape: f32[1,128], index: 4, kind: input, shape index: {}]
  %s5 = inlined_call_operand.vmem [shape: bf16[8,128], index: 5, kind: input, shape index: {}]
  %s6 = inlined_call_operand.vmem [shape: f32[1,128], index: 6, kind: input, shape index: {}]
  %s7 = inlined_call_operand.vmem [shape: bf16[8,128], index: 7, kind: input, shape index: {}]
  %s8 = inlined_call_operand.vmem [shape: f32[1,128], index: 8, kind: input, shape index: {}]
  %s9 = inlined_call_operand.vmem [shape: bf16[128,8], index: 9, kind: input, shape index: {}]
  %s10 = inlined_call_operand.vmem [shape: f32[1,8], index: 10, kind: input, shape index: {}]
  %s11 = inlined_call_operand.vmem [shape: f32[2,512,8], index: 11, kind: output, shape index: {}]
  %s12 = sld [smem:[#allocation0]]
  $region81: #{tpu_custom_call.1} parent=0
    _
  %s14 = ssub.s32 1, %s12
  %s15 = scalar_select 0, %s14, %s12
  loop: start=0, step=1, limit=6
  $region2: #{tpu_custom_call.1} parent=0 // loop_pre_header
    _
  $region3: #{tpu_custom_call.1} parent=0 // loop_header
    %s17 = sphi 0, %s21
    %p18 = scmp.ge.s32.totalorder %s17, 6
    %s24 = sphi 0, %s36
    %s25 = sphi 0, %s32
    %s26 = sphi 0, %s24
    %s27 = sphi 0, %s25
    %s28 = sphi 0, %s26
    %s29 = sphi 0, %s27
    %s39 = sphi 0, %s41
    %s42 = sphi 0, %s39
    %s43 = sphi 0, %s42
    %s59 = sphi 0, %s43
    %s63 = sphi 0, %s63
    %s65 = sphi 0, %s63
    %s66 = sphi 0, %s65
    %s80 = sphi 0, %s66
    %s84 = sphi 0, %s84
    %s86 = sphi 0, %s84
    %s87 = sphi 0, %s86
    %s101 = sphi 0, %s87
    %s105 = sphi 0, %s105
    %s107 = sphi 0, %s105
    %s108 = sphi 0, %s107
    %s122 = sphi 0, %s108
    %s126 = sphi 0, %s126
    %s128 = sphi 0, %s126
    %s129 = sphi 0, %s128
    %s143 = sphi 0, %s129
    %s147 = sphi 0, %s147
    %s149 = sphi 0, %s147
    %s150 = sphi 0, %s149
    %s164 = sphi 0, %s150
    %s168 = sphi 0, %s168
    %s170 = sphi 0, %s168
    %s171 = sphi 0, %s170
    %s185 = sphi 0, %s171
    %s189 = sphi 0, %s189
    %s191 = sphi 0, %s189
    %s192 = sphi 0, %s191
    %s206 = sphi 0, %s192
    %s210 = sphi 0, %s210
    %s212 = sphi 0, %s210
    %s213 = sphi 0, %s212
    %s227 = sphi 0, %s213
    %s231 = sphi 0, %s231
    %s233 = sphi 0, %s231
    %s234 = sphi 0, %s233
    %s248 = sphi 0, %s234
    %s252 = sphi 0, %s252
    %s254 = sphi 0, %s252
    %s255 = sphi 0, %s254
    %s269 = sphi 0, %s255
    %s277 = sphi 0, %s279
    %s280 = sphi 0, %s277
    %s281 = sphi 0, %s280
    %s297 = sphi 0, %s281
  $region4: #{tpu_custom_call.1} parent=0 // loop_header_branch
    %20 = sbr.rel (%p18) target = $region8
  $region5: #{tpu_custom_call.1} parent=0 // loop_body
    %s22 = ssub.s32 %s17, 1
    %s23 = ssub.s32 %s17, 2
    %s30 = sadd.s32 1, %s25
    %p31 = scmp.ge.s32.totalorder %s30, 2
    %s32 = scalar_select %p31, 0, %s30
    %s33 = sadd.s32 1, %s24
    %s34 = scalar_select %p31, %s33, %s24
    %p35 = scmp.ge.s32.totalorder %s34, 2
    %s36 = scalar_select %p35, 0, %s34
    %s37 = ssub.s32 %s24, %s36
    %p38 = scmp.eq.s32.totalorder %s37, 0
    %s40 = sadd.s32 %s39, 1
    %s41 = scalar_select %p38, %s39, %s40
    %p44 = pneg %p38
    %p45 = scmp.eq.s32.totalorder %s17, 3
    %p46 = por %p44, %p45
    %p47 = scmp.ne.s32.totalorder %s39, %s42
    %p48 = scmp.eq.s32.totalorder %s17, 0
    %p49 = por %p47, %p48
    %p50 = scmp.ne.s32.totalorder %s39, %s42
    %p51 = scmp.eq.s32.totalorder %s22, 3
    %p52 = por %p50, %p51
    %p53 = scmp.ne.s32.totalorder %s42, %s43
    %p54 = scmp.eq.s32.totalorder %s22, 0
    %p55 = por %p53, %p54
    %p56 = scmp.ne.s32.totalorder %s42, %s43
    %p57 = scmp.eq.s32.totalorder %s23, 3
    %p58 = por %p56, %p57
    %p60 = scmp.ne.s32.totalorder %s43, %s59
    %p61 = scmp.eq.s32.totalorder %s23, 0
    %p62 = por %p60, %p61
    %s64 = sadd.s32 %s63, 1
    %p67 = scmp.eq.s32.totalorder %s17, 3
    %p68 = scmp.ne.s32.totalorder %s63, %s65
    %p69 = scmp.eq.s32.totalorder %s17, 0
    %p70 = por %p68, %p69
    %p71 = scmp.ne.s32.totalorder %s63, %s65
    %p72 = scmp.eq.s32.totalorder %s22, 3
    %p73 = por %p71, %p72
    %p74 = scmp.ne.s32.totalorder %s65, %s66
    %p75 = scmp.eq.s32.totalorder %s22, 0
    %p76 = por %p74, %p75
    %p77 = scmp.ne.s32.totalorder %s65, %s66
    %p78 = scmp.eq.s32.totalorder %s23, 3
    %p79 = por %p77, %p78
    %p81 = scmp.ne.s32.totalorder %s66, %s80
    %p82 = scmp.eq.s32.totalorder %s23, 0
    %p83 = por %p81, %p82
    %s85 = sadd.s32 %s84, 1
    %p88 = scmp.eq.s32.totalorder %s17, 3
    %p89 = scmp.ne.s32.totalorder %s84, %s86
    %p90 = scmp.eq.s32.totalorder %s17, 0
    %p91 = por %p89, %p90
    %p92 = scmp.ne.s32.totalorder %s84, %s86
    %p93 = scmp.eq.s32.totalorder %s22, 3
    %p94 = por %p92, %p93
    %p95 = scmp.ne.s32.totalorder %s86, %s87
    %p96 = scmp.eq.s32.totalorder %s22, 0
    %p97 = por %p95, %p96
    %p98 = scmp.ne.s32.totalorder %s86, %s87
    %p99 = scmp.eq.s32.totalorder %s23, 3
    %p100 = por %p98, %p99
    %p102 = scmp.ne.s32.totalorder %s87, %s101
    %p103 = scmp.eq.s32.totalorder %s23, 0
    %p104 = por %p102, %p103
    %s106 = sadd.s32 %s105, 1
    %p109 = scmp.eq.s32.totalorder %s17, 3
    %p110 = scmp.ne.s32.totalorder %s105, %s107
    %p111 = scmp.eq.s32.totalorder %s17, 0
    %p112 = por %p110, %p111
    %p113 = scmp.ne.s32.totalorder %s105, %s107
    %p114 = scmp.eq.s32.totalorder %s22, 3
    %p115 = por %p113, %p114
    %p116 = scmp.ne.s32.totalorder %s107, %s108
    %p117 = scmp.eq.s32.totalorder %s22, 0
    %p118 = por %p116, %p117
    %p119 = scmp.ne.s32.totalorder %s107, %s108
    %p120 = scmp.eq.s32.totalorder %s23, 3
    %p121 = por %p119, %p120
    %p123 = scmp.ne.s32.totalorder %s108, %s122
    %p124 = scmp.eq.s32.totalorder %s23, 0
    %p125 = por %p123, %p124
    %s127 = sadd.s32 %s126, 1
    %p130 = scmp.eq.s32.totalorder %s17, 3
    %p131 = scmp.ne.s32.totalorder %s126, %s128
    %p132 = scmp.eq.s32.totalorder %s17, 0
    %p133 = por %p131, %p132
    %p134 = scmp.ne.s32.totalorder %s126, %s128
    %p135 = scmp.eq.s32.totalorder %s22, 3
    %p136 = por %p134, %p135
    %p137 = scmp.ne.s32.totalorder %s128, %s129
    %p138 = scmp.eq.s32.totalorder %s22, 0
    %p139 = por %p137, %p138
    %p140 = scmp.ne.s32.totalorder %s128, %s129
    %p141 = scmp.eq.s32.totalorder %s23, 3
    %p142 = por %p140, %p141
    %p144 = scmp.ne.s32.totalorder %s129, %s143
    %p145 = scmp.eq.s32.totalorder %s23, 0
    %p146 = por %p144, %p145
    %s148 = sadd.s32 %s147, 1
    %p151 = scmp.eq.s32.totalorder %s17, 3
    %p152 = scmp.ne.s32.totalorder %s147, %s149
    %p153 = scmp.eq.s32.totalorder %s17, 0
    %p154 = por %p152, %p153
    %p155 = scmp.ne.s32.totalorder %s147, %s149
    %p156 = scmp.eq.s32.totalorder %s22, 3
    %p157 = por %p155, %p156
    %p158 = scmp.ne.s32.totalorder %s149, %s150
    %p159 = scmp.eq.s32.totalorder %s22, 0
    %p160 = por %p158, %p159
    %p161 = scmp.ne.s32.totalorder %s149, %s150
    %p162 = scmp.eq.s32.totalorder %s23, 3
    %p163 = por %p161, %p162
    %p165 = scmp.ne.s32.totalorder %s150, %s164
    %p166 = scmp.eq.s32.totalorder %s23, 0
    %p167 = por %p165, %p166
    %s169 = sadd.s32 %s168, 1
    %p172 = scmp.eq.s32.totalorder %s17, 3
    %p173 = scmp.ne.s32.totalorder %s168, %s170
    %p174 = scmp.eq.s32.totalorder %s17, 0
    %p175 = por %p173, %p174
    %p176 = scmp.ne.s32.totalorder %s168, %s170
    %p177 = scmp.eq.s32.totalorder %s22, 3
    %p178 = por %p176, %p177
    %p179 = scmp.ne.s32.totalorder %s170, %s171
    %p180 = scmp.eq.s32.totalorder %s22, 0
    %p181 = por %p179, %p180
    %p182 = scmp.ne.s32.totalorder %s170, %s171
    %p183 = scmp.eq.s32.totalorder %s23, 3
    %p184 = por %p182, %p183
    %p186 = scmp.ne.s32.totalorder %s171, %s185
    %p187 = scmp.eq.s32.totalorder %s23, 0
    %p188 = por %p186, %p187
    %s190 = sadd.s32 %s189, 1
    %p193 = scmp.eq.s32.totalorder %s17, 3
    %p194 = scmp.ne.s32.totalorder %s189, %s191
    %p195 = scmp.eq.s32.totalorder %s17, 0
    %p196 = por %p194, %p195
    %p197 = scmp.ne.s32.totalorder %s189, %s191
    %p198 = scmp.eq.s32.totalorder %s22, 3
    %p199 = por %p197, %p198
    %p200 = scmp.ne.s32.totalorder %s191, %s192
    %p201 = scmp.eq.s32.totalorder %s22, 0
    %p202 = por %p200, %p201
    %p203 = scmp.ne.s32.totalorder %s191, %s192
    %p204 = scmp.eq.s32.totalorder %s23, 3
    %p205 = por %p203, %p204
    %p207 = scmp.ne.s32.totalorder %s192, %s206
    %p208 = scmp.eq.s32.totalorder %s23, 0
    %p209 = por %p207, %p208
    %s211 = sadd.s32 %s210, 1
    %p214 = scmp.eq.s32.totalorder %s17, 3
    %p215 = scmp.ne.s32.totalorder %s210, %s212
    %p216 = scmp.eq.s32.totalorder %s17, 0
    %p217 = por %p215, %p216
    %p218 = scmp.ne.s32.totalorder %s210, %s212
    %p219 = scmp.eq.s32.totalorder %s22, 3
    %p220 = por %p218, %p219
    %p221 = scmp.ne.s32.totalorder %s212, %s213
    %p222 = scmp.eq.s32.totalorder %s22, 0
    %p223 = por %p221, %p222
    %p224 = scmp.ne.s32.totalorder %s212, %s213
    %p225 = scmp.eq.s32.totalorder %s23, 3
    %p226 = por %p224, %p225
    %p228 = scmp.ne.s32.totalorder %s213, %s227
    %p229 = scmp.eq.s32.totalorder %s23, 0
    %p230 = por %p228, %p229
    %s232 = sadd.s32 %s231, 1
    %p235 = scmp.eq.s32.totalorder %s17, 3
    %p236 = scmp.ne.s32.totalorder %s231, %s233
    %p237 = scmp.eq.s32.totalorder %s17, 0
    %p238 = por %p236, %p237
    %p239 = scmp.ne.s32.totalorder %s231, %s233
    %p240 = scmp.eq.s32.totalorder %s22, 3
    %p241 = por %p239, %p240
    %p242 = scmp.ne.s32.totalorder %s233, %s234
    %p243 = scmp.eq.s32.totalorder %s22, 0
    %p244 = por %p242, %p243
    %p245 = scmp.ne.s32.totalorder %s233, %s234
    %p246 = scmp.eq.s32.totalorder %s23, 3
    %p247 = por %p245, %p246
    %p249 = scmp.ne.s32.totalorder %s234, %s248
    %p250 = scmp.eq.s32.totalorder %s23, 0
    %p251 = por %p249, %p250
    %s253 = sadd.s32 %s252, 1
    %p256 = scmp.eq.s32.totalorder %s17, 3
    %p257 = scmp.ne.s32.totalorder %s252, %s254
    %p258 = scmp.eq.s32.totalorder %s17, 0
    %p259 = por %p257, %p258
    %p260 = scmp.ne.s32.totalorder %s252, %s254
    %p261 = scmp.eq.s32.totalorder %s22, 3
    %p262 = por %p260, %p261
    %p263 = scmp.ne.s32.totalorder %s254, %s255
    %p264 = scmp.eq.s32.totalorder %s22, 0
    %p265 = por %p263, %p264
    %p266 = scmp.ne.s32.totalorder %s254, %s255
    %p267 = scmp.eq.s32.totalorder %s23, 3
    %p268 = por %p266, %p267
    %p270 = scmp.ne.s32.totalorder %s255, %s269
    %p271 = scmp.eq.s32.totalorder %s23, 0
    %p272 = por %p270, %p271
    %s273 = ssub.s32 %s24, %s36
    %s274 = ssub.s32 %s25, %s32
    %s275 = sor.u32 %s273, %s274
    %p276 = scmp.eq.s32.totalorder %s275, 0
    %s278 = sadd.s32 %s277, 1
    %s279 = scalar_select %p276, %s277, %s278
    %p282 = pneg %p276
    %p283 = scmp.eq.s32.totalorder %s17, 3
    %p284 = por %p282, %p283
    %p285 = scmp.ne.s32.totalorder %s277, %s280
    %p286 = scmp.eq.s32.totalorder %s17, 0
    %p287 = por %p285, %p286
    %p288 = scmp.ne.s32.totalorder %s277, %s280
    %p289 = scmp.eq.s32.totalorder %s22, 3
    %p290 = por %p288, %p289
    %p291 = scmp.ne.s32.totalorder %s280, %s281
    %p292 = scmp.eq.s32.totalorder %s22, 0
    %p293 = por %p291, %p292
    %p294 = scmp.ne.s32.totalorder %s280, %s281
    %p295 = scmp.eq.s32.totalorder %s23, 3
    %p296 = por %p294, %p295
    %p298 = scmp.ne.s32.totalorder %s281, %s297
    %p299 = scmp.eq.s32.totalorder %s23, 0
    %p300 = por %p298, %p299
    %p301 = scmp.le.s32.totalorder 1, %s17
    %p302 = scmp.lt.s32.totalorder %s17, 5
    %p303 = pnand %p301, %p302
    %p304 = pneg %p303
    // Predicated region
    $region9: #{tpu_custom_call.1} parent=5 // pred_check
      _
    $region10: #{tpu_custom_call.1} parent=5 // pred_check_branch
      %306 = sbr.rel (%p303) target = $region12
    $region11: #{tpu_custom_call.1} parent=5 // pred_region
      %s307 = ssub.s32 %s17, 1
      // Predicated region
      $region13: #{tpu_custom_call.1} parent=11 // pred_check
        %p308 = pneg %p55
      $region14: #{tpu_custom_call.1} parent=11 // pred_check_branch
        %310 = sbr.rel (%p308) target = $region16
      $region15: #{tpu_custom_call.1} parent=11 // pred_region
        %p311 = scmp.lt.s32.totalorder %s26, 1
        %s312 = scalar_select %p311, %s26, 1
        %s313 = smul.addr %s312, 64
        %s314 = smul.addr %s313, 8
        %s315 = scalar_lea.vmem %s0, %s314
      $region16: #{tpu_custom_call.1} parent=11 // pred_fallthru
        _
      // Predicated region
      $region17: #{tpu_custom_call.1} parent=11 // pred_check
        %p316 = pneg %p76
      $region18: #{tpu_custom_call.1} parent=11 // pred_check_branch
        %318 = sbr.rel (%p316) target = $region20
      $region19: #{tpu_custom_call.1} parent=11 // pred_region
        _
      $region20: #{tpu_custom_call.1} parent=11 // pred_fallthru
        _
      // Predicated region
      $region21: #{tpu_custom_call.1} parent=11 // pred_check
        %p319 = pneg %p97
      $region22: #{tpu_custom_call.1} parent=11 // pred_check_branch
        %321 = sbr.rel (%p319) target = $region24
      $region23: #{tpu_custom_call.1} parent=11 // pred_region
        _
      $region24: #{tpu_custom_call.1} parent=11 // pred_fallthru
        _
      // Predicated region
      $region25: #{tpu_custom_call.1} parent=11 // pred_check
        %p322 = pneg %p118
      $region26: #{tpu_custom_call.1} parent=11 // pred_check_branch
        %324 = sbr.rel (%p322) target = $region28
      $region27: #{tpu_custom_call.1} parent=11 // pred_region
        _
      $region28: #{tpu_custom_call.1} parent=11 // pred_fallthru
        _
      // Predicated region
      $region29: #{tpu_custom_call.1} parent=11 // pred_check
        %p325 = pneg %p139
      $region30: #{tpu_custom_call.1} parent=11 // pred_check_branch
        %327 = sbr.rel (%p325) target = $region32
      $region31: #{tpu_custom_call.1} parent=11 // pred_region
        _
      $region32: #{tpu_custom_call.1} parent=11 // pred_fallthru
        _
      // Predicated region
      $region33: #{tpu_custom_call.1} parent=11 // pred_check
        %p328 = pneg %p160
      $region34: #{tpu_custom_call.1} parent=11 // pred_check_branch
        %330 = sbr.rel (%p328) target = $region36
      $region35: #{tpu_custom_call.1} parent=11 // pred_region
        _
      $region36: #{tpu_custom_call.1} parent=11 // pred_fallthru
        _
      // Predicated region
      $region37: #{tpu_custom_call.1} parent=11 // pred_check
        %p331 = pneg %p181
      $region38: #{tpu_custom_call.1} parent=11 // pred_check_branch
        %333 = sbr.rel (%p331) target = $region40
      $region39: #{tpu_custom_call.1} parent=11 // pred_region
        _
      $region40: #{tpu_custom_call.1} parent=11 // pred_fallthru
        _
      // Predicated region
      $region41: #{tpu_custom_call.1} parent=11 // pred_check
        %p334 = pneg %p202
      $region42: #{tpu_custom_call.1} parent=11 // pred_check_branch
        %336 = sbr.rel (%p334) target = $region44
      $region43: #{tpu_custom_call.1} parent=11 // pred_region
        _
      $region44: #{tpu_custom_call.1} parent=11 // pred_fallthru
        _
      // Predicated region
      $region45: #{tpu_custom_call.1} parent=11 // pred_check
        %p337 = pneg %p223
      $region46: #{tpu_custom_call.1} parent=11 // pred_check_branch
        %339 = sbr.rel (%p337) target = $region48
      $region47: #{tpu_custom_call.1} parent=11 // pred_region
        _
      $region48: #{tpu_custom_call.1} parent=11 // pred_fallthru
        _
      // Predicated region
      $region49: #{tpu_custom_call.1} parent=11 // pred_check
        %p340 = pneg %p244
      $region50: #{tpu_custom_call.1} parent=11 // pred_check_branch
        %342 = sbr.rel (%p340) target = $region52
      $region51: #{tpu_custom_call.1} parent=11 // pred_region
        _
      $region52: #{tpu_custom_call.1} parent=11 // pred_fallthru
        _
      // Predicated region
      $region53: #{tpu_custom_call.1} parent=11 // pred_check
        %p343 = pneg %p265
      $region54: #{tpu_custom_call.1} parent=11 // pred_check_branch
        %345 = sbr.rel (%p343) target = $region56
      $region55: #{tpu_custom_call.1} parent=11 // pred_region
        _
      $region56: #{tpu_custom_call.1} parent=11 // pred_fallthru
        _
    $region12: #{tpu_custom_call.1} parent=5 // pred_fallthru
      _
    %p346 = scmp.lt.s32.totalorder %s17, 4
    // Predicated region
    $region57: #{tpu_custom_call.1} parent=5 // pred_check
      %p347 = pneg %p346
    $region58: #{tpu_custom_call.1} parent=5 // pred_check_branch
      %349 = sbr.rel (%p347) target = $region60
    $region59: #{tpu_custom_call.1} parent=5 // pred_region
      _
    $region60: #{tpu_custom_call.1} parent=5 // pred_fallthru
      _
    %p350 = scmp.le.s32.totalorder 1, %s17
    %p351 = scmp.lt.s32.totalorder %s17, 5
    %p352 = pnand %p350, %p351
    %p353 = pneg %p352
    // Predicated region
    $region61: #{tpu_custom_call.1} parent=5 // pred_check
      _
    $region62: #{tpu_custom_call.1} parent=5 // pred_check_branch
      %355 = sbr.rel (%p352) target = $region64
    $region63: #{tpu_custom_call.1} parent=5 // pred_region
      %s356 = ssub.s32 %s17, 1
      %p357 = scmp.lt.s32.totalorder %s26, 1
      %s358 = scalar_select %p357, %s26, 1
      %s359 = smul.addr %s358, 64
      %s360 = smul.addr %s359, 8
      %s361 = scalar_lea.vmem %s0, %s360
      %p362 = pneg %p55
      %p363 = pneg %p52
      %p364 = pneg %p76
      %p365 = pneg %p73
      %p366 = pneg %p97
      %p367 = pneg %p94
      %p368 = pneg %p118
      %p369 = pneg %p115
      %p370 = pneg %p139
      %p371 = pneg %p136
      %p372 = pneg %p160
      %p373 = pneg %p157
      %p374 = pneg %p181
      %p375 = pneg %p178
      %p376 = pneg %p202
      %p377 = pneg %p199
      %p378 = pneg %p223
      %p379 = pneg %p220
      %p380 = pneg %p244
      %p381 = pneg %p241
      %p382 = pneg %p265
      %p383 = pneg %p262
      %p384 = pneg %p293
      %p385 = pneg %p290
      %s386 = smul.u32 32, %s27
      %p387 = scmp.lt.s32.totalorder %s26, 1
      %s388 = scalar_select %p387, %s26, 1
      %p389 = scmp.lt.s32.totalorder %s386, 63
      %s390 = scalar_select %p389, %s386, 63
      %s391 = smul.addr %s388, 64
      %s392 = sadd.s32 %s390, %s391
      %s393 = smul.addr %s392, 8
      %s394 = scalar_lea.vmem %s11, %s393
      %p395 = scmp.lt.s32.totalorder %s26, 1
      %s396 = scalar_select %p395, %s26, 1
      %s397 = smul.addr %s396, 64
      %s398 = smul.addr %s397, 8
      %s399 = scalar_lea.vmem %s0, %s398
      %s400 = smul.u32 32, %s27
      %p401 = scmp.lt.s32.totalorder %s26, 1
      %s402 = scalar_select %p401, %s26, 1
      %p403 = scmp.lt.s32.totalorder %s400, 63
      %s404 = scalar_select %p403, %s400, 63
      %s405 = smul.addr %s402, 64
      %s406 = sadd.s32 %s404, %s405
      %s407 = smul.addr %s406, 8
      %s408 = scalar_lea.vmem %s11, %s407
      %s409 = smul.u32 32, %s27
      %p411 = scmp.eq.s32.totalorder %s27, 0
      // Predicated region
      $region65: #{tpu_custom_call.1} parent=63 // pred_check
        %p412 = pneg %p411
      $region66: #{tpu_custom_call.1} parent=63 // pred_check_branch
        %414 = sbr.rel (%p412) target = $region68
      $region67: #{tpu_custom_call.1} parent=63 // pred_region
        %v415 = vld [vmem:[%s399] sm:$0xff]
        %v416 = vld [vmem:[%s399 + $0x8] sm:$0xff]
        %v417 = vld [vmem:[%s399 + $0x10] sm:$0xff]
        %v418 = vld [vmem:[%s399 + $0x18] sm:$0xff]
        %v419 = vld [vmem:[%s399 + $0x20] sm:$0xff]
        %v420 = vld [vmem:[%s399 + $0x28] sm:$0xff]
        %v421 = vld [vmem:[%s399 + $0x30] sm:$0xff]
        %v422 = vld [vmem:[%s399 + $0x38] sm:$0xff]
        %v423 = vld [vmem:[%s399 + $0x40] sm:$0xff]
        %v424 = vld [vmem:[%s399 + $0x48] sm:$0xff]
        %v425 = vld [vmem:[%s399 + $0x50] sm:$0xff]
        %v426 = vld [vmem:[%s399 + $0x58] sm:$0xff]
        %v427 = vld [vmem:[%s399 + $0x60] sm:$0xff]
        %v428 = vld [vmem:[%s399 + $0x68] sm:$0xff]
        %v429 = vld [vmem:[%s399 + $0x70] sm:$0xff]
        %v430 = vld [vmem:[%s399 + $0x78] sm:$0xff]
        %v431 = vld [vmem:[%s399 + $0x80] sm:$0xff]
        %v432 = vld [vmem:[%s399 + $0x88] sm:$0xff]
        %v433 = vld [vmem:[%s399 + $0x90] sm:$0xff]
        %v434 = vld [vmem:[%s399 + $0x98] sm:$0xff]
        %v435 = vld [vmem:[%s399 + $0xa0] sm:$0xff]
        %v436 = vld [vmem:[%s399 + $0xa8] sm:$0xff]
        %v437 = vld [vmem:[%s399 + $0xb0] sm:$0xff]
        %v438 = vld [vmem:[%s399 + $0xb8] sm:$0xff]
        %v439 = vld [vmem:[%s399 + $0xc0] sm:$0xff]
        %v440 = vld [vmem:[%s399 + $0xc8] sm:$0xff]
        %v441 = vld [vmem:[%s399 + $0xd0] sm:$0xff]
        %v442 = vld [vmem:[%s399 + $0xd8] sm:$0xff]
        %v443 = vld [vmem:[%s399 + $0xe0] sm:$0xff]
        %v444 = vld [vmem:[%s399 + $0xe8] sm:$0xff]
        %v445 = vld [vmem:[%s399 + $0xf0] sm:$0xff]
        %v446 = vld [vmem:[%s399 + $0xf8] sm:$0xff]
        %v447 = vld [vmem:[%s399 + $0x100] sm:$0xff]
        %v448 = vld [vmem:[%s399 + $0x108] sm:$0xff]
        %v449 = vld [vmem:[%s399 + $0x110] sm:$0xff]
        %v450 = vld [vmem:[%s399 + $0x118] sm:$0xff]
        %v451 = vld [vmem:[%s399 + $0x120] sm:$0xff]
        %v452 = vld [vmem:[%s399 + $0x128] sm:$0xff]
        %v453 = vld [vmem:[%s399 + $0x130] sm:$0xff]
        %v454 = vld [vmem:[%s399 + $0x138] sm:$0xff]
        %v455 = vld [vmem:[%s399 + $0x140] sm:$0xff]
        %v456 = vld [vmem:[%s399 + $0x148] sm:$0xff]
        %v457 = vld [vmem:[%s399 + $0x150] sm:$0xff]
        %v458 = vld [vmem:[%s399 + $0x158] sm:$0xff]
        %v459 = vld [vmem:[%s399 + $0x160] sm:$0xff]
        %v460 = vld [vmem:[%s399 + $0x168] sm:$0xff]
        %v461 = vld [vmem:[%s399 + $0x170] sm:$0xff]
        %v462 = vld [vmem:[%s399 + $0x178] sm:$0xff]
        %v463 = vld [vmem:[%s399 + $0x180] sm:$0xff]
        %v464 = vld [vmem:[%s399 + $0x188] sm:$0xff]
        %v465 = vld [vmem:[%s399 + $0x190] sm:$0xff]
        %v466 = vld [vmem:[%s399 + $0x198] sm:$0xff]
        %v467 = vld [vmem:[%s399 + $0x1a0] sm:$0xff]
        %v468 = vld [vmem:[%s399 + $0x1a8] sm:$0xff]
        %v469 = vld [vmem:[%s399 + $0x1b0] sm:$0xff]
        %v470 = vld [vmem:[%s399 + $0x1b8] sm:$0xff]
        %v471 = vld [vmem:[%s399 + $0x1c0] sm:$0xff]
        %v472 = vld [vmem:[%s399 + $0x1c8] sm:$0xff]
        %v473 = vld [vmem:[%s399 + $0x1d0] sm:$0xff]
        %v474 = vld [vmem:[%s399 + $0x1d8] sm:$0xff]
        %v475 = vld [vmem:[%s399 + $0x1e0] sm:$0xff]
        %v476 = vld [vmem:[%s399 + $0x1e8] sm:$0xff]
        %v477 = vld [vmem:[%s399 + $0x1f0] sm:$0xff]
        %v478 = vld [vmem:[%s399 + $0x1f8] sm:$0xff]
        %vm479 = vcmask 64512
        %v480 = vsel %vm479, %v415, 0.0
        %v481 = vsel %vm479, %v416, 0.0
        %v482 = vadd.f32 %v480, %v481
        %v483 = vsel %vm479, %v417, 0.0
        %v484 = vadd.f32 %v482, %v483
        %v485 = vsel %vm479, %v418, 0.0
        %v486 = vadd.f32 %v484, %v485
        %v487 = vsel %vm479, %v419, 0.0
        %v488 = vadd.f32 %v486, %v487
        %v489 = vsel %vm479, %v420, 0.0
        %v490 = vadd.f32 %v488, %v489
        %v491 = vsel %vm479, %v421, 0.0
        %v492 = vadd.f32 %v490, %v491
        %v493 = vsel %vm479, %v422, 0.0
        %v494 = vadd.f32 %v492, %v493
        %v495 = vsel %vm479, %v423, 0.0
        %v496 = vadd.f32 %v494, %v495
        %v497 = vsel %vm479, %v424, 0.0
        %v498 = vadd.f32 %v496, %v497
        %v499 = vsel %vm479, %v425, 0.0
        %v500 = vadd.f32 %v498, %v499
        %v501 = vsel %vm479, %v426, 0.0
        %v502 = vadd.f32 %v500, %v501
        %v503 = vsel %vm479, %v427, 0.0
        %v504 = vadd.f32 %v502, %v503
        %v505 = vsel %vm479, %v428, 0.0
        %v506 = vadd.f32 %v504, %v505
        %v507 = vsel %vm479, %v429, 0.0
        %v508 = vadd.f32 %v506, %v507
        %v509 = vsel %vm479, %v430, 0.0
        %v510 = vadd.f32 %v508, %v509
        %v511 = vsel %vm479, %v431, 0.0
        %v512 = vadd.f32 %v510, %v511
        %v513 = vsel %vm479, %v432, 0.0
        %v514 = vadd.f32 %v512, %v513
        %v515 = vsel %vm479, %v433, 0.0
        %v516 = vadd.f32 %v514, %v515
        %v517 = vsel %vm479, %v434, 0.0
        %v518 = vadd.f32 %v516, %v517
        %v519 = vsel %vm479, %v435, 0.0
        %v520 = vadd.f32 %v518, %v519
        %v521 = vsel %vm479, %v436, 0.0
        %v522 = vadd.f32 %v520, %v521
        %v523 = vsel %vm479, %v437, 0.0
        %v524 = vadd.f32 %v522, %v523
        %v525 = vsel %vm479, %v438, 0.0
        %v526 = vadd.f32 %v524, %v525
        %v527 = vsel %vm479, %v439, 0.0
        %v528 = vadd.f32 %v526, %v527
        %v529 = vsel %vm479, %v440, 0.0
        %v530 = vadd.f32 %v528, %v529
        %v531 = vsel %vm479, %v441, 0.0
        %v532 = vadd.f32 %v530, %v531
        %v533 = vsel %vm479, %v442, 0.0
        %v534 = vadd.f32 %v532, %v533
        %v535 = vsel %vm479, %v443, 0.0
        %v536 = vadd.f32 %v534, %v535
        %v537 = vsel %vm479, %v444, 0.0
        %v538 = vadd.f32 %v536, %v537
        %v539 = vsel %vm479, %v445, 0.0
        %v540 = vadd.f32 %v538, %v539
        %v541 = vsel %vm479, %v446, 0.0
        %v542 = vadd.f32 %v540, %v541
        %v543 = vsel %vm479, %v447, 0.0
        %v544 = vadd.f32 %v542, %v543
        %v545 = vsel %vm479, %v448, 0.0
        %v546 = vadd.f32 %v544, %v545
        %v547 = vsel %vm479, %v449, 0.0
        %v548 = vadd.f32 %v546, %v547
        %v549 = vsel %vm479, %v450, 0.0
        %v550 = vadd.f32 %v548, %v549
        %v551 = vsel %vm479, %v451, 0.0
        %v552 = vadd.f32 %v550, %v551
        %v553 = vsel %vm479, %v452, 0.0
        %v554 = vadd.f32 %v552, %v553
        %v555 = vsel %vm479, %v453, 0.0
        %v556 = vadd.f32 %v554, %v555
        %v557 = vsel %vm479, %v454, 0.0
        %v558 = vadd.f32 %v556, %v557
        %v559 = vsel %vm479, %v455, 0.0
        %v560 = vadd.f32 %v558, %v559
        %v561 = vsel %vm479, %v456, 0.0
        %v562 = vadd.f32 %v560, %v561
        %v563 = vsel %vm479, %v457, 0.0
        %v564 = vadd.f32 %v562, %v563
        %v565 = vsel %vm479, %v458, 0.0
        %v566 = vadd.f32 %v564, %v565
        %v567 = vsel %vm479, %v459, 0.0
        %v568 = vadd.f32 %v566, %v567
        %v569 = vsel %vm479, %v460, 0.0
        %v570 = vadd.f32 %v568, %v569
        %v571 = vsel %vm479, %v461, 0.0
        %v572 = vadd.f32 %v570, %v571
        %v573 = vsel %vm479, %v462, 0.0
        %v574 = vadd.f32 %v572, %v573
        %v575 = vsel %vm479, %v463, 0.0
        %v576 = vadd.f32 %v574, %v575
        %v577 = vsel %vm479, %v464, 0.0
        %v578 = vadd.f32 %v576, %v577
        %v579 = vsel %vm479, %v465, 0.0
        %v580 = vadd.f32 %v578, %v579
        %v581 = vsel %vm479, %v466, 0.0
        %v582 = vadd.f32 %v580, %v581
        %v583 = vsel %vm479, %v467, 0.0
        %v584 = vadd.f32 %v582, %v583
        %v585 = vsel %vm479, %v468, 0.0
        %v586 = vadd.f32 %v584, %v585
        %v587 = vsel %vm479, %v469, 0.0
        %v588 = vadd.f32 %v586, %v587
        %v589 = vsel %vm479, %v470, 0.0
        %v590 = vadd.f32 %v588, %v589
        %v591 = vsel %vm479, %v471, 0.0
        %v592 = vadd.f32 %v590, %v591
        %v593 = vsel %vm479, %v472, 0.0
        %v594 = vadd.f32 %v592, %v593
        %v595 = vsel %vm479, %v473, 0.0
        %v596 = vadd.f32 %v594, %v595
        %v597 = vsel %vm479, %v474, 0.0
        %v598 = vadd.f32 %v596, %v597
        %v599 = vsel %vm479, %v475, 0.0
        %v600 = vadd.f32 %v598, %v599
        %v601 = vsel %vm479, %v476, 0.0
        %v602 = vadd.f32 %v600, %v601
        %v603 = vsel %vm479, %v477, 0.0
        %v604 = vadd.f32 %v602, %v603
        %v605 = vsel %vm479, %v478, 0.0
        %v606 = vadd.f32 %v604, %v605
        %607 = vadd.xlane.f32.xlu0 %v606
        %v608 = vpop.xlane.xlu0 %607
        %v609 = vrot.slane %v608, 4
        %v610 = vadd.f32 %v608, %v609
        %v611 = vrot.slane %v610, 2
        %v612 = vadd.f32 %v610, %v611
        %v613 = vrot.slane %v612, 1
        %v614 = vadd.f32 %v612, %v613
        %s615 = vtos %v614
        %v616 = vrcp.pop 4096.0
        %s617 = vtos %v616
        %s618 = smul.f32 %s615, %s617
        %v619 = vstv %s618
        %v620 = vsub.f32 %v415, %v619
        %v621 = vsub.f32 %v416, %v619
        %v622 = vsub.f32 %v417, %v619
        %v623 = vsub.f32 %v418, %v619
        %v624 = vsub.f32 %v419, %v619
        %v625 = vsub.f32 %v420, %v619
        %v626 = vsub.f32 %v421, %v619
        %v627 = vsub.f32 %v422, %v619
        %v628 = vsub.f32 %v423, %v619
        %v629 = vsub.f32 %v424, %v619
        %v630 = vsub.f32 %v425, %v619
        %v631 = vsub.f32 %v426, %v619
        %v632 = vsub.f32 %v427, %v619
        %v633 = vsub.f32 %v428, %v619
        %v634 = vsub.f32 %v429, %v619
        %v635 = vsub.f32 %v430, %v619
        %v636 = vsub.f32 %v431, %v619
        %v637 = vsub.f32 %v432, %v619
        %v638 = vsub.f32 %v433, %v619
        %v639 = vsub.f32 %v434, %v619
        %v640 = vsub.f32 %v435, %v619
        %v641 = vsub.f32 %v436, %v619
        %v642 = vsub.f32 %v437, %v619
        %v643 = vsub.f32 %v438, %v619
        %v644 = vsub.f32 %v439, %v619
        %v645 = vsub.f32 %v440, %v619
        %v646 = vsub.f32 %v441, %v619
        %v647 = vsub.f32 %v442, %v619
        %v648 = vsub.f32 %v443, %v619
        %v649 = vsub.f32 %v444, %v619
        %v650 = vsub.f32 %v445, %v619
        %v651 = vsub.f32 %v446, %v619
        %v652 = vsub.f32 %v447, %v619
        %v653 = vsub.f32 %v448, %v619
        %v654 = vsub.f32 %v449, %v619
        %v655 = vsub.f32 %v450, %v619
        %v656 = vsub.f32 %v451, %v619
        %v657 = vsub.f32 %v452, %v619
        %v658 = vsub.f32 %v453, %v619
        %v659 = vsub.f32 %v454, %v619
        %v660 = vsub.f32 %v455, %v619
        %v661 = vsub.f32 %v456, %v619
        %v662 = vsub.f32 %v457, %v619
        %v663 = vsub.f32 %v458, %v619
        %v664 = vsub.f32 %v459, %v619
        %v665 = vsub.f32 %v460, %v619
        %v666 = vsub.f32 %v461, %v619
        %v667 = vsub.f32 %v462, %v619
        %v668 = vsub.f32 %v463, %v619
        %v669 = vsub.f32 %v464, %v619
        %v670 = vsub.f32 %v465, %v619
        %v671 = vsub.f32 %v466, %v619
        %v672 = vsub.f32 %v467, %v619
        %v673 = vsub.f32 %v468, %v619
        %v674 = vsub.f32 %v469, %v619
        %v675 = vsub.f32 %v470, %v619
        %v676 = vsub.f32 %v471, %v619
        %v677 = vsub.f32 %v472, %v619
        %v678 = vsub.f32 %v473, %v619
        %v679 = vsub.f32 %v474, %v619
        %v680 = vsub.f32 %v475, %v619
        %v681 = vsub.f32 %v476, %v619
        %v682 = vsub.f32 %v477, %v619
        %v683 = vsub.f32 %v478, %v619
        %v684 = vmul.f32 %v620, %v620
        %v685 = vmul.f32 %v621, %v621
        %v686 = vmul.f32 %v622, %v622
        %v687 = vmul.f32 %v623, %v623
        %v688 = vmul.f32 %v624, %v624
        %v689 = vmul.f32 %v625, %v625
        %v690 = vmul.f32 %v626, %v626
        %v691 = vmul.f32 %v627, %v627
        %v692 = vmul.f32 %v628, %v628
        %v693 = vmul.f32 %v629, %v629
        %v694 = vmul.f32 %v630, %v630
        %v695 = vmul.f32 %v631, %v631
        %v696 = vmul.f32 %v632, %v632
        %v697 = vmul.f32 %v633, %v633
        %v698 = vmul.f32 %v634, %v634
        %v699 = vmul.f32 %v635, %v635
        %v700 = vmul.f32 %v636, %v636
        %v701 = vmul.f32 %v637, %v637
        %v702 = vmul.f32 %v638, %v638
        %v703 = vmul.f32 %v639, %v639
        %v704 = vmul.f32 %v640, %v640
        %v705 = vmul.f32 %v641, %v641
        %v706 = vmul.f32 %v642, %v642
        %v707 = vmul.f32 %v643, %v643
        %v708 = vmul.f32 %v644, %v644
        %v709 = vmul.f32 %v645, %v645
        %v710 = vmul.f32 %v646, %v646
        %v711 = vmul.f32 %v647, %v647
        %v712 = vmul.f32 %v648, %v648
        %v713 = vmul.f32 %v649, %v649
        %v714 = vmul.f32 %v650, %v650
        %v715 = vmul.f32 %v651, %v651
        %v716 = vmul.f32 %v652, %v652
        %v717 = vmul.f32 %v653, %v653
        %v718 = vmul.f32 %v654, %v654
        %v719 = vmul.f32 %v655, %v655
        %v720 = vmul.f32 %v656, %v656
        %v721 = vmul.f32 %v657, %v657
        %v722 = vmul.f32 %v658, %v658
        %v723 = vmul.f32 %v659, %v659
        %v724 = vmul.f32 %v660, %v660
        %v725 = vmul.f32 %v661, %v661
        %v726 = vmul.f32 %v662, %v662
        %v727 = vmul.f32 %v663, %v663
        %v728 = vmul.f32 %v664, %v664
        %v729 = vmul.f32 %v665, %v665
        %v730 = vmul.f32 %v666, %v666
        %v731 = vmul.f32 %v667, %v667
        %v732 = vmul.f32 %v668, %v668
        %v733 = vmul.f32 %v669, %v669
        %v734 = vmul.f32 %v670, %v670
        %v735 = vmul.f32 %v671, %v671
        %v736 = vmul.f32 %v672, %v672
        %v737 = vmul.f32 %v673, %v673
        %v738 = vmul.f32 %v674, %v674
        %v739 = vmul.f32 %v675, %v675
        %v740 = vmul.f32 %v676, %v676
        %v741 = vmul.f32 %v677, %v677
        %v742 = vmul.f32 %v678, %v678
        %v743 = vmul.f32 %v679, %v679
        %v744 = vmul.f32 %v680, %v680
        %v745 = vmul.f32 %v681, %v681
        %v746 = vmul.f32 %v682, %v682
        %v747 = vmul.f32 %v683, %v683
        %v748 = vsel %vm479, %v684, 0.0
        %v749 = vsel %vm479, %v685, 0.0
        %v750 = vadd.f32 %v748, %v749
        %v751 = vsel %vm479, %v686, 0.0
        %v752 = vadd.f32 %v750, %v751
        %v753 = vsel %vm479, %v687, 0.0
        %v754 = vadd.f32 %v752, %v753
        %v755 = vsel %vm479, %v688, 0.0
        %v756 = vadd.f32 %v754, %v755
        %v757 = vsel %vm479, %v689, 0.0
        %v758 = vadd.f32 %v756, %v757
        %v759 = vsel %vm479, %v690, 0.0
        %v760 = vadd.f32 %v758, %v759
        %v761 = vsel %vm479, %v691, 0.0
        %v762 = vadd.f32 %v760, %v761
        %v763 = vsel %vm479, %v692, 0.0
        %v764 = vadd.f32 %v762, %v763
        %v765 = vsel %vm479, %v693, 0.0
        %v766 = vadd.f32 %v764, %v765
        %v767 = vsel %vm479, %v694, 0.0
        %v768 = vadd.f32 %v766, %v767
        %v769 = vsel %vm479, %v695, 0.0
        %v770 = vadd.f32 %v768, %v769
        %v771 = vsel %vm479, %v696, 0.0
        %v772 = vadd.f32 %v770, %v771
        %v773 = vsel %vm479, %v697, 0.0
        %v774 = vadd.f32 %v772, %v773
        %v775 = vsel %vm479, %v698, 0.0
        %v776 = vadd.f32 %v774, %v775
        %v777 = vsel %vm479, %v699, 0.0
        %v778 = vadd.f32 %v776, %v777
        %v779 = vsel %vm479, %v700, 0.0
        %v780 = vadd.f32 %v778, %v779
        %v781 = vsel %vm479, %v701, 0.0
        %v782 = vadd.f32 %v780, %v781
        %v783 = vsel %vm479, %v702, 0.0
        %v784 = vadd.f32 %v782, %v783
        %v785 = vsel %vm479, %v703, 0.0
        %v786 = vadd.f32 %v784, %v785
        %v787 = vsel %vm479, %v704, 0.0
        %v788 = vadd.f32 %v786, %v787
        %v789 = vsel %vm479, %v705, 0.0
        %v790 = vadd.f32 %v788, %v789
        %v791 = vsel %vm479, %v706, 0.0
        %v792 = vadd.f32 %v790, %v791
        %v793 = vsel %vm479, %v707, 0.0
        %v794 = vadd.f32 %v792, %v793
        %v795 = vsel %vm479, %v708, 0.0
        %v796 = vadd.f32 %v794, %v795
        %v797 = vsel %vm479, %v709, 0.0
        %v798 = vadd.f32 %v796, %v797
        %v799 = vsel %vm479, %v710, 0.0
        %v800 = vadd.f32 %v798, %v799
        %v801 = vsel %vm479, %v711, 0.0
        %v802 = vadd.f32 %v800, %v801
        %v803 = vsel %vm479, %v712, 0.0
        %v804 = vadd.f32 %v802, %v803
        %v805 = vsel %vm479, %v713, 0.0
        %v806 = vadd.f32 %v804, %v805
        %v807 = vsel %vm479, %v714, 0.0
        %v808 = vadd.f32 %v806, %v807
        %v809 = vsel %vm479, %v715, 0.0
        %v810 = vadd.f32 %v808, %v809
        %v811 = vsel %vm479, %v716, 0.0
        %v812 = vadd.f32 %v810, %v811
        %v813 = vsel %vm479, %v717, 0.0
        %v814 = vadd.f32 %v812, %v813
        %v815 = vsel %vm479, %v718, 0.0
        %v816 = vadd.f32 %v814, %v815
        %v817 = vsel %vm479, %v719, 0.0
        %v818 = vadd.f32 %v816, %v817
        %v819 = vsel %vm479, %v720, 0.0
        %v820 = vadd.f32 %v818, %v819
        %v821 = vsel %vm479, %v721, 0.0
        %v822 = vadd.f32 %v820, %v821
        %v823 = vsel %vm479, %v722, 0.0
        %v824 = vadd.f32 %v822, %v823
        %v825 = vsel %vm479, %v723, 0.0
        %v826 = vadd.f32 %v824, %v825
        %v827 = vsel %vm479, %v724, 0.0
        %v828 = vadd.f32 %v826, %v827
        %v829 = vsel %vm479, %v725, 0.0
        %v830 = vadd.f32 %v828, %v829
        %v831 = vsel %vm479, %v726, 0.0
        %v832 = vadd.f32 %v830, %v831
        %v833 = vsel %vm479, %v727, 0.0
        %v834 = vadd.f32 %v832, %v833
        %v835 = vsel %vm479, %v728, 0.0
        %v836 = vadd.f32 %v834, %v835
        %v837 = vsel %vm479, %v729, 0.0
        %v838 = vadd.f32 %v836, %v837
        %v839 = vsel %vm479, %v730, 0.0
        %v840 = vadd.f32 %v838, %v839
        %v841 = vsel %vm479, %v731, 0.0
        %v842 = vadd.f32 %v840, %v841
        %v843 = vsel %vm479, %v732, 0.0
        %v844 = vadd.f32 %v842, %v843
        %v845 = vsel %vm479, %v733, 0.0
        %v846 = vadd.f32 %v844, %v845
        %v847 = vsel %vm479, %v734, 0.0
        %v848 = vadd.f32 %v846, %v847
        %v849 = vsel %vm479, %v735, 0.0
        %v850 = vadd.f32 %v848, %v849
        %v851 = vsel %vm479, %v736, 0.0
        %v852 = vadd.f32 %v850, %v851
        %v853 = vsel %vm479, %v737, 0.0
        %v854 = vadd.f32 %v852, %v853
        %v855 = vsel %vm479, %v738, 0.0
        %v856 = vadd.f32 %v854, %v855
        %v857 = vsel %vm479, %v739, 0.0
        %v858 = vadd.f32 %v856, %v857
        %v859 = vsel %vm479, %v740, 0.0
        %v860 = vadd.f32 %v858, %v859
        %v861 = vsel %vm479, %v741, 0.0
        %v862 = vadd.f32 %v860, %v861
        %v863 = vsel %vm479, %v742, 0.0
        %v864 = vadd.f32 %v862, %v863
        %v865 = vsel %vm479, %v743, 0.0
        %v866 = vadd.f32 %v864, %v865
        %v867 = vsel %vm479, %v744, 0.0
        %v868 = vadd.f32 %v866, %v867
        %v869 = vsel %vm479, %v745, 0.0
        %v870 = vadd.f32 %v868, %v869
        %v871 = vsel %vm479, %v746, 0.0
        %v872 = vadd.f32 %v870, %v871
        %v873 = vsel %vm479, %v747, 0.0
        %v874 = vadd.f32 %v872, %v873
        %875 = vadd.xlane.f32.xlu0 %v874
        %v876 = vpop.xlane.xlu0 %875
        %v877 = vrot.slane %v876, 4
        %v878 = vadd.f32 %v876, %v877
        %v879 = vrot.slane %v878, 2
        %v880 = vadd.f32 %v878, %v879
        %v881 = vrot.slane %v880, 1
        %v882 = vadd.f32 %v880, %v881
        %s883 = vtos %v882
        %v884 = vrcp.pop 4096.0
        %s885 = vtos %v884
        %s886 = smul.f32 %s883, %s885
        %s887 = sadd.f32 %s886, 1e-06
        %v888 = vstv %s887
        %v889 = vrsqrt.pop %v888
        %s890 = vtos %v889
        %v891 = vstv %s890
        %v892 = vmul.f32 %v620, %v891
        %v893 = vmul.f32 %v621, %v891
        %v894 = vmul.f32 %v622, %v891
        %v895 = vmul.f32 %v623, %v891
        %v896 = vmul.f32 %v624, %v891
        %v897 = vmul.f32 %v625, %v891
        %v898 = vmul.f32 %v626, %v891
        %v899 = vmul.f32 %v627, %v891
        %v900 = vmul.f32 %v628, %v891
        %v901 = vmul.f32 %v629, %v891
        %v902 = vmul.f32 %v630, %v891
        %v903 = vmul.f32 %v631, %v891
        %v904 = vmul.f32 %v632, %v891
        %v905 = vmul.f32 %v633, %v891
        %v906 = vmul.f32 %v634, %v891
        %v907 = vmul.f32 %v635, %v891
        %v908 = vmul.f32 %v636, %v891
        %v909 = vmul.f32 %v637, %v891
        %v910 = vmul.f32 %v638, %v891
        %v911 = vmul.f32 %v639, %v891
        %v912 = vmul.f32 %v640, %v891
        %v913 = vmul.f32 %v641, %v891
        %v914 = vmul.f32 %v642, %v891
        %v915 = vmul.f32 %v643, %v891
        %v916 = vmul.f32 %v644, %v891
        %v917 = vmul.f32 %v645, %v891
        %v918 = vmul.f32 %v646, %v891
        %v919 = vmul.f32 %v647, %v891
        %v920 = vmul.f32 %v648, %v891
        %v921 = vmul.f32 %v649, %v891
        %v922 = vmul.f32 %v650, %v891
        %v923 = vmul.f32 %v651, %v891
        %v924 = vmul.f32 %v652, %v891
        %v925 = vmul.f32 %v653, %v891
        %v926 = vmul.f32 %v654, %v891
        %v927 = vmul.f32 %v655, %v891
        %v928 = vmul.f32 %v656, %v891
        %v929 = vmul.f32 %v657, %v891
        %v930 = vmul.f32 %v658, %v891
        %v931 = vmul.f32 %v659, %v891
        %v932 = vmul.f32 %v660, %v891
        %v933 = vmul.f32 %v661, %v891
        %v934 = vmul.f32 %v662, %v891
        %v935 = vmul.f32 %v663, %v891
        %v936 = vmul.f32 %v664, %v891
        %v937 = vmul.f32 %v665, %v891
        %v938 = vmul.f32 %v666, %v891
        %v939 = vmul.f32 %v667, %v891
        %v940 = vmul.f32 %v668, %v891
        %v941 = vmul.f32 %v669, %v891
        %v942 = vmul.f32 %v670, %v891
        %v943 = vmul.f32 %v671, %v891
        %v944 = vmul.f32 %v672, %v891
        %v945 = vmul.f32 %v673, %v891
        %v946 = vmul.f32 %v674, %v891
        %v947 = vmul.f32 %v675, %v891
        %v948 = vmul.f32 %v676, %v891
        %v949 = vmul.f32 %v677, %v891
        %v950 = vmul.f32 %v678, %v891
        %v951 = vmul.f32 %v679, %v891
        %v952 = vmul.f32 %v680, %v891
        %v953 = vmul.f32 %v681, %v891
        %v954 = vmul.f32 %v682, %v891
        %v955 = vmul.f32 %v683, %v891
        %v956 = vld [vmem:[%s1] sm:$0x1]
        %v958 = vlaneseq
        %v959 = vshrl.u32 %v958, 7
        %v960 = vsub.s32 0, %v959
        %v961 = vrot.slane %v956, %v960
        %v963 = vmul.f32 %v892, %v961
        %v964 = vmul.f32 %v893, %v961
        %v965 = vmul.f32 %v894, %v961
        %v966 = vmul.f32 %v895, %v961
        %v967 = vmul.f32 %v896, %v961
        %v968 = vmul.f32 %v897, %v961
        %v969 = vmul.f32 %v898, %v961
        %v970 = vmul.f32 %v899, %v961
        %v971 = vmul.f32 %v900, %v961
        %v972 = vmul.f32 %v901, %v961
        %v973 = vmul.f32 %v902, %v961
        %v974 = vmul.f32 %v903, %v961
        %v975 = vmul.f32 %v904, %v961
        %v976 = vmul.f32 %v905, %v961
        %v977 = vmul.f32 %v906, %v961
        %v978 = vmul.f32 %v907, %v961
        %v979 = vmul.f32 %v908, %v961
        %v980 = vmul.f32 %v909, %v961
        %v981 = vmul.f32 %v910, %v961
        %v982 = vmul.f32 %v911, %v961
        %v983 = vmul.f32 %v912, %v961
        %v984 = vmul.f32 %v913, %v961
        %v985 = vmul.f32 %v914, %v961
        %v986 = vmul.f32 %v915, %v961
        %v987 = vmul.f32 %v916, %v961
        %v988 = vmul.f32 %v917, %v961
        %v989 = vmul.f32 %v918, %v961
        %v990 = vmul.f32 %v919, %v961
        %v991 = vmul.f32 %v920, %v961
        %v992 = vmul.f32 %v921, %v961
        %v993 = vmul.f32 %v922, %v961
        %v994 = vmul.f32 %v923, %v961
        %v995 = vmul.f32 %v924, %v961
        %v996 = vmul.f32 %v925, %v961
        %v997 = vmul.f32 %v926, %v961
        %v998 = vmul.f32 %v927, %v961
        %v999 = vmul.f32 %v928, %v961
        %v1000 = vmul.f32 %v929, %v961
        %v1001 = vmul.f32 %v930, %v961
        %v1002 = vmul.f32 %v931, %v961
        %v1003 = vmul.f32 %v932, %v961
        %v1004 = vmul.f32 %v933, %v961
        %v1005 = vmul.f32 %v934, %v961
        %v1006 = vmul.f32 %v935, %v961
        %v1007 = vmul.f32 %v936, %v961
        %v1008 = vmul.f32 %v937, %v961
        %v1009 = vmul.f32 %v938, %v961
        %v1010 = vmul.f32 %v939, %v961
        %v1011 = vmul.f32 %v940, %v961
        %v1012 = vmul.f32 %v941, %v961
        %v1013 = vmul.f32 %v942, %v961
        %v1014 = vmul.f32 %v943, %v961
        %v1015 = vmul.f32 %v944, %v961
        %v1016 = vmul.f32 %v945, %v961
        %v1017 = vmul.f32 %v946, %v961
        %v1018 = vmul.f32 %v947, %v961
        %v1019 = vmul.f32 %v948, %v961
        %v1020 = vmul.f32 %v949, %v961
        %v1021 = vmul.f32 %v950, %v961
        %v1022 = vmul.f32 %v951, %v961
        %v1023 = vmul.f32 %v952, %v961
        %v1024 = vmul.f32 %v953, %v961
        %v1025 = vmul.f32 %v954, %v961
        %v1026 = vmul.f32 %v955, %v961
        %v1027 = vld [vmem:[%s2] sm:$0x1]
        %v1029 = vlaneseq
        %v1030 = vshrl.u32 %v1029, 7
        %v1031 = vsub.s32 0, %v1030
        %v1032 = vrot.slane %v1027, %v1031
        %v1034 = vadd.f32 %v963, %v1032
        %v1035 = vadd.f32 %v964, %v1032
        %v1036 = vadd.f32 %v965, %v1032
        %v1037 = vadd.f32 %v966, %v1032
        %v1038 = vadd.f32 %v967, %v1032
        %v1039 = vadd.f32 %v968, %v1032
        %v1040 = vadd.f32 %v969, %v1032
        %v1041 = vadd.f32 %v970, %v1032
        %v1042 = vadd.f32 %v971, %v1032
        %v1043 = vadd.f32 %v972, %v1032
        %v1044 = vadd.f32 %v973, %v1032
        %v1045 = vadd.f32 %v974, %v1032
        %v1046 = vadd.f32 %v975, %v1032
        %v1047 = vadd.f32 %v976, %v1032
        %v1048 = vadd.f32 %v977, %v1032
        %v1049 = vadd.f32 %v978, %v1032
        %v1050 = vadd.f32 %v979, %v1032
        %v1051 = vadd.f32 %v980, %v1032
        %v1052 = vadd.f32 %v981, %v1032
        %v1053 = vadd.f32 %v982, %v1032
        %v1054 = vadd.f32 %v983, %v1032
        %v1055 = vadd.f32 %v984, %v1032
        %v1056 = vadd.f32 %v985, %v1032
        %v1057 = vadd.f32 %v986, %v1032
        %v1058 = vadd.f32 %v987, %v1032
        %v1059 = vadd.f32 %v988, %v1032
        %v1060 = vadd.f32 %v989, %v1032
        %v1061 = vadd.f32 %v990, %v1032
        %v1062 = vadd.f32 %v991, %v1032
        %v1063 = vadd.f32 %v992, %v1032
        %v1064 = vadd.f32 %v993, %v1032
        %v1065 = vadd.f32 %v994, %v1032
        %v1066 = vadd.f32 %v995, %v1032
        %v1067 = vadd.f32 %v996, %v1032
        %v1068 = vadd.f32 %v997, %v1032
        %v1069 = vadd.f32 %v998, %v1032
        %v1070 = vadd.f32 %v999, %v1032
        %v1071 = vadd.f32 %v1000, %v1032
        %v1072 = vadd.f32 %v1001, %v1032
        %v1073 = vadd.f32 %v1002, %v1032
        %v1074 = vadd.f32 %v1003, %v1032
        %v1075 = vadd.f32 %v1004, %v1032
        %v1076 = vadd.f32 %v1005, %v1032
        %v1077 = vadd.f32 %v1006, %v1032
        %v1078 = vadd.f32 %v1007, %v1032
        %v1079 = vadd.f32 %v1008, %v1032
        %v1080 = vadd.f32 %v1009, %v1032
        %v1081 = vadd.f32 %v1010, %v1032
        %v1082 = vadd.f32 %v1011, %v1032
        %v1083 = vadd.f32 %v1012, %v1032
        %v1084 = vadd.f32 %v1013, %v1032
        %v1085 = vadd.f32 %v1014, %v1032
        %v1086 = vadd.f32 %v1015, %v1032
        %v1087 = vadd.f32 %v1016, %v1032
        %v1088 = vadd.f32 %v1017, %v1032
        %v1089 = vadd.f32 %v1018, %v1032
        %v1090 = vadd.f32 %v1019, %v1032
        %v1091 = vadd.f32 %v1020, %v1032
        %v1092 = vadd.f32 %v1021, %v1032
        %v1093 = vadd.f32 %v1022, %v1032
        %v1094 = vadd.f32 %v1023, %v1032
        %v1095 = vadd.f32 %v1024, %v1032
        %v1096 = vadd.f32 %v1025, %v1032
        %v1097 = vadd.f32 %v1026, %v1032
        %v1098 = vpack.c.bf16 %v1035, %v1034
        %v1099 = vpack.c.bf16 %v1037, %v1036
        %v1100 = vpack.c.bf16 %v1039, %v1038
        %v1101 = vpack.c.bf16 %v1041, %v1040
        %v1102 = vpack.c.bf16 %v1043, %v1042
        %v1103 = vpack.c.bf16 %v1045, %v1044
        %v1104 = vpack.c.bf16 %v1047, %v1046
        %v1105 = vpack.c.bf16 %v1049, %v1048
        %v1106 = vpack.c.bf16 %v1051, %v1050
        %v1107 = vpack.c.bf16 %v1053, %v1052
        %v1108 = vpack.c.bf16 %v1055, %v1054
        %v1109 = vpack.c.bf16 %v1057, %v1056
        %v1110 = vpack.c.bf16 %v1059, %v1058
        %v1111 = vpack.c.bf16 %v1061, %v1060
        %v1112 = vpack.c.bf16 %v1063, %v1062
        %v1113 = vpack.c.bf16 %v1065, %v1064
        %v1114 = vpack.c.bf16 %v1067, %v1066
        %v1115 = vpack.c.bf16 %v1069, %v1068
        %v1116 = vpack.c.bf16 %v1071, %v1070
        %v1117 = vpack.c.bf16 %v1073, %v1072
        %v1118 = vpack.c.bf16 %v1075, %v1074
        %v1119 = vpack.c.bf16 %v1077, %v1076
        %v1120 = vpack.c.bf16 %v1079, %v1078
        %v1121 = vpack.c.bf16 %v1081, %v1080
        %v1122 = vpack.c.bf16 %v1083, %v1082
        %v1123 = vpack.c.bf16 %v1085, %v1084
        %v1124 = vpack.c.bf16 %v1087, %v1086
        %v1125 = vpack.c.bf16 %v1089, %v1088
        %v1126 = vpack.c.bf16 %v1091, %v1090
        %v1127 = vpack.c.bf16 %v1093, %v1092
        %v1128 = vpack.c.bf16 %v1095, %v1094
        %v1129 = vpack.c.bf16 %v1097, %v1096
        %1130 = vst.msk [vmem:[#allocation2] sm:$0xff] %vm479, %v1098
        %1131 = vst.msk [vmem:[#allocation2 + $0x8] sm:$0xff] %vm479, %v1099
        %1132 = vst.msk [vmem:[#allocation2 + $0x10] sm:$0xff] %vm479, %v1100
        %1133 = vst.msk [vmem:[#allocation2 + $0x18] sm:$0xff] %vm479, %v1101
        %1134 = vst.msk [vmem:[#allocation2 + $0x20] sm:$0xff] %vm479, %v1102
        %1135 = vst.msk [vmem:[#allocation2 + $0x28] sm:$0xff] %vm479, %v1103
        %1136 = vst.msk [vmem:[#allocation2 + $0x30] sm:$0xff] %vm479, %v1104
        %1137 = vst.msk [vmem:[#allocation2 + $0x38] sm:$0xff] %vm479, %v1105
        %1138 = vst.msk [vmem:[#allocation2 + $0x40] sm:$0xff] %vm479, %v1106
        %1139 = vst.msk [vmem:[#allocation2 + $0x48] sm:$0xff] %vm479, %v1107
        %1140 = vst.msk [vmem:[#allocation2 + $0x50] sm:$0xff] %vm479, %v1108
        %1141 = vst.msk [vmem:[#allocation2 + $0x58] sm:$0xff] %vm479, %v1109
        %1142 = vst.msk [vmem:[#allocation2 + $0x60] sm:$0xff] %vm479, %v1110
        %1143 = vst.msk [vmem:[#allocation2 + $0x68] sm:$0xff] %vm479, %v1111
        %1144 = vst.msk [vmem:[#allocation2 + $0x70] sm:$0xff] %vm479, %v1112
        %1145 = vst.msk [vmem:[#allocation2 + $0x78] sm:$0xff] %vm479, %v1113
        %1146 = vst.msk [vmem:[#allocation2 + $0x80] sm:$0xff] %vm479, %v1114
        %1147 = vst.msk [vmem:[#allocation2 + $0x88] sm:$0xff] %vm479, %v1115
        %1148 = vst.msk [vmem:[#allocation2 + $0x90] sm:$0xff] %vm479, %v1116
        %1149 = vst.msk [vmem:[#allocation2 + $0x98] sm:$0xff] %vm479, %v1117
        %1150 = vst.msk [vmem:[#allocation2 + $0xa0] sm:$0xff] %vm479, %v1118
        %1151 = vst.msk [vmem:[#allocation2 + $0xa8] sm:$0xff] %vm479, %v1119
        %1152 = vst.msk [vmem:[#allocation2 + $0xb0] sm:$0xff] %vm479, %v1120
        %1153 = vst.msk [vmem:[#allocation2 + $0xb8] sm:$0xff] %vm479, %v1121
        %1154 = vst.msk [vmem:[#allocation2 + $0xc0] sm:$0xff] %vm479, %v1122
        %1155 = vst.msk [vmem:[#allocation2 + $0xc8] sm:$0xff] %vm479, %v1123
        %1156 = vst.msk [vmem:[#allocation2 + $0xd0] sm:$0xff] %vm479, %v1124
        %1157 = vst.msk [vmem:[#allocation2 + $0xd8] sm:$0xff] %vm479, %v1125
        %1158 = vst.msk [vmem:[#allocation2 + $0xe0] sm:$0xff] %vm479, %v1126
        %1159 = vst.msk [vmem:[#allocation2 + $0xe8] sm:$0xff] %vm479, %v1127
        %1160 = vst.msk [vmem:[#allocation2 + $0xf0] sm:$0xff] %vm479, %v1128
        %1161 = vst.msk [vmem:[#allocation2 + $0xf8] sm:$0xff] %vm479, %v1129
        %v1162 = vld [vmem:[%s5] sm:$0xf]
        %v1163 = vld [vmem:[%s6] sm:$0x1]
        %v1165 = vlaneseq
        %v1166 = vshrl.u32 %v1165, 7
        %v1167 = vsub.s32 0, %v1166
        %v1168 = vrot.slane %v1163, %v1167
        %v1171 = vsel %vm479, %v1098, 0
        %v1174 = vsel %vm479, %v1099, 0
        %v1177 = vsel %vm479, %v1100, 0
        %v1180 = vsel %vm479, %v1101, 0
        %v1183 = vsel %vm479, %v1102, 0
        %v1186 = vsel %vm479, %v1103, 0
        %v1189 = vsel %vm479, %v1104, 0
        %v1192 = vsel %vm479, %v1105, 0
        %v1195 = vsel %vm479, %v1106, 0
        %v1198 = vsel %vm479, %v1107, 0
        %v1201 = vsel %vm479, %v1108, 0
        %v1204 = vsel %vm479, %v1109, 0
        %v1207 = vsel %vm479, %v1110, 0
        %v1210 = vsel %vm479, %v1111, 0
        %v1213 = vsel %vm479, %v1112, 0
        %v1216 = vsel %vm479, %v1113, 0
        %v1219 = vsel %vm479, %v1114, 0
        %v1222 = vsel %vm479, %v1115, 0
        %v1225 = vsel %vm479, %v1116, 0
        %v1228 = vsel %vm479, %v1117, 0
        %v1231 = vsel %vm479, %v1118, 0
        %v1234 = vsel %vm479, %v1119, 0
        %v1237 = vsel %vm479, %v1120, 0
        %v1240 = vsel %vm479, %v1121, 0
        %v1243 = vsel %vm479, %v1122, 0
        %v1246 = vsel %vm479, %v1123, 0
        %v1249 = vsel %vm479, %v1124, 0
        %v1252 = vsel %vm479, %v1125, 0
        %v1255 = vsel %vm479, %v1126, 0
        %v1258 = vsel %vm479, %v1127, 0
        %v1261 = vsel %vm479, %v1128, 0
        %v1264 = vsel %vm479, %v1129, 0
        %vm1266 = vcmask 1043456
        %v1268 = vsel %vm1266, %v1162, 0
        %1270 = vmatprep.subr.bf16.mxu0 0
        %1271 = vmatpush1.bf16.msra.mxu0 %v1268
        %1272 = vmatprep.subr.bf16.mxu0 0
        %1273 = vmatpush1.bf16.msra.mxu0 0
        %1274 = vmatprep.subr.bf16.mxu0 0
        %1275 = vmatpush1.bf16.msra.mxu0 0
        %1276 = vmatprep.subr.bf16.mxu0 0
        %1277 = vmatpush1.bf16.msra.mxu0 0
        %1278 = vmatprep.subr.bf16.mxu0 0
        %1279 = vmatpush1.bf16.msra.mxu0 0
        %1280 = vmatprep.subr.bf16.mxu0 0
        %1281 = vmatpush1.bf16.msra.mxu0 0
        %1282 = vmatprep.subr.bf16.mxu0 0
        %1283 = vmatpush1.bf16.msra.mxu0 0
        %1284 = vmatprep.subr.bf16.mxu0 0
        %1285 = vmatpush1.bf16.msra.mxu0 0
        %1286 = vmatprep.subr.bf16.mxu0 0
        %1287 = vmatpush1.bf16.msra.mxu0 0
        %1288 = vmatprep.subr.bf16.mxu0 0
        %1289 = vmatpush1.bf16.msra.mxu0 0
        %1290 = vmatprep.subr.bf16.mxu0 0
        %1291 = vmatpush1.bf16.msra.mxu0 0
        %1292 = vmatprep.subr.bf16.mxu0 0
        %1293 = vmatpush1.bf16.msra.mxu0 0
        %1294 = vmatprep.subr.bf16.mxu0 0
        %1295 = vmatpush1.bf16.msra.mxu0 0
        %1296 = vmatprep.subr.bf16.mxu0 0
        %1297 = vmatpush1.bf16.msra.mxu0 0
        %1298 = vmatprep.subr.bf16.mxu0 0
        %1299 = vmatpush1.bf16.msra.mxu0 0
        %1300 = vmatprep.subr.bf16.mxu0 0
        %1301 = vmatpush1.bf16.msra.mxu0 0
        %1302 = vmatprep.mubr.bf16.mxu0 0
        %1303 = vmatmul.mubr.bf16.gmra.mrb[0].mxu0 %v1171
        %v1304 = vpop.f32.mrb[0].mxu0
        %v1305 = vadd.f32 %v1168, %v1304
        %v1306 = vpop.f32.mrb[0].mxu0
        %v1307 = vpop.f32.mrb[0].mxu0
        %v1308 = vadd.f32 %v1168, %v1307
        %v1309 = vpop.f32.mrb[0].mxu0
        %1310 = vmatprep.mubr.bf16.mxu0 0
        %1311 = vmatmul.mubr.bf16.gmra.mrb[0].mxu0 %v1174
        %v1312 = vpop.f32.mrb[0].mxu0
        %v1313 = vadd.f32 %v1168, %v1312
        %v1314 = vpop.f32.mrb[0].mxu0
        %v1315 = vpop.f32.mrb[0].mxu0
        %v1316 = vadd.f32 %v1168, %v1315
        %v1317 = vpop.f32.mrb[0].mxu0
        %1318 = vmatprep.mubr.bf16.mxu0 0
        %1319 = vmatmul.mubr.bf16.gmra.mrb[0].mxu0 %v1177
        %v1320 = vpop.f32.mrb[0].mxu0
        %v1321 = vadd.f32 %v1168, %v1320
        %v1322 = vpop.f32.mrb[0].mxu0
        %v1323 = vpop.f32.mrb[0].mxu0
        %v1324 = vadd.f32 %v1168, %v1323
        %v1325 = vpop.f32.mrb[0].mxu0
        %1326 = vmatprep.mubr.bf16.mxu0 0
        %1327 = vmatmul.mubr.bf16.gmra.mrb[0].mxu0 %v1180
        %v1328 = vpop.f32.mrb[0].mxu0
        %v1329 = vadd.f32 %v1168, %v1328
        %v1330 = vpop.f32.mrb[0].mxu0
        %v1331 = vpop.f32.mrb[0].mxu0
        %v1332 = vadd.f32 %v1168, %v1331
        %v1333 = vpop.f32.mrb[0].mxu0
        %1334 = vmatprep.mubr.bf16.mxu0 0
        %1335 = vmatmul.mubr.bf16.gmra.mrb[0].mxu0 %v1183
        %v1336 = vpop.f32.mrb[0].mxu0
        %v1337 = vadd.f32 %v1168, %v1336
        %v1338 = vpop.f32.mrb[0].mxu0
        %v1339 = vpop.f32.mrb[0].mxu0
        %v1340 = vadd.f32 %v1168, %v1339
        %v1341 = vpop.f32.mrb[0].mxu0
        %1342 = vmatprep.mubr.bf16.mxu0 0
        %1343 = vmatmul.mubr.bf16.gmra.mrb[0].mxu0 %v1186
        %v1344 = vpop.f32.mrb[0].mxu0
        %v1345 = vadd.f32 %v1168, %v1344
        %v1346 = vpop.f32.mrb[0].mxu0
        %v1347 = vpop.f32.mrb[0].mxu0
        %v1348 = vadd.f32 %v1168, %v1347
        %v1349 = vpop.f32.mrb[0].mxu0
        %1350 = vmatprep.mubr.bf16.mxu0 0
        %1351 = vmatmul.mubr.bf16.gmra.mrb[0].mxu0 %v1189
        %v1352 = vpop.f32.mrb[0].mxu0
        %v1353 = vadd.f32 %v1168, %v1352
        %v1354 = vpop.f32.mrb[0].mxu0
        %v1355 = vpop.f32.mrb[0].mxu0
        %v1356 = vadd.f32 %v1168, %v1355
        %v1357 = vpop.f32.mrb[0].mxu0
        %1358 = vmatprep.mubr.bf16.mxu0 0
        %1359 = vmatmul.mubr.bf16.gmra.mrb[0].mxu0 %v1192
        %v1360 = vpop.f32.mrb[0].mxu0
        %v1361 = vadd.f32 %v1168, %v1360
        %v1362 = vpop.f32.mrb[0].mxu0
        %v1363 = vpop.f32.mrb[0].mxu0
        %v1364 = vadd.f32 %v1168, %v1363
        %v1365 = vpop.f32.mrb[0].mxu0
        %1366 = vmatprep.mubr.bf16.mxu0 0
        %1367 = vmatmul.mubr.bf16.gmra.mrb[0].mxu0 %v1195
        %v1368 = vpop.f32.mrb[0].mxu0
        %v1369 = vadd.f32 %v1168, %v1368
        %v1370 = vpop.f32.mrb[0].mxu0
        %v1371 = vpop.f32.mrb[0].mxu0
        %v1372 = vadd.f32 %v1168, %v1371
        %v1373 = vpop.f32.mrb[0].mxu0
        %1374 = vmatprep.mubr.bf16.mxu0 0
        %1375 = vmatmul.mubr.bf16.gmra.mrb[0].mxu0 %v1198
        %v1376 = vpop.f32.mrb[0].mxu0
        %v1377 = vadd.f32 %v1168, %v1376
        %v1378 = vpop.f32.mrb[0].mxu0
        %v1379 = vpop.f32.mrb[0].mxu0
        %v1380 = vadd.f32 %v1168, %v1379
        %v1381 = vpop.f32.mrb[0].mxu0
        %1382 = vmatprep.mubr.bf16.mxu0 0
        %1383 = vmatmul.mubr.bf16.gmra.mrb[0].mxu0 %v1201
        %v1384 = vpop.f32.mrb[0].mxu0
        %v1385 = vadd.f32 %v1168, %v1384
        %v1386 = vpop.f32.mrb[0].mxu0
        %v1387 = vpop.f32.mrb[0].mxu0
        %v1388 = vadd.f32 %v1168, %v1387
        %v1389 = vpop.f32.mrb[0].mxu0
        %1390 = vmatprep.mubr.bf16.mxu0 0
        %1391 = vmatmul.mubr.bf16.gmra.mrb[0].mxu0 %v1204
        %v1392 = vpop.f32.mrb[0].mxu0
        %v1393 = vadd.f32 %v1168, %v1392
        %v1394 = vpop.f32.mrb[0].mxu0
        %v1395 = vpop.f32.mrb[0].mxu0
        %v1396 = vadd.f32 %v1168, %v1395
        %v1397 = vpop.f32.mrb[0].mxu0
        %1398 = vmatprep.mubr.bf16.mxu0 0
        %1399 = vmatmul.mubr.bf16.gmra.mrb[0].mxu0 %v1207
        %v1400 = vpop.f32.mrb[0].mxu0
        %v1401 = vadd.f32 %v1168, %v1400
        %v1402 = vpop.f32.mrb[0].mxu0
        %v1403 = vpop.f32.mrb[0].mxu0
        %v1404 = vadd.f32 %v1168, %v1403
        %v1405 = vpop.f32.mrb[0].mxu0
        %1406 = vmatprep.mubr.bf16.mxu0 0
        %1407 = vmatmul.mubr.bf16.gmra.mrb[0].mxu0 %v1210
        %v1408 = vpop.f32.mrb[0].mxu0
        %v1409 = vadd.f32 %v1168, %v1408
        %v1410 = vpop.f32.mrb[0].mxu0
        %v1411 = vpop.f32.mrb[0].mxu0
        %v1412 = vadd.f32 %v1168, %v1411
        %v1413 = vpop.f32.mrb[0].mxu0
        %1414 = vmatprep.mubr.bf16.mxu0 0
        %1415 = vmatmul.mubr.bf16.gmra.mrb[0].mxu0 %v1213
        %v1416 = vpop.f32.mrb[0].mxu0
        %v1417 = vadd.f32 %v1168, %v1416
        %v1418 = vpop.f32.mrb[0].mxu0
        %v1419 = vpop.f32.mrb[0].mxu0
        %v1420 = vadd.f32 %v1168, %v1419
        %v1421 = vpop.f32.mrb[0].mxu0
        %1422 = vmatprep.mubr.bf16.mxu0 0
        %1423 = vmatmul.mubr.bf16.gmra.mrb[0].mxu0 %v1216
        %v1424 = vpop.f32.mrb[0].mxu0
        %v1425 = vadd.f32 %v1168, %v1424
        %v1426 = vpop.f32.mrb[0].mxu0
        %v1427 = vpop.f32.mrb[0].mxu0
        %v1428 = vadd.f32 %v1168, %v1427
        %v1429 = vpop.f32.mrb[0].mxu0
        %1430 = vmatprep.mubr.bf16.mxu0 0
        %1431 = vmatmul.mubr.bf16.gmra.mrb[0].mxu0 %v1219
        %v1432 = vpop.f32.mrb[0].mxu0
        %v1433 = vadd.f32 %v1168, %v1432
        %v1434 = vpop.f32.mrb[0].mxu0
        %v1435 = vpop.f32.mrb[0].mxu0
        %v1436 = vadd.f32 %v1168, %v1435
        %v1437 = vpop.f32.mrb[0].mxu0
        %1438 = vmatprep.mubr.bf16.mxu0 0
        %1439 = vmatmul.mubr.bf16.gmra.mrb[0].mxu0 %v1222
        %v1440 = vpop.f32.mrb[0].mxu0
        %v1441 = vadd.f32 %v1168, %v1440
        %v1442 = vpop.f32.mrb[0].mxu0
        %v1443 = vpop.f32.mrb[0].mxu0
        %v1444 = vadd.f32 %v1168, %v1443
        %v1445 = vpop.f32.mrb[0].mxu0
        %1446 = vmatprep.mubr.bf16.mxu0 0
        %1447 = vmatmul.mubr.bf16.gmra.mrb[0].mxu0 %v1225
        %v1448 = vpop.f32.mrb[0].mxu0
        %v1449 = vadd.f32 %v1168, %v1448
        %v1450 = vpop.f32.mrb[0].mxu0
        %v1451 = vpop.f32.mrb[0].mxu0
        %v1452 = vadd.f32 %v1168, %v1451
        %v1453 = vpop.f32.mrb[0].mxu0
        %1454 = vmatprep.mubr.bf16.mxu0 0
        %1455 = vmatmul.mubr.bf16.gmra.mrb[0].mxu0 %v1228
        %v1456 = vpop.f32.mrb[0].mxu0
        %v1457 = vadd.f32 %v1168, %v1456
        %v1458 = vpop.f32.mrb[0].mxu0
        %v1459 = vpop.f32.mrb[0].mxu0
        %v1460 = vadd.f32 %v1168, %v1459
        %v1461 = vpop.f32.mrb[0].mxu0
        %1462 = vmatprep.mubr.bf16.mxu0 0
        %1463 = vmatmul.mubr.bf16.gmra.mrb[0].mxu0 %v1231
        %v1464 = vpop.f32.mrb[0].mxu0
        %v1465 = vadd.f32 %v1168, %v1464
        %v1466 = vpop.f32.mrb[0].mxu0
        %v1467 = vpop.f32.mrb[0].mxu0
        %v1468 = vadd.f32 %v1168, %v1467
        %v1469 = vpop.f32.mrb[0].mxu0
        %1470 = vmatprep.mubr.bf16.mxu0 0
        %1471 = vmatmul.mubr.bf16.gmra.mrb[0].mxu0 %v1234
        %v1472 = vpop.f32.mrb[0].mxu0
        %v1473 = vadd.f32 %v1168, %v1472
        %v1474 = vpop.f32.mrb[0].mxu0
        %v1475 = vpop.f32.mrb[0].mxu0
        %v1476 = vadd.f32 %v1168, %v1475
        %v1477 = vpop.f32.mrb[0].mxu0
        %1478 = vmatprep.mubr.bf16.mxu0 0
        %1479 = vmatmul.mubr.bf16.gmra.mrb[0].mxu0 %v1237
        %v1480 = vpop.f32.mrb[0].mxu0
        %v1481 = vadd.f32 %v1168, %v1480
        %v1482 = vpop.f32.mrb[0].mxu0
        %v1483 = vpop.f32.mrb[0].mxu0
        %v1484 = vadd.f32 %v1168, %v1483
        %v1485 = vpop.f32.mrb[0].mxu0
        %1486 = vmatprep.mubr.bf16.mxu0 0
        %1487 = vmatmul.mubr.bf16.gmra.mrb[0].mxu0 %v1240
        %v1488 = vpop.f32.mrb[0].mxu0
        %v1489 = vadd.f32 %v1168, %v1488
        %v1490 = vpop.f32.mrb[0].mxu0
        %v1491 = vpop.f32.mrb[0].mxu0
        %v1492 = vadd.f32 %v1168, %v1491
        %v1493 = vpop.f32.mrb[0].mxu0
        %1494 = vmatprep.mubr.bf16.mxu0 0
        %1495 = vmatmul.mubr.bf16.gmra.mrb[0].mxu0 %v1243
        %v1496 = vpop.f32.mrb[0].mxu0
        %v1497 = vadd.f32 %v1168, %v1496
        %v1498 = vpop.f32.mrb[0].mxu0
        %v1499 = vpop.f32.mrb[0].mxu0
        %v1500 = vadd.f32 %v1168, %v1499
        %v1501 = vpop.f32.mrb[0].mxu0
        %1502 = vmatprep.mubr.bf16.mxu0 0
        %1503 = vmatmul.mubr.bf16.gmra.mrb[0].mxu0 %v1246
        %v1504 = vpop.f32.mrb[0].mxu0
        %v1505 = vadd.f32 %v1168, %v1504
        %v1506 = vpop.f32.mrb[0].mxu0
        %v1507 = vpop.f32.mrb[0].mxu0
        %v1508 = vadd.f32 %v1168, %v1507
        %v1509 = vpop.f32.mrb[0].mxu0
        %1510 = vmatprep.mubr.bf16.mxu0 0
        %1511 = vmatmul.mubr.bf16.gmra.mrb[0].mxu0 %v1249
        %v1512 = vpop.f32.mrb[0].mxu0
        %v1513 = vadd.f32 %v1168, %v1512
        %v1514 = vpop.f32.mrb[0].mxu0
        %v1515 = vpop.f32.mrb[0].mxu0
        %v1516 = vadd.f32 %v1168, %v1515
        %v1517 = vpop.f32.mrb[0].mxu0
        %1518 = vmatprep.mubr.bf16.mxu0 0
        %1519 = vmatmul.mubr.bf16.gmra.mrb[0].mxu0 %v1252
        %v1520 = vpop.f32.mrb[0].mxu0
        %v1521 = vadd.f32 %v1168, %v1520
        %v1522 = vpop.f32.mrb[0].mxu0
        %v1523 = vpop.f32.mrb[0].mxu0
        %v1524 = vadd.f32 %v1168, %v1523
        %v1525 = vpop.f32.mrb[0].mxu0
        %1526 = vmatprep.mubr.bf16.mxu0 0
        %1527 = vmatmul.mubr.bf16.gmra.mrb[0].mxu0 %v1255
        %v1528 = vpop.f32.mrb[0].mxu0
        %v1529 = vadd.f32 %v1168, %v1528
        %v1530 = vpop.f32.mrb[0].mxu0
        %v1531 = vpop.f32.mrb[0].mxu0
        %v1532 = vadd.f32 %v1168, %v1531
        %v1533 = vpop.f32.mrb[0].mxu0
        %1534 = vmatprep.mubr.bf16.mxu0 0
        %1535 = vmatmul.mubr.bf16.gmra.mrb[0].mxu0 %v1258
        %v1536 = vpop.f32.mrb[0].mxu0
        %v1537 = vadd.f32 %v1168, %v1536
        %v1538 = vpop.f32.mrb[0].mxu0
        %v1539 = vpop.f32.mrb[0].mxu0
        %v1540 = vadd.f32 %v1168, %v1539
        %v1541 = vpop.f32.mrb[0].mxu0
        %1542 = vmatprep.mubr.bf16.mxu0 0
        %1543 = vmatmul.mubr.bf16.gmra.mrb[0].mxu0 %v1261
        %v1544 = vpop.f32.mrb[0].mxu0
        %v1545 = vadd.f32 %v1168, %v1544
        %v1546 = vpop.f32.mrb[0].mxu0
        %v1547 = vpop.f32.mrb[0].mxu0
        %v1548 = vadd.f32 %v1168, %v1547
        %v1549 = vpop.f32.mrb[0].mxu0
        %1550 = vmatprep.mubr.bf16.mxu0 0
        %1551 = vmatmul.mubr.bf16.gmra.mrb[0].mxu0 %v1264
        %v1552 = vpop.f32.mrb[0].mxu0
        %v1553 = vadd.f32 %v1168, %v1552
        %v1554 = vpop.f32.mrb[0].mxu0
        %v1555 = vpop.f32.mrb[0].mxu0
        %v1556 = vadd.f32 %v1168, %v1555
        %v1557 = vpop.f32.mrb[0].mxu0
        %1558 = vdwg.mxu0
        %v1559 = vpack.c.bf16 %v1308, %v1305
        %v1560 = vpack.c.bf16 %v1316, %v1313
        %v1561 = vpack.c.bf16 %v1324, %v1321
        %v1562 = vpack.c.bf16 %v1332, %v1329
        %v1563 = vpack.c.bf16 %v1340, %v1337
        %v1564 = vpack.c.bf16 %v1348, %v1345
        %v1565 = vpack.c.bf16 %v1356, %v1353
        %v1566 = vpack.c.bf16 %v1364, %v1361
        %v1567 = vpack.c.bf16 %v1372, %v1369
        %v1568 = vpack.c.bf16 %v1380, %v1377
        %v1569 = vpack.c.bf16 %v1388, %v1385
        %v1570 = vpack.c.bf16 %v1396, %v1393
        %v1571 = vpack.c.bf16 %v1404, %v1401
        %v1572 = vpack.c.bf16 %v1412, %v1409
        %v1573 = vpack.c.bf16 %v1420, %v1417
        %v1574 = vpack.c.bf16 %v1428, %v1425
        %v1575 = vpack.c.bf16 %v1436, %v1433
        %v1576 = vpack.c.bf16 %v1444, %v1441
        %v1577 = vpack.c.bf16 %v1452, %v1449
        %v1578 = vpack.c.bf16 %v1460, %v1457
        %v1579 = vpack.c.bf16 %v1468, %v1465
        %v1580 = vpack.c.bf16 %v1476, %v1473
        %v1581 = vpack.c.bf16 %v1484, %v1481
        %v1582 = vpack.c.bf16 %v1492, %v1489
        %v1583 = vpack.c.bf16 %v1500, %v1497
        %v1584 = vpack.c.bf16 %v1508, %v1505
        %v1585 = vpack.c.bf16 %v1516, %v1513
        %v1586 = vpack.c.bf16 %v1524, %v1521
        %v1587 = vpack.c.bf16 %v1532, %v1529
        %v1588 = vpack.c.bf16 %v1540, %v1537
        %v1589 = vpack.c.bf16 %v1548, %v1545
        %v1590 = vpack.c.bf16 %v1556, %v1553
        %1591 = vst [vmem:[#allocation3] sm:$0xff] %v1559
        %1592 = vst [vmem:[#allocation3 + $0x8] sm:$0xff] %v1560
        %1593 = vst [vmem:[#allocation3 + $0x10] sm:$0xff] %v1561
        %1594 = vst [vmem:[#allocation3 + $0x18] sm:$0xff] %v1562
        %1595 = vst [vmem:[#allocation3 + $0x20] sm:$0xff] %v1563
        %1596 = vst [vmem:[#allocation3 + $0x28] sm:$0xff] %v1564
        %1597 = vst [vmem:[#allocation3 + $0x30] sm:$0xff] %v1565
        %1598 = vst [vmem:[#allocation3 + $0x38] sm:$0xff] %v1566
        %1599 = vst [vmem:[#allocation3 + $0x40] sm:$0xff] %v1567
        %1600 = vst [vmem:[#allocation3 + $0x48] sm:$0xff] %v1568
        %1601 = vst [vmem:[#allocation3 + $0x50] sm:$0xff] %v1569
        %1602 = vst [vmem:[#allocation3 + $0x58] sm:$0xff] %v1570
        %1603 = vst [vmem:[#allocation3 + $0x60] sm:$0xff] %v1571
        %1604 = vst [vmem:[#allocation3 + $0x68] sm:$0xff] %v1572
        %1605 = vst [vmem:[#allocation3 + $0x70] sm:$0xff] %v1573
        %1606 = vst [vmem:[#allocation3 + $0x78] sm:$0xff] %v1574
        %1607 = vst [vmem:[#allocation3 + $0x80] sm:$0xff] %v1575
        %1608 = vst [vmem:[#allocation3 + $0x88] sm:$0xff] %v1576
        %1609 = vst [vmem:[#allocation3 + $0x90] sm:$0xff] %v1577
        %1610 = vst [vmem:[#allocation3 + $0x98] sm:$0xff] %v1578
        %1611 = vst [vmem:[#allocation3 + $0xa0] sm:$0xff] %v1579
        %1612 = vst [vmem:[#allocation3 + $0xa8] sm:$0xff] %v1580
        %1613 = vst [vmem:[#allocation3 + $0xb0] sm:$0xff] %v1581
        %1614 = vst [vmem:[#allocation3 + $0xb8] sm:$0xff] %v1582
        %1615 = vst [vmem:[#allocation3 + $0xc0] sm:$0xff] %v1583
        %1616 = vst [vmem:[#allocation3 + $0xc8] sm:$0xff] %v1584
        %1617 = vst [vmem:[#allocation3 + $0xd0] sm:$0xff] %v1585
        %1618 = vst [vmem:[#allocation3 + $0xd8] sm:$0xff] %v1586
        %1619 = vst [vmem:[#allocation3 + $0xe0] sm:$0xff] %v1587
        %1620 = vst [vmem:[#allocation3 + $0xe8] sm:$0xff] %v1588
        %1621 = vst [vmem:[#allocation3 + $0xf0] sm:$0xff] %v1589
        %1622 = vst [vmem:[#allocation3 + $0xf8] sm:$0xff] %v1590
        %v1623 = vld [vmem:[%s7] sm:$0xf]
        %v1624 = vld [vmem:[%s8] sm:$0x1]
        %v1626 = vlaneseq
        %v1627 = vshrl.u32 %v1626, 7
        %v1628 = vsub.s32 0, %v1627
        %v1629 = vrot.slane %v1624, %v1628
        %v1632 = vsel %vm1266, %v1623, 0
        %1634 = vmatprep.subr.bf16.mxu0 0
        %1635 = vmatpush1.bf16.msra.mxu0 %v1632
        %1636 = vmatprep.subr.bf16.mxu0 0
        %1637 = vmatpush1.bf16.msra.mxu0 0
        %1638 = vmatprep.subr.bf16.mxu0 0
        %1639 = vmatpush1.bf16.msra.mxu0 0
        %1640 = vmatprep.subr.bf16.mxu0 0
        %1641 = vmatpush1.bf16.msra.mxu0 0
        %1642 = vmatprep.subr.bf16.mxu0 0
        %1643 = vmatpush1.bf16.msra.mxu0 0
        %1644 = vmatprep.subr.bf16.mxu0 0
        %1645 = vmatpush1.bf16.msra.mxu0 0
        %1646 = vmatprep.subr.bf16.mxu0 0
        %1647 = vmatpush1.bf16.msra.mxu0 0
        %1648 = vmatprep.subr.bf16.mxu0 0
        %1649 = vmatpush1.bf16.msra.mxu0 0
        %1650 = vmatprep.subr.bf16.mxu0 0
        %1651 = vmatpush1.bf16.msra.mxu0 0
        %1652 = vmatprep.subr.bf16.mxu0 0
        %1653 = vmatpush1.bf16.msra.mxu0 0
        %1654 = vmatprep.subr.bf16.mxu0 0
        %1655 = vmatpush1.bf16.msra.mxu0 0
        %1656 = vmatprep.subr.bf16.mxu0 0
        %1657 = vmatpush1.bf16.msra.mxu0 0
        %1658 = vmatprep.subr.bf16.mxu0 0
        %1659 = vmatpush1.bf16.msra.mxu0 0
        %1660 = vmatprep.subr.bf16.mxu0 0
        %1661 = vmatpush1.bf16.msra.mxu0 0
        %1662 = vmatprep.subr.bf16.mxu0 0
        %1663 = vmatpush1.bf16.msra.mxu0 0
        %1664 = vmatprep.subr.bf16.mxu0 0
        %1665 = vmatpush1.bf16.msra.mxu0 0
        %1666 = vmatprep.mubr.bf16.mxu0 0
        %1667 = vmatmul.mubr.bf16.gmra.mrb[0].mxu0 %v1171
        %v1668 = vpop.f32.mrb[0].mxu0
        %v1669 = vadd.f32 %v1629, %v1668
        %v1670 = vpop.f32.mrb[0].mxu0
        %v1671 = vpop.f32.mrb[0].mxu0
        %v1672 = vadd.f32 %v1629, %v1671
        %v1673 = vpop.f32.mrb[0].mxu0
        %1674 = vmatprep.mubr.bf16.mxu0 0
        %1675 = vmatmul.mubr.bf16.gmra.mrb[0].mxu0 %v1174
        %v1676 = vpop.f32.mrb[0].mxu0
        %v1677 = vadd.f32 %v1629, %v1676
        %v1678 = vpop.f32.mrb[0].mxu0
        %v1679 = vpop.f32.mrb[0].mxu0
        %v1680 = vadd.f32 %v1629, %v1679
        %v1681 = vpop.f32.mrb[0].mxu0
        %1682 = vmatprep.mubr.bf16.mxu0 0
        %1683 = vmatmul.mubr.bf16.gmra.mrb[0].mxu0 %v1177
        %v1684 = vpop.f32.mrb[0].mxu0
        %v1685 = vadd.f32 %v1629, %v1684
        %v1686 = vpop.f32.mrb[0].mxu0
        %v1687 = vpop.f32.mrb[0].mxu0
        %v1688 = vadd.f32 %v1629, %v1687
        %v1689 = vpop.f32.mrb[0].mxu0
        %1690 = vmatprep.mubr.bf16.mxu0 0
        %1691 = vmatmul.mubr.bf16.gmra.mrb[0].mxu0 %v1180
        %v1692 = vpop.f32.mrb[0].mxu0
        %v1693 = vadd.f32 %v1629, %v1692
        %v1694 = vpop.f32.mrb[0].mxu0
        %v1695 = vpop.f32.mrb[0].mxu0
        %v1696 = vadd.f32 %v1629, %v1695
        %v1697 = vpop.f32.mrb[0].mxu0
        %1698 = vmatprep.mubr.bf16.mxu0 0
        %1699 = vmatmul.mubr.bf16.gmra.mrb[0].mxu0 %v1183
        %v1700 = vpop.f32.mrb[0].mxu0
        %v1701 = vadd.f32 %v1629, %v1700
        %v1702 = vpop.f32.mrb[0].mxu0
        %v1703 = vpop.f32.mrb[0].mxu0
        %v1704 = vadd.f32 %v1629, %v1703
        %v1705 = vpop.f32.mrb[0].mxu0
        %1706 = vmatprep.mubr.bf16.mxu0 0
        %1707 = vmatmul.mubr.bf16.gmra.mrb[0].mxu0 %v1186
        %v1708 = vpop.f32.mrb[0].mxu0
        %v1709 = vadd.f32 %v1629, %v1708
        %v1710 = vpop.f32.mrb[0].mxu0
        %v1711 = vpop.f32.mrb[0].mxu0
        %v1712 = vadd.f32 %v1629, %v1711
        %v1713 = vpop.f32.mrb[0].mxu0
        %1714 = vmatprep.mubr.bf16.mxu0 0
        %1715 = vmatmul.mubr.bf16.gmra.mrb[0].mxu0 %v1189
        %v1716 = vpop.f32.mrb[0].mxu0
        %v1717 = vadd.f32 %v1629, %v1716
        %v1718 = vpop.f32.mrb[0].mxu0
        %v1719 = vpop.f32.mrb[0].mxu0
        %v1720 = vadd.f32 %v1629, %v1719
        %v1721 = vpop.f32.mrb[0].mxu0
        %1722 = vmatprep.mubr.bf16.mxu0 0
        %1723 = vmatmul.mubr.bf16.gmra.mrb[0].mxu0 %v1192
        %v1724 = vpop.f32.mrb[0].mxu0
        %v1725 = vadd.f32 %v1629, %v1724
        %v1726 = vpop.f32.mrb[0].mxu0
        %v1727 = vpop.f32.mrb[0].mxu0
        %v1728 = vadd.f32 %v1629, %v1727
        %v1729 = vpop.f32.mrb[0].mxu0
        %1730 = vmatprep.mubr.bf16.mxu0 0
        %1731 = vmatmul.mubr.bf16.gmra.mrb[0].mxu0 %v1195
        %v1732 = vpop.f32.mrb[0].mxu0
        %v1733 = vadd.f32 %v1629, %v1732
        %v1734 = vpop.f32.mrb[0].mxu0
        %v1735 = vpop.f32.mrb[0].mxu0
        %v1736 = vadd.f32 %v1629, %v1735
        %v1737 = vpop.f32.mrb[0].mxu0
        %1738 = vmatprep.mubr.bf16.mxu0 0
        %1739 = vmatmul.mubr.bf16.gmra.mrb[0].mxu0 %v1198
        %v1740 = vpop.f32.mrb[0].mxu0
        %v1741 = vadd.f32 %v1629, %v1740
        %v1742 = vpop.f32.mrb[0].mxu0
        %v1743 = vpop.f32.mrb[0].mxu0
        %v1744 = vadd.f32 %v1629, %v1743
        %v1745 = vpop.f32.mrb[0].mxu0
        %1746 = vmatprep.mubr.bf16.mxu0 0
        %1747 = vmatmul.mubr.bf16.gmra.mrb[0].mxu0 %v1201
        %v1748 = vpop.f32.mrb[0].mxu0
        %v1749 = vadd.f32 %v1629, %v1748
        %v1750 = vpop.f32.mrb[0].mxu0
        %v1751 = vpop.f32.mrb[0].mxu0
        %v1752 = vadd.f32 %v1629, %v1751
        %v1753 = vpop.f32.mrb[0].mxu0
        %1754 = vmatprep.mubr.bf16.mxu0 0
        %1755 = vmatmul.mubr.bf16.gmra.mrb[0].mxu0 %v1204
        %v1756 = vpop.f32.mrb[0].mxu0
        %v1757 = vadd.f32 %v1629, %v1756
        %v1758 = vpop.f32.mrb[0].mxu0
        %v1759 = vpop.f32.mrb[0].mxu0
        %v1760 = vadd.f32 %v1629, %v1759
        %v1761 = vpop.f32.mrb[0].mxu0
        %1762 = vmatprep.mubr.bf16.mxu0 0
        %1763 = vmatmul.mubr.bf16.gmra.mrb[0].mxu0 %v1207
        %v1764 = vpop.f32.mrb[0].mxu0
        %v1765 = vadd.f32 %v1629, %v1764
        %v1766 = vpop.f32.mrb[0].mxu0
        %v1767 = vpop.f32.mrb[0].mxu0
        %v1768 = vadd.f32 %v1629, %v1767
        %v1769 = vpop.f32.mrb[0].mxu0
        %1770 = vmatprep.mubr.bf16.mxu0 0
        %1771 = vmatmul.mubr.bf16.gmra.mrb[0].mxu0 %v1210
        %v1772 = vpop.f32.mrb[0].mxu0
        %v1773 = vadd.f32 %v1629, %v1772
        %v1774 = vpop.f32.mrb[0].mxu0
        %v1775 = vpop.f32.mrb[0].mxu0
        %v1776 = vadd.f32 %v1629, %v1775
        %v1777 = vpop.f32.mrb[0].mxu0
        %1778 = vmatprep.mubr.bf16.mxu0 0
        %1779 = vmatmul.mubr.bf16.gmra.mrb[0].mxu0 %v1213
        %v1780 = vpop.f32.mrb[0].mxu0
        %v1781 = vadd.f32 %v1629, %v1780
        %v1782 = vpop.f32.mrb[0].mxu0
        %v1783 = vpop.f32.mrb[0].mxu0
        %v1784 = vadd.f32 %v1629, %v1783
        %v1785 = vpop.f32.mrb[0].mxu0
        %1786 = vmatprep.mubr.bf16.mxu0 0
        %1787 = vmatmul.mubr.bf16.gmra.mrb[0].mxu0 %v1216
        %v1788 = vpop.f32.mrb[0].mxu0
        %v1789 = vadd.f32 %v1629, %v1788
        %v1790 = vpop.f32.mrb[0].mxu0
        %v1791 = vpop.f32.mrb[0].mxu0
        %v1792 = vadd.f32 %v1629, %v1791
        %v1793 = vpop.f32.mrb[0].mxu0
        %1794 = vmatprep.mubr.bf16.mxu0 0
        %1795 = vmatmul.mubr.bf16.gmra.mrb[0].mxu0 %v1219
        %v1796 = vpop.f32.mrb[0].mxu0
        %v1797 = vadd.f32 %v1629, %v1796
        %v1798 = vpop.f32.mrb[0].mxu0
        %v1799 = vpop.f32.mrb[0].mxu0
        %v1800 = vadd.f32 %v1629, %v1799
        %v1801 = vpop.f32.mrb[0].mxu0
        %1802 = vmatprep.mubr.bf16.mxu0 0
        %1803 = vmatmul.mubr.bf16.gmra.mrb[0].mxu0 %v1222
        %v1804 = vpop.f32.mrb[0].mxu0
        %v1805 = vadd.f32 %v1629, %v1804
        %v1806 = vpop.f32.mrb[0].mxu0
        %v1807 = vpop.f32.mrb[0].mxu0
        %v1808 = vadd.f32 %v1629, %v1807
        %v1809 = vpop.f32.mrb[0].mxu0
        %1810 = vmatprep.mubr.bf16.mxu0 0
        %1811 = vmatmul.mubr.bf16.gmra.mrb[0].mxu0 %v1225
        %v1812 = vpop.f32.mrb[0].mxu0
        %v1813 = vadd.f32 %v1629, %v1812
        %v1814 = vpop.f32.mrb[0].mxu0
        %v1815 = vpop.f32.mrb[0].mxu0
        %v1816 = vadd.f32 %v1629, %v1815
        %v1817 = vpop.f32.mrb[0].mxu0
        %1818 = vmatprep.mubr.bf16.mxu0 0
        %1819 = vmatmul.mubr.bf16.gmra.mrb[0].mxu0 %v1228
        %v1820 = vpop.f32.mrb[0].mxu0
        %v1821 = vadd.f32 %v1629, %v1820
        %v1822 = vpop.f32.mrb[0].mxu0
        %v1823 = vpop.f32.mrb[0].mxu0
        %v1824 = vadd.f32 %v1629, %v1823
        %v1825 = vpop.f32.mrb[0].mxu0
        %1826 = vmatprep.mubr.bf16.mxu0 0
        %1827 = vmatmul.mubr.bf16.gmra.mrb[0].mxu0 %v1231
        %v1828 = vpop.f32.mrb[0].mxu0
        %v1829 = vadd.f32 %v1629, %v1828
        %v1830 = vpop.f32.mrb[0].mxu0
        %v1831 = vpop.f32.mrb[0].mxu0
        %v1832 = vadd.f32 %v1629, %v1831
        %v1833 = vpop.f32.mrb[0].mxu0
        %1834 = vmatprep.mubr.bf16.mxu0 0
        %1835 = vmatmul.mubr.bf16.gmra.mrb[0].mxu0 %v1234
        %v1836 = vpop.f32.mrb[0].mxu0
        %v1837 = vadd.f32 %v1629, %v1836
        %v1838 = vpop.f32.mrb[0].mxu0
        %v1839 = vpop.f32.mrb[0].mxu0
        %v1840 = vadd.f32 %v1629, %v1839
        %v1841 = vpop.f32.mrb[0].mxu0
        %1842 = vmatprep.mubr.bf16.mxu0 0
        %1843 = vmatmul.mubr.bf16.gmra.mrb[0].mxu0 %v1237
        %v1844 = vpop.f32.mrb[0].mxu0
        %v1845 = vadd.f32 %v1629, %v1844
        %v1846 = vpop.f32.mrb[0].mxu0
        %v1847 = vpop.f32.mrb[0].mxu0
        %v1848 = vadd.f32 %v1629, %v1847
        %v1849 = vpop.f32.mrb[0].mxu0
        %1850 = vmatprep.mubr.bf16.mxu0 0
        %1851 = vmatmul.mubr.bf16.gmra.mrb[0].mxu0 %v1240
        %v1852 = vpop.f32.mrb[0].mxu0
        %v1853 = vadd.f32 %v1629, %v1852
        %v1854 = vpop.f32.mrb[0].mxu0
        %v1855 = vpop.f32.mrb[0].mxu0
        %v1856 = vadd.f32 %v1629, %v1855
        %v1857 = vpop.f32.mrb[0].mxu0
        %1858 = vmatprep.mubr.bf16.mxu0 0
        %1859 = vmatmul.mubr.bf16.gmra.mrb[0].mxu0 %v1243
        %v1860 = vpop.f32.mrb[0].mxu0
        %v1861 = vadd.f32 %v1629, %v1860
        %v1862 = vpop.f32.mrb[0].mxu0
        %v1863 = vpop.f32.mrb[0].mxu0
        %v1864 = vadd.f32 %v1629, %v1863
        %v1865 = vpop.f32.mrb[0].mxu0
        %1866 = vmatprep.mubr.bf16.mxu0 0
        %1867 = vmatmul.mubr.bf16.gmra.mrb[0].mxu0 %v1246
        %v1868 = vpop.f32.mrb[0].mxu0
        %v1869 = vadd.f32 %v1629, %v1868
        %v1870 = vpop.f32.mrb[0].mxu0
        %v1871 = vpop.f32.mrb[0].mxu0
        %v1872 = vadd.f32 %v1629, %v1871
        %v1873 = vpop.f32.mrb[0].mxu0
        %1874 = vmatprep.mubr.bf16.mxu0 0
        %1875 = vmatmul.mubr.bf16.gmra.mrb[0].mxu0 %v1249
        %v1876 = vpop.f32.mrb[0].mxu0
        %v1877 = vadd.f32 %v1629, %v1876
        %v1878 = vpop.f32.mrb[0].mxu0
        %v1879 = vpop.f32.mrb[0].mxu0
        %v1880 = vadd.f32 %v1629, %v1879
        %v1881 = vpop.f32.mrb[0].mxu0
        %1882 = vmatprep.mubr.bf16.mxu0 0
        %1883 = vmatmul.mubr.bf16.gmra.mrb[0].mxu0 %v1252
        %v1884 = vpop.f32.mrb[0].mxu0
        %v1885 = vadd.f32 %v1629, %v1884
        %v1886 = vpop.f32.mrb[0].mxu0
        %v1887 = vpop.f32.mrb[0].mxu0
        %v1888 = vadd.f32 %v1629, %v1887
        %v1889 = vpop.f32.mrb[0].mxu0
        %1890 = vmatprep.mubr.bf16.mxu0 0
        %1891 = vmatmul.mubr.bf16.gmra.mrb[0].mxu0 %v1255
        %v1892 = vpop.f32.mrb[0].mxu0
        %v1893 = vadd.f32 %v1629, %v1892
        %v1894 = vpop.f32.mrb[0].mxu0
        %v1895 = vpop.f32.mrb[0].mxu0
        %v1896 = vadd.f32 %v1629, %v1895
        %v1897 = vpop.f32.mrb[0].mxu0
        %1898 = vmatprep.mubr.bf16.mxu0 0
        %1899 = vmatmul.mubr.bf16.gmra.mrb[0].mxu0 %v1258
        %v1900 = vpop.f32.mrb[0].mxu0
        %v1901 = vadd.f32 %v1629, %v1900
        %v1902 = vpop.f32.mrb[0].mxu0
        %v1903 = vpop.f32.mrb[0].mxu0
        %v1904 = vadd.f32 %v1629, %v1903
        %v1905 = vpop.f32.mrb[0].mxu0
        %1906 = vmatprep.mubr.bf16.mxu0 0
        %1907 = vmatmul.mubr.bf16.gmra.mrb[0].mxu0 %v1261
        %v1908 = vpop.f32.mrb[0].mxu0
        %v1909 = vadd.f32 %v1629, %v1908
        %v1910 = vpop.f32.mrb[0].mxu0
        %v1911 = vpop.f32.mrb[0].mxu0
        %v1912 = vadd.f32 %v1629, %v1911
        %v1913 = vpop.f32.mrb[0].mxu0
        %1914 = vmatprep.mubr.bf16.mxu0 0
        %1915 = vmatmul.mubr.bf16.gmra.mrb[0].mxu0 %v1264
        %v1916 = vpop.f32.mrb[0].mxu0
        %v1917 = vadd.f32 %v1629, %v1916
        %v1918 = vpop.f32.mrb[0].mxu0
        %v1919 = vpop.f32.mrb[0].mxu0
        %v1920 = vadd.f32 %v1629, %v1919
        %v1921 = vpop.f32.mrb[0].mxu0
        %1922 = vdwg.mxu0
        %v1923 = vpack.c.bf16 %v1672, %v1669
        %v1924 = vpack.c.bf16 %v1680, %v1677
        %v1925 = vpack.c.bf16 %v1688, %v1685
        %v1926 = vpack.c.bf16 %v1696, %v1693
        %v1927 = vpack.c.bf16 %v1704, %v1701
        %v1928 = vpack.c.bf16 %v1712, %v1709
        %v1929 = vpack.c.bf16 %v1720, %v1717
        %v1930 = vpack.c.bf16 %v1728, %v1725
        %v1931 = vpack.c.bf16 %v1736, %v1733
        %v1932 = vpack.c.bf16 %v1744, %v1741
        %v1933 = vpack.c.bf16 %v1752, %v1749
        %v1934 = vpack.c.bf16 %v1760, %v1757
        %v1935 = vpack.c.bf16 %v1768, %v1765
        %v1936 = vpack.c.bf16 %v1776, %v1773
        %v1937 = vpack.c.bf16 %v1784, %v1781
        %v1938 = vpack.c.bf16 %v1792, %v1789
        %v1939 = vpack.c.bf16 %v1800, %v1797
        %v1940 = vpack.c.bf16 %v1808, %v1805
        %v1941 = vpack.c.bf16 %v1816, %v1813
        %v1942 = vpack.c.bf16 %v1824, %v1821
        %v1943 = vpack.c.bf16 %v1832, %v1829
        %v1944 = vpack.c.bf16 %v1840, %v1837
        %v1945 = vpack.c.bf16 %v1848, %v1845
        %v1946 = vpack.c.bf16 %v1856, %v1853
        %v1947 = vpack.c.bf16 %v1864, %v1861
        %v1948 = vpack.c.bf16 %v1872, %v1869
        %v1949 = vpack.c.bf16 %v1880, %v1877
        %v1950 = vpack.c.bf16 %v1888, %v1885
        %v1951 = vpack.c.bf16 %v1896, %v1893
        %v1952 = vpack.c.bf16 %v1904, %v1901
        %v1953 = vpack.c.bf16 %v1912, %v1909
        %v1954 = vpack.c.bf16 %v1920, %v1917
        %1955 = vst [vmem:[#allocation4] sm:$0xff] %v1923
        %1956 = vst [vmem:[#allocation4 + $0x8] sm:$0xff] %v1924
        %1957 = vst [vmem:[#allocation4 + $0x10] sm:$0xff] %v1925
        %1958 = vst [vmem:[#allocation4 + $0x18] sm:$0xff] %v1926
        %1959 = vst [vmem:[#allocation4 + $0x20] sm:$0xff] %v1927
        %1960 = vst [vmem:[#allocation4 + $0x28] sm:$0xff] %v1928
        %1961 = vst [vmem:[#allocation4 + $0x30] sm:$0xff] %v1929
        %1962 = vst [vmem:[#allocation4 + $0x38] sm:$0xff] %v1930
        %1963 = vst [vmem:[#allocation4 + $0x40] sm:$0xff] %v1931
        %1964 = vst [vmem:[#allocation4 + $0x48] sm:$0xff] %v1932
        %1965 = vst [vmem:[#allocation4 + $0x50] sm:$0xff] %v1933
        %1966 = vst [vmem:[#allocation4 + $0x58] sm:$0xff] %v1934
        %1967 = vst [vmem:[#allocation4 + $0x60] sm:$0xff] %v1935
        %1968 = vst [vmem:[#allocation4 + $0x68] sm:$0xff] %v1936
        %1969 = vst [vmem:[#allocation4 + $0x70] sm:$0xff] %v1937
        %1970 = vst [vmem:[#allocation4 + $0x78] sm:$0xff] %v1938
        %1971 = vst [vmem:[#allocation4 + $0x80] sm:$0xff] %v1939
        %1972 = vst [vmem:[#allocation4 + $0x88] sm:$0xff] %v1940
        %1973 = vst [vmem:[#allocation4 + $0x90] sm:$0xff] %v1941
        %1974 = vst [vmem:[#allocation4 + $0x98] sm:$0xff] %v1942
        %1975 = vst [vmem:[#allocation4 + $0xa0] sm:$0xff] %v1943
        %1976 = vst [vmem:[#allocation4 + $0xa8] sm:$0xff] %v1944
        %1977 = vst [vmem:[#allocation4 + $0xb0] sm:$0xff] %v1945
        %1978 = vst [vmem:[#allocation4 + $0xb8] sm:$0xff] %v1946
        %1979 = vst [vmem:[#allocation4 + $0xc0] sm:$0xff] %v1947
        %1980 = vst [vmem:[#allocation4 + $0xc8] sm:$0xff] %v1948
        %1981 = vst [vmem:[#allocation4 + $0xd0] sm:$0xff] %v1949
        %1982 = vst [vmem:[#allocation4 + $0xd8] sm:$0xff] %v1950
        %1983 = vst [vmem:[#allocation4 + $0xe0] sm:$0xff] %v1951
        %1984 = vst [vmem:[#allocation4 + $0xe8] sm:$0xff] %v1952
        %1985 = vst [vmem:[#allocation4 + $0xf0] sm:$0xff] %v1953
        %1986 = vst [vmem:[#allocation4 + $0xf8] sm:$0xff] %v1954
      $region68: #{tpu_custom_call.1} parent=63 // pred_fallthru
        _
      %s1987 = smul.u32 %s27, 256
      %s1988 = sshra.s32 %s1987, 4
      %s1989 = sand.u32 %s1987, 15
      %s1990 = smul.addr %s1988, 8
      %s1991 = scalar_lea.vmem [#allocation2], %s1990
      %v1992 = vld [vmem:[%s1991] sm:$0xff]
      %v1993 = vld [vmem:[%s1991 + $0x8] sm:$0xff]
      %v1994 = vld [vmem:[%s1991 + $0x10] sm:$0xff]
      %v1995 = vld [vmem:[%s1991 + $0x18] sm:$0xff]
      %v1996 = vld [vmem:[%s1991 + $0x20] sm:$0xff]
      %v1997 = vld [vmem:[%s1991 + $0x28] sm:$0xff]
      %v1998 = vld [vmem:[%s1991 + $0x30] sm:$0xff]
      %v1999 = vld [vmem:[%s1991 + $0x38] sm:$0xff]
      %v2000 = vld [vmem:[%s1991 + $0x40] sm:$0xff]
      %v2001 = vld [vmem:[%s1991 + $0x48] sm:$0xff]
      %v2002 = vld [vmem:[%s1991 + $0x50] sm:$0xff]
      %v2003 = vld [vmem:[%s1991 + $0x58] sm:$0xff]
      %v2004 = vld [vmem:[%s1991 + $0x60] sm:$0xff]
      %v2005 = vld [vmem:[%s1991 + $0x68] sm:$0xff]
      %v2006 = vld [vmem:[%s1991 + $0x70] sm:$0xff]
      %v2007 = vld [vmem:[%s1991 + $0x78] sm:$0xff]
      %v2008 = vld [vmem:[%s3] sm:$0xf]
      %v2009 = vld [vmem:[%s4] sm:$0x1]
      %v2011 = vlaneseq
      %v2012 = vshrl.u32 %v2011, 7
      %v2013 = vsub.s32 0, %v2012
      %v2014 = vrot.slane %v2009, %v2013
      %vm2016 = vcmask 64512
      %v2018 = vsel %vm2016, %v1992, 0
      %v2021 = vsel %vm2016, %v1993, 0
      %v2024 = vsel %vm2016, %v1994, 0
      %v2027 = vsel %vm2016, %v1995, 0
      %v2030 = vsel %vm2016, %v1996, 0
      %v2033 = vsel %vm2016, %v1997, 0
      %v2036 = vsel %vm2016, %v1998, 0
      %v2039 = vsel %vm2016, %v1999, 0
      %v2042 = vsel %vm2016, %v2000, 0
      %v2045 = vsel %vm2016, %v2001, 0
      %v2048 = vsel %vm2016, %v2002, 0
      %v2051 = vsel %vm2016, %v2003, 0
      %v2054 = vsel %vm2016, %v2004, 0
      %v2057 = vsel %vm2016, %v2005, 0
      %v2060 = vsel %vm2016, %v2006, 0
      %v2063 = vsel %vm2016, %v2007, 0
      %vm2065 = vcmask 1043456
      %v2067 = vsel %vm2065, %v2008, 0
      %2069 = vmatprep.subr.bf16.mxu0 0
      %2070 = vmatpush1.bf16.msra.mxu0 %v2067
      %2071 = vmatprep.subr.bf16.mxu0 0
      %2072 = vmatpush1.bf16.msra.mxu0 0
      %2073 = vmatprep.subr.bf16.mxu0 0
      %2074 = vmatpush1.bf16.msra.mxu0 0
      %2075 = vmatprep.subr.bf16.mxu0 0
      %2076 = vmatpush1.bf16.msra.mxu0 0
      %2077 = vmatprep.subr.bf16.mxu0 0
      %2078 = vmatpush1.bf16.msra.mxu0 0
      %2079 = vmatprep.subr.bf16.mxu0 0
      %2080 = vmatpush1.bf16.msra.mxu0 0
      %2081 = vmatprep.subr.bf16.mxu0 0
      %2082 = vmatpush1.bf16.msra.mxu0 0
      %2083 = vmatprep.subr.bf16.mxu0 0
      %2084 = vmatpush1.bf16.msra.mxu0 0
      %2085 = vmatprep.subr.bf16.mxu0 0
      %2086 = vmatpush1.bf16.msra.mxu0 0
      %2087 = vmatprep.subr.bf16.mxu0 0
      %2088 = vmatpush1.bf16.msra.mxu0 0
      %2089 = vmatprep.subr.bf16.mxu0 0
      %2090 = vmatpush1.bf16.msra.mxu0 0
      %2091 = vmatprep.subr.bf16.mxu0 0
      %2092 = vmatpush1.bf16.msra.mxu0 0
      %2093 = vmatprep.subr.bf16.mxu0 0
      %2094 = vmatpush1.bf16.msra.mxu0 0
      %2095 = vmatprep.subr.bf16.mxu0 0
      %2096 = vmatpush1.bf16.msra.mxu0 0
      %2097 = vmatprep.subr.bf16.mxu0 0
      %2098 = vmatpush1.bf16.msra.mxu0 0
      %2099 = vmatprep.subr.bf16.mxu0 0
      %2100 = vmatpush1.bf16.msra.mxu0 0
      %2101 = vmatprep.mubr.bf16.mxu0 0
      %2102 = vmatmul.mubr.bf16.gmra.mrb[0].mxu0 %v2018
      %v2103 = vpop.f32.mrb[0].mxu0
      %v2104 = vadd.f32 %v2014, %v2103
      %v2105 = vpop.f32.mrb[0].mxu0
      %v2106 = vpop.f32.mrb[0].mxu0
      %v2107 = vadd.f32 %v2014, %v2106
      %v2108 = vpop.f32.mrb[0].mxu0
      %2109 = vmatprep.mubr.bf16.mxu0 0
      %2110 = vmatmul.mubr.bf16.gmra.mrb[0].mxu0 %v2021
      %v2111 = vpop.f32.mrb[0].mxu0
      %v2112 = vadd.f32 %v2014, %v2111
      %v2113 = vpop.f32.mrb[0].mxu0
      %v2114 = vpop.f32.mrb[0].mxu0
      %v2115 = vadd.f32 %v2014, %v2114
      %v2116 = vpop.f32.mrb[0].mxu0
      %2117 = vmatprep.mubr.bf16.mxu0 0
      %2118 = vmatmul.mubr.bf16.gmra.mrb[0].mxu0 %v2024
      %v2119 = vpop.f32.mrb[0].mxu0
      %v2120 = vadd.f32 %v2014, %v2119
      %v2121 = vpop.f32.mrb[0].mxu0
      %v2122 = vpop.f32.mrb[0].mxu0
      %v2123 = vadd.f32 %v2014, %v2122
      %v2124 = vpop.f32.mrb[0].mxu0
      %2125 = vmatprep.mubr.bf16.mxu0 0
      %2126 = vmatmul.mubr.bf16.gmra.mrb[0].mxu0 %v2027
      %v2127 = vpop.f32.mrb[0].mxu0
      %v2128 = vadd.f32 %v2014, %v2127
      %v2129 = vpop.f32.mrb[0].mxu0
      %v2130 = vpop.f32.mrb[0].mxu0
      %v2131 = vadd.f32 %v2014, %v2130
      %v2132 = vpop.f32.mrb[0].mxu0
      %2133 = vmatprep.mubr.bf16.mxu0 0
      %2134 = vmatmul.mubr.bf16.gmra.mrb[0].mxu0 %v2030
      %v2135 = vpop.f32.mrb[0].mxu0
      %v2136 = vadd.f32 %v2014, %v2135
      %v2137 = vpop.f32.mrb[0].mxu0
      %v2138 = vpop.f32.mrb[0].mxu0
      %v2139 = vadd.f32 %v2014, %v2138
      %v2140 = vpop.f32.mrb[0].mxu0
      %2141 = vmatprep.mubr.bf16.mxu0 0
      %2142 = vmatmul.mubr.bf16.gmra.mrb[0].mxu0 %v2033
      %v2143 = vpop.f32.mrb[0].mxu0
      %v2144 = vadd.f32 %v2014, %v2143
      %v2145 = vpop.f32.mrb[0].mxu0
      %v2146 = vpop.f32.mrb[0].mxu0
      %v2147 = vadd.f32 %v2014, %v2146
      %v2148 = vpop.f32.mrb[0].mxu0
      %2149 = vmatprep.mubr.bf16.mxu0 0
      %2150 = vmatmul.mubr.bf16.gmra.mrb[0].mxu0 %v2036
      %v2151 = vpop.f32.mrb[0].mxu0
      %v2152 = vadd.f32 %v2014, %v2151
      %v2153 = vpop.f32.mrb[0].mxu0
      %v2154 = vpop.f32.mrb[0].mxu0
      %v2155 = vadd.f32 %v2014, %v2154
      %v2156 = vpop.f32.mrb[0].mxu0
      %2157 = vmatprep.mubr.bf16.mxu0 0
      %2158 = vmatmul.mubr.bf16.gmra.mrb[0].mxu0 %v2039
      %v2159 = vpop.f32.mrb[0].mxu0
      %v2160 = vadd.f32 %v2014, %v2159
      %v2161 = vpop.f32.mrb[0].mxu0
      %v2162 = vpop.f32.mrb[0].mxu0
      %v2163 = vadd.f32 %v2014, %v2162
      %v2164 = vpop.f32.mrb[0].mxu0
      %2165 = vmatprep.mubr.bf16.mxu0 0
      %2166 = vmatmul.mubr.bf16.gmra.mrb[0].mxu0 %v2042
      %v2167 = vpop.f32.mrb[0].mxu0
      %v2168 = vadd.f32 %v2014, %v2167
      %v2169 = vpop.f32.mrb[0].mxu0
      %v2170 = vpop.f32.mrb[0].mxu0
      %v2171 = vadd.f32 %v2014, %v2170
      %v2172 = vpop.f32.mrb[0].mxu0
      %2173 = vmatprep.mubr.bf16.mxu0 0
      %2174 = vmatmul.mubr.bf16.gmra.mrb[0].mxu0 %v2045
      %v2175 = vpop.f32.mrb[0].mxu0
      %v2176 = vadd.f32 %v2014, %v2175
      %v2177 = vpop.f32.mrb[0].mxu0
      %v2178 = vpop.f32.mrb[0].mxu0
      %v2179 = vadd.f32 %v2014, %v2178
      %v2180 = vpop.f32.mrb[0].mxu0
      %2181 = vmatprep.mubr.bf16.mxu0 0
      %2182 = vmatmul.mubr.bf16.gmra.mrb[0].mxu0 %v2048
      %v2183 = vpop.f32.mrb[0].mxu0
      %v2184 = vadd.f32 %v2014, %v2183
      %v2185 = vpop.f32.mrb[0].mxu0
      %v2186 = vpop.f32.mrb[0].mxu0
      %v2187 = vadd.f32 %v2014, %v2186
      %v2188 = vpop.f32.mrb[0].mxu0
      %2189 = vmatprep.mubr.bf16.mxu0 0
      %2190 = vmatmul.mubr.bf16.gmra.mrb[0].mxu0 %v2051
      %v2191 = vpop.f32.mrb[0].mxu0
      %v2192 = vadd.f32 %v2014, %v2191
      %v2193 = vpop.f32.mrb[0].mxu0
      %v2194 = vpop.f32.mrb[0].mxu0
      %v2195 = vadd.f32 %v2014, %v2194
      %v2196 = vpop.f32.mrb[0].mxu0
      %2197 = vmatprep.mubr.bf16.mxu0 0
      %2198 = vmatmul.mubr.bf16.gmra.mrb[0].mxu0 %v2054
      %v2199 = vpop.f32.mrb[0].mxu0
      %v2200 = vadd.f32 %v2014, %v2199
      %v2201 = vpop.f32.mrb[0].mxu0
      %v2202 = vpop.f32.mrb[0].mxu0
      %v2203 = vadd.f32 %v2014, %v2202
      %v2204 = vpop.f32.mrb[0].mxu0
      %2205 = vmatprep.mubr.bf16.mxu0 0
      %2206 = vmatmul.mubr.bf16.gmra.mrb[0].mxu0 %v2057
      %v2207 = vpop.f32.mrb[0].mxu0
      %v2208 = vadd.f32 %v2014, %v2207
      %v2209 = vpop.f32.mrb[0].mxu0
      %v2210 = vpop.f32.mrb[0].mxu0
      %v2211 = vadd.f32 %v2014, %v2210
      %v2212 = vpop.f32.mrb[0].mxu0
      %2213 = vmatprep.mubr.bf16.mxu0 0
      %2214 = vmatmul.mubr.bf16.gmra.mrb[0].mxu0 %v2060
      %v2215 = vpop.f32.mrb[0].mxu0
      %v2216 = vadd.f32 %v2014, %v2215
      %v2217 = vpop.f32.mrb[0].mxu0
      %v2218 = vpop.f32.mrb[0].mxu0
      %v2219 = vadd.f32 %v2014, %v2218
      %v2220 = vpop.f32.mrb[0].mxu0
      %2221 = vmatprep.mubr.bf16.mxu0 0
      %2222 = vmatmul.mubr.bf16.gmra.mrb[0].mxu0 %v2063
      %v2223 = vpop.f32.mrb[0].mxu0
      %v2224 = vadd.f32 %v2014, %v2223
      %v2225 = vpop.f32.mrb[0].mxu0
      %v2226 = vpop.f32.mrb[0].mxu0
      %v2227 = vadd.f32 %v2014, %v2226
      %v2228 = vpop.f32.mrb[0].mxu0
      %2229 = vdwg.mxu0
      %v2230 = vpack.c.bf16 %v2107, %v2104
      %v2231 = vpack.c.bf16 %v2115, %v2112
      %v2232 = vpack.c.bf16 %v2123, %v2120
      %v2233 = vpack.c.bf16 %v2131, %v2128
      %v2234 = vpack.c.bf16 %v2139, %v2136
      %v2235 = vpack.c.bf16 %v2147, %v2144
      %v2236 = vpack.c.bf16 %v2155, %v2152
      %v2237 = vpack.c.bf16 %v2163, %v2160
      %v2238 = vpack.c.bf16 %v2171, %v2168
      %v2239 = vpack.c.bf16 %v2179, %v2176
      %v2240 = vpack.c.bf16 %v2187, %v2184
      %v2241 = vpack.c.bf16 %v2195, %v2192
      %v2242 = vpack.c.bf16 %v2203, %v2200
      %v2243 = vpack.c.bf16 %v2211, %v2208
      %v2244 = vpack.c.bf16 %v2219, %v2216
      %v2245 = vpack.c.bf16 %v2227, %v2224
      %v2246 = vld [vmem:[#allocation3] sm:$0xff]
      %v2247 = vld [vmem:[#allocation3 + $0x8] sm:$0xff]
      %v2248 = vld [vmem:[#allocation3 + $0x10] sm:$0xff]
      %v2249 = vld [vmem:[#allocation3 + $0x18] sm:$0xff]
      %v2250 = vld [vmem:[#allocation3 + $0x20] sm:$0xff]
      %v2251 = vld [vmem:[#allocation3 + $0x28] sm:$0xff]
      %v2252 = vld [vmem:[#allocation3 + $0x30] sm:$0xff]
      %v2253 = vld [vmem:[#allocation3 + $0x38] sm:$0xff]
      %v2254 = vld [vmem:[#allocation3 + $0x40] sm:$0xff]
      %v2255 = vld [vmem:[#allocation3 + $0x48] sm:$0xff]
      %v2256 = vld [vmem:[#allocation3 + $0x50] sm:$0xff]
      %v2257 = vld [vmem:[#allocation3 + $0x58] sm:$0xff]
      %v2258 = vld [vmem:[#allocation3 + $0x60] sm:$0xff]
      %v2259 = vld [vmem:[#allocation3 + $0x68] sm:$0xff]
      %v2260 = vld [vmem:[#allocation3 + $0x70] sm:$0xff]
      %v2261 = vld [vmem:[#allocation3 + $0x78] sm:$0xff]
      %v2262 = vld [vmem:[#allocation3 + $0x80] sm:$0xff]
      %v2263 = vld [vmem:[#allocation3 + $0x88] sm:$0xff]
      %v2264 = vld [vmem:[#allocation3 + $0x90] sm:$0xff]
      %v2265 = vld [vmem:[#allocation3 + $0x98] sm:$0xff]
      %v2266 = vld [vmem:[#allocation3 + $0xa0] sm:$0xff]
      %v2267 = vld [vmem:[#allocation3 + $0xa8] sm:$0xff]
      %v2268 = vld [vmem:[#allocation3 + $0xb0] sm:$0xff]
      %v2269 = vld [vmem:[#allocation3 + $0xb8] sm:$0xff]
      %v2270 = vld [vmem:[#allocation3 + $0xc0] sm:$0xff]
      %v2271 = vld [vmem:[#allocation3 + $0xc8] sm:$0xff]
      %v2272 = vld [vmem:[#allocation3 + $0xd0] sm:$0xff]
      %v2273 = vld [vmem:[#allocation3 + $0xd8] sm:$0xff]
      %v2274 = vld [vmem:[#allocation3 + $0xe0] sm:$0xff]
      %v2275 = vld [vmem:[#allocation3 + $0xe8] sm:$0xff]
      %v2276 = vld [vmem:[#allocation3 + $0xf0] sm:$0xff]
      %v2277 = vld [vmem:[#allocation3 + $0xf8] sm:$0xff]
      %2278 = vmatprep.subr.bf16.mxu0 0
      %2279 = vmatpush1.bf16.xpose.msra.mxu0 %v2246
      %2280 = vmatprep.subr.bf16.mxu0 0
      %2281 = vmatpush1.bf16.xpose.msra.mxu0 %v2247
      %2282 = vmatprep.subr.bf16.mxu0 0
      %2283 = vmatpush1.bf16.xpose.msra.mxu0 %v2248
      %2284 = vmatprep.subr.bf16.mxu0 0
      %2285 = vmatpush1.bf16.xpose.msra.mxu0 %v2249
      %2286 = vmatprep.subr.bf16.mxu0 0
      %2287 = vmatpush1.bf16.xpose.msra.mxu0 %v2250
      %2288 = vmatprep.subr.bf16.mxu0 0
      %2289 = vmatpush1.bf16.xpose.msra.mxu0 %v2251
      %2290 = vmatprep.subr.bf16.mxu0 0
      %2291 = vmatpush1.bf16.xpose.msra.mxu0 %v2252
      %2292 = vmatprep.subr.bf16.mxu0 0
      %2293 = vmatpush1.bf16.xpose.msra.mxu0 %v2253
      %2294 = vmatprep.subr.bf16.mxu0 0
      %2295 = vmatpush1.bf16.xpose.msra.mxu0 %v2254
      %2296 = vmatprep.subr.bf16.mxu0 0
      %2297 = vmatpush1.bf16.xpose.msra.mxu0 %v2255
      %2298 = vmatprep.subr.bf16.mxu0 0
      %2299 = vmatpush1.bf16.xpose.msra.mxu0 %v2256
      %2300 = vmatprep.subr.bf16.mxu0 0
      %2301 = vmatpush1.bf16.xpose.msra.mxu0 %v2257
      %2302 = vmatprep.subr.bf16.mxu0 0
      %2303 = vmatpush1.bf16.xpose.msra.mxu0 %v2258
      %2304 = vmatprep.subr.bf16.mxu0 0
      %2305 = vmatpush1.bf16.xpose.msra.mxu0 %v2259
      %2306 = vmatprep.subr.bf16.mxu0 0
      %2307 = vmatpush1.bf16.xpose.msra.mxu0 %v2260
      %2308 = vmatprep.subr.bf16.mxu0 0
      %2309 = vmatpush1.bf16.xpose.msra.mxu0 %v2261
      %2310 = vmatprep.mubr.bf16.mxu0 0
      %2311 = vmatmul.mubr.bf16.gmra.mrb[0].mxu0 %v2230
      %v2312 = vpop.f32.mrb[0].mxu0
      %v2313 = vadd.f32 0.0, %v2312
      %v2314 = vpop.f32.mrb[0].mxu0
      %v2315 = vadd.f32 0.0, %v2314
      %v2316 = vpop.f32.mrb[0].mxu0
      %v2317 = vadd.f32 0.0, %v2316
      %v2318 = vpop.f32.mrb[0].mxu0
      %v2319 = vadd.f32 0.0, %v2318
      %2320 = vmatprep.mubr.bf16.mxu0 0
      %2321 = vmatmul.mubr.bf16.gmra.mrb[0].mxu0 %v2231
      %v2322 = vpop.f32.mrb[0].mxu0
      %v2323 = vadd.f32 0.0, %v2322
      %v2324 = vpop.f32.mrb[0].mxu0
      %v2325 = vadd.f32 0.0, %v2324
      %v2326 = vpop.f32.mrb[0].mxu0
      %v2327 = vadd.f32 0.0, %v2326
      %v2328 = vpop.f32.mrb[0].mxu0
      %v2329 = vadd.f32 0.0, %v2328
      %2330 = vmatprep.mubr.bf16.mxu0 0
      %2331 = vmatmul.mubr.bf16.gmra.mrb[0].mxu0 %v2232
      %v2332 = vpop.f32.mrb[0].mxu0
      %v2333 = vadd.f32 0.0, %v2332
      %v2334 = vpop.f32.mrb[0].mxu0
      %v2335 = vadd.f32 0.0, %v2334
      %v2336 = vpop.f32.mrb[0].mxu0
      %v2337 = vadd.f32 0.0, %v2336
      %v2338 = vpop.f32.mrb[0].mxu0
      %v2339 = vadd.f32 0.0, %v2338
      %2340 = vmatprep.mubr.bf16.mxu0 0
      %2341 = vmatmul.mubr.bf16.gmra.mrb[0].mxu0 %v2233
      %v2342 = vpop.f32.mrb[0].mxu0
      %v2343 = vadd.f32 0.0, %v2342
      %v2344 = vpop.f32.mrb[0].mxu0
      %v2345 = vadd.f32 0.0, %v2344
      %v2346 = vpop.f32.mrb[0].mxu0
      %v2347 = vadd.f32 0.0, %v2346
      %v2348 = vpop.f32.mrb[0].mxu0
      %v2349 = vadd.f32 0.0, %v2348
      %2350 = vmatprep.mubr.bf16.mxu0 0
      %2351 = vmatmul.mubr.bf16.gmra.mrb[0].mxu0 %v2234
      %v2352 = vpop.f32.mrb[0].mxu0
      %v2353 = vadd.f32 0.0, %v2352
      %v2354 = vpop.f32.mrb[0].mxu0
      %v2355 = vadd.f32 0.0, %v2354
      %v2356 = vpop.f32.mrb[0].mxu0
      %v2357 = vadd.f32 0.0, %v2356
      %v2358 = vpop.f32.mrb[0].mxu0
      %v2359 = vadd.f32 0.0, %v2358
      %2360 = vmatprep.mubr.bf16.mxu0 0
      %2361 = vmatmul.mubr.bf16.gmra.mrb[0].mxu0 %v2235
      %v2362 = vpop.f32.mrb[0].mxu0
      %v2363 = vadd.f32 0.0, %v2362
      %v2364 = vpop.f32.mrb[0].mxu0
      %v2365 = vadd.f32 0.0, %v2364
      %v2366 = vpop.f32.mrb[0].mxu0
      %v2367 = vadd.f32 0.0, %v2366
      %v2368 = vpop.f32.mrb[0].mxu0
      %v2369 = vadd.f32 0.0, %v2368
      %2370 = vmatprep.mubr.bf16.mxu0 0
      %2371 = vmatmul.mubr.bf16.gmra.mrb[0].mxu0 %v2236
      %v2372 = vpop.f32.mrb[0].mxu0
      %v2373 = vadd.f32 0.0, %v2372
      %v2374 = vpop.f32.mrb[0].mxu0
      %v2375 = vadd.f32 0.0, %v2374
      %v2376 = vpop.f32.mrb[0].mxu0
      %v2377 = vadd.f32 0.0, %v2376
      %v2378 = vpop.f32.mrb[0].mxu0
      %v2379 = vadd.f32 0.0, %v2378
      %2380 = vmatprep.mubr.bf16.mxu0 0
      %2381 = vmatmul.mubr.bf16.gmra.mrb[0].mxu0 %v2237
      %v2382 = vpop.f32.mrb[0].mxu0
      %v2383 = vadd.f32 0.0, %v2382
      %v2384 = vpop.f32.mrb[0].mxu0
      %v2385 = vadd.f32 0.0, %v2384
      %v2386 = vpop.f32.mrb[0].mxu0
      %v2387 = vadd.f32 0.0, %v2386
      %v2388 = vpop.f32.mrb[0].mxu0
      %v2389 = vadd.f32 0.0, %v2388
      %2390 = vmatprep.mubr.bf16.mxu0 0
      %2391 = vmatmul.mubr.bf16.gmra.mrb[0].mxu0 %v2238
      %v2392 = vpop.f32.mrb[0].mxu0
      %v2393 = vadd.f32 0.0, %v2392
      %v2394 = vpop.f32.mrb[0].mxu0
      %v2395 = vadd.f32 0.0, %v2394
      %v2396 = vpop.f32.mrb[0].mxu0
      %v2397 = vadd.f32 0.0, %v2396
      %v2398 = vpop.f32.mrb[0].mxu0
      %v2399 = vadd.f32 0.0, %v2398
      %2400 = vmatprep.mubr.bf16.mxu0 0
      %2401 = vmatmul.mubr.bf16.gmra.mrb[0].mxu0 %v2239
      %v2402 = vpop.f32.mrb[0].mxu0
      %v2403 = vadd.f32 0.0, %v2402
      %v2404 = vpop.f32.mrb[0].mxu0
      %v2405 = vadd.f32 0.0, %v2404
      %v2406 = vpop.f32.mrb[0].mxu0
      %v2407 = vadd.f32 0.0, %v2406
      %v2408 = vpop.f32.mrb[0].mxu0
      %v2409 = vadd.f32 0.0, %v2408
      %2410 = vmatprep.mubr.bf16.mxu0 0
      %2411 = vmatmul.mubr.bf16.gmra.mrb[0].mxu0 %v2240
      %v2412 = vpop.f32.mrb[0].mxu0
      %v2413 = vadd.f32 0.0, %v2412
      %v2414 = vpop.f32.mrb[0].mxu0
      %v2415 = vadd.f32 0.0, %v2414
      %v2416 = vpop.f32.mrb[0].mxu0
      %v2417 = vadd.f32 0.0, %v2416
      %v2418 = vpop.f32.mrb[0].mxu0
      %v2419 = vadd.f32 0.0, %v2418
      %2420 = vmatprep.mubr.bf16.mxu0 0
      %2421 = vmatmul.mubr.bf16.gmra.mrb[0].mxu0 %v2241
      %v2422 = vpop.f32.mrb[0].mxu0
      %v2423 = vadd.f32 0.0, %v2422
      %v2424 = vpop.f32.mrb[0].mxu0
      %v2425 = vadd.f32 0.0, %v2424
      %v2426 = vpop.f32.mrb[0].mxu0
      %v2427 = vadd.f32 0.0, %v2426
      %v2428 = vpop.f32.mrb[0].mxu0
      %v2429 = vadd.f32 0.0, %v2428
      %2430 = vmatprep.mubr.bf16.mxu0 0
      %2431 = vmatmul.mubr.bf16.gmra.mrb[0].mxu0 %v2242
      %v2432 = vpop.f32.mrb[0].mxu0
      %v2433 = vadd.f32 0.0, %v2432
      %v2434 = vpop.f32.mrb[0].mxu0
      %v2435 = vadd.f32 0.0, %v2434
      %v2436 = vpop.f32.mrb[0].mxu0
      %v2437 = vadd.f32 0.0, %v2436
      %v2438 = vpop.f32.mrb[0].mxu0
      %v2439 = vadd.f32 0.0, %v2438
      %2440 = vmatprep.mubr.bf16.mxu0 0
      %2441 = vmatmul.mubr.bf16.gmra.mrb[0].mxu0 %v2243
      %v2442 = vpop.f32.mrb[0].mxu0
      %v2443 = vadd.f32 0.0, %v2442
      %v2444 = vpop.f32.mrb[0].mxu0
      %v2445 = vadd.f32 0.0, %v2444
      %v2446 = vpop.f32.mrb[0].mxu0
      %v2447 = vadd.f32 0.0, %v2446
      %v2448 = vpop.f32.mrb[0].mxu0
      %v2449 = vadd.f32 0.0, %v2448
      %2450 = vmatprep.mubr.bf16.mxu0 0
      %2451 = vmatmul.mubr.bf16.gmra.mrb[0].mxu0 %v2244
      %v2452 = vpop.f32.mrb[0].mxu0
      %v2453 = vadd.f32 0.0, %v2452
      %v2454 = vpop.f32.mrb[0].mxu0
      %v2455 = vadd.f32 0.0, %v2454
      %v2456 = vpop.f32.mrb[0].mxu0
      %v2457 = vadd.f32 0.0, %v2456
      %v2458 = vpop.f32.mrb[0].mxu0
      %v2459 = vadd.f32 0.0, %v2458
      %2460 = vmatprep.mubr.bf16.mxu0 0
      %2461 = vmatmul.mubr.bf16.gmra.mrb[0].mxu0 %v2245
      %v2462 = vpop.f32.mrb[0].mxu0
      %v2463 = vadd.f32 0.0, %v2462
      %v2464 = vpop.f32.mrb[0].mxu0
      %v2465 = vadd.f32 0.0, %v2464
      %v2466 = vpop.f32.mrb[0].mxu0
      %v2467 = vadd.f32 0.0, %v2466
      %v2468 = vpop.f32.mrb[0].mxu0
      %v2469 = vadd.f32 0.0, %v2468
      %2470 = vdwg.mxu0
      %2471 = vmatprep.subr.bf16.mxu0 0
      %2472 = vmatpush1.bf16.xpose.msra.mxu0 %v2262
      %2473 = vmatprep.subr.bf16.mxu0 0
      %2474 = vmatpush1.bf16.xpose.msra.mxu0 %v2263
      %2475 = vmatprep.subr.bf16.mxu0 0
      %2476 = vmatpush1.bf16.xpose.msra.mxu0 %v2264
      %2477 = vmatprep.subr.bf16.mxu0 0
      %2478 = vmatpush1.bf16.xpose.msra.mxu0 %v2265
      %2479 = vmatprep.subr.bf16.mxu0 0
      %2480 = vmatpush1.bf16.xpose.msra.mxu0 %v2266
      %2481 = vmatprep.subr.bf16.mxu0 0
      %2482 = vmatpush1.bf16.xpose.msra.mxu0 %v2267
      %2483 = vmatprep.subr.bf16.mxu0 0
      %2484 = vmatpush1.bf16.xpose.msra.mxu0 %v2268
      %2485 = vmatprep.subr.bf16.mxu0 0
      %2486 = vmatpush1.bf16.xpose.msra.mxu0 %v2269
      %2487 = vmatprep.subr.bf16.mxu0 0
      %2488 = vmatpush1.bf16.xpose.msra.mxu0 %v2270
      %2489 = vmatprep.subr.bf16.mxu0 0
      %2490 = vmatpush1.bf16.xpose.msra.mxu0 %v2271
      %2491 = vmatprep.subr.bf16.mxu0 0
      %2492 = vmatpush1.bf16.xpose.msra.mxu0 %v2272
      %2493 = vmatprep.subr.bf16.mxu0 0
      %2494 = vmatpush1.bf16.xpose.msra.mxu0 %v2273
      %2495 = vmatprep.subr.bf16.mxu0 0
      %2496 = vmatpush1.bf16.xpose.msra.mxu0 %v2274
      %2497 = vmatprep.subr.bf16.mxu0 0
      %2498 = vmatpush1.bf16.xpose.msra.mxu0 %v2275
      %2499 = vmatprep.subr.bf16.mxu0 0
      %2500 = vmatpush1.bf16.xpose.msra.mxu0 %v2276
      %2501 = vmatprep.subr.bf16.mxu0 0
      %2502 = vmatpush1.bf16.xpose.msra.mxu0 %v2277
      %2503 = vmatprep.mubr.bf16.mxu0 0
      %2504 = vmatmul.mubr.bf16.gmra.mrb[0].mxu0 %v2230
      %v2505 = vpop.f32.mrb[0].mxu0
      %v2506 = vadd.f32 0.0, %v2505
      %v2507 = vpop.f32.mrb[0].mxu0
      %v2508 = vadd.f32 0.0, %v2507
      %v2509 = vpop.f32.mrb[0].mxu0
      %v2510 = vadd.f32 0.0, %v2509
      %v2511 = vpop.f32.mrb[0].mxu0
      %v2512 = vadd.f32 0.0, %v2511
      %2513 = vmatprep.mubr.bf16.mxu0 0
      %2514 = vmatmul.mubr.bf16.gmra.mrb[0].mxu0 %v2231
      %v2515 = vpop.f32.mrb[0].mxu0
      %v2516 = vadd.f32 0.0, %v2515
      %v2517 = vpop.f32.mrb[0].mxu0
      %v2518 = vadd.f32 0.0, %v2517
      %v2519 = vpop.f32.mrb[0].mxu0
      %v2520 = vadd.f32 0.0, %v2519
      %v2521 = vpop.f32.mrb[0].mxu0
      %v2522 = vadd.f32 0.0, %v2521
      %2523 = vmatprep.mubr.bf16.mxu0 0
      %2524 = vmatmul.mubr.bf16.gmra.mrb[0].mxu0 %v2232
      %v2525 = vpop.f32.mrb[0].mxu0
      %v2526 = vadd.f32 0.0, %v2525
      %v2527 = vpop.f32.mrb[0].mxu0
      %v2528 = vadd.f32 0.0, %v2527
      %v2529 = vpop.f32.mrb[0].mxu0
      %v2530 = vadd.f32 0.0, %v2529
      %v2531 = vpop.f32.mrb[0].mxu0
      %v2532 = vadd.f32 0.0, %v2531
      %2533 = vmatprep.mubr.bf16.mxu0 0
      %2534 = vmatmul.mubr.bf16.gmra.mrb[0].mxu0 %v2233
      %v2535 = vpop.f32.mrb[0].mxu0
      %v2536 = vadd.f32 0.0, %v2535
      %v2537 = vpop.f32.mrb[0].mxu0
      %v2538 = vadd.f32 0.0, %v2537
      %v2539 = vpop.f32.mrb[0].mxu0
      %v2540 = vadd.f32 0.0, %v2539
      %v2541 = vpop.f32.mrb[0].mxu0
      %v2542 = vadd.f32 0.0, %v2541
      %2543 = vmatprep.mubr.bf16.mxu0 0
      %2544 = vmatmul.mubr.bf16.gmra.mrb[0].mxu0 %v2234
      %v2545 = vpop.f32.mrb[0].mxu0
      %v2546 = vadd.f32 0.0, %v2545
      %v2547 = vpop.f32.mrb[0].mxu0
      %v2548 = vadd.f32 0.0, %v2547
      %v2549 = vpop.f32.mrb[0].mxu0
      %v2550 = vadd.f32 0.0, %v2549
      %v2551 = vpop.f32.mrb[0].mxu0
      %v2552 = vadd.f32 0.0, %v2551
      %2553 = vmatprep.mubr.bf16.mxu0 0
      %2554 = vmatmul.mubr.bf16.gmra.mrb[0].mxu0 %v2235
      %v2555 = vpop.f32.mrb[0].mxu0
      %v2556 = vadd.f32 0.0, %v2555
      %v2557 = vpop.f32.mrb[0].mxu0
      %v2558 = vadd.f32 0.0, %v2557
      %v2559 = vpop.f32.mrb[0].mxu0
      %v2560 = vadd.f32 0.0, %v2559
      %v2561 = vpop.f32.mrb[0].mxu0
      %v2562 = vadd.f32 0.0, %v2561
      %2563 = vmatprep.mubr.bf16.mxu0 0
      %2564 = vmatmul.mubr.bf16.gmra.mrb[0].mxu0 %v2236
      %v2565 = vpop.f32.mrb[0].mxu0
      %v2566 = vadd.f32 0.0, %v2565
      %v2567 = vpop.f32.mrb[0].mxu0
      %v2568 = vadd.f32 0.0, %v2567
      %v2569 = vpop.f32.mrb[0].mxu0
      %v2570 = vadd.f32 0.0, %v2569
      %v2571 = vpop.f32.mrb[0].mxu0
      %v2572 = vadd.f32 0.0, %v2571
      %2573 = vmatprep.mubr.bf16.mxu0 0
      %2574 = vmatmul.mubr.bf16.gmra.mrb[0].mxu0 %v2237
      %v2575 = vpop.f32.mrb[0].mxu0
      %v2576 = vadd.f32 0.0, %v2575
      %v2577 = vpop.f32.mrb[0].mxu0
      %v2578 = vadd.f32 0.0, %v2577
      %v2579 = vpop.f32.mrb[0].mxu0
      %v2580 = vadd.f32 0.0, %v2579
      %v2581 = vpop.f32.mrb[0].mxu0
      %v2582 = vadd.f32 0.0, %v2581
      %2583 = vmatprep.mubr.bf16.mxu0 0
      %2584 = vmatmul.mubr.bf16.gmra.mrb[0].mxu0 %v2238
      %v2585 = vpop.f32.mrb[0].mxu0
      %v2586 = vadd.f32 0.0, %v2585
      %v2587 = vpop.f32.mrb[0].mxu0
      %v2588 = vadd.f32 0.0, %v2587
      %v2589 = vpop.f32.mrb[0].mxu0
      %v2590 = vadd.f32 0.0, %v2589
      %v2591 = vpop.f32.mrb[0].mxu0
      %v2592 = vadd.f32 0.0, %v2591
      %2593 = vmatprep.mubr.bf16.mxu0 0
      %2594 = vmatmul.mubr.bf16.gmra.mrb[0].mxu0 %v2239
      %v2595 = vpop.f32.mrb[0].mxu0
      %v2596 = vadd.f32 0.0, %v2595
      %v2597 = vpop.f32.mrb[0].mxu0
      %v2598 = vadd.f32 0.0, %v2597
      %v2599 = vpop.f32.mrb[0].mxu0
      %v2600 = vadd.f32 0.0, %v2599
      %v2601 = vpop.f32.mrb[0].mxu0
      %v2602 = vadd.f32 0.0, %v2601
      %2603 = vmatprep.mubr.bf16.mxu0 0
      %2604 = vmatmul.mubr.bf16.gmra.mrb[0].mxu0 %v2240
      %v2605 = vpop.f32.mrb[0].mxu0
      %v2606 = vadd.f32 0.0, %v2605
      %v2607 = vpop.f32.mrb[0].mxu0
      %v2608 = vadd.f32 0.0, %v2607
      %v2609 = vpop.f32.mrb[0].mxu0
      %v2610 = vadd.f32 0.0, %v2609
      %v2611 = vpop.f32.mrb[0].mxu0
      %v2612 = vadd.f32 0.0, %v2611
      %2613 = vmatprep.mubr.bf16.mxu0 0
      %2614 = vmatmul.mubr.bf16.gmra.mrb[0].mxu0 %v2241
      %v2615 = vpop.f32.mrb[0].mxu0
      %v2616 = vadd.f32 0.0, %v2615
      %v2617 = vpop.f32.mrb[0].mxu0
      %v2618 = vadd.f32 0.0, %v2617
      %v2619 = vpop.f32.mrb[0].mxu0
      %v2620 = vadd.f32 0.0, %v2619
      %v2621 = vpop.f32.mrb[0].mxu0
      %v2622 = vadd.f32 0.0, %v2621
      %2623 = vmatprep.mubr.bf16.mxu0 0
      %2624 = vmatmul.mubr.bf16.gmra.mrb[0].mxu0 %v2242
      %v2625 = vpop.f32.mrb[0].mxu0
      %v2626 = vadd.f32 0.0, %v2625
      %v2627 = vpop.f32.mrb[0].mxu0
      %v2628 = vadd.f32 0.0, %v2627
      %v2629 = vpop.f32.mrb[0].mxu0
      %v2630 = vadd.f32 0.0, %v2629
      %v2631 = vpop.f32.mrb[0].mxu0
      %v2632 = vadd.f32 0.0, %v2631
      %2633 = vmatprep.mubr.bf16.mxu0 0
      %2634 = vmatmul.mubr.bf16.gmra.mrb[0].mxu0 %v2243
      %v2635 = vpop.f32.mrb[0].mxu0
      %v2636 = vadd.f32 0.0, %v2635
      %v2637 = vpop.f32.mrb[0].mxu0
      %v2638 = vadd.f32 0.0, %v2637
      %v2639 = vpop.f32.mrb[0].mxu0
      %v2640 = vadd.f32 0.0, %v2639
      %v2641 = vpop.f32.mrb[0].mxu0
      %v2642 = vadd.f32 0.0, %v2641
      %2643 = vmatprep.mubr.bf16.mxu0 0
      %2644 = vmatmul.mubr.bf16.gmra.mrb[0].mxu0 %v2244
      %v2645 = vpop.f32.mrb[0].mxu0
      %v2646 = vadd.f32 0.0, %v2645
      %v2647 = vpop.f32.mrb[0].mxu0
      %v2648 = vadd.f32 0.0, %v2647
      %v2649 = vpop.f32.mrb[0].mxu0
      %v2650 = vadd.f32 0.0, %v2649
      %v2651 = vpop.f32.mrb[0].mxu0
      %v2652 = vadd.f32 0.0, %v2651
      %2653 = vmatprep.mubr.bf16.mxu0 0
      %2654 = vmatmul.mubr.bf16.gmra.mrb[0].mxu0 %v2245
      %v2655 = vpop.f32.mrb[0].mxu0
      %v2656 = vadd.f32 0.0, %v2655
      %v2657 = vpop.f32.mrb[0].mxu0
      %v2658 = vadd.f32 0.0, %v2657
      %v2659 = vpop.f32.mrb[0].mxu0
      %v2660 = vadd.f32 0.0, %v2659
      %v2661 = vpop.f32.mrb[0].mxu0
      %v2662 = vadd.f32 0.0, %v2661
      %2663 = vdwg.mxu0
      %v2664 = vmax.f32 %v2313, %v2315
      %v2665 = vmax.f32 %v2664, %v2506
      %v2666 = vmax.f32 %v2665, %v2508
      %2667 = vmax.xlane.f32.xlu0 %v2666
      %v2668 = vpop.xlane.xlu0 %2667
      %v2669 = vmax.f32 %v2317, %v2319
      %v2670 = vmax.f32 %v2669, %v2510
      %v2671 = vmax.f32 %v2670, %v2512
      %2672 = vmax.xlane.f32.xlu0 %v2671
      %v2673 = vpop.xlane.xlu0 %2672
      %v2674 = vmax.f32 %v2323, %v2325
      %v2675 = vmax.f32 %v2674, %v2516
      %v2676 = vmax.f32 %v2675, %v2518
      %2677 = vmax.xlane.f32.xlu0 %v2676
      %v2678 = vpop.xlane.xlu0 %2677
      %v2679 = vmax.f32 %v2327, %v2329
      %v2680 = vmax.f32 %v2679, %v2520
      %v2681 = vmax.f32 %v2680, %v2522
      %2682 = vmax.xlane.f32.xlu0 %v2681
      %v2683 = vpop.xlane.xlu0 %2682
      %v2684 = vmax.f32 %v2333, %v2335
      %v2685 = vmax.f32 %v2684, %v2526
      %v2686 = vmax.f32 %v2685, %v2528
      %2687 = vmax.xlane.f32.xlu0 %v2686
      %v2688 = vpop.xlane.xlu0 %2687
      %v2689 = vmax.f32 %v2337, %v2339
      %v2690 = vmax.f32 %v2689, %v2530
      %v2691 = vmax.f32 %v2690, %v2532
      %2692 = vmax.xlane.f32.xlu0 %v2691
      %v2693 = vpop.xlane.xlu0 %2692
      %v2694 = vmax.f32 %v2343, %v2345
      %v2695 = vmax.f32 %v2694, %v2536
      %v2696 = vmax.f32 %v2695, %v2538
      %2697 = vmax.xlane.f32.xlu0 %v2696
      %v2698 = vpop.xlane.xlu0 %2697
      %v2699 = vmax.f32 %v2347, %v2349
      %v2700 = vmax.f32 %v2699, %v2540
      %v2701 = vmax.f32 %v2700, %v2542
      %2702 = vmax.xlane.f32.xlu0 %v2701
      %v2703 = vpop.xlane.xlu0 %2702
      %v2704 = vmax.f32 %v2353, %v2355
      %v2705 = vmax.f32 %v2704, %v2546
      %v2706 = vmax.f32 %v2705, %v2548
      %2707 = vmax.xlane.f32.xlu0 %v2706
      %v2708 = vpop.xlane.xlu0 %2707
      %v2709 = vmax.f32 %v2357, %v2359
      %v2710 = vmax.f32 %v2709, %v2550
      %v2711 = vmax.f32 %v2710, %v2552
      %2712 = vmax.xlane.f32.xlu0 %v2711
      %v2713 = vpop.xlane.xlu0 %2712
      %v2714 = vmax.f32 %v2363, %v2365
      %v2715 = vmax.f32 %v2714, %v2556
      %v2716 = vmax.f32 %v2715, %v2558
      %2717 = vmax.xlane.f32.xlu0 %v2716
      %v2718 = vpop.xlane.xlu0 %2717
      %v2719 = vmax.f32 %v2367, %v2369
      %v2720 = vmax.f32 %v2719, %v2560
      %v2721 = vmax.f32 %v2720, %v2562
      %2722 = vmax.xlane.f32.xlu0 %v2721
      %v2723 = vpop.xlane.xlu0 %2722
      %v2724 = vmax.f32 %v2373, %v2375
      %v2725 = vmax.f32 %v2724, %v2566
      %v2726 = vmax.f32 %v2725, %v2568
      %2727 = vmax.xlane.f32.xlu0 %v2726
      %v2728 = vpop.xlane.xlu0 %2727
      %v2729 = vmax.f32 %v2377, %v2379
      %v2730 = vmax.f32 %v2729, %v2570
      %v2731 = vmax.f32 %v2730, %v2572
      %2732 = vmax.xlane.f32.xlu0 %v2731
      %v2733 = vpop.xlane.xlu0 %2732
      %v2734 = vmax.f32 %v2383, %v2385
      %v2735 = vmax.f32 %v2734, %v2576
      %v2736 = vmax.f32 %v2735, %v2578
      %2737 = vmax.xlane.f32.xlu0 %v2736
      %v2738 = vpop.xlane.xlu0 %2737
      %v2739 = vmax.f32 %v2387, %v2389
      %v2740 = vmax.f32 %v2739, %v2580
      %v2741 = vmax.f32 %v2740, %v2582
      %2742 = vmax.xlane.f32.xlu0 %v2741
      %v2743 = vpop.xlane.xlu0 %2742
      %v2744 = vmax.f32 %v2393, %v2395
      %v2745 = vmax.f32 %v2744, %v2586
      %v2746 = vmax.f32 %v2745, %v2588
      %2747 = vmax.xlane.f32.xlu0 %v2746
      %v2748 = vpop.xlane.xlu0 %2747
      %v2749 = vmax.f32 %v2397, %v2399
      %v2750 = vmax.f32 %v2749, %v2590
      %v2751 = vmax.f32 %v2750, %v2592
      %2752 = vmax.xlane.f32.xlu0 %v2751
      %v2753 = vpop.xlane.xlu0 %2752
      %v2754 = vmax.f32 %v2403, %v2405
      %v2755 = vmax.f32 %v2754, %v2596
      %v2756 = vmax.f32 %v2755, %v2598
      %2757 = vmax.xlane.f32.xlu0 %v2756
      %v2758 = vpop.xlane.xlu0 %2757
      %v2759 = vmax.f32 %v2407, %v2409
      %v2760 = vmax.f32 %v2759, %v2600
      %v2761 = vmax.f32 %v2760, %v2602
      %2762 = vmax.xlane.f32.xlu0 %v2761
      %v2763 = vpop.xlane.xlu0 %2762
      %v2764 = vmax.f32 %v2413, %v2415
      %v2765 = vmax.f32 %v2764, %v2606
      %v2766 = vmax.f32 %v2765, %v2608
      %2767 = vmax.xlane.f32.xlu0 %v2766
      %v2768 = vpop.xlane.xlu0 %2767
      %v2769 = vmax.f32 %v2417, %v2419
      %v2770 = vmax.f32 %v2769, %v2610
      %v2771 = vmax.f32 %v2770, %v2612
      %2772 = vmax.xlane.f32.xlu0 %v2771
      %v2773 = vpop.xlane.xlu0 %2772
      %v2774 = vmax.f32 %v2423, %v2425
      %v2775 = vmax.f32 %v2774, %v2616
      %v2776 = vmax.f32 %v2775, %v2618
      %2777 = vmax.xlane.f32.xlu0 %v2776
      %v2778 = vpop.xlane.xlu0 %2777
      %v2779 = vmax.f32 %v2427, %v2429
      %v2780 = vmax.f32 %v2779, %v2620
      %v2781 = vmax.f32 %v2780, %v2622
      %2782 = vmax.xlane.f32.xlu0 %v2781
      %v2783 = vpop.xlane.xlu0 %2782
      %v2784 = vmax.f32 %v2433, %v2435
      %v2785 = vmax.f32 %v2784, %v2626
      %v2786 = vmax.f32 %v2785, %v2628
      %2787 = vmax.xlane.f32.xlu0 %v2786
      %v2788 = vpop.xlane.xlu0 %2787
      %v2789 = vmax.f32 %v2437, %v2439
      %v2790 = vmax.f32 %v2789, %v2630
      %v2791 = vmax.f32 %v2790, %v2632
      %2792 = vmax.xlane.f32.xlu0 %v2791
      %v2793 = vpop.xlane.xlu0 %2792
      %v2794 = vmax.f32 %v2443, %v2445
      %v2795 = vmax.f32 %v2794, %v2636
      %v2796 = vmax.f32 %v2795, %v2638
      %2797 = vmax.xlane.f32.xlu0 %v2796
      %v2798 = vpop.xlane.xlu0 %2797
      %v2799 = vmax.f32 %v2447, %v2449
      %v2800 = vmax.f32 %v2799, %v2640
      %v2801 = vmax.f32 %v2800, %v2642
      %2802 = vmax.xlane.f32.xlu0 %v2801
      %v2803 = vpop.xlane.xlu0 %2802
      %v2804 = vmax.f32 %v2453, %v2455
      %v2805 = vmax.f32 %v2804, %v2646
      %v2806 = vmax.f32 %v2805, %v2648
      %2807 = vmax.xlane.f32.xlu0 %v2806
      %v2808 = vpop.xlane.xlu0 %2807
      %v2809 = vmax.f32 %v2457, %v2459
      %v2810 = vmax.f32 %v2809, %v2650
      %v2811 = vmax.f32 %v2810, %v2652
      %2812 = vmax.xlane.f32.xlu0 %v2811
      %v2813 = vpop.xlane.xlu0 %2812
      %v2814 = vmax.f32 %v2463, %v2465
      %v2815 = vmax.f32 %v2814, %v2656
      %v2816 = vmax.f32 %v2815, %v2658
      %2817 = vmax.xlane.f32.xlu0 %v2816
      %v2818 = vpop.xlane.xlu0 %2817
      %v2819 = vmax.f32 %v2467, %v2469
      %v2820 = vmax.f32 %v2819, %v2660
      %v2821 = vmax.f32 %v2820, %v2662
      %2822 = vmax.xlane.f32.xlu0 %v2821
      %v2823 = vpop.xlane.xlu0 %2822
      %v2824 = vsub.f32 %v2313, %v2668
      %v2825 = vsub.f32 %v2315, %v2668
      %v2826 = vsub.f32 %v2506, %v2668
      %v2827 = vsub.f32 %v2508, %v2668
      %v2828 = vsub.f32 %v2317, %v2673
      %v2829 = vsub.f32 %v2319, %v2673
      %v2830 = vsub.f32 %v2510, %v2673
      %v2831 = vsub.f32 %v2512, %v2673
      %v2832 = vsub.f32 %v2323, %v2678
      %v2833 = vsub.f32 %v2325, %v2678
      %v2834 = vsub.f32 %v2516, %v2678
      %v2835 = vsub.f32 %v2518, %v2678
      %v2836 = vsub.f32 %v2327, %v2683
      %v2837 = vsub.f32 %v2329, %v2683
      %v2838 = vsub.f32 %v2520, %v2683
      %v2839 = vsub.f32 %v2522, %v2683
      %v2840 = vsub.f32 %v2333, %v2688
      %v2841 = vsub.f32 %v2335, %v2688
      %v2842 = vsub.f32 %v2526, %v2688
      %v2843 = vsub.f32 %v2528, %v2688
      %v2844 = vsub.f32 %v2337, %v2693
      %v2845 = vsub.f32 %v2339, %v2693
      %v2846 = vsub.f32 %v2530, %v2693
      %v2847 = vsub.f32 %v2532, %v2693
      %v2848 = vsub.f32 %v2343, %v2698
      %v2849 = vsub.f32 %v2345, %v2698
      %v2850 = vsub.f32 %v2536, %v2698
      %v2851 = vsub.f32 %v2538, %v2698
      %v2852 = vsub.f32 %v2347, %v2703
      %v2853 = vsub.f32 %v2349, %v2703
      %v2854 = vsub.f32 %v2540, %v2703
      %v2855 = vsub.f32 %v2542, %v2703
      %v2856 = vsub.f32 %v2353, %v2708
      %v2857 = vsub.f32 %v2355, %v2708
      %v2858 = vsub.f32 %v2546, %v2708
      %v2859 = vsub.f32 %v2548, %v2708
      %v2860 = vsub.f32 %v2357, %v2713
      %v2861 = vsub.f32 %v2359, %v2713
      %v2862 = vsub.f32 %v2550, %v2713
      %v2863 = vsub.f32 %v2552, %v2713
      %v2864 = vsub.f32 %v2363, %v2718
      %v2865 = vsub.f32 %v2365, %v2718
      %v2866 = vsub.f32 %v2556, %v2718
      %v2867 = vsub.f32 %v2558, %v2718
      %v2868 = vsub.f32 %v2367, %v2723
      %v2869 = vsub.f32 %v2369, %v2723
      %v2870 = vsub.f32 %v2560, %v2723
      %v2871 = vsub.f32 %v2562, %v2723
      %v2872 = vsub.f32 %v2373, %v2728
      %v2873 = vsub.f32 %v2375, %v2728
      %v2874 = vsub.f32 %v2566, %v2728
      %v2875 = vsub.f32 %v2568, %v2728
      %v2876 = vsub.f32 %v2377, %v2733
      %v2877 = vsub.f32 %v2379, %v2733
      %v2878 = vsub.f32 %v2570, %v2733
      %v2879 = vsub.f32 %v2572, %v2733
      %v2880 = vsub.f32 %v2383, %v2738
      %v2881 = vsub.f32 %v2385, %v2738
      %v2882 = vsub.f32 %v2576, %v2738
      %v2883 = vsub.f32 %v2578, %v2738
      %v2884 = vsub.f32 %v2387, %v2743
      %v2885 = vsub.f32 %v2389, %v2743
      %v2886 = vsub.f32 %v2580, %v2743
      %v2887 = vsub.f32 %v2582, %v2743
      %v2888 = vsub.f32 %v2393, %v2748
      %v2889 = vsub.f32 %v2395, %v2748
      %v2890 = vsub.f32 %v2586, %v2748
      %v2891 = vsub.f32 %v2588, %v2748
      %v2892 = vsub.f32 %v2397, %v2753
      %v2893 = vsub.f32 %v2399, %v2753
      %v2894 = vsub.f32 %v2590, %v2753
      %v2895 = vsub.f32 %v2592, %v2753
      %v2896 = vsub.f32 %v2403, %v2758
      %v2897 = vsub.f32 %v2405, %v2758
      %v2898 = vsub.f32 %v2596, %v2758
      %v2899 = vsub.f32 %v2598, %v2758
      %v2900 = vsub.f32 %v2407, %v2763
      %v2901 = vsub.f32 %v2409, %v2763
      %v2902 = vsub.f32 %v2600, %v2763
      %v2903 = vsub.f32 %v2602, %v2763
      %v2904 = vsub.f32 %v2413, %v2768
      %v2905 = vsub.f32 %v2415, %v2768
      %v2906 = vsub.f32 %v2606, %v2768
      %v2907 = vsub.f32 %v2608, %v2768
      %v2908 = vsub.f32 %v2417, %v2773
      %v2909 = vsub.f32 %v2419, %v2773
      %v2910 = vsub.f32 %v2610, %v2773
      %v2911 = vsub.f32 %v2612, %v2773
      %v2912 = vsub.f32 %v2423, %v2778
      %v2913 = vsub.f32 %v2425, %v2778
      %v2914 = vsub.f32 %v2616, %v2778
      %v2915 = vsub.f32 %v2618, %v2778
      %v2916 = vsub.f32 %v2427, %v2783
      %v2917 = vsub.f32 %v2429, %v2783
      %v2918 = vsub.f32 %v2620, %v2783
      %v2919 = vsub.f32 %v2622, %v2783
      %v2920 = vsub.f32 %v2433, %v2788
      %v2921 = vsub.f32 %v2435, %v2788
      %v2922 = vsub.f32 %v2626, %v2788
      %v2923 = vsub.f32 %v2628, %v2788
      %v2924 = vsub.f32 %v2437, %v2793
      %v2925 = vsub.f32 %v2439, %v2793
      %v2926 = vsub.f32 %v2630, %v2793
      %v2927 = vsub.f32 %v2632, %v2793
      %v2928 = vsub.f32 %v2443, %v2798
      %v2929 = vsub.f32 %v2445, %v2798
      %v2930 = vsub.f32 %v2636, %v2798
      %v2931 = vsub.f32 %v2638, %v2798
      %v2932 = vsub.f32 %v2447, %v2803
      %v2933 = vsub.f32 %v2449, %v2803
      %v2934 = vsub.f32 %v2640, %v2803
      %v2935 = vsub.f32 %v2642, %v2803
      %v2936 = vsub.f32 %v2453, %v2808
      %v2937 = vsub.f32 %v2455, %v2808
      %v2938 = vsub.f32 %v2646, %v2808
      %v2939 = vsub.f32 %v2648, %v2808
      %v2940 = vsub.f32 %v2457, %v2813
      %v2941 = vsub.f32 %v2459, %v2813
      %v2942 = vsub.f32 %v2650, %v2813
      %v2943 = vsub.f32 %v2652, %v2813
      %v2944 = vsub.f32 %v2463, %v2818
      %v2945 = vsub.f32 %v2465, %v2818
      %v2946 = vsub.f32 %v2656, %v2818
      %v2947 = vsub.f32 %v2658, %v2818
      %v2948 = vsub.f32 %v2467, %v2823
      %v2949 = vsub.f32 %v2469, %v2823
      %v2950 = vsub.f32 %v2660, %v2823
      %v2951 = vsub.f32 %v2662, %v2823
      %v2952 = vmul.f32 %v2824, 1.442695
      %v2953 = vpow.pop %v2952
      %v2954 = vmul.f32 %v2825, 1.442695
      %v2955 = vpow.pop %v2954
      %v2956 = vmul.f32 %v2826, 1.442695
      %v2957 = vpow.pop %v2956
      %v2958 = vmul.f32 %v2827, 1.442695
      %v2959 = vpow.pop %v2958
      %v2960 = vmul.f32 %v2828, 1.442695
      %v2961 = vpow.pop %v2960
      %v2962 = vmul.f32 %v2829, 1.442695
      %v2963 = vpow.pop %v2962
      %v2964 = vmul.f32 %v2830, 1.442695
      %v2965 = vpow.pop %v2964
      %v2966 = vmul.f32 %v2831, 1.442695
      %v2967 = vpow.pop %v2966
      %v2968 = vmul.f32 %v2832, 1.442695
      %v2969 = vpow.pop %v2968
      %v2970 = vmul.f32 %v2833, 1.442695
      %v2971 = vpow.pop %v2970
      %v2972 = vmul.f32 %v2834, 1.442695
      %v2973 = vpow.pop %v2972
      %v2974 = vmul.f32 %v2835, 1.442695
      %v2975 = vpow.pop %v2974
      %v2976 = vmul.f32 %v2836, 1.442695
      %v2977 = vpow.pop %v2976
      %v2978 = vmul.f32 %v2837, 1.442695
      %v2979 = vpow.pop %v2978
      %v2980 = vmul.f32 %v2838, 1.442695
      %v2981 = vpow.pop %v2980
      %v2982 = vmul.f32 %v2839, 1.442695
      %v2983 = vpow.pop %v2982
      %v2984 = vmul.f32 %v2840, 1.442695
      %v2985 = vpow.pop %v2984
      %v2986 = vmul.f32 %v2841, 1.442695
      %v2987 = vpow.pop %v2986
      %v2988 = vmul.f32 %v2842, 1.442695
      %v2989 = vpow.pop %v2988
      %v2990 = vmul.f32 %v2843, 1.442695
      %v2991 = vpow.pop %v2990
      %v2992 = vmul.f32 %v2844, 1.442695
      %v2993 = vpow.pop %v2992
      %v2994 = vmul.f32 %v2845, 1.442695
      %v2995 = vpow.pop %v2994
      %v2996 = vmul.f32 %v2846, 1.442695
      %v2997 = vpow.pop %v2996
      %v2998 = vmul.f32 %v2847, 1.442695
      %v2999 = vpow.pop %v2998
      %v3000 = vmul.f32 %v2848, 1.442695
      %v3001 = vpow.pop %v3000
      %v3002 = vmul.f32 %v2849, 1.442695
      %v3003 = vpow.pop %v3002
      %v3004 = vmul.f32 %v2850, 1.442695
      %v3005 = vpow.pop %v3004
      %v3006 = vmul.f32 %v2851, 1.442695
      %v3007 = vpow.pop %v3006
      %v3008 = vmul.f32 %v2852, 1.442695
      %v3009 = vpow.pop %v3008
      %v3010 = vmul.f32 %v2853, 1.442695
      %v3011 = vpow.pop %v3010
      %v3012 = vmul.f32 %v2854, 1.442695
      %v3013 = vpow.pop %v3012
      %v3014 = vmul.f32 %v2855, 1.442695
      %v3015 = vpow.pop %v3014
      %v3016 = vmul.f32 %v2856, 1.442695
      %v3017 = vpow.pop %v3016
      %v3018 = vmul.f32 %v2857, 1.442695
      %v3019 = vpow.pop %v3018
      %v3020 = vmul.f32 %v2858, 1.442695
      %v3021 = vpow.pop %v3020
      %v3022 = vmul.f32 %v2859, 1.442695
      %v3023 = vpow.pop %v3022
      %v3024 = vmul.f32 %v2860, 1.442695
      %v3025 = vpow.pop %v3024
      %v3026 = vmul.f32 %v2861, 1.442695
      %v3027 = vpow.pop %v3026
      %v3028 = vmul.f32 %v2862, 1.442695
      %v3029 = vpow.pop %v3028
      %v3030 = vmul.f32 %v2863, 1.442695
      %v3031 = vpow.pop %v3030
      %v3032 = vmul.f32 %v2864, 1.442695
      %v3033 = vpow.pop %v3032
      %v3034 = vmul.f32 %v2865, 1.442695
      %v3035 = vpow.pop %v3034
      %v3036 = vmul.f32 %v2866, 1.442695
      %v3037 = vpow.pop %v3036
      %v3038 = vmul.f32 %v2867, 1.442695
      %v3039 = vpow.pop %v3038
      %v3040 = vmul.f32 %v2868, 1.442695
      %v3041 = vpow.pop %v3040
      %v3042 = vmul.f32 %v2869, 1.442695
      %v3043 = vpow.pop %v3042
      %v3044 = vmul.f32 %v2870, 1.442695
      %v3045 = vpow.pop %v3044
      %v3046 = vmul.f32 %v2871, 1.442695
      %v3047 = vpow.pop %v3046
      %v3048 = vmul.f32 %v2872, 1.442695
      %v3049 = vpow.pop %v3048
      %v3050 = vmul.f32 %v2873, 1.442695
      %v3051 = vpow.pop %v3050
      %v3052 = vmul.f32 %v2874, 1.442695
      %v3053 = vpow.pop %v3052
      %v3054 = vmul.f32 %v2875, 1.442695
      %v3055 = vpow.pop %v3054
      %v3056 = vmul.f32 %v2876, 1.442695
      %v3057 = vpow.pop %v3056
      %v3058 = vmul.f32 %v2877, 1.442695
      %v3059 = vpow.pop %v3058
      %v3060 = vmul.f32 %v2878, 1.442695
      %v3061 = vpow.pop %v3060
      %v3062 = vmul.f32 %v2879, 1.442695
      %v3063 = vpow.pop %v3062
      %v3064 = vmul.f32 %v2880, 1.442695
      %v3065 = vpow.pop %v3064
      %v3066 = vmul.f32 %v2881, 1.442695
      %v3067 = vpow.pop %v3066
      %v3068 = vmul.f32 %v2882, 1.442695
      %v3069 = vpow.pop %v3068
      %v3070 = vmul.f32 %v2883, 1.442695
      %v3071 = vpow.pop %v3070
      %v3072 = vmul.f32 %v2884, 1.442695
      %v3073 = vpow.pop %v3072
      %v3074 = vmul.f32 %v2885, 1.442695
      %v3075 = vpow.pop %v3074
      %v3076 = vmul.f32 %v2886, 1.442695
      %v3077 = vpow.pop %v3076
      %v3078 = vmul.f32 %v2887, 1.442695
      %v3079 = vpow.pop %v3078
      %v3080 = vmul.f32 %v2888, 1.442695
      %v3081 = vpow.pop %v3080
      %v3082 = vmul.f32 %v2889, 1.442695
      %v3083 = vpow.pop %v3082
      %v3084 = vmul.f32 %v2890, 1.442695
      %v3085 = vpow.pop %v3084
      %v3086 = vmul.f32 %v2891, 1.442695
      %v3087 = vpow.pop %v3086
      %v3088 = vmul.f32 %v2892, 1.442695
      %v3089 = vpow.pop %v3088
      %v3090 = vmul.f32 %v2893, 1.442695
      %v3091 = vpow.pop %v3090
      %v3092 = vmul.f32 %v2894, 1.442695
      %v3093 = vpow.pop %v3092
      %v3094 = vmul.f32 %v2895, 1.442695
      %v3095 = vpow.pop %v3094
      %v3096 = vmul.f32 %v2896, 1.442695
      %v3097 = vpow.pop %v3096
      %v3098 = vmul.f32 %v2897, 1.442695
      %v3099 = vpow.pop %v3098
      %v3100 = vmul.f32 %v2898, 1.442695
      %v3101 = vpow.pop %v3100
      %v3102 = vmul.f32 %v2899, 1.442695
      %v3103 = vpow.pop %v3102
      %v3104 = vmul.f32 %v2900, 1.442695
      %v3105 = vpow.pop %v3104
      %v3106 = vmul.f32 %v2901, 1.442695
      %v3107 = vpow.pop %v3106
      %v3108 = vmul.f32 %v2902, 1.442695
      %v3109 = vpow.pop %v3108
      %v3110 = vmul.f32 %v2903, 1.442695
      %v3111 = vpow.pop %v3110
      %v3112 = vmul.f32 %v2904, 1.442695
      %v3113 = vpow.pop %v3112
      %v3114 = vmul.f32 %v2905, 1.442695
      %v3115 = vpow.pop %v3114
      %v3116 = vmul.f32 %v2906, 1.442695
      %v3117 = vpow.pop %v3116
      %v3118 = vmul.f32 %v2907, 1.442695
      %v3119 = vpow.pop %v3118
      %v3120 = vmul.f32 %v2908, 1.442695
      %v3121 = vpow.pop %v3120
      %v3122 = vmul.f32 %v2909, 1.442695
      %v3123 = vpow.pop %v3122
      %v3124 = vmul.f32 %v2910, 1.442695
      %v3125 = vpow.pop %v3124
      %v3126 = vmul.f32 %v2911, 1.442695
      %v3127 = vpow.pop %v3126
      %v3128 = vmul.f32 %v2912, 1.442695
      %v3129 = vpow.pop %v3128
      %v3130 = vmul.f32 %v2913, 1.442695
      %v3131 = vpow.pop %v3130
      %v3132 = vmul.f32 %v2914, 1.442695
      %v3133 = vpow.pop %v3132
      %v3134 = vmul.f32 %v2915, 1.442695
      %v3135 = vpow.pop %v3134
      %v3136 = vmul.f32 %v2916, 1.442695
      %v3137 = vpow.pop %v3136
      %v3138 = vmul.f32 %v2917, 1.442695
      %v3139 = vpow.pop %v3138
      %v3140 = vmul.f32 %v2918, 1.442695
      %v3141 = vpow.pop %v3140
      %v3142 = vmul.f32 %v2919, 1.442695
      %v3143 = vpow.pop %v3142
      %v3144 = vmul.f32 %v2920, 1.442695
      %v3145 = vpow.pop %v3144
      %v3146 = vmul.f32 %v2921, 1.442695
      %v3147 = vpow.pop %v3146
      %v3148 = vmul.f32 %v2922, 1.442695
      %v3149 = vpow.pop %v3148
      %v3150 = vmul.f32 %v2923, 1.442695
      %v3151 = vpow.pop %v3150
      %v3152 = vmul.f32 %v2924, 1.442695
      %v3153 = vpow.pop %v3152
      %v3154 = vmul.f32 %v2925, 1.442695
      %v3155 = vpow.pop %v3154
      %v3156 = vmul.f32 %v2926, 1.442695
      %v3157 = vpow.pop %v3156
      %v3158 = vmul.f32 %v2927, 1.442695
      %v3159 = vpow.pop %v3158
      %v3160 = vmul.f32 %v2928, 1.442695
      %v3161 = vpow.pop %v3160
      %v3162 = vmul.f32 %v2929, 1.442695
      %v3163 = vpow.pop %v3162
      %v3164 = vmul.f32 %v2930, 1.442695
      %v3165 = vpow.pop %v3164
      %v3166 = vmul.f32 %v2931, 1.442695
      %v3167 = vpow.pop %v3166
      %v3168 = vmul.f32 %v2932, 1.442695
      %v3169 = vpow.pop %v3168
      %v3170 = vmul.f32 %v2933, 1.442695
      %v3171 = vpow.pop %v3170
      %v3172 = vmul.f32 %v2934, 1.442695
      %v3173 = vpow.pop %v3172
      %v3174 = vmul.f32 %v2935, 1.442695
      %v3175 = vpow.pop %v3174
      %v3176 = vmul.f32 %v2936, 1.442695
      %v3177 = vpow.pop %v3176
      %v3178 = vmul.f32 %v2937, 1.442695
      %v3179 = vpow.pop %v3178
      %v3180 = vmul.f32 %v2938, 1.442695
      %v3181 = vpow.pop %v3180
      %v3182 = vmul.f32 %v2939, 1.442695
      %v3183 = vpow.pop %v3182
      %v3184 = vmul.f32 %v2940, 1.442695
      %v3185 = vpow.pop %v3184
      %v3186 = vmul.f32 %v2941, 1.442695
      %v3187 = vpow.pop %v3186
      %v3188 = vmul.f32 %v2942, 1.442695
      %v3189 = vpow.pop %v3188
      %v3190 = vmul.f32 %v2943, 1.442695
      %v3191 = vpow.pop %v3190
      %v3192 = vmul.f32 %v2944, 1.442695
      %v3193 = vpow.pop %v3192
      %v3194 = vmul.f32 %v2945, 1.442695
      %v3195 = vpow.pop %v3194
      %v3196 = vmul.f32 %v2946, 1.442695
      %v3197 = vpow.pop %v3196
      %v3198 = vmul.f32 %v2947, 1.442695
      %v3199 = vpow.pop %v3198
      %v3200 = vmul.f32 %v2948, 1.442695
      %v3201 = vpow.pop %v3200
      %v3202 = vmul.f32 %v2949, 1.442695
      %v3203 = vpow.pop %v3202
      %v3204 = vmul.f32 %v2950, 1.442695
      %v3205 = vpow.pop %v3204
      %v3206 = vmul.f32 %v2951, 1.442695
      %v3207 = vpow.pop %v3206
      %v3208 = vadd.f32 %v2953, %v2955
      %v3209 = vadd.f32 %v3208, %v2957
      %v3210 = vadd.f32 %v3209, %v2959
      %3211 = vadd.xlane.f32.xlu0 %v3210
      %v3212 = vpop.xlane.xlu0 %3211
      %v3213 = vadd.f32 %v2961, %v2963
      %v3214 = vadd.f32 %v3213, %v2965
      %v3215 = vadd.f32 %v3214, %v2967
      %3216 = vadd.xlane.f32.xlu0 %v3215
      %v3217 = vpop.xlane.xlu0 %3216
      %v3218 = vadd.f32 %v2969, %v2971
      %v3219 = vadd.f32 %v3218, %v2973
      %v3220 = vadd.f32 %v3219, %v2975
      %3221 = vadd.xlane.f32.xlu0 %v3220
      %v3222 = vpop.xlane.xlu0 %3221
      %v3223 = vadd.f32 %v2977, %v2979
      %v3224 = vadd.f32 %v3223, %v2981
      %v3225 = vadd.f32 %v3224, %v2983
      %3226 = vadd.xlane.f32.xlu0 %v3225
      %v3227 = vpop.xlane.xlu0 %3226
      %v3228 = vadd.f32 %v2985, %v2987
      %v3229 = vadd.f32 %v3228, %v2989
      %v3230 = vadd.f32 %v3229, %v2991
      %3231 = vadd.xlane.f32.xlu0 %v3230
      %v3232 = vpop.xlane.xlu0 %3231
      %v3233 = vadd.f32 %v2993, %v2995
      %v3234 = vadd.f32 %v3233, %v2997
      %v3235 = vadd.f32 %v3234, %v2999
      %3236 = vadd.xlane.f32.xlu0 %v3235
      %v3237 = vpop.xlane.xlu0 %3236
      %v3238 = vadd.f32 %v3001, %v3003
      %v3239 = vadd.f32 %v3238, %v3005
      %v3240 = vadd.f32 %v3239, %v3007
      %3241 = vadd.xlane.f32.xlu0 %v3240
      %v3242 = vpop.xlane.xlu0 %3241
      %v3243 = vadd.f32 %v3009, %v3011
      %v3244 = vadd.f32 %v3243, %v3013
      %v3245 = vadd.f32 %v3244, %v3015
      %3246 = vadd.xlane.f32.xlu0 %v3245
      %v3247 = vpop.xlane.xlu0 %3246
      %v3248 = vadd.f32 %v3017, %v3019
      %v3249 = vadd.f32 %v3248, %v3021
      %v3250 = vadd.f32 %v3249, %v3023
      %3251 = vadd.xlane.f32.xlu0 %v3250
      %v3252 = vpop.xlane.xlu0 %3251
      %v3253 = vadd.f32 %v3025, %v3027
      %v3254 = vadd.f32 %v3253, %v3029
      %v3255 = vadd.f32 %v3254, %v3031
      %3256 = vadd.xlane.f32.xlu0 %v3255
      %v3257 = vpop.xlane.xlu0 %3256
      %v3258 = vadd.f32 %v3033, %v3035
      %v3259 = vadd.f32 %v3258, %v3037
      %v3260 = vadd.f32 %v3259, %v3039
      %3261 = vadd.xlane.f32.xlu0 %v3260
      %v3262 = vpop.xlane.xlu0 %3261
      %v3263 = vadd.f32 %v3041, %v3043
      %v3264 = vadd.f32 %v3263, %v3045
      %v3265 = vadd.f32 %v3264, %v3047
      %3266 = vadd.xlane.f32.xlu0 %v3265
      %v3267 = vpop.xlane.xlu0 %3266
      %v3268 = vadd.f32 %v3049, %v3051
      %v3269 = vadd.f32 %v3268, %v3053
      %v3270 = vadd.f32 %v3269, %v3055
      %3271 = vadd.xlane.f32.xlu0 %v3270
      %v3272 = vpop.xlane.xlu0 %3271
      %v3273 = vadd.f32 %v3057, %v3059
      %v3274 = vadd.f32 %v3273, %v3061
      %v3275 = vadd.f32 %v3274, %v3063
      %3276 = vadd.xlane.f32.xlu0 %v3275
      %v3277 = vpop.xlane.xlu0 %3276
      %v3278 = vadd.f32 %v3065, %v3067
      %v3279 = vadd.f32 %v3278, %v3069
      %v3280 = vadd.f32 %v3279, %v3071
      %3281 = vadd.xlane.f32.xlu0 %v3280
      %v3282 = vpop.xlane.xlu0 %3281
      %v3283 = vadd.f32 %v3073, %v3075
      %v3284 = vadd.f32 %v3283, %v3077
      %v3285 = vadd.f32 %v3284, %v3079
      %3286 = vadd.xlane.f32.xlu0 %v3285
      %v3287 = vpop.xlane.xlu0 %3286
      %v3288 = vadd.f32 %v3081, %v3083
      %v3289 = vadd.f32 %v3288, %v3085
      %v3290 = vadd.f32 %v3289, %v3087
      %3291 = vadd.xlane.f32.xlu0 %v3290
      %v3292 = vpop.xlane.xlu0 %3291
      %v3293 = vadd.f32 %v3089, %v3091
      %v3294 = vadd.f32 %v3293, %v3093
      %v3295 = vadd.f32 %v3294, %v3095
      %3296 = vadd.xlane.f32.xlu0 %v3295
      %v3297 = vpop.xlane.xlu0 %3296
      %v3298 = vadd.f32 %v3097, %v3099
      %v3299 = vadd.f32 %v3298, %v3101
      %v3300 = vadd.f32 %v3299, %v3103
      %3301 = vadd.xlane.f32.xlu0 %v3300
      %v3302 = vpop.xlane.xlu0 %3301
      %v3303 = vadd.f32 %v3105, %v3107
      %v3304 = vadd.f32 %v3303, %v3109
      %v3305 = vadd.f32 %v3304, %v3111
      %3306 = vadd.xlane.f32.xlu0 %v3305
      %v3307 = vpop.xlane.xlu0 %3306
      %v3308 = vadd.f32 %v3113, %v3115
      %v3309 = vadd.f32 %v3308, %v3117
      %v3310 = vadd.f32 %v3309, %v3119
      %3311 = vadd.xlane.f32.xlu0 %v3310
      %v3312 = vpop.xlane.xlu0 %3311
      %v3313 = vadd.f32 %v3121, %v3123
      %v3314 = vadd.f32 %v3313, %v3125
      %v3315 = vadd.f32 %v3314, %v3127
      %3316 = vadd.xlane.f32.xlu0 %v3315
      %v3317 = vpop.xlane.xlu0 %3316
      %v3318 = vadd.f32 %v3129, %v3131
      %v3319 = vadd.f32 %v3318, %v3133
      %v3320 = vadd.f32 %v3319, %v3135
      %3321 = vadd.xlane.f32.xlu0 %v3320
      %v3322 = vpop.xlane.xlu0 %3321
      %v3323 = vadd.f32 %v3137, %v3139
      %v3324 = vadd.f32 %v3323, %v3141
      %v3325 = vadd.f32 %v3324, %v3143
      %3326 = vadd.xlane.f32.xlu0 %v3325
      %v3327 = vpop.xlane.xlu0 %3326
      %v3328 = vadd.f32 %v3145, %v3147
      %v3329 = vadd.f32 %v3328, %v3149
      %v3330 = vadd.f32 %v3329, %v3151
      %3331 = vadd.xlane.f32.xlu0 %v3330
      %v3332 = vpop.xlane.xlu0 %3331
      %v3333 = vadd.f32 %v3153, %v3155
      %v3334 = vadd.f32 %v3333, %v3157
      %v3335 = vadd.f32 %v3334, %v3159
      %3336 = vadd.xlane.f32.xlu0 %v3335
      %v3337 = vpop.xlane.xlu0 %3336
      %v3338 = vadd.f32 %v3161, %v3163
      %v3339 = vadd.f32 %v3338, %v3165
      %v3340 = vadd.f32 %v3339, %v3167
      %3341 = vadd.xlane.f32.xlu0 %v3340
      %v3342 = vpop.xlane.xlu0 %3341
      %v3343 = vadd.f32 %v3169, %v3171
      %v3344 = vadd.f32 %v3343, %v3173
      %v3345 = vadd.f32 %v3344, %v3175
      %3346 = vadd.xlane.f32.xlu0 %v3345
      %v3347 = vpop.xlane.xlu0 %3346
      %v3348 = vadd.f32 %v3177, %v3179
      %v3349 = vadd.f32 %v3348, %v3181
      %v3350 = vadd.f32 %v3349, %v3183
      %3351 = vadd.xlane.f32.xlu0 %v3350
      %v3352 = vpop.xlane.xlu0 %3351
      %v3353 = vadd.f32 %v3185, %v3187
      %v3354 = vadd.f32 %v3353, %v3189
      %v3355 = vadd.f32 %v3354, %v3191
      %3356 = vadd.xlane.f32.xlu0 %v3355
      %v3357 = vpop.xlane.xlu0 %3356
      %v3358 = vadd.f32 %v3193, %v3195
      %v3359 = vadd.f32 %v3358, %v3197
      %v3360 = vadd.f32 %v3359, %v3199
      %3361 = vadd.xlane.f32.xlu0 %v3360
      %v3362 = vpop.xlane.xlu0 %3361
      %v3363 = vadd.f32 %v3201, %v3203
      %v3364 = vadd.f32 %v3363, %v3205
      %v3365 = vadd.f32 %v3364, %v3207
      %3366 = vadd.xlane.f32.xlu0 %v3365
      %v3367 = vpop.xlane.xlu0 %3366
      %v3368 = vpack.c.bf16 %v2961, %v2953
      %v3369 = vpack.c.bf16 %v2963, %v2955
      %v3370 = vpack.c.bf16 %v2965, %v2957
      %v3371 = vpack.c.bf16 %v2967, %v2959
      %v3372 = vpack.c.bf16 %v2977, %v2969
      %v3373 = vpack.c.bf16 %v2979, %v2971
      %v3374 = vpack.c.bf16 %v2981, %v2973
      %v3375 = vpack.c.bf16 %v2983, %v2975
      %v3376 = vpack.c.bf16 %v2993, %v2985
      %v3377 = vpack.c.bf16 %v2995, %v2987
      %v3378 = vpack.c.bf16 %v2997, %v2989
      %v3379 = vpack.c.bf16 %v2999, %v2991
      %v3380 = vpack.c.bf16 %v3009, %v3001
      %v3381 = vpack.c.bf16 %v3011, %v3003
      %v3382 = vpack.c.bf16 %v3013, %v3005
      %v3383 = vpack.c.bf16 %v3015, %v3007
      %v3384 = vpack.c.bf16 %v3025, %v3017
      %v3385 = vpack.c.bf16 %v3027, %v3019
      %v3386 = vpack.c.bf16 %v3029, %v3021
      %v3387 = vpack.c.bf16 %v3031, %v3023
      %v3388 = vpack.c.bf16 %v3041, %v3033
      %v3389 = vpack.c.bf16 %v3043, %v3035
      %v3390 = vpack.c.bf16 %v3045, %v3037
      %v3391 = vpack.c.bf16 %v3047, %v3039
      %v3392 = vpack.c.bf16 %v3057, %v3049
      %v3393 = vpack.c.bf16 %v3059, %v3051
      %v3394 = vpack.c.bf16 %v3061, %v3053
      %v3395 = vpack.c.bf16 %v3063, %v3055
      %v3396 = vpack.c.bf16 %v3073, %v3065
      %v3397 = vpack.c.bf16 %v3075, %v3067
      %v3398 = vpack.c.bf16 %v3077, %v3069
      %v3399 = vpack.c.bf16 %v3079, %v3071
      %v3400 = vpack.c.bf16 %v3089, %v3081
      %v3401 = vpack.c.bf16 %v3091, %v3083
      %v3402 = vpack.c.bf16 %v3093, %v3085
      %v3403 = vpack.c.bf16 %v3095, %v3087
      %v3404 = vpack.c.bf16 %v3105, %v3097
      %v3405 = vpack.c.bf16 %v3107, %v3099
      %v3406 = vpack.c.bf16 %v3109, %v3101
      %v3407 = vpack.c.bf16 %v3111, %v3103
      %v3408 = vpack.c.bf16 %v3121, %v3113
      %v3409 = vpack.c.bf16 %v3123, %v3115
      %v3410 = vpack.c.bf16 %v3125, %v3117
      %v3411 = vpack.c.bf16 %v3127, %v3119
      %v3412 = vpack.c.bf16 %v3137, %v3129
      %v3413 = vpack.c.bf16 %v3139, %v3131
      %v3414 = vpack.c.bf16 %v3141, %v3133
      %v3415 = vpack.c.bf16 %v3143, %v3135
      %v3416 = vpack.c.bf16 %v3153, %v3145
      %v3417 = vpack.c.bf16 %v3155, %v3147
      %v3418 = vpack.c.bf16 %v3157, %v3149
      %v3419 = vpack.c.bf16 %v3159, %v3151
      %v3420 = vpack.c.bf16 %v3169, %v3161
      %v3421 = vpack.c.bf16 %v3171, %v3163
      %v3422 = vpack.c.bf16 %v3173, %v3165
      %v3423 = vpack.c.bf16 %v3175, %v3167
      %v3424 = vpack.c.bf16 %v3185, %v3177
      %v3425 = vpack.c.bf16 %v3187, %v3179
      %v3426 = vpack.c.bf16 %v3189, %v3181
      %v3427 = vpack.c.bf16 %v3191, %v3183
      %v3428 = vpack.c.bf16 %v3201, %v3193
      %v3429 = vpack.c.bf16 %v3203, %v3195
      %v3430 = vpack.c.bf16 %v3205, %v3197
      %v3431 = vpack.c.bf16 %v3207, %v3199
      %v3432 = vld [vmem:[#allocation4] sm:$0xff]
      %v3433 = vld [vmem:[#allocation4 + $0x8] sm:$0xff]
      %v3434 = vld [vmem:[#allocation4 + $0x10] sm:$0xff]
      %v3435 = vld [vmem:[#allocation4 + $0x18] sm:$0xff]
      %v3436 = vld [vmem:[#allocation4 + $0x20] sm:$0xff]
      %v3437 = vld [vmem:[#allocation4 + $0x28] sm:$0xff]
      %v3438 = vld [vmem:[#allocation4 + $0x30] sm:$0xff]
      %v3439 = vld [vmem:[#allocation4 + $0x38] sm:$0xff]
      %v3440 = vld [vmem:[#allocation4 + $0x40] sm:$0xff]
      %v3441 = vld [vmem:[#allocation4 + $0x48] sm:$0xff]
      %v3442 = vld [vmem:[#allocation4 + $0x50] sm:$0xff]
      %v3443 = vld [vmem:[#allocation4 + $0x58] sm:$0xff]
      %v3444 = vld [vmem:[#allocation4 + $0x60] sm:$0xff]
      %v3445 = vld [vmem:[#allocation4 + $0x68] sm:$0xff]
      %v3446 = vld [vmem:[#allocation4 + $0x70] sm:$0xff]
      %v3447 = vld [vmem:[#allocation4 + $0x78] sm:$0xff]
      %v3448 = vld [vmem:[#allocation4 + $0x80] sm:$0xff]
      %v3449 = vld [vmem:[#allocation4 + $0x88] sm:$0xff]
      %v3450 = vld [vmem:[#allocation4 + $0x90] sm:$0xff]
      %v3451 = vld [vmem:[#allocation4 + $0x98] sm:$0xff]
      %v3452 = vld [vmem:[#allocation4 + $0xa0] sm:$0xff]
      %v3453 = vld [vmem:[#allocation4 + $0xa8] sm:$0xff]
      %v3454 = vld [vmem:[#allocation4 + $0xb0] sm:$0xff]
      %v3455 = vld [vmem:[#allocation4 + $0xb8] sm:$0xff]
      %v3456 = vld [vmem:[#allocation4 + $0xc0] sm:$0xff]
      %v3457 = vld [vmem:[#allocation4 + $0xc8] sm:$0xff]
      %v3458 = vld [vmem:[#allocation4 + $0xd0] sm:$0xff]
      %v3459 = vld [vmem:[#allocation4 + $0xd8] sm:$0xff]
      %v3460 = vld [vmem:[#allocation4 + $0xe0] sm:$0xff]
      %v3461 = vld [vmem:[#allocation4 + $0xe8] sm:$0xff]
      %v3462 = vld [vmem:[#allocation4 + $0xf0] sm:$0xff]
      %v3463 = vld [vmem:[#allocation4 + $0xf8] sm:$0xff]
      %3464 = vmatprep.subr.bf16.mxu0 0
      %3465 = vmatpush1.bf16.msra.mxu0 %v3432
      %3466 = vmatprep.subr.bf16.mxu0 0
      %3467 = vmatpush1.bf16.msra.mxu0 %v3433
      %3468 = vmatprep.subr.bf16.mxu0 0
      %3469 = vmatpush1.bf16.msra.mxu0 %v3434
      %3470 = vmatprep.subr.bf16.mxu0 0
      %3471 = vmatpush1.bf16.msra.mxu0 %v3435
      %3472 = vmatprep.subr.bf16.mxu0 0
      %3473 = vmatpush1.bf16.msra.mxu0 %v3436
      %3474 = vmatprep.subr.bf16.mxu0 0
      %3475 = vmatpush1.bf16.msra.mxu0 %v3437
      %3476 = vmatprep.subr.bf16.mxu0 0
      %3477 = vmatpush1.bf16.msra.mxu0 %v3438
      %3478 = vmatprep.subr.bf16.mxu0 0
      %3479 = vmatpush1.bf16.msra.mxu0 %v3439
      %3480 = vmatprep.subr.bf16.mxu0 0
      %3481 = vmatpush1.bf16.msra.mxu0 %v3440
      %3482 = vmatprep.subr.bf16.mxu0 0
      %3483 = vmatpush1.bf16.msra.mxu0 %v3441
      %3484 = vmatprep.subr.bf16.mxu0 0
      %3485 = vmatpush1.bf16.msra.mxu0 %v3442
      %3486 = vmatprep.subr.bf16.mxu0 0
      %3487 = vmatpush1.bf16.msra.mxu0 %v3443
      %3488 = vmatprep.subr.bf16.mxu0 0
      %3489 = vmatpush1.bf16.msra.mxu0 %v3444
      %3490 = vmatprep.subr.bf16.mxu0 0
      %3491 = vmatpush1.bf16.msra.mxu0 %v3445
      %3492 = vmatprep.subr.bf16.mxu0 0
      %3493 = vmatpush1.bf16.msra.mxu0 %v3446
      %3494 = vmatprep.subr.bf16.mxu0 0
      %3495 = vmatpush1.bf16.msra.mxu0 %v3447
      %3496 = vmatprep.mubr.bf16.mxu0 %v3369
      %3497 = vmatmul.mubr.bf16.gmra.mrb[0].mxu0 %v3368
      %v3498 = vpop.f32.mrb[0].mxu0
      %v3499 = vadd.f32 0.0, %v3498
      %v3500 = vpop.f32.mrb[0].mxu0
      %v3501 = vpop.f32.mrb[0].mxu0
      %v3502 = vadd.f32 0.0, %v3501
      %v3503 = vpop.f32.mrb[0].mxu0
      %3504 = vmatprep.mubr.bf16.mxu0 %v3373
      %3505 = vmatmul.mubr.bf16.gmra.mrb[0].mxu0 %v3372
      %v3506 = vpop.f32.mrb[0].mxu0
      %v3507 = vadd.f32 0.0, %v3506
      %v3508 = vpop.f32.mrb[0].mxu0
      %v3509 = vpop.f32.mrb[0].mxu0
      %v3510 = vadd.f32 0.0, %v3509
      %v3511 = vpop.f32.mrb[0].mxu0
      %3512 = vmatprep.mubr.bf16.mxu0 %v3377
      %3513 = vmatmul.mubr.bf16.gmra.mrb[0].mxu0 %v3376
      %v3514 = vpop.f32.mrb[0].mxu0
      %v3515 = vadd.f32 0.0, %v3514
      %v3516 = vpop.f32.mrb[0].mxu0
      %v3517 = vpop.f32.mrb[0].mxu0
      %v3518 = vadd.f32 0.0, %v3517
      %v3519 = vpop.f32.mrb[0].mxu0
      %3520 = vmatprep.mubr.bf16.mxu0 %v3381
      %3521 = vmatmul.mubr.bf16.gmra.mrb[0].mxu0 %v3380
      %v3522 = vpop.f32.mrb[0].mxu0
      %v3523 = vadd.f32 0.0, %v3522
      %v3524 = vpop.f32.mrb[0].mxu0
      %v3525 = vpop.f32.mrb[0].mxu0
      %v3526 = vadd.f32 0.0, %v3525
      %v3527 = vpop.f32.mrb[0].mxu0
      %3528 = vmatprep.mubr.bf16.mxu0 %v3385
      %3529 = vmatmul.mubr.bf16.gmra.mrb[0].mxu0 %v3384
      %v3530 = vpop.f32.mrb[0].mxu0
      %v3531 = vadd.f32 0.0, %v3530
      %v3532 = vpop.f32.mrb[0].mxu0
      %v3533 = vpop.f32.mrb[0].mxu0
      %v3534 = vadd.f32 0.0, %v3533
      %v3535 = vpop.f32.mrb[0].mxu0
      %3536 = vmatprep.mubr.bf16.mxu0 %v3389
      %3537 = vmatmul.mubr.bf16.gmra.mrb[0].mxu0 %v3388
      %v3538 = vpop.f32.mrb[0].mxu0
      %v3539 = vadd.f32 0.0, %v3538
      %v3540 = vpop.f32.mrb[0].mxu0
      %v3541 = vpop.f32.mrb[0].mxu0
      %v3542 = vadd.f32 0.0, %v3541
      %v3543 = vpop.f32.mrb[0].mxu0
      %3544 = vmatprep.mubr.bf16.mxu0 %v3393
      %3545 = vmatmul.mubr.bf16.gmra.mrb[0].mxu0 %v3392
      %v3546 = vpop.f32.mrb[0].mxu0
      %v3547 = vadd.f32 0.0, %v3546
      %v3548 = vpop.f32.mrb[0].mxu0
      %v3549 = vpop.f32.mrb[0].mxu0
      %v3550 = vadd.f32 0.0, %v3549
      %v3551 = vpop.f32.mrb[0].mxu0
      %3552 = vmatprep.mubr.bf16.mxu0 %v3397
      %3553 = vmatmul.mubr.bf16.gmra.mrb[0].mxu0 %v3396
      %v3554 = vpop.f32.mrb[0].mxu0
      %v3555 = vadd.f32 0.0, %v3554
      %v3556 = vpop.f32.mrb[0].mxu0
      %v3557 = vpop.f32.mrb[0].mxu0
      %v3558 = vadd.f32 0.0, %v3557
      %v3559 = vpop.f32.mrb[0].mxu0
      %3560 = vmatprep.mubr.bf16.mxu0 %v3401
      %3561 = vmatmul.mubr.bf16.gmra.mrb[0].mxu0 %v3400
      %v3562 = vpop.f32.mrb[0].mxu0
      %v3563 = vadd.f32 0.0, %v3562
      %v3564 = vpop.f32.mrb[0].mxu0
      %v3565 = vpop.f32.mrb[0].mxu0
      %v3566 = vadd.f32 0.0, %v3565
      %v3567 = vpop.f32.mrb[0].mxu0
      %3568 = vmatprep.mubr.bf16.mxu0 %v3405
      %3569 = vmatmul.mubr.bf16.gmra.mrb[0].mxu0 %v3404
      %v3570 = vpop.f32.mrb[0].mxu0
      %v3571 = vadd.f32 0.0, %v3570
      %v3572 = vpop.f32.mrb[0].mxu0
      %v3573 = vpop.f32.mrb[0].mxu0
      %v3574 = vadd.f32 0.0, %v3573
      %v3575 = vpop.f32.mrb[0].mxu0
      %3576 = vmatprep.mubr.bf16.mxu0 %v3409
      %3577 = vmatmul.mubr.bf16.gmra.mrb[0].mxu0 %v3408
      %v3578 = vpop.f32.mrb[0].mxu0
      %v3579 = vadd.f32 0.0, %v3578
      %v3580 = vpop.f32.mrb[0].mxu0
      %v3581 = vpop.f32.mrb[0].mxu0
      %v3582 = vadd.f32 0.0, %v3581
      %v3583 = vpop.f32.mrb[0].mxu0
      %3584 = vmatprep.mubr.bf16.mxu0 %v3413
      %3585 = vmatmul.mubr.bf16.gmra.mrb[0].mxu0 %v3412
      %v3586 = vpop.f32.mrb[0].mxu0
      %v3587 = vadd.f32 0.0, %v3586
      %v3588 = vpop.f32.mrb[0].mxu0
      %v3589 = vpop.f32.mrb[0].mxu0
      %v3590 = vadd.f32 0.0, %v3589
      %v3591 = vpop.f32.mrb[0].mxu0
      %3592 = vmatprep.mubr.bf16.mxu0 %v3417
      %3593 = vmatmul.mubr.bf16.gmra.mrb[0].mxu0 %v3416
      %v3594 = vpop.f32.mrb[0].mxu0
      %v3595 = vadd.f32 0.0, %v3594
      %v3596 = vpop.f32.mrb[0].mxu0
      %v3597 = vpop.f32.mrb[0].mxu0
      %v3598 = vadd.f32 0.0, %v3597
      %v3599 = vpop.f32.mrb[0].mxu0
      %3600 = vmatprep.mubr.bf16.mxu0 %v3421
      %3601 = vmatmul.mubr.bf16.gmra.mrb[0].mxu0 %v3420
      %v3602 = vpop.f32.mrb[0].mxu0
      %v3603 = vadd.f32 0.0, %v3602
      %v3604 = vpop.f32.mrb[0].mxu0
      %v3605 = vpop.f32.mrb[0].mxu0
      %v3606 = vadd.f32 0.0, %v3605
      %v3607 = vpop.f32.mrb[0].mxu0
      %3608 = vmatprep.mubr.bf16.mxu0 %v3425
      %3609 = vmatmul.mubr.bf16.gmra.mrb[0].mxu0 %v3424
      %v3610 = vpop.f32.mrb[0].mxu0
      %v3611 = vadd.f32 0.0, %v3610
      %v3612 = vpop.f32.mrb[0].mxu0
      %v3613 = vpop.f32.mrb[0].mxu0
      %v3614 = vadd.f32 0.0, %v3613
      %v3615 = vpop.f32.mrb[0].mxu0
      %3616 = vmatprep.mubr.bf16.mxu0 %v3429
      %3617 = vmatmul.mubr.bf16.gmra.mrb[0].mxu0 %v3428
      %v3618 = vpop.f32.mrb[0].mxu0
      %v3619 = vadd.f32 0.0, %v3618
      %v3620 = vpop.f32.mrb[0].mxu0
      %v3621 = vpop.f32.mrb[0].mxu0
      %v3622 = vadd.f32 0.0, %v3621
      %v3623 = vpop.f32.mrb[0].mxu0
      %3624 = vdwg.mxu0
      %3625 = vmatprep.subr.bf16.mxu0 0
      %3626 = vmatpush1.bf16.msra.mxu0 %v3448
      %3627 = vmatprep.subr.bf16.mxu0 0
      %3628 = vmatpush1.bf16.msra.mxu0 %v3449
      %3629 = vmatprep.subr.bf16.mxu0 0
      %3630 = vmatpush1.bf16.msra.mxu0 %v3450
      %3631 = vmatprep.subr.bf16.mxu0 0
      %3632 = vmatpush1.bf16.msra.mxu0 %v3451
      %3633 = vmatprep.subr.bf16.mxu0 0
      %3634 = vmatpush1.bf16.msra.mxu0 %v3452
      %3635 = vmatprep.subr.bf16.mxu0 0
      %3636 = vmatpush1.bf16.msra.mxu0 %v3453
      %3637 = vmatprep.subr.bf16.mxu0 0
      %3638 = vmatpush1.bf16.msra.mxu0 %v3454
      %3639 = vmatprep.subr.bf16.mxu0 0
      %3640 = vmatpush1.bf16.msra.mxu0 %v3455
      %3641 = vmatprep.subr.bf16.mxu0 0
      %3642 = vmatpush1.bf16.msra.mxu0 %v3456
      %3643 = vmatprep.subr.bf16.mxu0 0
      %3644 = vmatpush1.bf16.msra.mxu0 %v3457
      %3645 = vmatprep.subr.bf16.mxu0 0
      %3646 = vmatpush1.bf16.msra.mxu0 %v3458
      %3647 = vmatprep.subr.bf16.mxu0 0
      %3648 = vmatpush1.bf16.msra.mxu0 %v3459
      %3649 = vmatprep.subr.bf16.mxu0 0
      %3650 = vmatpush1.bf16.msra.mxu0 %v3460
      %3651 = vmatprep.subr.bf16.mxu0 0
      %3652 = vmatpush1.bf16.msra.mxu0 %v3461
      %3653 = vmatprep.subr.bf16.mxu0 0
      %3654 = vmatpush1.bf16.msra.mxu0 %v3462
      %3655 = vmatprep.subr.bf16.mxu0 0
      %3656 = vmatpush1.bf16.msra.mxu0 %v3463
      %3657 = vmatprep.mubr.bf16.mxu0 %v3371
      %3658 = vmatmul.mubr.bf16.gmra.mrb[0].mxu0 %v3370
      %v3659 = vpop.f32.mrb[0].mxu0
      %v3660 = vadd.f32 %v3499, %v3659
      %v3661 = vpop.f32.mrb[0].mxu0
      %v3662 = vpop.f32.mrb[0].mxu0
      %v3663 = vadd.f32 %v3502, %v3662
      %v3664 = vpop.f32.mrb[0].mxu0
      %3665 = vmatprep.mubr.bf16.mxu0 %v3375
      %3666 = vmatmul.mubr.bf16.gmra.mrb[0].mxu0 %v3374
      %v3667 = vpop.f32.mrb[0].mxu0
      %v3668 = vadd.f32 %v3507, %v3667
      %v3669 = vpop.f32.mrb[0].mxu0
      %v3670 = vpop.f32.mrb[0].mxu0
      %v3671 = vadd.f32 %v3510, %v3670
      %v3672 = vpop.f32.mrb[0].mxu0
      %3673 = vmatprep.mubr.bf16.mxu0 %v3379
      %3674 = vmatmul.mubr.bf16.gmra.mrb[0].mxu0 %v3378
      %v3675 = vpop.f32.mrb[0].mxu0
      %v3676 = vadd.f32 %v3515, %v3675
      %v3677 = vpop.f32.mrb[0].mxu0
      %v3678 = vpop.f32.mrb[0].mxu0
      %v3679 = vadd.f32 %v3518, %v3678
      %v3680 = vpop.f32.mrb[0].mxu0
      %3681 = vmatprep.mubr.bf16.mxu0 %v3383
      %3682 = vmatmul.mubr.bf16.gmra.mrb[0].mxu0 %v3382
      %v3683 = vpop.f32.mrb[0].mxu0
      %v3684 = vadd.f32 %v3523, %v3683
      %v3685 = vpop.f32.mrb[0].mxu0
      %v3686 = vpop.f32.mrb[0].mxu0
      %v3687 = vadd.f32 %v3526, %v3686
      %v3688 = vpop.f32.mrb[0].mxu0
      %3689 = vmatprep.mubr.bf16.mxu0 %v3387
      %3690 = vmatmul.mubr.bf16.gmra.mrb[0].mxu0 %v3386
      %v3691 = vpop.f32.mrb[0].mxu0
      %v3692 = vadd.f32 %v3531, %v3691
      %v3693 = vpop.f32.mrb[0].mxu0
      %v3694 = vpop.f32.mrb[0].mxu0
      %v3695 = vadd.f32 %v3534, %v3694
      %v3696 = vpop.f32.mrb[0].mxu0
      %3697 = vmatprep.mubr.bf16.mxu0 %v3391
      %3698 = vmatmul.mubr.bf16.gmra.mrb[0].mxu0 %v3390
      %v3699 = vpop.f32.mrb[0].mxu0
      %v3700 = vadd.f32 %v3539, %v3699
      %v3701 = vpop.f32.mrb[0].mxu0
      %v3702 = vpop.f32.mrb[0].mxu0
      %v3703 = vadd.f32 %v3542, %v3702
      %v3704 = vpop.f32.mrb[0].mxu0
      %3705 = vmatprep.mubr.bf16.mxu0 %v3395
      %3706 = vmatmul.mubr.bf16.gmra.mrb[0].mxu0 %v3394
      %v3707 = vpop.f32.mrb[0].mxu0
      %v3708 = vadd.f32 %v3547, %v3707
      %v3709 = vpop.f32.mrb[0].mxu0
      %v3710 = vpop.f32.mrb[0].mxu0
      %v3711 = vadd.f32 %v3550, %v3710
      %v3712 = vpop.f32.mrb[0].mxu0
      %3713 = vmatprep.mubr.bf16.mxu0 %v3399
      %3714 = vmatmul.mubr.bf16.gmra.mrb[0].mxu0 %v3398
      %v3715 = vpop.f32.mrb[0].mxu0
      %v3716 = vadd.f32 %v3555, %v3715
      %v3717 = vpop.f32.mrb[0].mxu0
      %v3718 = vpop.f32.mrb[0].mxu0
      %v3719 = vadd.f32 %v3558, %v3718
      %v3720 = vpop.f32.mrb[0].mxu0
      %3721 = vmatprep.mubr.bf16.mxu0 %v3403
      %3722 = vmatmul.mubr.bf16.gmra.mrb[0].mxu0 %v3402
      %v3723 = vpop.f32.mrb[0].mxu0
      %v3724 = vadd.f32 %v3563, %v3723
      %v3725 = vpop.f32.mrb[0].mxu0
      %v3726 = vpop.f32.mrb[0].mxu0
      %v3727 = vadd.f32 %v3566, %v3726
      %v3728 = vpop.f32.mrb[0].mxu0
      %3729 = vmatprep.mubr.bf16.mxu0 %v3407
      %3730 = vmatmul.mubr.bf16.gmra.mrb[0].mxu0 %v3406
      %v3731 = vpop.f32.mrb[0].mxu0
      %v3732 = vadd.f32 %v3571, %v3731
      %v3733 = vpop.f32.mrb[0].mxu0
      %v3734 = vpop.f32.mrb[0].mxu0
      %v3735 = vadd.f32 %v3574, %v3734
      %v3736 = vpop.f32.mrb[0].mxu0
      %3737 = vmatprep.mubr.bf16.mxu0 %v3411
      %3738 = vmatmul.mubr.bf16.gmra.mrb[0].mxu0 %v3410
      %v3739 = vpop.f32.mrb[0].mxu0
      %v3740 = vadd.f32 %v3579, %v3739
      %v3741 = vpop.f32.mrb[0].mxu0
      %v3742 = vpop.f32.mrb[0].mxu0
      %v3743 = vadd.f32 %v3582, %v3742
      %v3744 = vpop.f32.mrb[0].mxu0
      %3745 = vmatprep.mubr.bf16.mxu0 %v3415
      %3746 = vmatmul.mubr.bf16.gmra.mrb[0].mxu0 %v3414
      %v3747 = vpop.f32.mrb[0].mxu0
      %v3748 = vadd.f32 %v3587, %v3747
      %v3749 = vpop.f32.mrb[0].mxu0
      %v3750 = vpop.f32.mrb[0].mxu0
      %v3751 = vadd.f32 %v3590, %v3750
      %v3752 = vpop.f32.mrb[0].mxu0
      %3753 = vmatprep.mubr.bf16.mxu0 %v3419
      %3754 = vmatmul.mubr.bf16.gmra.mrb[0].mxu0 %v3418
      %v3755 = vpop.f32.mrb[0].mxu0
      %v3756 = vadd.f32 %v3595, %v3755
      %v3757 = vpop.f32.mrb[0].mxu0
      %v3758 = vpop.f32.mrb[0].mxu0
      %v3759 = vadd.f32 %v3598, %v3758
      %v3760 = vpop.f32.mrb[0].mxu0
      %3761 = vmatprep.mubr.bf16.mxu0 %v3423
      %3762 = vmatmul.mubr.bf16.gmra.mrb[0].mxu0 %v3422
      %v3763 = vpop.f32.mrb[0].mxu0
      %v3764 = vadd.f32 %v3603, %v3763
      %v3765 = vpop.f32.mrb[0].mxu0
      %v3766 = vpop.f32.mrb[0].mxu0
      %v3767 = vadd.f32 %v3606, %v3766
      %v3768 = vpop.f32.mrb[0].mxu0
      %3769 = vmatprep.mubr.bf16.mxu0 %v3427
      %3770 = vmatmul.mubr.bf16.gmra.mrb[0].mxu0 %v3426
      %v3771 = vpop.f32.mrb[0].mxu0
      %v3772 = vadd.f32 %v3611, %v3771
      %v3773 = vpop.f32.mrb[0].mxu0
      %v3774 = vpop.f32.mrb[0].mxu0
      %v3775 = vadd.f32 %v3614, %v3774
      %v3776 = vpop.f32.mrb[0].mxu0
      %3777 = vmatprep.mubr.bf16.mxu0 %v3431
      %3778 = vmatmul.mubr.bf16.gmra.mrb[0].mxu0 %v3430
      %v3779 = vpop.f32.mrb[0].mxu0
      %v3780 = vadd.f32 %v3619, %v3779
      %v3781 = vpop.f32.mrb[0].mxu0
      %v3782 = vpop.f32.mrb[0].mxu0
      %v3783 = vadd.f32 %v3622, %v3782
      %v3784 = vpop.f32.mrb[0].mxu0
      %3785 = vdwg.mxu0
      %v3786 = vrcp.pop %v3212
      %v3787 = vmul.f32 1.0, %v3786
      %v3788 = vrcp.pop %v3217
      %v3789 = vmul.f32 1.0, %v3788
      %v3790 = vrcp.pop %v3222
      %v3791 = vmul.f32 1.0, %v3790
      %v3792 = vrcp.pop %v3227
      %v3793 = vmul.f32 1.0, %v3792
      %v3794 = vrcp.pop %v3232
      %v3795 = vmul.f32 1.0, %v3794
      %v3796 = vrcp.pop %v3237
      %v3797 = vmul.f32 1.0, %v3796
      %v3798 = vrcp.pop %v3242
      %v3799 = vmul.f32 1.0, %v3798
      %v3800 = vrcp.pop %v3247
      %v3801 = vmul.f32 1.0, %v3800
      %v3802 = vrcp.pop %v3252
      %v3803 = vmul.f32 1.0, %v3802
      %v3804 = vrcp.pop %v3257
      %v3805 = vmul.f32 1.0, %v3804
      %v3806 = vrcp.pop %v3262
      %v3807 = vmul.f32 1.0, %v3806
      %v3808 = vrcp.pop %v3267
      %v3809 = vmul.f32 1.0, %v3808
      %v3810 = vrcp.pop %v3272
      %v3811 = vmul.f32 1.0, %v3810
      %v3812 = vrcp.pop %v3277
      %v3813 = vmul.f32 1.0, %v3812
      %v3814 = vrcp.pop %v3282
      %v3815 = vmul.f32 1.0, %v3814
      %v3816 = vrcp.pop %v3287
      %v3817 = vmul.f32 1.0, %v3816
      %v3818 = vrcp.pop %v3292
      %v3819 = vmul.f32 1.0, %v3818
      %v3820 = vrcp.pop %v3297
      %v3821 = vmul.f32 1.0, %v3820
      %v3822 = vrcp.pop %v3302
      %v3823 = vmul.f32 1.0, %v3822
      %v3824 = vrcp.pop %v3307
      %v3825 = vmul.f32 1.0, %v3824
      %v3826 = vrcp.pop %v3312
      %v3827 = vmul.f32 1.0, %v3826
      %v3828 = vrcp.pop %v3317
      %v3829 = vmul.f32 1.0, %v3828
      %v3830 = vrcp.pop %v3322
      %v3831 = vmul.f32 1.0, %v3830
      %v3832 = vrcp.pop %v3327
      %v3833 = vmul.f32 1.0, %v3832
      %v3834 = vrcp.pop %v3332
      %v3835 = vmul.f32 1.0, %v3834
      %v3836 = vrcp.pop %v3337
      %v3837 = vmul.f32 1.0, %v3836
      %v3838 = vrcp.pop %v3342
      %v3839 = vmul.f32 1.0, %v3838
      %v3840 = vrcp.pop %v3347
      %v3841 = vmul.f32 1.0, %v3840
      %v3842 = vrcp.pop %v3352
      %v3843 = vmul.f32 1.0, %v3842
      %v3844 = vrcp.pop %v3357
      %v3845 = vmul.f32 1.0, %v3844
      %v3846 = vrcp.pop %v3362
      %v3847 = vmul.f32 1.0, %v3846
      %v3848 = vrcp.pop %v3367
      %v3849 = vmul.f32 1.0, %v3848
      %v3850 = vmul.f32 %v3660, %v3787
      %v3851 = vmul.f32 %v3663, %v3789
      %v3852 = vmul.f32 %v3668, %v3791
      %v3853 = vmul.f32 %v3671, %v3793
      %v3854 = vmul.f32 %v3676, %v3795
      %v3855 = vmul.f32 %v3679, %v3797
      %v3856 = vmul.f32 %v3684, %v3799
      %v3857 = vmul.f32 %v3687, %v3801
      %v3858 = vmul.f32 %v3692, %v3803
      %v3859 = vmul.f32 %v3695, %v3805
      %v3860 = vmul.f32 %v3700, %v3807
      %v3861 = vmul.f32 %v3703, %v3809
      %v3862 = vmul.f32 %v3708, %v3811
      %v3863 = vmul.f32 %v3711, %v3813
      %v3864 = vmul.f32 %v3716, %v3815
      %v3865 = vmul.f32 %v3719, %v3817
      %v3866 = vmul.f32 %v3724, %v3819
      %v3867 = vmul.f32 %v3727, %v3821
      %v3868 = vmul.f32 %v3732, %v3823
      %v3869 = vmul.f32 %v3735, %v3825
      %v3870 = vmul.f32 %v3740, %v3827
      %v3871 = vmul.f32 %v3743, %v3829
      %v3872 = vmul.f32 %v3748, %v3831
      %v3873 = vmul.f32 %v3751, %v3833
      %v3874 = vmul.f32 %v3756, %v3835
      %v3875 = vmul.f32 %v3759, %v3837
      %v3876 = vmul.f32 %v3764, %v3839
      %v3877 = vmul.f32 %v3767, %v3841
      %v3878 = vmul.f32 %v3772, %v3843
      %v3879 = vmul.f32 %v3775, %v3845
      %v3880 = vmul.f32 %v3780, %v3847
      %v3881 = vmul.f32 %v3783, %v3849
      %v3882 = vpack.c.bf16 %v3851, %v3850
      %v3883 = vpack.c.bf16 %v3853, %v3852
      %v3884 = vpack.c.bf16 %v3855, %v3854
      %v3885 = vpack.c.bf16 %v3857, %v3856
      %v3886 = vpack.c.bf16 %v3859, %v3858
      %v3887 = vpack.c.bf16 %v3861, %v3860
      %v3888 = vpack.c.bf16 %v3863, %v3862
      %v3889 = vpack.c.bf16 %v3865, %v3864
      %v3890 = vpack.c.bf16 %v3867, %v3866
      %v3891 = vpack.c.bf16 %v3869, %v3868
      %v3892 = vpack.c.bf16 %v3871, %v3870
      %v3893 = vpack.c.bf16 %v3873, %v3872
      %v3894 = vpack.c.bf16 %v3875, %v3874
      %v3895 = vpack.c.bf16 %v3877, %v3876
      %v3896 = vpack.c.bf16 %v3879, %v3878
      %v3897 = vpack.c.bf16 %v3881, %v3880
      %v3898 = vld [vmem:[%s9] sm:$0xf]
      %v3899 = vld [vmem:[%s9 + $0x4] sm:$0xf]
      %v3900 = vld [vmem:[%s9 + $0x8] sm:$0xf]
      %v3901 = vld [vmem:[%s9 + $0xc] sm:$0xf]
      %v3902 = vld [vmem:[%s9 + $0x10] sm:$0xf]
      %v3903 = vld [vmem:[%s9 + $0x14] sm:$0xf]
      %v3904 = vld [vmem:[%s9 + $0x18] sm:$0xf]
      %v3905 = vld [vmem:[%s9 + $0x1c] sm:$0xf]
      %v3906 = vld [vmem:[%s9 + $0x20] sm:$0xf]
      %v3907 = vld [vmem:[%s9 + $0x24] sm:$0xf]
      %v3908 = vld [vmem:[%s9 + $0x28] sm:$0xf]
      %v3909 = vld [vmem:[%s9 + $0x2c] sm:$0xf]
      %v3910 = vld [vmem:[%s9 + $0x30] sm:$0xf]
      %v3911 = vld [vmem:[%s9 + $0x34] sm:$0xf]
      %v3912 = vld [vmem:[%s9 + $0x38] sm:$0xf]
      %v3913 = vld [vmem:[%s9 + $0x3c] sm:$0xf]
      %v3914 = vld [vmem:[%s10] sm:$0x1]
      %v3916 = vlaneseq
      %v3917 = vshrl.u32 %v3916, 7
      %v3918 = vsub.s32 0, %v3917
      %v3919 = vrot.slane %v3914, %v3918
      %v3937 = vunpack.c.l.b16 %v3898
      %v3938 = vunpack.c.l.b16 %v3899
      %v3939 = vunpack.c.l.b16 %v3900
      %v3940 = vunpack.c.l.b16 %v3901
      %v3941 = vunpack.c.l.b16 %v3902
      %v3942 = vunpack.c.l.b16 %v3903
      %v3943 = vunpack.c.l.b16 %v3904
      %v3944 = vunpack.c.l.b16 %v3905
      %v3945 = vunpack.c.l.b16 %v3906
      %v3946 = vunpack.c.l.b16 %v3907
      %v3947 = vunpack.c.l.b16 %v3908
      %v3948 = vunpack.c.l.b16 %v3909
      %v3949 = vunpack.c.l.b16 %v3910
      %v3950 = vunpack.c.l.b16 %v3911
      %v3951 = vunpack.c.l.b16 %v3912
      %v3952 = vunpack.c.l.b16 %v3913
      %v3953 = vpack.c.b16 %v3938, %v3937
      %v3954 = vpack.c.b16 %v3940, %v3939
      %v3955 = vpack.c.b16 %v3942, %v3941
      %v3956 = vpack.c.b16 %v3944, %v3943
      %v3957 = vpack.c.b16 %v3946, %v3945
      %v3958 = vpack.c.b16 %v3948, %v3947
      %v3959 = vpack.c.b16 %v3950, %v3949
      %v3960 = vpack.c.b16 %v3952, %v3951
      %3969 = vmatprep.subr.bf16.mxu0 0
      %3970 = vmatpush1.bf16.msra.mxu0 %v3953
      %3971 = vmatprep.subr.bf16.mxu0 0
      %3972 = vmatpush1.bf16.msra.mxu0 %v3954
      %3973 = vmatprep.subr.bf16.mxu0 0
      %3974 = vmatpush1.bf16.msra.mxu0 %v3955
      %3975 = vmatprep.subr.bf16.mxu0 0
      %3976 = vmatpush1.bf16.msra.mxu0 %v3956
      %3977 = vmatprep.subr.bf16.mxu0 0
      %3978 = vmatpush1.bf16.msra.mxu0 %v3957
      %3979 = vmatprep.subr.bf16.mxu0 0
      %3980 = vmatpush1.bf16.msra.mxu0 %v3958
      %3981 = vmatprep.subr.bf16.mxu0 0
      %3982 = vmatpush1.bf16.msra.mxu0 %v3959
      %3983 = vmatprep.subr.bf16.mxu0 0
      %3984 = vmatpush1.bf16.msra.mxu0 %v3960
      %3985 = vmatprep.subr.bf16.mxu0 0
      %3986 = vmatpush1.bf16.msra.mxu0 0
      %3987 = vmatprep.subr.bf16.mxu0 0
      %3988 = vmatpush1.bf16.msra.mxu0 0
      %3989 = vmatprep.subr.bf16.mxu0 0
      %3990 = vmatpush1.bf16.msra.mxu0 0
      %3991 = vmatprep.subr.bf16.mxu0 0
      %3992 = vmatpush1.bf16.msra.mxu0 0
      %3993 = vmatprep.subr.bf16.mxu0 0
      %3994 = vmatpush1.bf16.msra.mxu0 0
      %3995 = vmatprep.subr.bf16.mxu0 0
      %3996 = vmatpush1.bf16.msra.mxu0 0
      %3997 = vmatprep.subr.bf16.mxu0 0
      %3998 = vmatpush1.bf16.msra.mxu0 0
      %3999 = vmatprep.subr.bf16.mxu0 0
      %4000 = vmatpush1.bf16.msra.mxu0 0
      %4001 = vmatprep.mubr.bf16.mxu0 0
      %4002 = vmatmul.mubr.bf16.gmra.mrb[0].mxu0 %v3882
      %v4003 = vpop.f32.mrb[0].mxu0
      %v4004 = vadd.f32 %v3919, %v4003
      %v4005 = vpop.f32.mrb[0].mxu0
      %v4006 = vpop.f32.mrb[0].mxu0
      %v4007 = vadd.f32 %v3919, %v4006
      %v4008 = vpop.f32.mrb[0].mxu0
      %4009 = vmatprep.mubr.bf16.mxu0 0
      %4010 = vmatmul.mubr.bf16.gmra.mrb[0].mxu0 %v3883
      %v4011 = vpop.f32.mrb[0].mxu0
      %v4012 = vadd.f32 %v3919, %v4011
      %v4013 = vpop.f32.mrb[0].mxu0
      %v4014 = vpop.f32.mrb[0].mxu0
      %v4015 = vadd.f32 %v3919, %v4014
      %v4016 = vpop.f32.mrb[0].mxu0
      %4017 = vmatprep.mubr.bf16.mxu0 0
      %4018 = vmatmul.mubr.bf16.gmra.mrb[0].mxu0 %v3884
      %v4019 = vpop.f32.mrb[0].mxu0
      %v4020 = vadd.f32 %v3919, %v4019
      %v4021 = vpop.f32.mrb[0].mxu0
      %v4022 = vpop.f32.mrb[0].mxu0
      %v4023 = vadd.f32 %v3919, %v4022
      %v4024 = vpop.f32.mrb[0].mxu0
      %4025 = vmatprep.mubr.bf16.mxu0 0
      %4026 = vmatmul.mubr.bf16.gmra.mrb[0].mxu0 %v3885
      %v4027 = vpop.f32.mrb[0].mxu0
      %v4028 = vadd.f32 %v3919, %v4027
      %v4029 = vpop.f32.mrb[0].mxu0
      %v4030 = vpop.f32.mrb[0].mxu0
      %v4031 = vadd.f32 %v3919, %v4030
      %v4032 = vpop.f32.mrb[0].mxu0
      %4033 = vmatprep.mubr.bf16.mxu0 0
      %4034 = vmatmul.mubr.bf16.gmra.mrb[0].mxu0 %v3886
      %v4035 = vpop.f32.mrb[0].mxu0
      %v4036 = vadd.f32 %v3919, %v4035
      %v4037 = vpop.f32.mrb[0].mxu0
      %v4038 = vpop.f32.mrb[0].mxu0
      %v4039 = vadd.f32 %v3919, %v4038
      %v4040 = vpop.f32.mrb[0].mxu0
      %4041 = vmatprep.mubr.bf16.mxu0 0
      %4042 = vmatmul.mubr.bf16.gmra.mrb[0].mxu0 %v3887
      %v4043 = vpop.f32.mrb[0].mxu0
      %v4044 = vadd.f32 %v3919, %v4043
      %v4045 = vpop.f32.mrb[0].mxu0
      %v4046 = vpop.f32.mrb[0].mxu0
      %v4047 = vadd.f32 %v3919, %v4046
      %v4048 = vpop.f32.mrb[0].mxu0
      %4049 = vmatprep.mubr.bf16.mxu0 0
      %4050 = vmatmul.mubr.bf16.gmra.mrb[0].mxu0 %v3888
      %v4051 = vpop.f32.mrb[0].mxu0
      %v4052 = vadd.f32 %v3919, %v4051
      %v4053 = vpop.f32.mrb[0].mxu0
      %v4054 = vpop.f32.mrb[0].mxu0
      %v4055 = vadd.f32 %v3919, %v4054
      %v4056 = vpop.f32.mrb[0].mxu0
      %4057 = vmatprep.mubr.bf16.mxu0 0
      %4058 = vmatmul.mubr.bf16.gmra.mrb[0].mxu0 %v3889
      %v4059 = vpop.f32.mrb[0].mxu0
      %v4060 = vadd.f32 %v3919, %v4059
      %v4061 = vpop.f32.mrb[0].mxu0
      %v4062 = vpop.f32.mrb[0].mxu0
      %v4063 = vadd.f32 %v3919, %v4062
      %v4064 = vpop.f32.mrb[0].mxu0
      %4065 = vmatprep.mubr.bf16.mxu0 0
      %4066 = vmatmul.mubr.bf16.gmra.mrb[0].mxu0 %v3890
      %v4067 = vpop.f32.mrb[0].mxu0
      %v4068 = vadd.f32 %v3919, %v4067
      %v4069 = vpop.f32.mrb[0].mxu0
      %v4070 = vpop.f32.mrb[0].mxu0
      %v4071 = vadd.f32 %v3919, %v4070
      %v4072 = vpop.f32.mrb[0].mxu0
      %4073 = vmatprep.mubr.bf16.mxu0 0
      %4074 = vmatmul.mubr.bf16.gmra.mrb[0].mxu0 %v3891
      %v4075 = vpop.f32.mrb[0].mxu0
      %v4076 = vadd.f32 %v3919, %v4075
      %v4077 = vpop.f32.mrb[0].mxu0
      %v4078 = vpop.f32.mrb[0].mxu0
      %v4079 = vadd.f32 %v3919, %v4078
      %v4080 = vpop.f32.mrb[0].mxu0
      %4081 = vmatprep.mubr.bf16.mxu0 0
      %4082 = vmatmul.mubr.bf16.gmra.mrb[0].mxu0 %v3892
      %v4083 = vpop.f32.mrb[0].mxu0
      %v4084 = vadd.f32 %v3919, %v4083
      %v4085 = vpop.f32.mrb[0].mxu0
      %v4086 = vpop.f32.mrb[0].mxu0
      %v4087 = vadd.f32 %v3919, %v4086
      %v4088 = vpop.f32.mrb[0].mxu0
      %4089 = vmatprep.mubr.bf16.mxu0 0
      %4090 = vmatmul.mubr.bf16.gmra.mrb[0].mxu0 %v3893
      %v4091 = vpop.f32.mrb[0].mxu0
      %v4092 = vadd.f32 %v3919, %v4091
      %v4093 = vpop.f32.mrb[0].mxu0
      %v4094 = vpop.f32.mrb[0].mxu0
      %v4095 = vadd.f32 %v3919, %v4094
      %v4096 = vpop.f32.mrb[0].mxu0
      %4097 = vmatprep.mubr.bf16.mxu0 0
      %4098 = vmatmul.mubr.bf16.gmra.mrb[0].mxu0 %v3894
      %v4099 = vpop.f32.mrb[0].mxu0
      %v4100 = vadd.f32 %v3919, %v4099
      %v4101 = vpop.f32.mrb[0].mxu0
      %v4102 = vpop.f32.mrb[0].mxu0
      %v4103 = vadd.f32 %v3919, %v4102
      %v4104 = vpop.f32.mrb[0].mxu0
      %4105 = vmatprep.mubr.bf16.mxu0 0
      %4106 = vmatmul.mubr.bf16.gmra.mrb[0].mxu0 %v3895
      %v4107 = vpop.f32.mrb[0].mxu0
      %v4108 = vadd.f32 %v3919, %v4107
      %v4109 = vpop.f32.mrb[0].mxu0
      %v4110 = vpop.f32.mrb[0].mxu0
      %v4111 = vadd.f32 %v3919, %v4110
      %v4112 = vpop.f32.mrb[0].mxu0
      %4113 = vmatprep.mubr.bf16.mxu0 0
      %4114 = vmatmul.mubr.bf16.gmra.mrb[0].mxu0 %v3896
      %v4115 = vpop.f32.mrb[0].mxu0
      %v4116 = vadd.f32 %v3919, %v4115
      %v4117 = vpop.f32.mrb[0].mxu0
      %v4118 = vpop.f32.mrb[0].mxu0
      %v4119 = vadd.f32 %v3919, %v4118
      %v4120 = vpop.f32.mrb[0].mxu0
      %4121 = vmatprep.mubr.bf16.mxu0 0
      %4122 = vmatmul.mubr.bf16.gmra.mrb[0].mxu0 %v3897
      %v4123 = vpop.f32.mrb[0].mxu0
      %v4124 = vadd.f32 %v3919, %v4123
      %v4125 = vpop.f32.mrb[0].mxu0
      %v4126 = vpop.f32.mrb[0].mxu0
      %v4127 = vadd.f32 %v3919, %v4126
      %v4128 = vpop.f32.mrb[0].mxu0
      %4129 = vdwg.mxu0
      %s4130 = scalar_lea.vmem %s399, %s1987
      %v4131 = vld [vmem:[%s4130] sm:$0xff]
      %v4132 = vld [vmem:[%s4130 + $0x8] sm:$0xff]
      %v4133 = vld [vmem:[%s4130 + $0x10] sm:$0xff]
      %v4134 = vld [vmem:[%s4130 + $0x18] sm:$0xff]
      %v4135 = vld [vmem:[%s4130 + $0x20] sm:$0xff]
      %v4136 = vld [vmem:[%s4130 + $0x28] sm:$0xff]
      %v4137 = vld [vmem:[%s4130 + $0x30] sm:$0xff]
      %v4138 = vld [vmem:[%s4130 + $0x38] sm:$0xff]
      %v4139 = vld [vmem:[%s4130 + $0x40] sm:$0xff]
      %v4140 = vld [vmem:[%s4130 + $0x48] sm:$0xff]
      %v4141 = vld [vmem:[%s4130 + $0x50] sm:$0xff]
      %v4142 = vld [vmem:[%s4130 + $0x58] sm:$0xff]
      %v4143 = vld [vmem:[%s4130 + $0x60] sm:$0xff]
      %v4144 = vld [vmem:[%s4130 + $0x68] sm:$0xff]
      %v4145 = vld [vmem:[%s4130 + $0x70] sm:$0xff]
      %v4146 = vld [vmem:[%s4130 + $0x78] sm:$0xff]
      %v4147 = vld [vmem:[%s4130 + $0x80] sm:$0xff]
      %v4148 = vld [vmem:[%s4130 + $0x88] sm:$0xff]
      %v4149 = vld [vmem:[%s4130 + $0x90] sm:$0xff]
      %v4150 = vld [vmem:[%s4130 + $0x98] sm:$0xff]
      %v4151 = vld [vmem:[%s4130 + $0xa0] sm:$0xff]
      %v4152 = vld [vmem:[%s4130 + $0xa8] sm:$0xff]
      %v4153 = vld [vmem:[%s4130 + $0xb0] sm:$0xff]
      %v4154 = vld [vmem:[%s4130 + $0xb8] sm:$0xff]
      %v4155 = vld [vmem:[%s4130 + $0xc0] sm:$0xff]
      %v4156 = vld [vmem:[%s4130 + $0xc8] sm:$0xff]
      %v4157 = vld [vmem:[%s4130 + $0xd0] sm:$0xff]
      %v4158 = vld [vmem:[%s4130 + $0xd8] sm:$0xff]
      %v4159 = vld [vmem:[%s4130 + $0xe0] sm:$0xff]
      %v4160 = vld [vmem:[%s4130 + $0xe8] sm:$0xff]
      %v4161 = vld [vmem:[%s4130 + $0xf0] sm:$0xff]
      %v4162 = vld [vmem:[%s4130 + $0xf8] sm:$0xff]
      %v4163 = vadd.f32 %v4131, %v4004
      %v4164 = vadd.f32 %v4132, %v4007
      %v4165 = vadd.f32 %v4133, %v4012
      %v4166 = vadd.f32 %v4134, %v4015
      %v4167 = vadd.f32 %v4135, %v4020
      %v4168 = vadd.f32 %v4136, %v4023
      %v4169 = vadd.f32 %v4137, %v4028
      %v4170 = vadd.f32 %v4138, %v4031
      %v4171 = vadd.f32 %v4139, %v4036
      %v4172 = vadd.f32 %v4140, %v4039
      %v4173 = vadd.f32 %v4141, %v4044
      %v4174 = vadd.f32 %v4142, %v4047
      %v4175 = vadd.f32 %v4143, %v4052
      %v4176 = vadd.f32 %v4144, %v4055
      %v4177 = vadd.f32 %v4145, %v4060
      %v4178 = vadd.f32 %v4146, %v4063
      %v4179 = vadd.f32 %v4147, %v4068
      %v4180 = vadd.f32 %v4148, %v4071
      %v4181 = vadd.f32 %v4149, %v4076
      %v4182 = vadd.f32 %v4150, %v4079
      %v4183 = vadd.f32 %v4151, %v4084
      %v4184 = vadd.f32 %v4152, %v4087
      %v4185 = vadd.f32 %v4153, %v4092
      %v4186 = vadd.f32 %v4154, %v4095
      %v4187 = vadd.f32 %v4155, %v4100
      %v4188 = vadd.f32 %v4156, %v4103
      %v4189 = vadd.f32 %v4157, %v4108
      %v4190 = vadd.f32 %v4158, %v4111
      %v4191 = vadd.f32 %v4159, %v4116
      %v4192 = vadd.f32 %v4160, %v4119
      %v4193 = vadd.f32 %v4161, %v4124
      %v4194 = vadd.f32 %v4162, %v4127
      %4195 = vst.msk [vmem:[%s408] sm:$0xff] %vm2016, %v4163
      %4196 = vst.msk [vmem:[%s408 + $0x8] sm:$0xff] %vm2016, %v4164
      %4197 = vst.msk [vmem:[%s408 + $0x10] sm:$0xff] %vm2016, %v4165
      %4198 = vst.msk [vmem:[%s408 + $0x18] sm:$0xff] %vm2016, %v4166
      %4199 = vst.msk [vmem:[%s408 + $0x20] sm:$0xff] %vm2016, %v4167
      %4200 = vst.msk [vmem:[%s408 + $0x28] sm:$0xff] %vm2016, %v4168
      %4201 = vst.msk [vmem:[%s408 + $0x30] sm:$0xff] %vm2016, %v4169
      %4202 = vst.msk [vmem:[%s408 + $0x38] sm:$0xff] %vm2016, %v4170
      %4203 = vst.msk [vmem:[%s408 + $0x40] sm:$0xff] %vm2016, %v4171
      %4204 = vst.msk [vmem:[%s408 + $0x48] sm:$0xff] %vm2016, %v4172
      %4205 = vst.msk [vmem:[%s408 + $0x50] sm:$0xff] %vm2016, %v4173
      %4206 = vst.msk [vmem:[%s408 + $0x58] sm:$0xff] %vm2016, %v4174
      %4207 = vst.msk [vmem:[%s408 + $0x60] sm:$0xff] %vm2016, %v4175
      %4208 = vst.msk [vmem:[%s408 + $0x68] sm:$0xff] %vm2016, %v4176
      %4209 = vst.msk [vmem:[%s408 + $0x70] sm:$0xff] %vm2016, %v4177
      %4210 = vst.msk [vmem:[%s408 + $0x78] sm:$0xff] %vm2016, %v4178
      %4211 = vst.msk [vmem:[%s408 + $0x80] sm:$0xff] %vm2016, %v4179
      %4212 = vst.msk [vmem:[%s408 + $0x88] sm:$0xff] %vm2016, %v4180
      %4213 = vst.msk [vmem:[%s408 + $0x90] sm:$0xff] %vm2016, %v4181
      %4214 = vst.msk [vmem:[%s408 + $0x98] sm:$0xff] %vm2016, %v4182
      %4215 = vst.msk [vmem:[%s408 + $0xa0] sm:$0xff] %vm2016, %v4183
      %4216 = vst.msk [vmem:[%s408 + $0xa8] sm:$0xff] %vm2016, %v4184
      %4217 = vst.msk [vmem:[%s408 + $0xb0] sm:$0xff] %vm2016, %v4185
      %4218 = vst.msk [vmem:[%s408 + $0xb8] sm:$0xff] %vm2016, %v4186
      %4219 = vst.msk [vmem:[%s408 + $0xc0] sm:$0xff] %vm2016, %v4187
      %4220 = vst.msk [vmem:[%s408 + $0xc8] sm:$0xff] %vm2016, %v4188
      %4221 = vst.msk [vmem:[%s408 + $0xd0] sm:$0xff] %vm2016, %v4189
      %4222 = vst.msk [vmem:[%s408 + $0xd8] sm:$0xff] %vm2016, %v4190
      %4223 = vst.msk [vmem:[%s408 + $0xe0] sm:$0xff] %vm2016, %v4191
      %4224 = vst.msk [vmem:[%s408 + $0xe8] sm:$0xff] %vm2016, %v4192
      %4225 = vst.msk [vmem:[%s408 + $0xf0] sm:$0xff] %vm2016, %v4193
      %4226 = vst.msk [vmem:[%s408 + $0xf8] sm:$0xff] %vm2016, %v4194
      %s4227 = smul.u32 32, %s27
      %p4228 = scmp.lt.s32.totalorder %s26, 1
      %s4229 = scalar_select %p4228, %s26, 1
      %p4230 = scmp.lt.s32.totalorder %s4227, 63
      %s4231 = scalar_select %p4230, %s4227, 63
      %s4232 = smul.addr %s4229, 64
      %s4233 = sadd.s32 %s4231, %s4232
      %s4234 = smul.addr %s4233, 8
      %s4235 = scalar_lea.vmem %s11, %s4234
      // Predicated region
      $region69: #{tpu_custom_call.1} parent=63 // pred_check
        %p4236 = pneg %p290
      $region70: #{tpu_custom_call.1} parent=63 // pred_check_branch
        %4238 = sbr.rel (%p4236) target = $region72
      $region71: #{tpu_custom_call.1} parent=63 // pred_region
        %s4239 = smul.u32 32, %s27
      $region72: #{tpu_custom_call.1} parent=63 // pred_fallthru
        _
    $region64: #{tpu_custom_call.1} parent=5 // pred_fallthru
      _
    %p4240 = scmp.le.s32.totalorder 2, %s17
    // Predicated region
    $region73: #{tpu_custom_call.1} parent=5 // pred_check
      %p4241 = pneg %p4240
    $region74: #{tpu_custom_call.1} parent=5 // pred_check_branch
      %4243 = sbr.rel (%p4241) target = $region76
    $region75: #{tpu_custom_call.1} parent=5 // pred_region
      %s4244 = ssub.s32 %s17, 2
      // Predicated region
      $region77: #{tpu_custom_call.1} parent=75 // pred_check
        %p4245 = pneg %p296
      $region78: #{tpu_custom_call.1} parent=75 // pred_check_branch
        %4247 = sbr.rel (%p4245) target = $region80
      $region79: #{tpu_custom_call.1} parent=75 // pred_region
        %s4248 = smul.u32 32, %s29
        %p4249 = scmp.lt.s32.totalorder %s28, 1
        %s4250 = scalar_select %p4249, %s28, 1
        %p4251 = scmp.lt.s32.totalorder %s4248, 63
        %s4252 = scalar_select %p4251, %s4248, 63
        %s4253 = smul.addr %s4250, 64
        %s4254 = sadd.s32 %s4252, %s4253
        %s4255 = smul.addr %s4254, 8
        %s4256 = scalar_lea.vmem %s11, %s4255
      $region80: #{tpu_custom_call.1} parent=75 // pred_fallthru
        _
    $region76: #{tpu_custom_call.1} parent=5 // pred_fallthru
      _
  $region6: #{tpu_custom_call.1} parent=0 // loop_footer
    %s21 = sadd.s32 1, %s17
  $region7: #{tpu_custom_call.1} parent=0 // loop_footer_branch
    %16 = sbr.rel target = $region3
  $region8: #{tpu_custom_call.1} parent=0 // loop_exit
    _

// kernel: tpu_custom_call.1
$region0: #{tpu_custom_call.1}
  #allocation0 [shape = 'u32[]', space=smem, size = 0x4, offset = 0x4, fixed_abs, tag = 'smem constant byte address 0x4 - core index']
  #allocation1 [shape = 'u32[144,128]{1,0:T(1,128)}', space=vmem, size = 0x12000, scoped, tag = 'internal scratch']
  #allocation2 [shape = 'bf16[512,8]{1,0:T(16,128)(2,1)}', space=vmem, size = 0x20000, scoped, tag = 'scratch operand']
  #allocation3 [shape = 'bf16[512,128]{1,0:T(16,128)(2,1)}', space=vmem, size = 0x20000, scoped, tag = 'scratch operand']
  #allocation4 [shape = 'bf16[512,128]{1,0:T(16,128)(2,1)}', space=vmem, size = 0x20000, scoped, tag = 'scratch operand']
  %s0 = inlined_call_operand.vmem [shape: f32[2,512,8], index: 0, kind: input, shape index: {}]
  %s1 = inlined_call_operand.vmem [shape: f32[1,8], index: 1, kind: input, shape index: {}]
  %s2 = inlined_call_operand.vmem [shape: f32[1,8], index: 2, kind: input, shape index: {}]
  %s3 = inlined_call_operand.vmem [shape: bf16[8,128], index: 3, kind: input, shape index: {}]
  %s4 = inlined_call_operand.vmem [shape: f32[1,128], index: 4, kind: input, shape index: {}]
  %s5 = inlined_call_operand.vmem [shape: bf16[8,128], index: 5, kind: input, shape index: {}]
  %s6 = inlined_call_operand.vmem [shape: f32[1,128], index: 6, kind: input, shape index: {}]
  %s7 = inlined_call_operand.vmem [shape: bf16[8,128], index: 7, kind: input, shape index: {}]
  %s8 = inlined_call_operand.vmem [shape: f32[1,128], index: 8, kind: input, shape index: {}]
  %s9 = inlined_call_operand.vmem [shape: bf16[128,8], index: 9, kind: input, shape index: {}]
  %s10 = inlined_call_operand.vmem [shape: f32[1,8], index: 10, kind: input, shape index: {}]
  %s11 = inlined_call_operand.vmem [shape: f32[2,512,8], index: 11, kind: output, shape index: {}]
  %s12 = sld [smem:[#allocation0]]
  $region81: #{tpu_custom_call.1} parent=0
    _
  %s14 = ssub.s32 1, %s12
  %s15 = scalar_select 0, %s14, %s12
  loop: start=0, step=1, limit=6
  $region2: #{tpu_custom_call.1} parent=0 // loop_pre_header
    _
  $region3: #{tpu_custom_call.1} parent=0 // loop_header
    %s17 = sphi 0, %s21
    %p18 = scmp.ge.s32.totalorder %s17, 6
    %s24 = sphi 0, %s36
    %s25 = sphi 0, %s32
    %s26 = sphi 0, %s24
    %s27 = sphi 0, %s25
    %s28 = sphi 0, %s26
    %s29 = sphi 0, %s27
    %s39 = sphi 0, %s41
    %s42 = sphi 0, %s39
    %s43 = sphi 0, %s42
    %s59 = sphi 0, %s43
    %s63 = sphi 0, %s63
    %s65 = sphi 0, %s63
    %s66 = sphi 0, %s65
    %s80 = sphi 0, %s66
    %s84 = sphi 0, %s84
    %s86 = sphi 0, %s84
    %s87 = sphi 0, %s86
    %s101 = sphi 0, %s87
    %s105 = sphi 0, %s105
    %s107 = sphi 0, %s105
    %s108 = sphi 0, %s107
    %s122 = sphi 0, %s108
    %s126 = sphi 0, %s126
    %s128 = sphi 0, %s126
    %s129 = sphi 0, %s128
    %s143 = sphi 0, %s129
    %s147 = sphi 0, %s147
    %s149 = sphi 0, %s147
    %s150 = sphi 0, %s149
    %s164 = sphi 0, %s150
    %s168 = sphi 0, %s168
    %s170 = sphi 0, %s168
    %s171 = sphi 0, %s170
    %s185 = sphi 0, %s171
    %s189 = sphi 0, %s189
    %s191 = sphi 0, %s189
    %s192 = sphi 0, %s191
    %s206 = sphi 0, %s192
    %s210 = sphi 0, %s210
    %s212 = sphi 0, %s210
    %s213 = sphi 0, %s212
    %s227 = sphi 0, %s213
    %s231 = sphi 0, %s231
    %s233 = sphi 0, %s231
    %s234 = sphi 0, %s233
    %s248 = sphi 0, %s234
    %s252 = sphi 0, %s252
    %s254 = sphi 0, %s252
    %s255 = sphi 0, %s254
    %s269 = sphi 0, %s255
    %s277 = sphi 0, %s279
    %s280 = sphi 0, %s277
    %s281 = sphi 0, %s280
    %s297 = sphi 0, %s281
  $region4: #{tpu_custom_call.1} parent=0 // loop_header_branch
    %20 = sbr.rel (%p18) target = $region8
  $region5: #{tpu_custom_call.1} parent=0 // loop_body
    %s22 = ssub.s32 %s17, 1
    %s23 = ssub.s32 %s17, 2
    %s30 = sadd.s32 1, %s25
    %p31 = scmp.ge.s32.totalorder %s30, 2
    %s32 = scalar_select %p31, 0, %s30
    %s33 = sadd.s32 1, %s24
    %s34 = scalar_select %p31, %s33, %s24
    %p35 = scmp.ge.s32.totalorder %s34, 2
    %s36 = scalar_select %p35, 0, %s34
    %s37 = ssub.s32 %s24, %s36
    %p38 = scmp.eq.s32.totalorder %s37, 0
    %s40 = sadd.s32 %s39, 1
    %s41 = scalar_select %p38, %s39, %s40
    %p44 = pneg %p38
    %p45 = scmp.eq.s32.totalorder %s17, 3
    %p46 = por %p44, %p45
    %p47 = scmp.ne.s32.totalorder %s39, %s42
    %p48 = scmp.eq.s32.totalorder %s17, 0
    %p49 = por %p47, %p48
    %p50 = scmp.ne.s32.totalorder %s39, %s42
    %p51 = scmp.eq.s32.totalorder %s22, 3
    %p52 = por %p50, %p51
    %p53 = scmp.ne.s32.totalorder %s42, %s43
    %p54 = scmp.eq.s32.totalorder %s22, 0
    %p55 = por %p53, %p54
    %p56 = scmp.ne.s32.totalorder %s42, %s43
    %p57 = scmp.eq.s32.totalorder %s23, 3
    %p58 = por %p56, %p57
    %p60 = scmp.ne.s32.totalorder %s43, %s59
    %p61 = scmp.eq.s32.totalorder %s23, 0
    %p62 = por %p60, %p61
    %s64 = sadd.s32 %s63, 1
    %p67 = scmp.eq.s32.totalorder %s17, 3
    %p68 = scmp.ne.s32.totalorder %s63, %s65
    %p69 = scmp.eq.s32.totalorder %s17, 0
    %p70 = por %p68, %p69
    %p71 = scmp.ne.s32.totalorder %s63, %s65
    %p72 = scmp.eq.s32.totalorder %s22, 3
    %p73 = por %p71, %p72
    %p74 = scmp.ne.s32.totalorder %s65, %s66
    %p75 = scmp.eq.s32.totalorder %s22, 0
    %p76 = por %p74, %p75
    %p77 = scmp.ne.s32.totalorder %s65, %s66
    %p78 = scmp.eq.s32.totalorder %s23, 3
    %p79 = por %p77, %p78
    %p81 = scmp.ne.s32.totalorder %s66, %s80
    %p82 = scmp.eq.s32.totalorder %s23, 0
    %p83 = por %p81, %p82
    %s85 = sadd.s32 %s84, 1
    %p88 = scmp.eq.s32.totalorder %s17, 3
    %p89 = scmp.ne.s32.totalorder %s84, %s86
    %p90 = scmp.eq.s32.totalorder %s17, 0
    %p91 = por %p89, %p90
    %p92 = scmp.ne.s32.totalorder %s84, %s86
    %p93 = scmp.eq.s32.totalorder %s22, 3
    %p94 = por %p92, %p93
    %p95 = scmp.ne.s32.totalorder %s86, %s87
    %p96 = scmp.eq.s32.totalorder %s22, 0
    %p97 = por %p95, %p96
    %p98 = scmp.ne.s32.totalorder %s86, %s87
    %p99 = scmp.eq.s32.totalorder %s23, 3
    %p100 = por %p98, %p99
    %p102 = scmp.ne.s32.totalorder %s87, %s101
    %p103 = scmp.eq.s32.totalorder %s23, 0
    %p104 = por %p102, %p103
    %s106 = sadd.s32 %s105, 1
    %p109 = scmp.eq.s32.totalorder %s17, 3
    %p110 = scmp.ne.s32.totalorder %s105, %s107
    %p111 = scmp.eq.s32.totalorder %s17, 0
    %p112 = por %p110, %p111
    %p113 = scmp.ne.s32.totalorder %s105, %s107
    %p114 = scmp.eq.s32.totalorder %s22, 3
    %p115 = por %p113, %p114
    %p116 = scmp.ne.s32.totalorder %s107, %s108
    %p117 = scmp.eq.s32.totalorder %s22, 0
    %p118 = por %p116, %p117
    %p119 = scmp.ne.s32.totalorder %s107, %s108
    %p120 = scmp.eq.s32.totalorder %s23, 3
    %p121 = por %p119, %p120
    %p123 = scmp.ne.s32.totalorder %s108, %s122
    %p124 = scmp.eq.s32.totalorder %s23, 0
    %p125 = por %p123, %p124
    %s127 = sadd.s32 %s126, 1
    %p130 = scmp.eq.s32.totalorder %s17, 3
    %p131 = scmp.ne.s32.totalorder %s126, %s128
    %p132 = scmp.eq.s32.totalorder %s17, 0
    %p133 = por %p131, %p132
    %p134 = scmp.ne.s32.totalorder %s126, %s128
    %p135 = scmp.eq.s32.totalorder %s22, 3
    %p136 = por %p134, %p135
    %p137 = scmp.ne.s32.totalorder %s128, %s129
    %p138 = scmp.eq.s32.totalorder %s22, 0
    %p139 = por %p137, %p138
    %p140 = scmp.ne.s32.totalorder %s128, %s129
    %p141 = scmp.eq.s32.totalorder %s23, 3
    %p142 = por %p140, %p141
    %p144 = scmp.ne.s32.totalorder %s129, %s143
    %p145 = scmp.eq.s32.totalorder %s23, 0
    %p146 = por %p144, %p145
    %s148 = sadd.s32 %s147, 1
    %p151 = scmp.eq.s32.totalorder %s17, 3
    %p152 = scmp.ne.s32.totalorder %s147, %s149
    %p153 = scmp.eq.s32.totalorder %s17, 0
    %p154 = por %p152, %p153
    %p155 = scmp.ne.s32.totalorder %s147, %s149
    %p156 = scmp.eq.s32.totalorder %s22, 3
    %p157 = por %p155, %p156
    %p158 = scmp.ne.s32.totalorder %s149, %s150
    %p159 = scmp.eq.s32.totalorder %s22, 0
    %p160 = por %p158, %p159
    %p161 = scmp.ne.s32.totalorder %s149, %s150
    %p162 = scmp.eq.s32.totalorder %s23, 3
    %p163 = por %p161, %p162
    %p165 = scmp.ne.s32.totalorder %s150, %s164
    %p166 = scmp.eq.s32.totalorder %s23, 0
    %p167 = por %p165, %p166
    %s169 = sadd.s32 %s168, 1
    %p172 = scmp.eq.s32.totalorder %s17, 3
    %p173 = scmp.ne.s32.totalorder %s168, %s170
    %p174 = scmp.eq.s32.totalorder %s17, 0
    %p175 = por %p173, %p174
    %p176 = scmp.ne.s32.totalorder %s168, %s170
    %p177 = scmp.eq.s32.totalorder %s22, 3
    %p178 = por %p176, %p177
    %p179 = scmp.ne.s32.totalorder %s170, %s171
    %p180 = scmp.eq.s32.totalorder %s22, 0
    %p181 = por %p179, %p180
    %p182 = scmp.ne.s32.totalorder %s170, %s171
    %p183 = scmp.eq.s32.totalorder %s23, 3
    %p184 = por %p182, %p183
    %p186 = scmp.ne.s32.totalorder %s171, %s185
    %p187 = scmp.eq.s32.totalorder %s23, 0
    %p188 = por %p186, %p187
    %s190 = sadd.s32 %s189, 1
    %p193 = scmp.eq.s32.totalorder %s17, 3
    %p194 = scmp.ne.s32.totalorder %s189, %s191
    %p195 = scmp.eq.s32.totalorder %s17, 0
    %p196 = por %p194, %p195
    %p197 = scmp.ne.s32.totalorder %s189, %s191
    %p198 = scmp.eq.s32.totalorder %s22, 3
    %p199 = por %p197, %p198
    %p200 = scmp.ne.s32.totalorder %s191, %s192
    %p201 = scmp.eq.s32.totalorder %s22, 0
    %p202 = por %p200, %p201
    %p203 = scmp.ne.s32.totalorder %s191, %s192
    %p204 = scmp.eq.s32.totalorder %s23, 3
    %p205 = por %p203, %p204
    %p207 = scmp.ne.s32.totalorder %s192, %s206
    %p208 = scmp.eq.s32.totalorder %s23, 0
    %p209 = por %p207, %p208
    %s211 = sadd.s32 %s210, 1
    %p214 = scmp.eq.s32.totalorder %s17, 3
    %p215 = scmp.ne.s32.totalorder %s210, %s212
    %p216 = scmp.eq.s32.totalorder %s17, 0
    %p217 = por %p215, %p216
    %p218 = scmp.ne.s32.totalorder %s210, %s212
    %p219 = scmp.eq.s32.totalorder %s22, 3
    %p220 = por %p218, %p219
    %p221 = scmp.ne.s32.totalorder %s212, %s213
    %p222 = scmp.eq.s32.totalorder %s22, 0
    %p223 = por %p221, %p222
    %p224 = scmp.ne.s32.totalorder %s212, %s213
    %p225 = scmp.eq.s32.totalorder %s23, 3
    %p226 = por %p224, %p225
    %p228 = scmp.ne.s32.totalorder %s213, %s227
    %p229 = scmp.eq.s32.totalorder %s23, 0
    %p230 = por %p228, %p229
    %s232 = sadd.s32 %s231, 1
    %p235 = scmp.eq.s32.totalorder %s17, 3
    %p236 = scmp.ne.s32.totalorder %s231, %s233
    %p237 = scmp.eq.s32.totalorder %s17, 0
    %p238 = por %p236, %p237
    %p239 = scmp.ne.s32.totalorder %s231, %s233
    %p240 = scmp.eq.s32.totalorder %s22, 3
    %p241 = por %p239, %p240
    %p242 = scmp.ne.s32.totalorder %s233, %s234
    %p243 = scmp.eq.s32.totalorder %s22, 0
    %p244 = por %p242, %p243
    %p245 = scmp.ne.s32.totalorder %s233, %s234
    %p246 = scmp.eq.s32.totalorder %s23, 3
    %p247 = por %p245, %p246
    %p249 = scmp.ne.s32.totalorder %s234, %s248
    %p250 = scmp.eq.s32.totalorder %s23, 0
    %p251 = por %p249, %p250
    %s253 = sadd.s32 %s252, 1
    %p256 = scmp.eq.s32.totalorder %s17, 3
    %p257 = scmp.ne.s32.totalorder %s252, %s254
    %p258 = scmp.eq.s32.totalorder %s17, 0
    %p259 = por %p257, %p258
    %p260 = scmp.ne.s32.totalorder %s252, %s254
    %p261 = scmp.eq.s32.totalorder %s22, 3
    %p262 = por %p260, %p261
    %p263 = scmp.ne.s32.totalorder %s254, %s255
    %p264 = scmp.eq.s32.totalorder %s22, 0
    %p265 = por %p263, %p264
    %p266 = scmp.ne.s32.totalorder %s254, %s255
    %p267 = scmp.eq.s32.totalorder %s23, 3
    %p268 = por %p266, %p267
    %p270 = scmp.ne.s32.totalorder %s255, %s269
    %p271 = scmp.eq.s32.totalorder %s23, 0
    %p272 = por %p270, %p271
    %s273 = ssub.s32 %s24, %s36
    %s274 = ssub.s32 %s25, %s32
    %s275 = sor.u32 %s273, %s274
    %p276 = scmp.eq.s32.totalorder %s275, 0
    %s278 = sadd.s32 %s277, 1
    %s279 = scalar_select %p276, %s277, %s278
    %p282 = pneg %p276
    %p283 = scmp.eq.s32.totalorder %s17, 3
    %p284 = por %p282, %p283
    %p285 = scmp.ne.s32.totalorder %s277, %s280
    %p286 = scmp.eq.s32.totalorder %s17, 0
    %p287 = por %p285, %p286
    %p288 = scmp.ne.s32.totalorder %s277, %s280
    %p289 = scmp.eq.s32.totalorder %s22, 3
    %p290 = por %p288, %p289
    %p291 = scmp.ne.s32.totalorder %s280, %s281
    %p292 = scmp.eq.s32.totalorder %s22, 0
    %p293 = por %p291, %p292
    %p294 = scmp.ne.s32.totalorder %s280, %s281
    %p295 = scmp.eq.s32.totalorder %s23, 3
    %p296 = por %p294, %p295
    %p298 = scmp.ne.s32.totalorder %s281, %s297
    %p299 = scmp.eq.s32.totalorder %s23, 0
    %p300 = por %p298, %p299
    %p301 = scmp.le.s32.totalorder 1, %s17
    %p302 = scmp.lt.s32.totalorder %s17, 5
    %p303 = pnand %p301, %p302
    %p304 = pneg %p303
    // Predicated region
    $region9: #{tpu_custom_call.1} parent=5 // pred_check
      _
    $region10: #{tpu_custom_call.1} parent=5 // pred_check_branch
      %306 = sbr.rel (%p303) target = $region12
    $region11: #{tpu_custom_call.1} parent=5 // pred_region
      %s307 = ssub.s32 %s17, 1
      // Predicated region
      $region13: #{tpu_custom_call.1} parent=11 // pred_check
        %p308 = pneg %p76
      $region14: #{tpu_custom_call.1} parent=11 // pred_check_branch
        %310 = sbr.rel (%p308) target = $region16
      $region15: #{tpu_custom_call.1} parent=11 // pred_region
        _
      $region16: #{tpu_custom_call.1} parent=11 // pred_fallthru
        _
      // Predicated region
      $region17: #{tpu_custom_call.1} parent=11 // pred_check
        %p311 = pneg %p97
      $region18: #{tpu_custom_call.1} parent=11 // pred_check_branch
        %313 = sbr.rel (%p311) target = $region20
      $region19: #{tpu_custom_call.1} parent=11 // pred_region
        _
      $region20: #{tpu_custom_call.1} parent=11 // pred_fallthru
        _
      // Predicated region
      $region21: #{tpu_custom_call.1} parent=11 // pred_check
        %p314 = pneg %p118
      $region22: #{tpu_custom_call.1} parent=11 // pred_check_branch
        %316 = sbr.rel (%p314) target = $region24
      $region23: #{tpu_custom_call.1} parent=11 // pred_region
        _
      $region24: #{tpu_custom_call.1} parent=11 // pred_fallthru
        _
      // Predicated region
      $region25: #{tpu_custom_call.1} parent=11 // pred_check
        %p317 = pneg %p139
      $region26: #{tpu_custom_call.1} parent=11 // pred_check_branch
        %319 = sbr.rel (%p317) target = $region28
      $region27: #{tpu_custom_call.1} parent=11 // pred_region
        _
      $region28: #{tpu_custom_call.1} parent=11 // pred_fallthru
        _
      // Predicated region
      $region29: #{tpu_custom_call.1} parent=11 // pred_check
        %p320 = pneg %p160
      $region30: #{tpu_custom_call.1} parent=11 // pred_check_branch
        %322 = sbr.rel (%p320) target = $region32
      $region31: #{tpu_custom_call.1} parent=11 // pred_region
        _
      $region32: #{tpu_custom_call.1} parent=11 // pred_fallthru
        _
      // Predicated region
      $region33: #{tpu_custom_call.1} parent=11 // pred_check
        %p323 = pneg %p181
      $region34: #{tpu_custom_call.1} parent=11 // pred_check_branch
        %325 = sbr.rel (%p323) target = $region36
      $region35: #{tpu_custom_call.1} parent=11 // pred_region
        _
      $region36: #{tpu_custom_call.1} parent=11 // pred_fallthru
        _
      // Predicated region
      $region37: #{tpu_custom_call.1} parent=11 // pred_check
        %p326 = pneg %p202
      $region38: #{tpu_custom_call.1} parent=11 // pred_check_branch
        %328 = sbr.rel (%p326) target = $region40
      $region39: #{tpu_custom_call.1} parent=11 // pred_region
        _
      $region40: #{tpu_custom_call.1} parent=11 // pred_fallthru
        _
      // Predicated region
      $region41: #{tpu_custom_call.1} parent=11 // pred_check
        %p329 = pneg %p223
      $region42: #{tpu_custom_call.1} parent=11 // pred_check_branch
        %331 = sbr.rel (%p329) target = $region44
      $region43: #{tpu_custom_call.1} parent=11 // pred_region
        _
      $region44: #{tpu_custom_call.1} parent=11 // pred_fallthru
        _
      // Predicated region
      $region45: #{tpu_custom_call.1} parent=11 // pred_check
        %p332 = pneg %p244
      $region46: #{tpu_custom_call.1} parent=11 // pred_check_branch
        %334 = sbr.rel (%p332) target = $region48
      $region47: #{tpu_custom_call.1} parent=11 // pred_region
        _
      $region48: #{tpu_custom_call.1} parent=11 // pred_fallthru
        _
      // Predicated region
      $region49: #{tpu_custom_call.1} parent=11 // pred_check
        %p335 = pneg %p265
      $region50: #{tpu_custom_call.1} parent=11 // pred_check_branch
        %337 = sbr.rel (%p335) target = $region52
      $region51: #{tpu_custom_call.1} parent=11 // pred_region
        _
      $region52: #{tpu_custom_call.1} parent=11 // pred_fallthru
        _
    $region12: #{tpu_custom_call.1} parent=5 // pred_fallthru
      _
    %p338 = scmp.lt.s32.totalorder %s17, 4
    // Predicated region
    $region53: #{tpu_custom_call.1} parent=5 // pred_check
      %p339 = pneg %p338
    $region54: #{tpu_custom_call.1} parent=5 // pred_check_branch
      %341 = sbr.rel (%p339) target = $region56
    $region55: #{tpu_custom_call.1} parent=5 // pred_region
      // Predicated region
      $region57: #{tpu_custom_call.1} parent=55 // pred_check
        %p342 = pneg %p49
      $region58: #{tpu_custom_call.1} parent=55 // pred_check_branch
        %344 = sbr.rel (%p342) target = $region60
      $region59: #{tpu_custom_call.1} parent=55 // pred_region
        %p345 = scmp.lt.s32.totalorder %s24, 1
        %s346 = scalar_select %p345, %s24, 1
        %s347 = smul.addr %s346, 64
        %s348 = smul.addr %s347, 8
        %s349 = scalar_lea.vmem %s0, %s348
      $region60: #{tpu_custom_call.1} parent=55 // pred_fallthru
        _
    $region56: #{tpu_custom_call.1} parent=5 // pred_fallthru
      _
    %p350 = scmp.le.s32.totalorder 1, %s17
    %p351 = scmp.lt.s32.totalorder %s17, 5
    %p352 = pnand %p350, %p351
    %p353 = pneg %p352
    // Predicated region
    $region61: #{tpu_custom_call.1} parent=5 // pred_check
      _
    $region62: #{tpu_custom_call.1} parent=5 // pred_check_branch
      %355 = sbr.rel (%p352) target = $region64
    $region63: #{tpu_custom_call.1} parent=5 // pred_region
      %s356 = ssub.s32 %s17, 1
      %p357 = scmp.lt.s32.totalorder %s26, 1
      %s358 = scalar_select %p357, %s26, 1
      %s359 = smul.addr %s358, 64
      %s360 = smul.addr %s359, 8
      %s361 = scalar_lea.vmem %s0, %s360
      %p362 = pneg %p55
      %p363 = pneg %p52
      %p364 = pneg %p76
      %p365 = pneg %p73
      %p366 = pneg %p97
      %p367 = pneg %p94
      %p368 = pneg %p118
      %p369 = pneg %p115
      %p370 = pneg %p139
      %p371 = pneg %p136
      %p372 = pneg %p160
      %p373 = pneg %p157
      %p374 = pneg %p181
      %p375 = pneg %p178
      %p376 = pneg %p202
      %p377 = pneg %p199
      %p378 = pneg %p223
      %p379 = pneg %p220
      %p380 = pneg %p244
      %p381 = pneg %p241
      %p382 = pneg %p265
      %p383 = pneg %p262
      %p384 = pneg %p293
      %p385 = pneg %p290
      %s386 = smul.u32 32, %s27
      %p387 = scmp.lt.s32.totalorder %s26, 1
      %s388 = scalar_select %p387, %s26, 1
      %p389 = scmp.lt.s32.totalorder %s386, 63
      %s390 = scalar_select %p389, %s386, 63
      %s391 = smul.addr %s388, 64
      %s392 = sadd.s32 %s390, %s391
      %s393 = smul.addr %s392, 8
      %s394 = scalar_lea.vmem %s11, %s393
      %p395 = scmp.lt.s32.totalorder %s26, 1
      %s396 = scalar_select %p395, %s26, 1
      %s397 = smul.addr %s396, 64
      %s398 = smul.addr %s397, 8
      %s399 = scalar_lea.vmem %s0, %s398
      %s400 = smul.u32 32, %s27
      %p401 = scmp.lt.s32.totalorder %s26, 1
      %s402 = scalar_select %p401, %s26, 1
      %p403 = scmp.lt.s32.totalorder %s400, 63
      %s404 = scalar_select %p403, %s400, 63
      %s405 = smul.addr %s402, 64
      %s406 = sadd.s32 %s404, %s405
      %s407 = smul.addr %s406, 8
      %s408 = scalar_lea.vmem %s11, %s407
      %s409 = smul.u32 32, %s27
      %p411 = scmp.eq.s32.totalorder %s27, 0
      // Predicated region
      $region65: #{tpu_custom_call.1} parent=63 // pred_check
        %p412 = pneg %p411
      $region66: #{tpu_custom_call.1} parent=63 // pred_check_branch
        %414 = sbr.rel (%p412) target = $region68
      $region67: #{tpu_custom_call.1} parent=63 // pred_region
        %v415 = vld [vmem:[%s399] sm:$0xff]
        %v416 = vld [vmem:[%s399 + $0x8] sm:$0xff]
        %v417 = vld [vmem:[%s399 + $0x10] sm:$0xff]
        %v418 = vld [vmem:[%s399 + $0x18] sm:$0xff]
        %v419 = vld [vmem:[%s399 + $0x20] sm:$0xff]
        %v420 = vld [vmem:[%s399 + $0x28] sm:$0xff]
        %v421 = vld [vmem:[%s399 + $0x30] sm:$0xff]
        %v422 = vld [vmem:[%s399 + $0x38] sm:$0xff]
        %v423 = vld [vmem:[%s399 + $0x40] sm:$0xff]
        %v424 = vld [vmem:[%s399 + $0x48] sm:$0xff]
        %v425 = vld [vmem:[%s399 + $0x50] sm:$0xff]
        %v426 = vld [vmem:[%s399 + $0x58] sm:$0xff]
        %v427 = vld [vmem:[%s399 + $0x60] sm:$0xff]
        %v428 = vld [vmem:[%s399 + $0x68] sm:$0xff]
        %v429 = vld [vmem:[%s399 + $0x70] sm:$0xff]
        %v430 = vld [vmem:[%s399 + $0x78] sm:$0xff]
        %v431 = vld [vmem:[%s399 + $0x80] sm:$0xff]
        %v432 = vld [vmem:[%s399 + $0x88] sm:$0xff]
        %v433 = vld [vmem:[%s399 + $0x90] sm:$0xff]
        %v434 = vld [vmem:[%s399 + $0x98] sm:$0xff]
        %v435 = vld [vmem:[%s399 + $0xa0] sm:$0xff]
        %v436 = vld [vmem:[%s399 + $0xa8] sm:$0xff]
        %v437 = vld [vmem:[%s399 + $0xb0] sm:$0xff]
        %v438 = vld [vmem:[%s399 + $0xb8] sm:$0xff]
        %v439 = vld [vmem:[%s399 + $0xc0] sm:$0xff]
        %v440 = vld [vmem:[%s399 + $0xc8] sm:$0xff]
        %v441 = vld [vmem:[%s399 + $0xd0] sm:$0xff]
        %v442 = vld [vmem:[%s399 + $0xd8] sm:$0xff]
        %v443 = vld [vmem:[%s399 + $0xe0] sm:$0xff]
        %v444 = vld [vmem:[%s399 + $0xe8] sm:$0xff]
        %v445 = vld [vmem:[%s399 + $0xf0] sm:$0xff]
        %v446 = vld [vmem:[%s399 + $0xf8] sm:$0xff]
        %v447 = vld [vmem:[%s399 + $0x100] sm:$0xff]
        %v448 = vld [vmem:[%s399 + $0x108] sm:$0xff]
        %v449 = vld [vmem:[%s399 + $0x110] sm:$0xff]
        %v450 = vld [vmem:[%s399 + $0x118] sm:$0xff]
        %v451 = vld [vmem:[%s399 + $0x120] sm:$0xff]
        %v452 = vld [vmem:[%s399 + $0x128] sm:$0xff]
        %v453 = vld [vmem:[%s399 + $0x130] sm:$0xff]
        %v454 = vld [vmem:[%s399 + $0x138] sm:$0xff]
        %v455 = vld [vmem:[%s399 + $0x140] sm:$0xff]
        %v456 = vld [vmem:[%s399 + $0x148] sm:$0xff]
        %v457 = vld [vmem:[%s399 + $0x150] sm:$0xff]
        %v458 = vld [vmem:[%s399 + $0x158] sm:$0xff]
        %v459 = vld [vmem:[%s399 + $0x160] sm:$0xff]
        %v460 = vld [vmem:[%s399 + $0x168] sm:$0xff]
        %v461 = vld [vmem:[%s399 + $0x170] sm:$0xff]
        %v462 = vld [vmem:[%s399 + $0x178] sm:$0xff]
        %v463 = vld [vmem:[%s399 + $0x180] sm:$0xff]
        %v464 = vld [vmem:[%s399 + $0x188] sm:$0xff]
        %v465 = vld [vmem:[%s399 + $0x190] sm:$0xff]
        %v466 = vld [vmem:[%s399 + $0x198] sm:$0xff]
        %v467 = vld [vmem:[%s399 + $0x1a0] sm:$0xff]
        %v468 = vld [vmem:[%s399 + $0x1a8] sm:$0xff]
        %v469 = vld [vmem:[%s399 + $0x1b0] sm:$0xff]
        %v470 = vld [vmem:[%s399 + $0x1b8] sm:$0xff]
        %v471 = vld [vmem:[%s399 + $0x1c0] sm:$0xff]
        %v472 = vld [vmem:[%s399 + $0x1c8] sm:$0xff]
        %v473 = vld [vmem:[%s399 + $0x1d0] sm:$0xff]
        %v474 = vld [vmem:[%s399 + $0x1d8] sm:$0xff]
        %v475 = vld [vmem:[%s399 + $0x1e0] sm:$0xff]
        %v476 = vld [vmem:[%s399 + $0x1e8] sm:$0xff]
        %v477 = vld [vmem:[%s399 + $0x1f0] sm:$0xff]
        %v478 = vld [vmem:[%s399 + $0x1f8] sm:$0xff]
        %vm479 = vcmask 64512
        %v480 = vsel %vm479, %v415, 0.0
        %v481 = vsel %vm479, %v416, 0.0
        %v482 = vadd.f32 %v480, %v481
        %v483 = vsel %vm479, %v417, 0.0
        %v484 = vadd.f32 %v482, %v483
        %v485 = vsel %vm479, %v418, 0.0
        %v486 = vadd.f32 %v484, %v485
        %v487 = vsel %vm479, %v419, 0.0
        %v488 = vadd.f32 %v486, %v487
        %v489 = vsel %vm479, %v420, 0.0
        %v490 = vadd.f32 %v488, %v489
        %v491 = vsel %vm479, %v421, 0.0
        %v492 = vadd.f32 %v490, %v491
        %v493 = vsel %vm479, %v422, 0.0
        %v494 = vadd.f32 %v492, %v493
        %v495 = vsel %vm479, %v423, 0.0
        %v496 = vadd.f32 %v494, %v495
        %v497 = vsel %vm479, %v424, 0.0
        %v498 = vadd.f32 %v496, %v497
        %v499 = vsel %vm479, %v425, 0.0
        %v500 = vadd.f32 %v498, %v499
        %v501 = vsel %vm479, %v426, 0.0
        %v502 = vadd.f32 %v500, %v501
        %v503 = vsel %vm479, %v427, 0.0
        %v504 = vadd.f32 %v502, %v503
        %v505 = vsel %vm479, %v428, 0.0
        %v506 = vadd.f32 %v504, %v505
        %v507 = vsel %vm479, %v429, 0.0
        %v508 = vadd.f32 %v506, %v507
        %v509 = vsel %vm479, %v430, 0.0
        %v510 = vadd.f32 %v508, %v509
        %v511 = vsel %vm479, %v431, 0.0
        %v512 = vadd.f32 %v510, %v511
        %v513 = vsel %vm479, %v432, 0.0
        %v514 = vadd.f32 %v512, %v513
        %v515 = vsel %vm479, %v433, 0.0
        %v516 = vadd.f32 %v514, %v515
        %v517 = vsel %vm479, %v434, 0.0
        %v518 = vadd.f32 %v516, %v517
        %v519 = vsel %vm479, %v435, 0.0
        %v520 = vadd.f32 %v518, %v519
        %v521 = vsel %vm479, %v436, 0.0
        %v522 = vadd.f32 %v520, %v521
        %v523 = vsel %vm479, %v437, 0.0
        %v524 = vadd.f32 %v522, %v523
        %v525 = vsel %vm479, %v438, 0.0
        %v526 = vadd.f32 %v524, %v525
        %v527 = vsel %vm479, %v439, 0.0
        %v528 = vadd.f32 %v526, %v527
        %v529 = vsel %vm479, %v440, 0.0
        %v530 = vadd.f32 %v528, %v529
        %v531 = vsel %vm479, %v441, 0.0
        %v532 = vadd.f32 %v530, %v531
        %v533 = vsel %vm479, %v442, 0.0
        %v534 = vadd.f32 %v532, %v533
        %v535 = vsel %vm479, %v443, 0.0
        %v536 = vadd.f32 %v534, %v535
        %v537 = vsel %vm479, %v444, 0.0
        %v538 = vadd.f32 %v536, %v537
        %v539 = vsel %vm479, %v445, 0.0
        %v540 = vadd.f32 %v538, %v539
        %v541 = vsel %vm479, %v446, 0.0
        %v542 = vadd.f32 %v540, %v541
        %v543 = vsel %vm479, %v447, 0.0
        %v544 = vadd.f32 %v542, %v543
        %v545 = vsel %vm479, %v448, 0.0
        %v546 = vadd.f32 %v544, %v545
        %v547 = vsel %vm479, %v449, 0.0
        %v548 = vadd.f32 %v546, %v547
        %v549 = vsel %vm479, %v450, 0.0
        %v550 = vadd.f32 %v548, %v549
        %v551 = vsel %vm479, %v451, 0.0
        %v552 = vadd.f32 %v550, %v551
        %v553 = vsel %vm479, %v452, 0.0
        %v554 = vadd.f32 %v552, %v553
        %v555 = vsel %vm479, %v453, 0.0
        %v556 = vadd.f32 %v554, %v555
        %v557 = vsel %vm479, %v454, 0.0
        %v558 = vadd.f32 %v556, %v557
        %v559 = vsel %vm479, %v455, 0.0
        %v560 = vadd.f32 %v558, %v559
        %v561 = vsel %vm479, %v456, 0.0
        %v562 = vadd.f32 %v560, %v561
        %v563 = vsel %vm479, %v457, 0.0
        %v564 = vadd.f32 %v562, %v563
        %v565 = vsel %vm479, %v458, 0.0
        %v566 = vadd.f32 %v564, %v565
        %v567 = vsel %vm479, %v459, 0.0
        %v568 = vadd.f32 %v566, %v567
        %v569 = vsel %vm479, %v460, 0.0
        %v570 = vadd.f32 %v568, %v569
        %v571 = vsel %vm479, %v461, 0.0
        %v572 = vadd.f32 %v570, %v571
        %v573 = vsel %vm479, %v462, 0.0
        %v574 = vadd.f32 %v572, %v573
        %v575 = vsel %vm479, %v463, 0.0
        %v576 = vadd.f32 %v574, %v575
        %v577 = vsel %vm479, %v464, 0.0
        %v578 = vadd.f32 %v576, %v577
        %v579 = vsel %vm479, %v465, 0.0
        %v580 = vadd.f32 %v578, %v579
        %v581 = vsel %vm479, %v466, 0.0
        %v582 = vadd.f32 %v580, %v581
        %v583 = vsel %vm479, %v467, 0.0
        %v584 = vadd.f32 %v582, %v583
        %v585 = vsel %vm479, %v468, 0.0
        %v586 = vadd.f32 %v584, %v585
        %v587 = vsel %vm479, %v469, 0.0
        %v588 = vadd.f32 %v586, %v587
        %v589 = vsel %vm479, %v470, 0.0
        %v590 = vadd.f32 %v588, %v589
        %v591 = vsel %vm479, %v471, 0.0
        %v592 = vadd.f32 %v590, %v591
        %v593 = vsel %vm479, %v472, 0.0
        %v594 = vadd.f32 %v592, %v593
        %v595 = vsel %vm479, %v473, 0.0
        %v596 = vadd.f32 %v594, %v595
        %v597 = vsel %vm479, %v474, 0.0
        %v598 = vadd.f32 %v596, %v597
        %v599 = vsel %vm479, %v475, 0.0
        %v600 = vadd.f32 %v598, %v599
        %v601 = vsel %vm479, %v476, 0.0
        %v602 = vadd.f32 %v600, %v601
        %v603 = vsel %vm479, %v477, 0.0
        %v604 = vadd.f32 %v602, %v603
        %v605 = vsel %vm479, %v478, 0.0
        %v606 = vadd.f32 %v604, %v605
        %607 = vadd.xlane.f32.xlu0 %v606
        %v608 = vpop.xlane.xlu0 %607
        %v609 = vrot.slane %v608, 4
        %v610 = vadd.f32 %v608, %v609
        %v611 = vrot.slane %v610, 2
        %v612 = vadd.f32 %v610, %v611
        %v613 = vrot.slane %v612, 1
        %v614 = vadd.f32 %v612, %v613
        %s615 = vtos %v614
        %v616 = vrcp.pop 4096.0
        %s617 = vtos %v616
        %s618 = smul.f32 %s615, %s617
        %v619 = vstv %s618
        %v620 = vsub.f32 %v415, %v619
        %v621 = vsub.f32 %v416, %v619
        %v622 = vsub.f32 %v417, %v619
        %v623 = vsub.f32 %v418, %v619
        %v624 = vsub.f32 %v419, %v619
        %v625 = vsub.f32 %v420, %v619
        %v626 = vsub.f32 %v421, %v619
        %v627 = vsub.f32 %v422, %v619
        %v628 = vsub.f32 %v423, %v619
        %v629 = vsub.f32 %v424, %v619
        %v630 = vsub.f32 %v425, %v619
        %v631 = vsub.f32 %v426, %v619
        %v632 = vsub.f32 %v427, %v619
        %v633 = vsub.f32 %v428, %v619
        %v634 = vsub.f32 %v429, %v619
        %v635 = vsub.f32 %v430, %v619
        %v636 = vsub.f32 %v431, %v619
        %v637 = vsub.f32 %v432, %v619
        %v638 = vsub.f32 %v433, %v619
        %v639 = vsub.f32 %v434, %v619
        %v640 = vsub.f32 %v435, %v619
        %v641 = vsub.f32 %v436, %v619
        %v642 = vsub.f32 %v437, %v619
        %v643 = vsub.f32 %v438, %v619
        %v644 = vsub.f32 %v439, %v619
        %v645 = vsub.f32 %v440, %v619
        %v646 = vsub.f32 %v441, %v619
        %v647 = vsub.f32 %v442, %v619
        %v648 = vsub.f32 %v443, %v619
        %v649 = vsub.f32 %v444, %v619
        %v650 = vsub.f32 %v445, %v619
        %v651 = vsub.f32 %v446, %v619
        %v652 = vsub.f32 %v447, %v619
        %v653 = vsub.f32 %v448, %v619
        %v654 = vsub.f32 %v449, %v619
        %v655 = vsub.f32 %v450, %v619
        %v656 = vsub.f32 %v451, %v619
        %v657 = vsub.f32 %v452, %v619
        %v658 = vsub.f32 %v453, %v619
        %v659 = vsub.f32 %v454, %v619
        %v660 = vsub.f32 %v455, %v619
        %v661 = vsub.f32 %v456, %v619
        %v662 = vsub.f32 %v457, %v619
        %v663 = vsub.f32 %v458, %v619
        %v664 = vsub.f32 %v459, %v619
        %v665 = vsub.f32 %v460, %v619
        %v666 = vsub.f32 %v461, %v619
        %v667 = vsub.f32 %v462, %v619
        %v668 = vsub.f32 %v463, %v619
        %v669 = vsub.f32 %v464, %v619
        %v670 = vsub.f32 %v465, %v619
        %v671 = vsub.f32 %v466, %v619
        %v672 = vsub.f32 %v467, %v619
        %v673 = vsub.f32 %v468, %v619
        %v674 = vsub.f32 %v469, %v619
        %v675 = vsub.f32 %v470, %v619
        %v676 = vsub.f32 %v471, %v619
        %v677 = vsub.f32 %v472, %v619
        %v678 = vsub.f32 %v473, %v619
        %v679 = vsub.f32 %v474, %v619
        %v680 = vsub.f32 %v475, %v619
        %v681 = vsub.f32 %v476, %v619
        %v682 = vsub.f32 %v477, %v619
        %v683 = vsub.f32 %v478, %v619
        %v684 = vmul.f32 %v620, %v620
        %v685 = vmul.f32 %v621, %v621
        %v686 = vmul.f32 %v622, %v622
        %v687 = vmul.f32 %v623, %v623
        %v688 = vmul.f32 %v624, %v624
        %v689 = vmul.f32 %v625, %v625
        %v690 = vmul.f32 %v626, %v626
        %v691 = vmul.f32 %v627, %v627
        %v692 = vmul.f32 %v628, %v628
        %v693 = vmul.f32 %v629, %v629
        %v694 = vmul.f32 %v630, %v630
        %v695 = vmul.f32 %v631, %v631
        %v696 = vmul.f32 %v632, %v632
        %v697 = vmul.f32 %v633, %v633
        %v698 = vmul.f32 %v634, %v634
        %v699 = vmul.f32 %v635, %v635
        %v700 = vmul.f32 %v636, %v636
        %v701 = vmul.f32 %v637, %v637
        %v702 = vmul.f32 %v638, %v638
        %v703 = vmul.f32 %v639, %v639
        %v704 = vmul.f32 %v640, %v640
        %v705 = vmul.f32 %v641, %v641
        %v706 = vmul.f32 %v642, %v642
        %v707 = vmul.f32 %v643, %v643
        %v708 = vmul.f32 %v644, %v644
        %v709 = vmul.f32 %v645, %v645
        %v710 = vmul.f32 %v646, %v646
        %v711 = vmul.f32 %v647, %v647
        %v712 = vmul.f32 %v648, %v648
        %v713 = vmul.f32 %v649, %v649
        %v714 = vmul.f32 %v650, %v650
        %v715 = vmul.f32 %v651, %v651
        %v716 = vmul.f32 %v652, %v652
        %v717 = vmul.f32 %v653, %v653
        %v718 = vmul.f32 %v654, %v654
        %v719 = vmul.f32 %v655, %v655
        %v720 = vmul.f32 %v656, %v656
        %v721 = vmul.f32 %v657, %v657
        %v722 = vmul.f32 %v658, %v658
        %v723 = vmul.f32 %v659, %v659
        %v724 = vmul.f32 %v660, %v660
        %v725 = vmul.f32 %v661, %v661
        %v726 = vmul.f32 %v662, %v662
        %v727 = vmul.f32 %v663, %v663
        %v728 = vmul.f32 %v664, %v664
        %v729 = vmul.f32 %v665, %v665
        %v730 = vmul.f32 %v666, %v666
        %v731 = vmul.f32 %v667, %v667
        %v732 = vmul.f32 %v668, %v668
        %v733 = vmul.f32 %v669, %v669
        %v734 = vmul.f32 %v670, %v670
        %v735 = vmul.f32 %v671, %v671
        %v736 = vmul.f32 %v672, %v672
        %v737 = vmul.f32 %v673, %v673
        %v738 = vmul.f32 %v674, %v674
        %v739 = vmul.f32 %v675, %v675
        %v740 = vmul.f32 %v676, %v676
        %v741 = vmul.f32 %v677, %v677
        %v742 = vmul.f32 %v678, %v678
        %v743 = vmul.f32 %v679, %v679
        %v744 = vmul.f32 %v680, %v680
        %v745 = vmul.f32 %v681, %v681
        %v746 = vmul.f32 %v682, %v682
        %v747 = vmul.f32 %v683, %v683
        %v748 = vsel %vm479, %v684, 0.0
        %v749 = vsel %vm479, %v685, 0.0
        %v750 = vadd.f32 %v748, %v749
        %v751 = vsel %vm479, %v686, 0.0
        %v752 = vadd.f32 %v750, %v751
        %v753 = vsel %vm479, %v687, 0.0
        %v754 = vadd.f32 %v752, %v753
        %v755 = vsel %vm479, %v688, 0.0
        %v756 = vadd.f32 %v754, %v755
        %v757 = vsel %vm479, %v689, 0.0
        %v758 = vadd.f32 %v756, %v757
        %v759 = vsel %vm479, %v690, 0.0
        %v760 = vadd.f32 %v758, %v759
        %v761 = vsel %vm479, %v691, 0.0
        %v762 = vadd.f32 %v760, %v761
        %v763 = vsel %vm479, %v692, 0.0
        %v764 = vadd.f32 %v762, %v763
        %v765 = vsel %vm479, %v693, 0.0
        %v766 = vadd.f32 %v764, %v765
        %v767 = vsel %vm479, %v694, 0.0
        %v768 = vadd.f32 %v766, %v767
        %v769 = vsel %vm479, %v695, 0.0
        %v770 = vadd.f32 %v768, %v769
        %v771 = vsel %vm479, %v696, 0.0
        %v772 = vadd.f32 %v770, %v771
        %v773 = vsel %vm479, %v697, 0.0
        %v774 = vadd.f32 %v772, %v773
        %v775 = vsel %vm479, %v698, 0.0
        %v776 = vadd.f32 %v774, %v775
        %v777 = vsel %vm479, %v699, 0.0
        %v778 = vadd.f32 %v776, %v777
        %v779 = vsel %vm479, %v700, 0.0
        %v780 = vadd.f32 %v778, %v779
        %v781 = vsel %vm479, %v701, 0.0
        %v782 = vadd.f32 %v780, %v781
        %v783 = vsel %vm479, %v702, 0.0
        %v784 = vadd.f32 %v782, %v783
        %v785 = vsel %vm479, %v703, 0.0
        %v786 = vadd.f32 %v784, %v785
        %v787 = vsel %vm479, %v704, 0.0
        %v788 = vadd.f32 %v786, %v787
        %v789 = vsel %vm479, %v705, 0.0
        %v790 = vadd.f32 %v788, %v789
        %v791 = vsel %vm479, %v706, 0.0
        %v792 = vadd.f32 %v790, %v791
        %v793 = vsel %vm479, %v707, 0.0
        %v794 = vadd.f32 %v792, %v793
        %v795 = vsel %vm479, %v708, 0.0
        %v796 = vadd.f32 %v794, %v795
        %v797 = vsel %vm479, %v709, 0.0
        %v798 = vadd.f32 %v796, %v797
        %v799 = vsel %vm479, %v710, 0.0
        %v800 = vadd.f32 %v798, %v799
        %v801 = vsel %vm479, %v711, 0.0
        %v802 = vadd.f32 %v800, %v801
        %v803 = vsel %vm479, %v712, 0.0
        %v804 = vadd.f32 %v802, %v803
        %v805 = vsel %vm479, %v713, 0.0
        %v806 = vadd.f32 %v804, %v805
        %v807 = vsel %vm479, %v714, 0.0
        %v808 = vadd.f32 %v806, %v807
        %v809 = vsel %vm479, %v715, 0.0
        %v810 = vadd.f32 %v808, %v809
        %v811 = vsel %vm479, %v716, 0.0
        %v812 = vadd.f32 %v810, %v811
        %v813 = vsel %vm479, %v717, 0.0
        %v814 = vadd.f32 %v812, %v813
        %v815 = vsel %vm479, %v718, 0.0
        %v816 = vadd.f32 %v814, %v815
        %v817 = vsel %vm479, %v719, 0.0
        %v818 = vadd.f32 %v816, %v817
        %v819 = vsel %vm479, %v720, 0.0
        %v820 = vadd.f32 %v818, %v819
        %v821 = vsel %vm479, %v721, 0.0
        %v822 = vadd.f32 %v820, %v821
        %v823 = vsel %vm479, %v722, 0.0
        %v824 = vadd.f32 %v822, %v823
        %v825 = vsel %vm479, %v723, 0.0
        %v826 = vadd.f32 %v824, %v825
        %v827 = vsel %vm479, %v724, 0.0
        %v828 = vadd.f32 %v826, %v827
        %v829 = vsel %vm479, %v725, 0.0
        %v830 = vadd.f32 %v828, %v829
        %v831 = vsel %vm479, %v726, 0.0
        %v832 = vadd.f32 %v830, %v831
        %v833 = vsel %vm479, %v727, 0.0
        %v834 = vadd.f32 %v832, %v833
        %v835 = vsel %vm479, %v728, 0.0
        %v836 = vadd.f32 %v834, %v835
        %v837 = vsel %vm479, %v729, 0.0
        %v838 = vadd.f32 %v836, %v837
        %v839 = vsel %vm479, %v730, 0.0
        %v840 = vadd.f32 %v838, %v839
        %v841 = vsel %vm479, %v731, 0.0
        %v842 = vadd.f32 %v840, %v841
        %v843 = vsel %vm479, %v732, 0.0
        %v844 = vadd.f32 %v842, %v843
        %v845 = vsel %vm479, %v733, 0.0
        %v846 = vadd.f32 %v844, %v845
        %v847 = vsel %vm479, %v734, 0.0
        %v848 = vadd.f32 %v846, %v847
        %v849 = vsel %vm479, %v735, 0.0
        %v850 = vadd.f32 %v848, %v849
        %v851 = vsel %vm479, %v736, 0.0
        %v852 = vadd.f32 %v850, %v851
        %v853 = vsel %vm479, %v737, 0.0
        %v854 = vadd.f32 %v852, %v853
        %v855 = vsel %vm479, %v738, 0.0
        %v856 = vadd.f32 %v854, %v855
        %v857 = vsel %vm479, %v739, 0.0
        %v858 = vadd.f32 %v856, %v857
        %v859 = vsel %vm479, %v740, 0.0
        %v860 = vadd.f32 %v858, %v859
        %v861 = vsel %vm479, %v741, 0.0
        %v862 = vadd.f32 %v860, %v861
        %v863 = vsel %vm479, %v742, 0.0
        %v864 = vadd.f32 %v862, %v863
        %v865 = vsel %vm479, %v743, 0.0
        %v866 = vadd.f32 %v864, %v865
        %v867 = vsel %vm479, %v744, 0.0
        %v868 = vadd.f32 %v866, %v867
        %v869 = vsel %vm479, %v745, 0.0
        %v870 = vadd.f32 %v868, %v869
        %v871 = vsel %vm479, %v746, 0.0
        %v872 = vadd.f32 %v870, %v871
        %v873 = vsel %vm479, %v747, 0.0
        %v874 = vadd.f32 %v872, %v873
        %875 = vadd.xlane.f32.xlu0 %v874
        %v876 = vpop.xlane.xlu0 %875
        %v877 = vrot.slane %v876, 4
        %v878 = vadd.f32 %v876, %v877
        %v879 = vrot.slane %v878, 2
        %v880 = vadd.f32 %v878, %v879
        %v881 = vrot.slane %v880, 1
        %v882 = vadd.f32 %v880, %v881
        %s883 = vtos %v882
        %v884 = vrcp.pop 4096.0
        %s885 = vtos %v884
        %s886 = smul.f32 %s883, %s885
        %s887 = sadd.f32 %s886, 1e-06
        %v888 = vstv %s887
        %v889 = vrsqrt.pop %v888
        %s890 = vtos %v889
        %v891 = vstv %s890
        %v892 = vmul.f32 %v620, %v891
        %v893 = vmul.f32 %v621, %v891
        %v894 = vmul.f32 %v622, %v891
        %v895 = vmul.f32 %v623, %v891
        %v896 = vmul.f32 %v624, %v891
        %v897 = vmul.f32 %v625, %v891
        %v898 = vmul.f32 %v626, %v891
        %v899 = vmul.f32 %v627, %v891
        %v900 = vmul.f32 %v628, %v891
        %v901 = vmul.f32 %v629, %v891
        %v902 = vmul.f32 %v630, %v891
        %v903 = vmul.f32 %v631, %v891
        %v904 = vmul.f32 %v632, %v891
        %v905 = vmul.f32 %v633, %v891
        %v906 = vmul.f32 %v634, %v891
        %v907 = vmul.f32 %v635, %v891
        %v908 = vmul.f32 %v636, %v891
        %v909 = vmul.f32 %v637, %v891
        %v910 = vmul.f32 %v638, %v891
        %v911 = vmul.f32 %v639, %v891
        %v912 = vmul.f32 %v640, %v891
        %v913 = vmul.f32 %v641, %v891
        %v914 = vmul.f32 %v642, %v891
        %v915 = vmul.f32 %v643, %v891
        %v916 = vmul.f32 %v644, %v891
        %v917 = vmul.f32 %v645, %v891
        %v918 = vmul.f32 %v646, %v891
        %v919 = vmul.f32 %v647, %v891
        %v920 = vmul.f32 %v648, %v891
        %v921 = vmul.f32 %v649, %v891
        %v922 = vmul.f32 %v650, %v891
        %v923 = vmul.f32 %v651, %v891
        %v924 = vmul.f32 %v652, %v891
        %v925 = vmul.f32 %v653, %v891
        %v926 = vmul.f32 %v654, %v891
        %v927 = vmul.f32 %v655, %v891
        %v928 = vmul.f32 %v656, %v891
        %v929 = vmul.f32 %v657, %v891
        %v930 = vmul.f32 %v658, %v891
        %v931 = vmul.f32 %v659, %v891
        %v932 = vmul.f32 %v660, %v891
        %v933 = vmul.f32 %v661, %v891
        %v934 = vmul.f32 %v662, %v891
        %v935 = vmul.f32 %v663, %v891
        %v936 = vmul.f32 %v664, %v891
        %v937 = vmul.f32 %v665, %v891
        %v938 = vmul.f32 %v666, %v891
        %v939 = vmul.f32 %v667, %v891
        %v940 = vmul.f32 %v668, %v891
        %v941 = vmul.f32 %v669, %v891
        %v942 = vmul.f32 %v670, %v891
        %v943 = vmul.f32 %v671, %v891
        %v944 = vmul.f32 %v672, %v891
        %v945 = vmul.f32 %v673, %v891
        %v946 = vmul.f32 %v674, %v891
        %v947 = vmul.f32 %v675, %v891
        %v948 = vmul.f32 %v676, %v891
        %v949 = vmul.f32 %v677, %v891
        %v950 = vmul.f32 %v678, %v891
        %v951 = vmul.f32 %v679, %v891
        %v952 = vmul.f32 %v680, %v891
        %v953 = vmul.f32 %v681, %v891
        %v954 = vmul.f32 %v682, %v891
        %v955 = vmul.f32 %v683, %v891
        %v956 = vld [vmem:[%s1] sm:$0x1]
        %v958 = vlaneseq
        %v959 = vshrl.u32 %v958, 7
        %v960 = vsub.s32 0, %v959
        %v961 = vrot.slane %v956, %v960
        %v963 = vmul.f32 %v892, %v961
        %v964 = vmul.f32 %v893, %v961
        %v965 = vmul.f32 %v894, %v961
        %v966 = vmul.f32 %v895, %v961
        %v967 = vmul.f32 %v896, %v961
        %v968 = vmul.f32 %v897, %v961
        %v969 = vmul.f32 %v898, %v961
        %v970 = vmul.f32 %v899, %v961
        %v971 = vmul.f32 %v900, %v961
        %v972 = vmul.f32 %v901, %v961
        %v973 = vmul.f32 %v902, %v961
        %v974 = vmul.f32 %v903, %v961
        %v975 = vmul.f32 %v904, %v961
        %v976 = vmul.f32 %v905, %v961
        %v977 = vmul.f32 %v906, %v961
        %v978 = vmul.f32 %v907, %v961
        %v979 = vmul.f32 %v908, %v961
        %v980 = vmul.f32 %v909, %v961
        %v981 = vmul.f32 %v910, %v961
        %v982 = vmul.f32 %v911, %v961
        %v983 = vmul.f32 %v912, %v961
        %v984 = vmul.f32 %v913, %v961
        %v985 = vmul.f32 %v914, %v961
        %v986 = vmul.f32 %v915, %v961
        %v987 = vmul.f32 %v916, %v961
        %v988 = vmul.f32 %v917, %v961
        %v989 = vmul.f32 %v918, %v961
        %v990 = vmul.f32 %v919, %v961
        %v991 = vmul.f32 %v920, %v961
        %v992 = vmul.f32 %v921, %v961
        %v993 = vmul.f32 %v922, %v961
        %v994 = vmul.f32 %v923, %v961
        %v995 = vmul.f32 %v924, %v961
        %v996 = vmul.f32 %v925, %v961
        %v997 = vmul.f32 %v926, %v961
        %v998 = vmul.f32 %v927, %v961
        %v999 = vmul.f32 %v928, %v961
        %v1000 = vmul.f32 %v929, %v961
        %v1001 = vmul.f32 %v930, %v961
        %v1002 = vmul.f32 %v931, %v961
        %v1003 = vmul.f32 %v932, %v961
        %v1004 = vmul.f32 %v933, %v961
        %v1005 = vmul.f32 %v934, %v961
        %v1006 = vmul.f32 %v935, %v961
        %v1007 = vmul.f32 %v936, %v961
        %v1008 = vmul.f32 %v937, %v961
        %v1009 = vmul.f32 %v938, %v961
        %v1010 = vmul.f32 %v939, %v961
        %v1011 = vmul.f32 %v940, %v961
        %v1012 = vmul.f32 %v941, %v961
        %v1013 = vmul.f32 %v942, %v961
        %v1014 = vmul.f32 %v943, %v961
        %v1015 = vmul.f32 %v944, %v961
        %v1016 = vmul.f32 %v945, %v961
        %v1017 = vmul.f32 %v946, %v961
        %v1018 = vmul.f32 %v947, %v961
        %v1019 = vmul.f32 %v948, %v961
        %v1020 = vmul.f32 %v949, %v961
        %v1021 = vmul.f32 %v950, %v961
        %v1022 = vmul.f32 %v951, %v961
        %v1023 = vmul.f32 %v952, %v961
        %v1024 = vmul.f32 %v953, %v961
        %v1025 = vmul.f32 %v954, %v961
        %v1026 = vmul.f32 %v955, %v961
        %v1027 = vld [vmem:[%s2] sm:$0x1]
        %v1029 = vlaneseq
        %v1030 = vshrl.u32 %v1029, 7
        %v1031 = vsub.s32 0, %v1030
        %v1032 = vrot.slane %v1027, %v1031
        %v1034 = vadd.f32 %v963, %v1032
        %v1035 = vadd.f32 %v964, %v1032
        %v1036 = vadd.f32 %v965, %v1032
        %v1037 = vadd.f32 %v966, %v1032
        %v1038 = vadd.f32 %v967, %v1032
        %v1039 = vadd.f32 %v968, %v1032
        %v1040 = vadd.f32 %v969, %v1032
        %v1041 = vadd.f32 %v970, %v1032
        %v1042 = vadd.f32 %v971, %v1032
        %v1043 = vadd.f32 %v972, %v1032
        %v1044 = vadd.f32 %v973, %v1032
        %v1045 = vadd.f32 %v974, %v1032
        %v1046 = vadd.f32 %v975, %v1032
        %v1047 = vadd.f32 %v976, %v1032
        %v1048 = vadd.f32 %v977, %v1032
        %v1049 = vadd.f32 %v978, %v1032
        %v1050 = vadd.f32 %v979, %v1032
        %v1051 = vadd.f32 %v980, %v1032
        %v1052 = vadd.f32 %v981, %v1032
        %v1053 = vadd.f32 %v982, %v1032
        %v1054 = vadd.f32 %v983, %v1032
        %v1055 = vadd.f32 %v984, %v1032
        %v1056 = vadd.f32 %v985, %v1032
        %v1057 = vadd.f32 %v986, %v1032
        %v1058 = vadd.f32 %v987, %v1032
        %v1059 = vadd.f32 %v988, %v1032
        %v1060 = vadd.f32 %v989, %v1032
        %v1061 = vadd.f32 %v990, %v1032
        %v1062 = vadd.f32 %v991, %v1032
        %v1063 = vadd.f32 %v992, %v1032
        %v1064 = vadd.f32 %v993, %v1032
        %v1065 = vadd.f32 %v994, %v1032
        %v1066 = vadd.f32 %v995, %v1032
        %v1067 = vadd.f32 %v996, %v1032
        %v1068 = vadd.f32 %v997, %v1032
        %v1069 = vadd.f32 %v998, %v1032
        %v1070 = vadd.f32 %v999, %v1032
        %v1071 = vadd.f32 %v1000, %v1032
        %v1072 = vadd.f32 %v1001, %v1032
        %v1073 = vadd.f32 %v1002, %v1032
        %v1074 = vadd.f32 %v1003, %v1032
        %v1075 = vadd.f32 %v1004, %v1032
        %v1076 = vadd.f32 %v1005, %v1032
        %v1077 = vadd.f32 %v1006, %v1032
        %v1078 = vadd.f32 %v1007, %v1032
        %v1079 = vadd.f32 %v1008, %v1032
        %v1080 = vadd.f32 %v1009, %v1032
        %v1081 = vadd.f32 %v1010, %v1032
        %v1082 = vadd.f32 %v1011, %v1032
        %v1083 = vadd.f32 %v1012, %v1032
        %v1084 = vadd.f32 %v1013, %v1032
        %v1085 = vadd.f32 %v1014, %v1032
        %v1086 = vadd.f32 %v1015, %v1032
        %v1087 = vadd.f32 %v1016, %v1032
        %v1088 = vadd.f32 %v1017, %v1032
        %v1089 = vadd.f32 %v1018, %v1032
        %v1090 = vadd.f32 %v1019, %v1032
        %v1091 = vadd.f32 %v1020, %v1032
        %v1092 = vadd.f32 %v1021, %v1032
        %v1093 = vadd.f32 %v1022, %v1032
        %v1094 = vadd.f32 %v1023, %v1032
        %v1095 = vadd.f32 %v1024, %v1032
        %v1096 = vadd.f32 %v1025, %v1032
        %v1097 = vadd.f32 %v1026, %v1032
        %v1098 = vpack.c.bf16 %v1035, %v1034
        %v1099 = vpack.c.bf16 %v1037, %v1036
        %v1100 = vpack.c.bf16 %v1039, %v1038
        %v1101 = vpack.c.bf16 %v1041, %v1040
        %v1102 = vpack.c.bf16 %v1043, %v1042
        %v1103 = vpack.c.bf16 %v1045, %v1044
        %v1104 = vpack.c.bf16 %v1047, %v1046
        %v1105 = vpack.c.bf16 %v1049, %v1048
        %v1106 = vpack.c.bf16 %v1051, %v1050
        %v1107 = vpack.c.bf16 %v1053, %v1052
        %v1108 = vpack.c.bf16 %v1055, %v1054
        %v1109 = vpack.c.bf16 %v1057, %v1056
        %v1110 = vpack.c.bf16 %v1059, %v1058
        %v1111 = vpack.c.bf16 %v1061, %v1060
        %v1112 = vpack.c.bf16 %v1063, %v1062
        %v1113 = vpack.c.bf16 %v1065, %v1064
        %v1114 = vpack.c.bf16 %v1067, %v1066
        %v1115 = vpack.c.bf16 %v1069, %v1068
        %v1116 = vpack.c.bf16 %v1071, %v1070
        %v1117 = vpack.c.bf16 %v1073, %v1072
        %v1118 = vpack.c.bf16 %v1075, %v1074
        %v1119 = vpack.c.bf16 %v1077, %v1076
        %v1120 = vpack.c.bf16 %v1079, %v1078
        %v1121 = vpack.c.bf16 %v1081, %v1080
        %v1122 = vpack.c.bf16 %v1083, %v1082
        %v1123 = vpack.c.bf16 %v1085, %v1084
        %v1124 = vpack.c.bf16 %v1087, %v1086
        %v1125 = vpack.c.bf16 %v1089, %v1088
        %v1126 = vpack.c.bf16 %v1091, %v1090
        %v1127 = vpack.c.bf16 %v1093, %v1092
        %v1128 = vpack.c.bf16 %v1095, %v1094
        %v1129 = vpack.c.bf16 %v1097, %v1096
        %1130 = vst.msk [vmem:[#allocation2] sm:$0xff] %vm479, %v1098
        %1131 = vst.msk [vmem:[#allocation2 + $0x8] sm:$0xff] %vm479, %v1099
        %1132 = vst.msk [vmem:[#allocation2 + $0x10] sm:$0xff] %vm479, %v1100
        %1133 = vst.msk [vmem:[#allocation2 + $0x18] sm:$0xff] %vm479, %v1101
        %1134 = vst.msk [vmem:[#allocation2 + $0x20] sm:$0xff] %vm479, %v1102
        %1135 = vst.msk [vmem:[#allocation2 + $0x28] sm:$0xff] %vm479, %v1103
        %1136 = vst.msk [vmem:[#allocation2 + $0x30] sm:$0xff] %vm479, %v1104
        %1137 = vst.msk [vmem:[#allocation2 + $0x38] sm:$0xff] %vm479, %v1105
        %1138 = vst.msk [vmem:[#allocation2 + $0x40] sm:$0xff] %vm479, %v1106
        %1139 = vst.msk [vmem:[#allocation2 + $0x48] sm:$0xff] %vm479, %v1107
        %1140 = vst.msk [vmem:[#allocation2 + $0x50] sm:$0xff] %vm479, %v1108
        %1141 = vst.msk [vmem:[#allocation2 + $0x58] sm:$0xff] %vm479, %v1109
        %1142 = vst.msk [vmem:[#allocation2 + $0x60] sm:$0xff] %vm479, %v1110
        %1143 = vst.msk [vmem:[#allocation2 + $0x68] sm:$0xff] %vm479, %v1111
        %1144 = vst.msk [vmem:[#allocation2 + $0x70] sm:$0xff] %vm479, %v1112
        %1145 = vst.msk [vmem:[#allocation2 + $0x78] sm:$0xff] %vm479, %v1113
        %1146 = vst.msk [vmem:[#allocation2 + $0x80] sm:$0xff] %vm479, %v1114
        %1147 = vst.msk [vmem:[#allocation2 + $0x88] sm:$0xff] %vm479, %v1115
        %1148 = vst.msk [vmem:[#allocation2 + $0x90] sm:$0xff] %vm479, %v1116
        %1149 = vst.msk [vmem:[#allocation2 + $0x98] sm:$0xff] %vm479, %v1117
        %1150 = vst.msk [vmem:[#allocation2 + $0xa0] sm:$0xff] %vm479, %v1118
        %1151 = vst.msk [vmem:[#allocation2 + $0xa8] sm:$0xff] %vm479, %v1119
        %1152 = vst.msk [vmem:[#allocation2 + $0xb0] sm:$0xff] %vm479, %v1120
        %1153 = vst.msk [vmem:[#allocation2 + $0xb8] sm:$0xff] %vm479, %v1121
        %1154 = vst.msk [vmem:[#allocation2 + $0xc0] sm:$0xff] %vm479, %v1122
        %1155 = vst.msk [vmem:[#allocation2 + $0xc8] sm:$0xff] %vm479, %v1123
        %1156 = vst.msk [vmem:[#allocation2 + $0xd0] sm:$0xff] %vm479, %v1124
        %1157 = vst.msk [vmem:[#allocation2 + $0xd8] sm:$0xff] %vm479, %v1125
        %1158 = vst.msk [vmem:[#allocation2 + $0xe0] sm:$0xff] %vm479, %v1126
        %1159 = vst.msk [vmem:[#allocation2 + $0xe8] sm:$0xff] %vm479, %v1127
        %1160 = vst.msk [vmem:[#allocation2 + $0xf0] sm:$0xff] %vm479, %v1128
        %1161 = vst.msk [vmem:[#allocation2 + $0xf8] sm:$0xff] %vm479, %v1129
        %v1162 = vld [vmem:[%s5] sm:$0xf]
        %v1163 = vld [vmem:[%s6] sm:$0x1]
        %v1165 = vlaneseq
        %v1166 = vshrl.u32 %v1165, 7
        %v1167 = vsub.s32 0, %v1166
        %v1168 = vrot.slane %v1163, %v1167
        %v1171 = vsel %vm479, %v1098, 0
        %v1174 = vsel %vm479, %v1099, 0
        %v1177 = vsel %vm479, %v1100, 0
        %v1180 = vsel %vm479, %v1101, 0
        %v1183 = vsel %vm479, %v1102, 0
        %v1186 = vsel %vm479, %v1103, 0
        %v1189 = vsel %vm479, %v1104, 0
        %v1192 = vsel %vm479, %v1105, 0
        %v1195 = vsel %vm479, %v1106, 0
        %v1198 = vsel %vm479, %v1107, 0
        %v1201 = vsel %vm479, %v1108, 0
        %v1204 = vsel %vm479, %v1109, 0
        %v1207 = vsel %vm479, %v1110, 0
        %v1210 = vsel %vm479, %v1111, 0
        %v1213 = vsel %vm479, %v1112, 0
        %v1216 = vsel %vm479, %v1113, 0
        %v1219 = vsel %vm479, %v1114, 0
        %v1222 = vsel %vm479, %v1115, 0
        %v1225 = vsel %vm479, %v1116, 0
        %v1228 = vsel %vm479, %v1117, 0
        %v1231 = vsel %vm479, %v1118, 0
        %v1234 = vsel %vm479, %v1119, 0
        %v1237 = vsel %vm479, %v1120, 0
        %v1240 = vsel %vm479, %v1121, 0
        %v1243 = vsel %vm479, %v1122, 0
        %v1246 = vsel %vm479, %v1123, 0
        %v1249 = vsel %vm479, %v1124, 0
        %v1252 = vsel %vm479, %v1125, 0
        %v1255 = vsel %vm479, %v1126, 0
        %v1258 = vsel %vm479, %v1127, 0
        %v1261 = vsel %vm479, %v1128, 0
        %v1264 = vsel %vm479, %v1129, 0
        %vm1266 = vcmask 1043456
        %v1268 = vsel %vm1266, %v1162, 0
        %1270 = vmatprep.subr.bf16.mxu0 0
        %1271 = vmatpush1.bf16.msra.mxu0 %v1268
        %1272 = vmatprep.subr.bf16.mxu0 0
        %1273 = vmatpush1.bf16.msra.mxu0 0
        %1274 = vmatprep.subr.bf16.mxu0 0
        %1275 = vmatpush1.bf16.msra.mxu0 0
        %1276 = vmatprep.subr.bf16.mxu0 0
        %1277 = vmatpush1.bf16.msra.mxu0 0
        %1278 = vmatprep.subr.bf16.mxu0 0
        %1279 = vmatpush1.bf16.msra.mxu0 0
        %1280 = vmatprep.subr.bf16.mxu0 0
        %1281 = vmatpush1.bf16.msra.mxu0 0
        %1282 = vmatprep.subr.bf16.mxu0 0
        %1283 = vmatpush1.bf16.msra.mxu0 0
        %1284 = vmatprep.subr.bf16.mxu0 0
        %1285 = vmatpush1.bf16.msra.mxu0 0
        %1286 = vmatprep.subr.bf16.mxu0 0
        %1287 = vmatpush1.bf16.msra.mxu0 0
        %1288 = vmatprep.subr.bf16.mxu0 0
        %1289 = vmatpush1.bf16.msra.mxu0 0
        %1290 = vmatprep.subr.bf16.mxu0 0
        %1291 = vmatpush1.bf16.msra.mxu0 0
        %1292 = vmatprep.subr.bf16.mxu0 0
        %1293 = vmatpush1.bf16.msra.mxu0 0
        %1294 = vmatprep.subr.bf16.mxu0 0
        %1295 = vmatpush1.bf16.msra.mxu0 0
        %1296 = vmatprep.subr.bf16.mxu0 0
        %1297 = vmatpush1.bf16.msra.mxu0 0
        %1298 = vmatprep.subr.bf16.mxu0 0
        %1299 = vmatpush1.bf16.msra.mxu0 0
        %1300 = vmatprep.subr.bf16.mxu0 0
        %1301 = vmatpush1.bf16.msra.mxu0 0
        %1302 = vmatprep.mubr.bf16.mxu0 0
        %1303 = vmatmul.mubr.bf16.gmra.mrb[0].mxu0 %v1171
        %v1304 = vpop.f32.mrb[0].mxu0
        %v1305 = vadd.f32 %v1168, %v1304
        %v1306 = vpop.f32.mrb[0].mxu0
        %v1307 = vpop.f32.mrb[0].mxu0
        %v1308 = vadd.f32 %v1168, %v1307
        %v1309 = vpop.f32.mrb[0].mxu0
        %1310 = vmatprep.mubr.bf16.mxu0 0
        %1311 = vmatmul.mubr.bf16.gmra.mrb[0].mxu0 %v1174
        %v1312 = vpop.f32.mrb[0].mxu0
        %v1313 = vadd.f32 %v1168, %v1312
        %v1314 = vpop.f32.mrb[0].mxu0
        %v1315 = vpop.f32.mrb[0].mxu0
        %v1316 = vadd.f32 %v1168, %v1315
        %v1317 = vpop.f32.mrb[0].mxu0
        %1318 = vmatprep.mubr.bf16.mxu0 0
        %1319 = vmatmul.mubr.bf16.gmra.mrb[0].mxu0 %v1177
        %v1320 = vpop.f32.mrb[0].mxu0
        %v1321 = vadd.f32 %v1168, %v1320
        %v1322 = vpop.f32.mrb[0].mxu0
        %v1323 = vpop.f32.mrb[0].mxu0
        %v1324 = vadd.f32 %v1168, %v1323
        %v1325 = vpop.f32.mrb[0].mxu0
        %1326 = vmatprep.mubr.bf16.mxu0 0
        %1327 = vmatmul.mubr.bf16.gmra.mrb[0].mxu0 %v1180
        %v1328 = vpop.f32.mrb[0].mxu0
        %v1329 = vadd.f32 %v1168, %v1328
        %v1330 = vpop.f32.mrb[0].mxu0
        %v1331 = vpop.f32.mrb[0].mxu0
        %v1332 = vadd.f32 %v1168, %v1331
        %v1333 = vpop.f32.mrb[0].mxu0
        %1334 = vmatprep.mubr.bf16.mxu0 0
        %1335 = vmatmul.mubr.bf16.gmra.mrb[0].mxu0 %v1183
        %v1336 = vpop.f32.mrb[0].mxu0
        %v1337 = vadd.f32 %v1168, %v1336
        %v1338 = vpop.f32.mrb[0].mxu0
        %v1339 = vpop.f32.mrb[0].mxu0
        %v1340 = vadd.f32 %v1168, %v1339
        %v1341 = vpop.f32.mrb[0].mxu0
        %1342 = vmatprep.mubr.bf16.mxu0 0
        %1343 = vmatmul.mubr.bf16.gmra.mrb[0].mxu0 %v1186
        %v1344 = vpop.f32.mrb[0].mxu0
        %v1345 = vadd.f32 %v1168, %v1344
        %v1346 = vpop.f32.mrb[0].mxu0
        %v1347 = vpop.f32.mrb[0].mxu0
        %v1348 = vadd.f32 %v1168, %v1347
        %v1349 = vpop.f32.mrb[0].mxu0
        %1350 = vmatprep.mubr.bf16.mxu0 0
        %1351 = vmatmul.mubr.bf16.gmra.mrb[0].mxu0 %v1189
        %v1352 = vpop.f32.mrb[0].mxu0
        %v1353 = vadd.f32 %v1168, %v1352
        %v1354 = vpop.f32.mrb[0].mxu0
        %v1355 = vpop.f32.mrb[0].mxu0
        %v1356 = vadd.f32 %v1168, %v1355
        %v1357 = vpop.f32.mrb[0].mxu0
        %1358 = vmatprep.mubr.bf16.mxu0 0
        %1359 = vmatmul.mubr.bf16.gmra.mrb[0].mxu0 %v1192
        %v1360 = vpop.f32.mrb[0].mxu0
        %v1361 = vadd.f32 %v1168, %v1360
        %v1362 = vpop.f32.mrb[0].mxu0
        %v1363 = vpop.f32.mrb[0].mxu0
        %v1364 = vadd.f32 %v1168, %v1363
        %v1365 = vpop.f32.mrb[0].mxu0
        %1366 = vmatprep.mubr.bf16.mxu0 0
        %1367 = vmatmul.mubr.bf16.gmra.mrb[0].mxu0 %v1195
        %v1368 = vpop.f32.mrb[0].mxu0
        %v1369 = vadd.f32 %v1168, %v1368
        %v1370 = vpop.f32.mrb[0].mxu0
        %v1371 = vpop.f32.mrb[0].mxu0
        %v1372 = vadd.f32 %v1168, %v1371
        %v1373 = vpop.f32.mrb[0].mxu0
        %1374 = vmatprep.mubr.bf16.mxu0 0
        %1375 = vmatmul.mubr.bf16.gmra.mrb[0].mxu0 %v1198
        %v1376 = vpop.f32.mrb[0].mxu0
        %v1377 = vadd.f32 %v1168, %v1376
        %v1378 = vpop.f32.mrb[0].mxu0
        %v1379 = vpop.f32.mrb[0].mxu0
        %v1380 = vadd.f32 %v1168, %v1379
        %v1381 = vpop.f32.mrb[0].mxu0
        %1382 = vmatprep.mubr.bf16.mxu0 0
        %1383 = vmatmul.mubr.bf16.gmra.mrb[0].mxu0 %v1201
        %v1384 = vpop.f32.mrb[0].mxu0
        %v1385 = vadd.f32 %v1168, %v1384
        %v1386 = vpop.f32.mrb[0].mxu0
        %v1387 = vpop.f32.mrb[0].mxu0
        %v1388 = vadd.f32 %v1168, %v1387
        %v1389 = vpop.f32.mrb[0].mxu0
        %1390 = vmatprep.mubr.bf16.mxu0 0
        %1391 = vmatmul.mubr.bf16.gmra.mrb[0].mxu0 %v1204
        %v1392 = vpop.f32.mrb[0].mxu0
        %v1393 = vadd.f32 %v1168, %v1392
        %v1394 = vpop.f32.mrb[0].mxu0
        %v1395 = vpop.f32.mrb[0].mxu0
        %v1396 = vadd.f32 %v1168, %v1395
        %v1397 = vpop.f32.mrb[0].mxu0
        %1398 = vmatprep.mubr.bf16.mxu0 0
        %1399 = vmatmul.mubr.bf16.gmra.mrb[0].mxu0 %v1207
        %v1400 = vpop.f32.mrb[0].mxu0
        %v1401 = vadd.f32 %v1168, %v1400
        %v1402 = vpop.f32.mrb[0].mxu0
        %v1403 = vpop.f32.mrb[0].mxu0
        %v1404 = vadd.f32 %v1168, %v1403
        %v1405 = vpop.f32.mrb[0].mxu0
        %1406 = vmatprep.mubr.bf16.mxu0 0
        %1407 = vmatmul.mubr.bf16.gmra.mrb[0].mxu0 %v1210
        %v1408 = vpop.f32.mrb[0].mxu0
        %v1409 = vadd.f32 %v1168, %v1408
        %v1410 = vpop.f32.mrb[0].mxu0
        %v1411 = vpop.f32.mrb[0].mxu0
        %v1412 = vadd.f32 %v1168, %v1411
        %v1413 = vpop.f32.mrb[0].mxu0
        %1414 = vmatprep.mubr.bf16.mxu0 0
        %1415 = vmatmul.mubr.bf16.gmra.mrb[0].mxu0 %v1213
        %v1416 = vpop.f32.mrb[0].mxu0
        %v1417 = vadd.f32 %v1168, %v1416
        %v1418 = vpop.f32.mrb[0].mxu0
        %v1419 = vpop.f32.mrb[0].mxu0
        %v1420 = vadd.f32 %v1168, %v1419
        %v1421 = vpop.f32.mrb[0].mxu0
        %1422 = vmatprep.mubr.bf16.mxu0 0
        %1423 = vmatmul.mubr.bf16.gmra.mrb[0].mxu0 %v1216
        %v1424 = vpop.f32.mrb[0].mxu0
        %v1425 = vadd.f32 %v1168, %v1424
        %v1426 = vpop.f32.mrb[0].mxu0
        %v1427 = vpop.f32.mrb[0].mxu0
        %v1428 = vadd.f32 %v1168, %v1427
        %v1429 = vpop.f32.mrb[0].mxu0
        %1430 = vmatprep.mubr.bf16.mxu0 0
        %1431 = vmatmul.mubr.bf16.gmra.mrb[0].mxu0 %v1219
        %v1432 = vpop.f32.mrb[0].mxu0
        %v1433 = vadd.f32 %v1168, %v1432
        %v1434 = vpop.f32.mrb[0].mxu0
        %v1435 = vpop.f32.mrb[0].mxu0
        %v1436 = vadd.f32 %v1168, %v1435
        %v1437 = vpop.f32.mrb[0].mxu0
        %1438 = vmatprep.mubr.bf16.mxu0 0
        %1439 = vmatmul.mubr.bf16.gmra.mrb[0].mxu0 %v1222
        %v1440 = vpop.f32.mrb[0].mxu0
        %v1441 = vadd.f32 %v1168, %v1440
        %v1442 = vpop.f32.mrb[0].mxu0
        %v1443 = vpop.f32.mrb[0].mxu0
        %v1444 = vadd.f32 %v1168, %v1443
        %v1445 = vpop.f32.mrb[0].mxu0
        %1446 = vmatprep.mubr.bf16.mxu0 0
        %1447 = vmatmul.mubr.bf16.gmra.mrb[0].mxu0 %v1225
        %v1448 = vpop.f32.mrb[0].mxu0
        %v1449 = vadd.f32 %v1168, %v1448
        %v1450 = vpop.f32.mrb[0].mxu0
        %v1451 = vpop.f32.mrb[0].mxu0
        %v1452 = vadd.f32 %v1168, %v1451
        %v1453 = vpop.f32.mrb[0].mxu0
        %1454 = vmatprep.mubr.bf16.mxu0 0
        %1455 = vmatmul.mubr.bf16.gmra.mrb[0].mxu0 %v1228
        %v1456 = vpop.f32.mrb[0].mxu0
        %v1457 = vadd.f32 %v1168, %v1456
        %v1458 = vpop.f32.mrb[0].mxu0
        %v1459 = vpop.f32.mrb[0].mxu0
        %v1460 = vadd.f32 %v1168, %v1459
        %v1461 = vpop.f32.mrb[0].mxu0
        %1462 = vmatprep.mubr.bf16.mxu0 0
        %1463 = vmatmul.mubr.bf16.gmra.mrb[0].mxu0 %v1231
        %v1464 = vpop.f32.mrb[0].mxu0
        %v1465 = vadd.f32 %v1168, %v1464
        %v1466 = vpop.f32.mrb[0].mxu0
        %v1467 = vpop.f32.mrb[0].mxu0
        %v1468 = vadd.f32 %v1168, %v1467
        %v1469 = vpop.f32.mrb[0].mxu0
        %1470 = vmatprep.mubr.bf16.mxu0 0
        %1471 = vmatmul.mubr.bf16.gmra.mrb[0].mxu0 %v1234
        %v1472 = vpop.f32.mrb[0].mxu0
        %v1473 = vadd.f32 %v1168, %v1472
        %v1474 = vpop.f32.mrb[0].mxu0
        %v1475 = vpop.f32.mrb[0].mxu0
        %v1476 = vadd.f32 %v1168, %v1475
        %v1477 = vpop.f32.mrb[0].mxu0
        %1478 = vmatprep.mubr.bf16.mxu0 0
        %1479 = vmatmul.mubr.bf16.gmra.mrb[0].mxu0 %v1237
        %v1480 = vpop.f32.mrb[0].mxu0
        %v1481 = vadd.f32 %v1168, %v1480
        %v1482 = vpop.f32.mrb[0].mxu0
        %v1483 = vpop.f32.mrb[0].mxu0
        %v1484 = vadd.f32 %v1168, %v1483
        %v1485 = vpop.f32.mrb[0].mxu0
        %1486 = vmatprep.mubr.bf16.mxu0 0
        %1487 = vmatmul.mubr.bf16.gmra.mrb[0].mxu0 %v1240
        %v1488 = vpop.f32.mrb[0].mxu0
        %v1489 = vadd.f32 %v1168, %v1488
        %v1490 = vpop.f32.mrb[0].mxu0
        %v1491 = vpop.f32.mrb[0].mxu0
        %v1492 = vadd.f32 %v1168, %v1491
        %v1493 = vpop.f32.mrb[0].mxu0
        %1494 = vmatprep.mubr.bf16.mxu0 0
        %1495 = vmatmul.mubr.bf16.gmra.mrb[0].mxu0 %v1243
        %v1496 = vpop.f32.mrb[0].mxu0
        %v1497 = vadd.f32 %v1168, %v1496
        %v1498 = vpop.f32.mrb[0].mxu0
        %v1499 = vpop.f32.mrb[0].mxu0
        %v1500 = vadd.f32 %v1168, %v1499
        %v1501 = vpop.f32.mrb[0].mxu0
        %1502 = vmatprep.mubr.bf16.mxu0 0
        %1503 = vmatmul.mubr.bf16.gmra.mrb[0].mxu0 %v1246
        %v1504 = vpop.f32.mrb[0].mxu0
        %v1505 = vadd.f32 %v1168, %v1504
        %v1506 = vpop.f32.mrb[0].mxu0
        %v1507 = vpop.f32.mrb[0].mxu0
        %v1508 = vadd.f32 %v1168, %v1507
        %v1509 = vpop.f32.mrb[0].mxu0
        %1510 = vmatprep.mubr.bf16.mxu0 0
        %1511 = vmatmul.mubr.bf16.gmra.mrb[0].mxu0 %v1249
        %v1512 = vpop.f32.mrb[0].mxu0
        %v1513 = vadd.f32 %v1168, %v1512
        %v1514 = vpop.f32.mrb[0].mxu0
        %v1515 = vpop.f32.mrb[0].mxu0
        %v1516 = vadd.f32 %v1168, %v1515
        %v1517 = vpop.f32.mrb[0].mxu0
        %1518 = vmatprep.mubr.bf16.mxu0 0
        %1519 = vmatmul.mubr.bf16.gmra.mrb[0].mxu0 %v1252
        %v1520 = vpop.f32.mrb[0].mxu0
        %v1521 = vadd.f32 %v1168, %v1520
        %v1522 = vpop.f32.mrb[0].mxu0
        %v1523 = vpop.f32.mrb[0].mxu0
        %v1524 = vadd.f32 %v1168, %v1523
        %v1525 = vpop.f32.mrb[0].mxu0
        %1526 = vmatprep.mubr.bf16.mxu0 0
        %1527 = vmatmul.mubr.bf16.gmra.mrb[0].mxu0 %v1255
        %v1528 = vpop.f32.mrb[0].mxu0
        %v1529 = vadd.f32 %v1168, %v1528
        %v1530 = vpop.f32.mrb[0].mxu0
        %v1531 = vpop.f32.mrb[0].mxu0
        %v1532 = vadd.f32 %v1168, %v1531
        %v1533 = vpop.f32.mrb[0].mxu0
        %1534 = vmatprep.mubr.bf16.mxu0 0
        %1535 = vmatmul.mubr.bf16.gmra.mrb[0].mxu0 %v1258
        %v1536 = vpop.f32.mrb[0].mxu0
        %v1537 = vadd.f32 %v1168, %v1536
        %v1538 = vpop.f32.mrb[0].mxu0
        %v1539 = vpop.f32.mrb[0].mxu0
        %v1540 = vadd.f32 %v1168, %v1539
        %v1541 = vpop.f32.mrb[0].mxu0
        %1542 = vmatprep.mubr.bf16.mxu0 0
        %1543 = vmatmul.mubr.bf16.gmra.mrb[0].mxu0 %v1261
        %v1544 = vpop.f32.mrb[0].mxu0
        %v1545 = vadd.f32 %v1168, %v1544
        %v1546 = vpop.f32.mrb[0].mxu0
        %v1547 = vpop.f32.mrb[0].mxu0
        %v1548 = vadd.f32 %v1168, %v1547
        %v1549 = vpop.f32.mrb[0].mxu0
        %1550 = vmatprep.mubr.bf16.mxu0 0
        %1551 = vmatmul.mubr.bf16.gmra.mrb[0].mxu0 %v1264
        %v1552 = vpop.f32.mrb[0].mxu0
        %v1553 = vadd.f32 %v1168, %v1552
        %v1554 = vpop.f32.mrb[0].mxu0
        %v1555 = vpop.f32.mrb[0].mxu0
        %v1556 = vadd.f32 %v1168, %v1555
        %v1557 = vpop.f32.mrb[0].mxu0
        %1558 = vdwg.mxu0
        %v1559 = vpack.c.bf16 %v1308, %v1305
        %v1560 = vpack.c.bf16 %v1316, %v1313
        %v1561 = vpack.c.bf16 %v1324, %v1321
        %v1562 = vpack.c.bf16 %v1332, %v1329
        %v1563 = vpack.c.bf16 %v1340, %v1337
        %v1564 = vpack.c.bf16 %v1348, %v1345
        %v1565 = vpack.c.bf16 %v1356, %v1353
        %v1566 = vpack.c.bf16 %v1364, %v1361
        %v1567 = vpack.c.bf16 %v1372, %v1369
        %v1568 = vpack.c.bf16 %v1380, %v1377
        %v1569 = vpack.c.bf16 %v1388, %v1385
        %v1570 = vpack.c.bf16 %v1396, %v1393
        %v1571 = vpack.c.bf16 %v1404, %v1401
        %v1572 = vpack.c.bf16 %v1412, %v1409
        %v1573 = vpack.c.bf16 %v1420, %v1417
        %v1574 = vpack.c.bf16 %v1428, %v1425
        %v1575 = vpack.c.bf16 %v1436, %v1433
        %v1576 = vpack.c.bf16 %v1444, %v1441
        %v1577 = vpack.c.bf16 %v1452, %v1449
        %v1578 = vpack.c.bf16 %v1460, %v1457
        %v1579 = vpack.c.bf16 %v1468, %v1465
        %v1580 = vpack.c.bf16 %v1476, %v1473
        %v1581 = vpack.c.bf16 %v1484, %v1481
        %v1582 = vpack.c.bf16 %v1492, %v1489
        %v1583 = vpack.c.bf16 %v1500, %v1497
        %v1584 = vpack.c.bf16 %v1508, %v1505
        %v1585 = vpack.c.bf16 %v1516, %v1513
        %v1586 = vpack.c.bf16 %v1524, %v1521
        %v1587 = vpack.c.bf16 %v1532, %v1529
        %v1588 = vpack.c.bf16 %v1540, %v1537
        %v1589 = vpack.c.bf16 %v1548, %v1545
        %v1590 = vpack.c.bf16 %v1556, %v1553
        %1591 = vst [vmem:[#allocation3] sm:$0xff] %v1559
        %1592 = vst [vmem:[#allocation3 + $0x8] sm:$0xff] %v1560
        %1593 = vst [vmem:[#allocation3 + $0x10] sm:$0xff] %v1561
        %1594 = vst [vmem:[#allocation3 + $0x18] sm:$0xff] %v1562
        %1595 = vst [vmem:[#allocation3 + $0x20] sm:$0xff] %v1563
        %1596 = vst [vmem:[#allocation3 + $0x28] sm:$0xff] %v1564
        %1597 = vst [vmem:[#allocation3 + $0x30] sm:$0xff] %v1565
        %1598 = vst [vmem:[#allocation3 + $0x38] sm:$0xff] %v1566
        %1599 = vst [vmem:[#allocation3 + $0x40] sm:$0xff] %v1567
        %1600 = vst [vmem:[#allocation3 + $0x48] sm:$0xff] %v1568
        %1601 = vst [vmem:[#allocation3 + $0x50] sm:$0xff] %v1569
        %1602 = vst [vmem:[#allocation3 + $0x58] sm:$0xff] %v1570
        %1603 = vst [vmem:[#allocation3 + $0x60] sm:$0xff] %v1571
        %1604 = vst [vmem:[#allocation3 + $0x68] sm:$0xff] %v1572
        %1605 = vst [vmem:[#allocation3 + $0x70] sm:$0xff] %v1573
        %1606 = vst [vmem:[#allocation3 + $0x78] sm:$0xff] %v1574
        %1607 = vst [vmem:[#allocation3 + $0x80] sm:$0xff] %v1575
        %1608 = vst [vmem:[#allocation3 + $0x88] sm:$0xff] %v1576
        %1609 = vst [vmem:[#allocation3 + $0x90] sm:$0xff] %v1577
        %1610 = vst [vmem:[#allocation3 + $0x98] sm:$0xff] %v1578
        %1611 = vst [vmem:[#allocation3 + $0xa0] sm:$0xff] %v1579
        %1612 = vst [vmem:[#allocation3 + $0xa8] sm:$0xff] %v1580
        %1613 = vst [vmem:[#allocation3 + $0xb0] sm:$0xff] %v1581
        %1614 = vst [vmem:[#allocation3 + $0xb8] sm:$0xff] %v1582
        %1615 = vst [vmem:[#allocation3 + $0xc0] sm:$0xff] %v1583
        %1616 = vst [vmem:[#allocation3 + $0xc8] sm:$0xff] %v1584
        %1617 = vst [vmem:[#allocation3 + $0xd0] sm:$0xff] %v1585
        %1618 = vst [vmem:[#allocation3 + $0xd8] sm:$0xff] %v1586
        %1619 = vst [vmem:[#allocation3 + $0xe0] sm:$0xff] %v1587
        %1620 = vst [vmem:[#allocation3 + $0xe8] sm:$0xff] %v1588
        %1621 = vst [vmem:[#allocation3 + $0xf0] sm:$0xff] %v1589
        %1622 = vst [vmem:[#allocation3 + $0xf8] sm:$0xff] %v1590
        %v1623 = vld [vmem:[%s7] sm:$0xf]
        %v1624 = vld [vmem:[%s8] sm:$0x1]
        %v1626 = vlaneseq
        %v1627 = vshrl.u32 %v1626, 7
        %v1628 = vsub.s32 0, %v1627
        %v1629 = vrot.slane %v1624, %v1628
        %v1632 = vsel %vm1266, %v1623, 0
        %1634 = vmatprep.subr.bf16.mxu0 0
        %1635 = vmatpush1.bf16.msra.mxu0 %v1632
        %1636 = vmatprep.subr.bf16.mxu0 0
        %1637 = vmatpush1.bf16.msra.mxu0 0
        %1638 = vmatprep.subr.bf16.mxu0 0
        %1639 = vmatpush1.bf16.msra.mxu0 0
        %1640 = vmatprep.subr.bf16.mxu0 0
        %1641 = vmatpush1.bf16.msra.mxu0 0
        %1642 = vmatprep.subr.bf16.mxu0 0
        %1643 = vmatpush1.bf16.msra.mxu0 0
        %1644 = vmatprep.subr.bf16.mxu0 0
        %1645 = vmatpush1.bf16.msra.mxu0 0
        %1646 = vmatprep.subr.bf16.mxu0 0
        %1647 = vmatpush1.bf16.msra.mxu0 0
        %1648 = vmatprep.subr.bf16.mxu0 0
        %1649 = vmatpush1.bf16.msra.mxu0 0
        %1650 = vmatprep.subr.bf16.mxu0 0
        %1651 = vmatpush1.bf16.msra.mxu0 0
        %1652 = vmatprep.subr.bf16.mxu0 0
        %1653 = vmatpush1.bf16.msra.mxu0 0
        %1654 = vmatprep.subr.bf16.mxu0 0
        %1655 = vmatpush1.bf16.msra.mxu0 0
        %1656 = vmatprep.subr.bf16.mxu0 0
        %1657 = vmatpush1.bf16.msra.mxu0 0
        %1658 = vmatprep.subr.bf16.mxu0 0
        %1659 = vmatpush1.bf16.msra.mxu0 0
        %1660 = vmatprep.subr.bf16.mxu0 0
        %1661 = vmatpush1.bf16.msra.mxu0 0
        %1662 = vmatprep.subr.bf16.mxu0 0
        %1663 = vmatpush1.bf16.msra.mxu0 0
        %1664 = vmatprep.subr.bf16.mxu0 0
        %1665 = vmatpush1.bf16.msra.mxu0 0
        %1666 = vmatprep.mubr.bf16.mxu0 0
        %1667 = vmatmul.mubr.bf16.gmra.mrb[0].mxu0 %v1171
        %v1668 = vpop.f32.mrb[0].mxu0
        %v1669 = vadd.f32 %v1629, %v1668
        %v1670 = vpop.f32.mrb[0].mxu0
        %v1671 = vpop.f32.mrb[0].mxu0
        %v1672 = vadd.f32 %v1629, %v1671
        %v1673 = vpop.f32.mrb[0].mxu0
        %1674 = vmatprep.mubr.bf16.mxu0 0
        %1675 = vmatmul.mubr.bf16.gmra.mrb[0].mxu0 %v1174
        %v1676 = vpop.f32.mrb[0].mxu0
        %v1677 = vadd.f32 %v1629, %v1676
        %v1678 = vpop.f32.mrb[0].mxu0
        %v1679 = vpop.f32.mrb[0].mxu0
        %v1680 = vadd.f32 %v1629, %v1679
        %v1681 = vpop.f32.mrb[0].mxu0
        %1682 = vmatprep.mubr.bf16.mxu0 0
        %1683 = vmatmul.mubr.bf16.gmra.mrb[0].mxu0 %v1177
        %v1684 = vpop.f32.mrb[0].mxu0
        %v1685 = vadd.f32 %v1629, %v1684
        %v1686 = vpop.f32.mrb[0].mxu0
        %v1687 = vpop.f32.mrb[0].mxu0
        %v1688 = vadd.f32 %v1629, %v1687
        %v1689 = vpop.f32.mrb[0].mxu0
        %1690 = vmatprep.mubr.bf16.mxu0 0
        %1691 = vmatmul.mubr.bf16.gmra.mrb[0].mxu0 %v1180
        %v1692 = vpop.f32.mrb[0].mxu0
        %v1693 = vadd.f32 %v1629, %v1692
        %v1694 = vpop.f32.mrb[0].mxu0
        %v1695 = vpop.f32.mrb[0].mxu0
        %v1696 = vadd.f32 %v1629, %v1695
        %v1697 = vpop.f32.mrb[0].mxu0
        %1698 = vmatprep.mubr.bf16.mxu0 0
        %1699 = vmatmul.mubr.bf16.gmra.mrb[0].mxu0 %v1183
        %v1700 = vpop.f32.mrb[0].mxu0
        %v1701 = vadd.f32 %v1629, %v1700
        %v1702 = vpop.f32.mrb[0].mxu0
        %v1703 = vpop.f32.mrb[0].mxu0
        %v1704 = vadd.f32 %v1629, %v1703
        %v1705 = vpop.f32.mrb[0].mxu0
        %1706 = vmatprep.mubr.bf16.mxu0 0
        %1707 = vmatmul.mubr.bf16.gmra.mrb[0].mxu0 %v1186
        %v1708 = vpop.f32.mrb[0].mxu0
        %v1709 = vadd.f32 %v1629, %v1708
        %v1710 = vpop.f32.mrb[0].mxu0
        %v1711 = vpop.f32.mrb[0].mxu0
        %v1712 = vadd.f32 %v1629, %v1711
        %v1713 = vpop.f32.mrb[0].mxu0
        %1714 = vmatprep.mubr.bf16.mxu0 0
        %1715 = vmatmul.mubr.bf16.gmra.mrb[0].mxu0 %v1189
        %v1716 = vpop.f32.mrb[0].mxu0
        %v1717 = vadd.f32 %v1629, %v1716
        %v1718 = vpop.f32.mrb[0].mxu0
        %v1719 = vpop.f32.mrb[0].mxu0
        %v1720 = vadd.f32 %v1629, %v1719
        %v1721 = vpop.f32.mrb[0].mxu0
        %1722 = vmatprep.mubr.bf16.mxu0 0
        %1723 = vmatmul.mubr.bf16.gmra.mrb[0].mxu0 %v1192
        %v1724 = vpop.f32.mrb[0].mxu0
        %v1725 = vadd.f32 %v1629, %v1724
        %v1726 = vpop.f32.mrb[0].mxu0
        %v1727 = vpop.f32.mrb[0].mxu0
        %v1728 = vadd.f32 %v1629, %v1727
        %v1729 = vpop.f32.mrb[0].mxu0
        %1730 = vmatprep.mubr.bf16.mxu0 0
        %1731 = vmatmul.mubr.bf16.gmra.mrb[0].mxu0 %v1195
        %v1732 = vpop.f32.mrb[0].mxu0
        %v1733 = vadd.f32 %v1629, %v1732
        %v1734 = vpop.f32.mrb[0].mxu0
        %v1735 = vpop.f32.mrb[0].mxu0
        %v1736 = vadd.f32 %v1629, %v1735
        %v1737 = vpop.f32.mrb[0].mxu0
        %1738 = vmatprep.mubr.bf16.mxu0 0
        %1739 = vmatmul.mubr.bf16.gmra.mrb[0].mxu0 %v1198
        %v1740 = vpop.f32.mrb[0].mxu0
        %v1741 = vadd.f32 %v1629, %v1740
        %v1742 = vpop.f32.mrb[0].mxu0
        %v1743 = vpop.f32.mrb[0].mxu0
        %v1744 = vadd.f32 %v1629, %v1743
        %v1745 = vpop.f32.mrb[0].mxu0
        %1746 = vmatprep.mubr.bf16.mxu0 0
        %1747 = vmatmul.mubr.bf16.gmra.mrb[0].mxu0 %v1201
        %v1748 = vpop.f32.mrb[0].mxu0
        %v1749 = vadd.f32 %v1629, %v1748
        %v1750 = vpop.f32.mrb[0].mxu0
        %v1751 = vpop.f32.mrb[0].mxu0
        %v1752 = vadd.f32 %v1629, %v1751
        %v1753 = vpop.f32.mrb[0].mxu0
        %1754 = vmatprep.mubr.bf16.mxu0 0
        %1755 = vmatmul.mubr.bf16.gmra.mrb[0].mxu0 %v1204
        %v1756 = vpop.f32.mrb[0].mxu0
        %v1757 = vadd.f32 %v1629, %v1756
        %v1758 = vpop.f32.mrb[0].mxu0
        %v1759 = vpop.f32.mrb[0].mxu0
        %v1760 = vadd.f32 %v1629, %v1759
        %v1761 = vpop.f32.mrb[0].mxu0
        %1762 = vmatprep.mubr.bf16.mxu0 0
        %1763 = vmatmul.mubr.bf16.gmra.mrb[0].mxu0 %v1207
        %v1764 = vpop.f32.mrb[0].mxu0
        %v1765 = vadd.f32 %v1629, %v1764
        %v1766 = vpop.f32.mrb[0].mxu0
        %v1767 = vpop.f32.mrb[0].mxu0
        %v1768 = vadd.f32 %v1629, %v1767
        %v1769 = vpop.f32.mrb[0].mxu0
        %1770 = vmatprep.mubr.bf16.mxu0 0
        %1771 = vmatmul.mubr.bf16.gmra.mrb[0].mxu0 %v1210
        %v1772 = vpop.f32.mrb[0].mxu0
        %v1773 = vadd.f32 %v1629, %v1772
        %v1774 = vpop.f32.mrb[0].mxu0
        %v1775 = vpop.f32.mrb[0].mxu0
        %v1776 = vadd.f32 %v1629, %v1775
        %v1777 = vpop.f32.mrb[0].mxu0
        %1778 = vmatprep.mubr.bf16.mxu0 0
        %1779 = vmatmul.mubr.bf16.gmra.mrb[0].mxu0 %v1213
        %v1780 = vpop.f32.mrb[0].mxu0
        %v1781 = vadd.f32 %v1629, %v1780
        %v1782 = vpop.f32.mrb[0].mxu0
        %v1783 = vpop.f32.mrb[0].mxu0
        %v1784 = vadd.f32 %v1629, %v1783
        %v1785 = vpop.f32.mrb[0].mxu0
        %1786 = vmatprep.mubr.bf16.mxu0 0
        %1787 = vmatmul.mubr.bf16.gmra.mrb[0].mxu0 %v1216
        %v1788 = vpop.f32.mrb[0].mxu0
        %v1789 = vadd.f32 %v1629, %v1788
        %v1790 = vpop.f32.mrb[0].mxu0
        %v1791 = vpop.f32.mrb[0].mxu0
        %v1792 = vadd.f32 %v1629, %v1791
        %v1793 = vpop.f32.mrb[0].mxu0
        %1794 = vmatprep.mubr.bf16.mxu0 0
        %1795 = vmatmul.mubr.bf16.gmra.mrb[0].mxu0 %v1219
        %v1796 = vpop.f32.mrb[0].mxu0
        %v1797 = vadd.f32 %v1629, %v1796
        %v1798 = vpop.f32.mrb[0].mxu0
        %v1799 = vpop.f32.mrb[0].mxu0
        %v1800 = vadd.f32 %v1629, %v1799
        %v1801 = vpop.f32.mrb[0].mxu0
        %1802 = vmatprep.mubr.bf16.mxu0 0
        %1803 = vmatmul.mubr.bf16.gmra.mrb[0].mxu0 %v1222
        %v1804 = vpop.f32.mrb[0].mxu0
        %v1805 = vadd.f32 %v1629, %v1804
        %v1806 = vpop.f32.mrb[0].mxu0
        %v1807 = vpop.f32.mrb[0].mxu0
        %v1808 = vadd.f32 %v1629, %v1807
        %v1809 = vpop.f32.mrb[0].mxu0
        %1810 = vmatprep.mubr.bf16.mxu0 0
        %1811 = vmatmul.mubr.bf16.gmra.mrb[0].mxu0 %v1225
        %v1812 = vpop.f32.mrb[0].mxu0
        %v1813 = vadd.f32 %v1629, %v1812
        %v1814 = vpop.f32.mrb[0].mxu0
        %v1815 = vpop.f32.mrb[0].mxu0
        %v1816 = vadd.f32 %v1629, %v1815
        %v1817 = vpop.f32.mrb[0].mxu0
        %1818 = vmatprep.mubr.bf16.mxu0 0
        %1819 = vmatmul.mubr.bf16.gmra.mrb[0].mxu0 %v1228
        %v1820 = vpop.f32.mrb[0].mxu0
        %v1821 = vadd.f32 %v1629, %v1820
        %v1822 = vpop.f32.mrb[0].mxu0
        %v1823 = vpop.f32.mrb[0].mxu0
        %v1824 = vadd.f32 %v1629, %v1823
        %v1825 = vpop.f32.mrb[0].mxu0
        %1826 = vmatprep.mubr.bf16.mxu0 0
        %1827 = vmatmul.mubr.bf16.gmra.mrb[0].mxu0 %v1231
        %v1828 = vpop.f32.mrb[0].mxu0
        %v1829 = vadd.f32 %v1629, %v1828
        %v1830 = vpop.f32.mrb[0].mxu0
        %v1831 = vpop.f32.mrb[0].mxu0
        %v1832 = vadd.f32 %v1629, %v1831
        %v1833 = vpop.f32.mrb[0].mxu0
        %1834 = vmatprep.mubr.bf16.mxu0 0
        %1835 = vmatmul.mubr.bf16.gmra.mrb[0].mxu0 %v1234
        %v1836 = vpop.f32.mrb[0].mxu0
        %v1837 = vadd.f32 %v1629, %v1836
        %v1838 = vpop.f32.mrb[0].mxu0
        %v1839 = vpop.f32.mrb[0].mxu0
        %v1840 = vadd.f32 %v1629, %v1839
        %v1841 = vpop.f32.mrb[0].mxu0
        %1842 = vmatprep.mubr.bf16.mxu0 0
        %1843 = vmatmul.mubr.bf16.gmra.mrb[0].mxu0 %v1237
        %v1844 = vpop.f32.mrb[0].mxu0
        %v1845 = vadd.f32 %v1629, %v1844
        %v1846 = vpop.f32.mrb[0].mxu0
        %v1847 = vpop.f32.mrb[0].mxu0
        %v1848 = vadd.f32 %v1629, %v1847
        %v1849 = vpop.f32.mrb[0].mxu0
        %1850 = vmatprep.mubr.bf16.mxu0 0
        %1851 = vmatmul.mubr.bf16.gmra.mrb[0].mxu0 %v1240
        %v1852 = vpop.f32.mrb[0].mxu0
        %v1853 = vadd.f32 %v1629, %v1852
        %v1854 = vpop.f32.mrb[0].mxu0
        %v1855 = vpop.f32.mrb[0].mxu0
        %v1856 = vadd.f32 %v1629, %v1855
        %v1857 = vpop.f32.mrb[0].mxu0
        %1858 = vmatprep.mubr.bf16.mxu0 0
        %1859 = vmatmul.mubr.bf16.gmra.mrb[0].mxu0 %v1243
        %v1860 = vpop.f32.mrb[0].mxu0
        %v1861 = vadd.f32 %v1629, %v1860
        %v1862 = vpop.f32.mrb[0].mxu0
        %v1863 = vpop.f32.mrb[0].mxu0
        %v1864 = vadd.f32 %v1629, %v1863
        %v1865 = vpop.f32.mrb[0].mxu0
        %1866 = vmatprep.mubr.bf16.mxu0 0
        %1867 = vmatmul.mubr.bf16.gmra.mrb[0].mxu0 %v1246
        %v1868 = vpop.f32.mrb[0].mxu0
        %v1869 = vadd.f32 %v1629, %v1868
        %v1870 = vpop.f32.mrb[0].mxu0
        %v1871 = vpop.f32.mrb[0].mxu0
        %v1872 = vadd.f32 %v1629, %v1871
        %v1873 = vpop.f32.mrb[0].mxu0
        %1874 = vmatprep.mubr.bf16.mxu0 0
        %1875 = vmatmul.mubr.bf16.gmra.mrb[0].mxu0 %v1249
        %v1876 = vpop.f32.mrb[0].mxu0
        %v1877 = vadd.f32 %v1629, %v1876
        %v1878 = vpop.f32.mrb[0].mxu0
        %v1879 = vpop.f32.mrb[0].mxu0
        %v1880 = vadd.f32 %v1629, %v1879
        %v1881 = vpop.f32.mrb[0].mxu0
        %1882 = vmatprep.mubr.bf16.mxu0 0
        %1883 = vmatmul.mubr.bf16.gmra.mrb[0].mxu0 %v1252
        %v1884 = vpop.f32.mrb[0].mxu0
        %v1885 = vadd.f32 %v1629, %v1884
        %v1886 = vpop.f32.mrb[0].mxu0
        %v1887 = vpop.f32.mrb[0].mxu0
        %v1888 = vadd.f32 %v1629, %v1887
        %v1889 = vpop.f32.mrb[0].mxu0
        %1890 = vmatprep.mubr.bf16.mxu0 0
        %1891 = vmatmul.mubr.bf16.gmra.mrb[0].mxu0 %v1255
        %v1892 = vpop.f32.mrb[0].mxu0
        %v1893 = vadd.f32 %v1629, %v1892
        %v1894 = vpop.f32.mrb[0].mxu0
        %v1895 = vpop.f32.mrb[0].mxu0
        %v1896 = vadd.f32 %v1629, %v1895
        %v1897 = vpop.f32.mrb[0].mxu0
        %1898 = vmatprep.mubr.bf16.mxu0 0
        %1899 = vmatmul.mubr.bf16.gmra.mrb[0].mxu0 %v1258
        %v1900 = vpop.f32.mrb[0].mxu0
        %v1901 = vadd.f32 %v1629, %v1900
        %v1902 = vpop.f32.mrb[0].mxu0
        %v1903 = vpop.f32.mrb[0].mxu0
        %v1904 = vadd.f32 %v1629, %v1903
        %v1905 = vpop.f32.mrb[0].mxu0
        %1906 = vmatprep.mubr.bf16.mxu0 0
        %1907 = vmatmul.mubr.bf16.gmra.mrb[0].mxu0 %v1261
        %v1908 = vpop.f32.mrb[0].mxu0
        %v1909 = vadd.f32 %v1629, %v1908
        %v1910 = vpop.f32.mrb[0].mxu0
        %v1911 = vpop.f32.mrb[0].mxu0
        %v1912 = vadd.f32 %v1629, %v1911
        %v1913 = vpop.f32.mrb[0].mxu0
        %1914 = vmatprep.mubr.bf16.mxu0 0
        %1915 = vmatmul.mubr.bf16.gmra.mrb[0].mxu0 %v1264
        %v1916 = vpop.f32.mrb[0].mxu0
        %v1917 = vadd.f32 %v1629, %v1916
        %v1918 = vpop.f32.mrb[0].mxu0
        %v1919 = vpop.f32.mrb[0].mxu0
        %v1920 = vadd.f32 %v1629, %v1919
        %v1921 = vpop.f32.mrb[0].mxu0
        %1922 = vdwg.mxu0
        %v1923 = vpack.c.bf16 %v1672, %v1669
        %v1924 = vpack.c.bf16 %v1680, %v1677
        %v1925 = vpack.c.bf16 %v1688, %v1685
        %v1926 = vpack.c.bf16 %v1696, %v1693
        %v1927 = vpack.c.bf16 %v1704, %v1701
        %v1928 = vpack.c.bf16 %v1712, %v1709
        %v1929 = vpack.c.bf16 %v1720, %v1717
        %v1930 = vpack.c.bf16 %v1728, %v1725
        %v1931 = vpack.c.bf16 %v1736, %v1733
        %v1932 = vpack.c.bf16 %v1744, %v1741
        %v1933 = vpack.c.bf16 %v1752, %v1749
        %v1934 = vpack.c.bf16 %v1760, %v1757
        %v1935 = vpack.c.bf16 %v1768, %v1765
        %v1936 = vpack.c.bf16 %v1776, %v1773
        %v1937 = vpack.c.bf16 %v1784, %v1781
        %v1938 = vpack.c.bf16 %v1792, %v1789
        %v1939 = vpack.c.bf16 %v1800, %v1797
        %v1940 = vpack.c.bf16 %v1808, %v1805
        %v1941 = vpack.c.bf16 %v1816, %v1813
        %v1942 = vpack.c.bf16 %v1824, %v1821
        %v1943 = vpack.c.bf16 %v1832, %v1829
        %v1944 = vpack.c.bf16 %v1840, %v1837
        %v1945 = vpack.c.bf16 %v1848, %v1845
        %v1946 = vpack.c.bf16 %v1856, %v1853
        %v1947 = vpack.c.bf16 %v1864, %v1861
        %v1948 = vpack.c.bf16 %v1872, %v1869
        %v1949 = vpack.c.bf16 %v1880, %v1877
        %v1950 = vpack.c.bf16 %v1888, %v1885
        %v1951 = vpack.c.bf16 %v1896, %v1893
        %v1952 = vpack.c.bf16 %v1904, %v1901
        %v1953 = vpack.c.bf16 %v1912, %v1909
        %v1954 = vpack.c.bf16 %v1920, %v1917
        %1955 = vst [vmem:[#allocation4] sm:$0xff] %v1923
        %1956 = vst [vmem:[#allocation4 + $0x8] sm:$0xff] %v1924
        %1957 = vst [vmem:[#allocation4 + $0x10] sm:$0xff] %v1925
        %1958 = vst [vmem:[#allocation4 + $0x18] sm:$0xff] %v1926
        %1959 = vst [vmem:[#allocation4 + $0x20] sm:$0xff] %v1927
        %1960 = vst [vmem:[#allocation4 + $0x28] sm:$0xff] %v1928
        %1961 = vst [vmem:[#allocation4 + $0x30] sm:$0xff] %v1929
        %1962 = vst [vmem:[#allocation4 + $0x38] sm:$0xff] %v1930
        %1963 = vst [vmem:[#allocation4 + $0x40] sm:$0xff] %v1931
        %1964 = vst [vmem:[#allocation4 + $0x48] sm:$0xff] %v1932
        %1965 = vst [vmem:[#allocation4 + $0x50] sm:$0xff] %v1933
        %1966 = vst [vmem:[#allocation4 + $0x58] sm:$0xff] %v1934
        %1967 = vst [vmem:[#allocation4 + $0x60] sm:$0xff] %v1935
        %1968 = vst [vmem:[#allocation4 + $0x68] sm:$0xff] %v1936
        %1969 = vst [vmem:[#allocation4 + $0x70] sm:$0xff] %v1937
        %1970 = vst [vmem:[#allocation4 + $0x78] sm:$0xff] %v1938
        %1971 = vst [vmem:[#allocation4 + $0x80] sm:$0xff] %v1939
        %1972 = vst [vmem:[#allocation4 + $0x88] sm:$0xff] %v1940
        %1973 = vst [vmem:[#allocation4 + $0x90] sm:$0xff] %v1941
        %1974 = vst [vmem:[#allocation4 + $0x98] sm:$0xff] %v1942
        %1975 = vst [vmem:[#allocation4 + $0xa0] sm:$0xff] %v1943
        %1976 = vst [vmem:[#allocation4 + $0xa8] sm:$0xff] %v1944
        %1977 = vst [vmem:[#allocation4 + $0xb0] sm:$0xff] %v1945
        %1978 = vst [vmem:[#allocation4 + $0xb8] sm:$0xff] %v1946
        %1979 = vst [vmem:[#allocation4 + $0xc0] sm:$0xff] %v1947
        %1980 = vst [vmem:[#allocation4 + $0xc8] sm:$0xff] %v1948
        %1981 = vst [vmem:[#allocation4 + $0xd0] sm:$0xff] %v1949
        %1982 = vst [vmem:[#allocation4 + $0xd8] sm:$0xff] %v1950
        %1983 = vst [vmem:[#allocation4 + $0xe0] sm:$0xff] %v1951
        %1984 = vst [vmem:[#allocation4 + $0xe8] sm:$0xff] %v1952
        %1985 = vst [vmem:[#allocation4 + $0xf0] sm:$0xff] %v1953
        %1986 = vst [vmem:[#allocation4 + $0xf8] sm:$0xff] %v1954
      $region68: #{tpu_custom_call.1} parent=63 // pred_fallthru
        _
      %s1987 = smul.u32 %s27, 256
      %s1988 = sshra.s32 %s1987, 4
      %s1989 = sand.u32 %s1987, 15
      %s1990 = smul.addr %s1988, 8
      %s1991 = scalar_lea.vmem [#allocation2], %s1990
      %v1992 = vld [vmem:[%s1991] sm:$0xff]
      %v1993 = vld [vmem:[%s1991 + $0x8] sm:$0xff]
      %v1994 = vld [vmem:[%s1991 + $0x10] sm:$0xff]
      %v1995 = vld [vmem:[%s1991 + $0x18] sm:$0xff]
      %v1996 = vld [vmem:[%s1991 + $0x20] sm:$0xff]
      %v1997 = vld [vmem:[%s1991 + $0x28] sm:$0xff]
      %v1998 = vld [vmem:[%s1991 + $0x30] sm:$0xff]
      %v1999 = vld [vmem:[%s1991 + $0x38] sm:$0xff]
      %v2000 = vld [vmem:[%s1991 + $0x40] sm:$0xff]
      %v2001 = vld [vmem:[%s1991 + $0x48] sm:$0xff]
      %v2002 = vld [vmem:[%s1991 + $0x50] sm:$0xff]
      %v2003 = vld [vmem:[%s1991 + $0x58] sm:$0xff]
      %v2004 = vld [vmem:[%s1991 + $0x60] sm:$0xff]
      %v2005 = vld [vmem:[%s1991 + $0x68] sm:$0xff]
      %v2006 = vld [vmem:[%s1991 + $0x70] sm:$0xff]
      %v2007 = vld [vmem:[%s1991 + $0x78] sm:$0xff]
      %v2008 = vld [vmem:[%s3] sm:$0xf]
      %v2009 = vld [vmem:[%s4] sm:$0x1]
      %v2011 = vlaneseq
      %v2012 = vshrl.u32 %v2011, 7
      %v2013 = vsub.s32 0, %v2012
      %v2014 = vrot.slane %v2009, %v2013
      %vm2016 = vcmask 64512
      %v2018 = vsel %vm2016, %v1992, 0
      %v2021 = vsel %vm2016, %v1993, 0
      %v2024 = vsel %vm2016, %v1994, 0
      %v2027 = vsel %vm2016, %v1995, 0
      %v2030 = vsel %vm2016, %v1996, 0
      %v2033 = vsel %vm2016, %v1997, 0
      %v2036 = vsel %vm2016, %v1998, 0
      %v2039 = vsel %vm2016, %v1999, 0
      %v2042 = vsel %vm2016, %v2000, 0
      %v2045 = vsel %vm2016, %v2001, 0
      %v2048 = vsel %vm2016, %v2002, 0
      %v2051 = vsel %vm2016, %v2003, 0
      %v2054 = vsel %vm2016, %v2004, 0
      %v2057 = vsel %vm2016, %v2005, 0
      %v2060 = vsel %vm2016, %v2006, 0
      %v2063 = vsel %vm2016, %v2007, 0
      %vm2065 = vcmask 1043456
      %v2067 = vsel %vm2065, %v2008, 0
      %2069 = vmatprep.subr.bf16.mxu0 0
      %2070 = vmatpush1.bf16.msra.mxu0 %v2067
      %2071 = vmatprep.subr.bf16.mxu0 0
      %2072 = vmatpush1.bf16.msra.mxu0 0
      %2073 = vmatprep.subr.bf16.mxu0 0
      %2074 = vmatpush1.bf16.msra.mxu0 0
      %2075 = vmatprep.subr.bf16.mxu0 0
      %2076 = vmatpush1.bf16.msra.mxu0 0
      %2077 = vmatprep.subr.bf16.mxu0 0
      %2078 = vmatpush1.bf16.msra.mxu0 0
      %2079 = vmatprep.subr.bf16.mxu0 0
      %2080 = vmatpush1.bf16.msra.mxu0 0
      %2081 = vmatprep.subr.bf16.mxu0 0
      %2082 = vmatpush1.bf16.msra.mxu0 0
      %2083 = vmatprep.subr.bf16.mxu0 0
      %2084 = vmatpush1.bf16.msra.mxu0 0
      %2085 = vmatprep.subr.bf16.mxu0 0
      %2086 = vmatpush1.bf16.msra.mxu0 0
      %2087 = vmatprep.subr.bf16.mxu0 0
      %2088 = vmatpush1.bf16.msra.mxu0 0
      %2089 = vmatprep.subr.bf16.mxu0 0
      %2090 = vmatpush1.bf16.msra.mxu0 0
      %2091 = vmatprep.subr.bf16.mxu0 0
      %2092 = vmatpush1.bf16.msra.mxu0 0
      %2093 = vmatprep.subr.bf16.mxu0 0
      %2094 = vmatpush1.bf16.msra.mxu0 0
      %2095 = vmatprep.subr.bf16.mxu0 0
      %2096 = vmatpush1.bf16.msra.mxu0 0
      %2097 = vmatprep.subr.bf16.mxu0 0
      %2098 = vmatpush1.bf16.msra.mxu0 0
      %2099 = vmatprep.subr.bf16.mxu0 0
      %2100 = vmatpush1.bf16.msra.mxu0 0
      %2101 = vmatprep.mubr.bf16.mxu0 0
      %2102 = vmatmul.mubr.bf16.gmra.mrb[0].mxu0 %v2018
      %v2103 = vpop.f32.mrb[0].mxu0
      %v2104 = vadd.f32 %v2014, %v2103
      %v2105 = vpop.f32.mrb[0].mxu0
      %v2106 = vpop.f32.mrb[0].mxu0
      %v2107 = vadd.f32 %v2014, %v2106
      %v2108 = vpop.f32.mrb[0].mxu0
      %2109 = vmatprep.mubr.bf16.mxu0 0
      %2110 = vmatmul.mubr.bf16.gmra.mrb[0].mxu0 %v2021
      %v2111 = vpop.f32.mrb[0].mxu0
      %v2112 = vadd.f32 %v2014, %v2111
      %v2113 = vpop.f32.mrb[0].mxu0
      %v2114 = vpop.f32.mrb[0].mxu0
      %v2115 = vadd.f32 %v2014, %v2114
      %v2116 = vpop.f32.mrb[0].mxu0
      %2117 = vmatprep.mubr.bf16.mxu0 0
      %2118 = vmatmul.mubr.bf16.gmra.mrb[0].mxu0 %v2024
      %v2119 = vpop.f32.mrb[0].mxu0
      %v2120 = vadd.f32 %v2014, %v2119
      %v2121 = vpop.f32.mrb[0].mxu0
      %v2122 = vpop.f32.mrb[0].mxu0
      %v2123 = vadd.f32 %v2014, %v2122
      %v2124 = vpop.f32.mrb[0].mxu0
      %2125 = vmatprep.mubr.bf16.mxu0 0
      %2126 = vmatmul.mubr.bf16.gmra.mrb[0].mxu0 %v2027
      %v2127 = vpop.f32.mrb[0].mxu0
      %v2128 = vadd.f32 %v2014, %v2127
      %v2129 = vpop.f32.mrb[0].mxu0
      %v2130 = vpop.f32.mrb[0].mxu0
      %v2131 = vadd.f32 %v2014, %v2130
      %v2132 = vpop.f32.mrb[0].mxu0
      %2133 = vmatprep.mubr.bf16.mxu0 0
      %2134 = vmatmul.mubr.bf16.gmra.mrb[0].mxu0 %v2030
      %v2135 = vpop.f32.mrb[0].mxu0
      %v2136 = vadd.f32 %v2014, %v2135
      %v2137 = vpop.f32.mrb[0].mxu0
      %v2138 = vpop.f32.mrb[0].mxu0
      %v2139 = vadd.f32 %v2014, %v2138
      %v2140 = vpop.f32.mrb[0].mxu0
      %2141 = vmatprep.mubr.bf16.mxu0 0
      %2142 = vmatmul.mubr.bf16.gmra.mrb[0].mxu0 %v2033
      %v2143 = vpop.f32.mrb[0].mxu0
      %v2144 = vadd.f32 %v2014, %v2143
      %v2145 = vpop.f32.mrb[0].mxu0
      %v2146 = vpop.f32.mrb[0].mxu0
      %v2147 = vadd.f32 %v2014, %v2146
      %v2148 = vpop.f32.mrb[0].mxu0
      %2149 = vmatprep.mubr.bf16.mxu0 0
      %2150 = vmatmul.mubr.bf16.gmra.mrb[0].mxu0 %v2036
      %v2151 = vpop.f32.mrb[0].mxu0
      %v2152 = vadd.f32 %v2014, %v2151
      %v2153 = vpop.f32.mrb[0].mxu0
      %v2154 = vpop.f32.mrb[0].mxu0
      %v2155 = vadd.f32 %v2014, %v2154
      %v2156 = vpop.f32.mrb[0].mxu0
      %2157 = vmatprep.mubr.bf16.mxu0 0
      %2158 = vmatmul.mubr.bf16.gmra.mrb[0].mxu0 %v2039
      %v2159 = vpop.f32.mrb[0].mxu0
      %v2160 = vadd.f32 %v2014, %v2159
      %v2161 = vpop.f32.mrb[0].mxu0
      %v2162 = vpop.f32.mrb[0].mxu0
      %v2163 = vadd.f32 %v2014, %v2162
      %v2164 = vpop.f32.mrb[0].mxu0
      %2165 = vmatprep.mubr.bf16.mxu0 0
      %2166 = vmatmul.mubr.bf16.gmra.mrb[0].mxu0 %v2042
      %v2167 = vpop.f32.mrb[0].mxu0
      %v2168 = vadd.f32 %v2014, %v2167
      %v2169 = vpop.f32.mrb[0].mxu0
      %v2170 = vpop.f32.mrb[0].mxu0
      %v2171 = vadd.f32 %v2014, %v2170
      %v2172 = vpop.f32.mrb[0].mxu0
      %2173 = vmatprep.mubr.bf16.mxu0 0
      %2174 = vmatmul.mubr.bf16.gmra.mrb[0].mxu0 %v2045
      %v2175 = vpop.f32.mrb[0].mxu0
      %v2176 = vadd.f32 %v2014, %v2175
      %v2177 = vpop.f32.mrb[0].mxu0
      %v2178 = vpop.f32.mrb[0].mxu0
      %v2179 = vadd.f32 %v2014, %v2178
      %v2180 = vpop.f32.mrb[0].mxu0
      %2181 = vmatprep.mubr.bf16.mxu0 0
      %2182 = vmatmul.mubr.bf16.gmra.mrb[0].mxu0 %v2048
      %v2183 = vpop.f32.mrb[0].mxu0
      %v2184 = vadd.f32 %v2014, %v2183
      %v2185 = vpop.f32.mrb[0].mxu0
      %v2186 = vpop.f32.mrb[0].mxu0
      %v2187 = vadd.f32 %v2014, %v2186
      %v2188 = vpop.f32.mrb[0].mxu0
      %2189 = vmatprep.mubr.bf16.mxu0 0
      %2190 = vmatmul.mubr.bf16.gmra.mrb[0].mxu0 %v2051
      %v2191 = vpop.f32.mrb[0].mxu0
      %v2192 = vadd.f32 %v2014, %v2191
      %v2193 = vpop.f32.mrb[0].mxu0
      %v2194 = vpop.f32.mrb[0].mxu0
      %v2195 = vadd.f32 %v2014, %v2194
      %v2196 = vpop.f32.mrb[0].mxu0
      %2197 = vmatprep.mubr.bf16.mxu0 0
      %2198 = vmatmul.mubr.bf16.gmra.mrb[0].mxu0 %v2054
      %v2199 = vpop.f32.mrb[0].mxu0
      %v2200 = vadd.f32 %v2014, %v2199
      %v2201 = vpop.f32.mrb[0].mxu0
      %v2202 = vpop.f32.mrb[0].mxu0
      %v2203 = vadd.f32 %v2014, %v2202
      %v2204 = vpop.f32.mrb[0].mxu0
      %2205 = vmatprep.mubr.bf16.mxu0 0
      %2206 = vmatmul.mubr.bf16.gmra.mrb[0].mxu0 %v2057
      %v2207 = vpop.f32.mrb[0].mxu0
      %v2208 = vadd.f32 %v2014, %v2207
      %v2209 = vpop.f32.mrb[0].mxu0
      %v2210 = vpop.f32.mrb[0].mxu0
      %v2211 = vadd.f32 %v2014, %v2210
      %v2212 = vpop.f32.mrb[0].mxu0
      %2213 = vmatprep.mubr.bf16.mxu0 0
      %2214 = vmatmul.mubr.bf16.gmra.mrb[0].mxu0 %v2060
      %v2215 = vpop.f32.mrb[0].mxu0
      %v2216 = vadd.f32 %v2014, %v2215
      %v2217 = vpop.f32.mrb[0].mxu0
      %v2218 = vpop.f32.mrb[0].mxu0
      %v2219 = vadd.f32 %v2014, %v2218
      %v2220 = vpop.f32.mrb[0].mxu0
      %2221 = vmatprep.mubr.bf16.mxu0 0
      %2222 = vmatmul.mubr.bf16.gmra.mrb[0].mxu0 %v2063
      %v2223 = vpop.f32.mrb[0].mxu0
      %v2224 = vadd.f32 %v2014, %v2223
      %v2225 = vpop.f32.mrb[0].mxu0
      %v2226 = vpop.f32.mrb[0].mxu0
      %v2227 = vadd.f32 %v2014, %v2226
      %v2228 = vpop.f32.mrb[0].mxu0
      %2229 = vdwg.mxu0
      %v2230 = vpack.c.bf16 %v2107, %v2104
      %v2231 = vpack.c.bf16 %v2115, %v2112
      %v2232 = vpack.c.bf16 %v2123, %v2120
      %v2233 = vpack.c.bf16 %v2131, %v2128
      %v2234 = vpack.c.bf16 %v2139, %v2136
      %v2235 = vpack.c.bf16 %v2147, %v2144
      %v2236 = vpack.c.bf16 %v2155, %v2152
      %v2237 = vpack.c.bf16 %v2163, %v2160
      %v2238 = vpack.c.bf16 %v2171, %v2168
      %v2239 = vpack.c.bf16 %v2179, %v2176
      %v2240 = vpack.c.bf16 %v2187, %v2184
      %v2241 = vpack.c.bf16 %v2195, %v2192
      %v2242 = vpack.c.bf16 %v2203, %v2200
      %v2243 = vpack.c.bf16 %v2211, %v2208
      %v2244 = vpack.c.bf16 %v2219, %v2216
      %v2245 = vpack.c.bf16 %v2227, %v2224
      %v2246 = vld [vmem:[#allocation3] sm:$0xff]
      %v2247 = vld [vmem:[#allocation3 + $0x8] sm:$0xff]
      %v2248 = vld [vmem:[#allocation3 + $0x10] sm:$0xff]
      %v2249 = vld [vmem:[#allocation3 + $0x18] sm:$0xff]
      %v2250 = vld [vmem:[#allocation3 + $0x20] sm:$0xff]
      %v2251 = vld [vmem:[#allocation3 + $0x28] sm:$0xff]
      %v2252 = vld [vmem:[#allocation3 + $0x30] sm:$0xff]
      %v2253 = vld [vmem:[#allocation3 + $0x38] sm:$0xff]
      %v2254 = vld [vmem:[#allocation3 + $0x40] sm:$0xff]
      %v2255 = vld [vmem:[#allocation3 + $0x48] sm:$0xff]
      %v2256 = vld [vmem:[#allocation3 + $0x50] sm:$0xff]
      %v2257 = vld [vmem:[#allocation3 + $0x58] sm:$0xff]
      %v2258 = vld [vmem:[#allocation3 + $0x60] sm:$0xff]
      %v2259 = vld [vmem:[#allocation3 + $0x68] sm:$0xff]
      %v2260 = vld [vmem:[#allocation3 + $0x70] sm:$0xff]
      %v2261 = vld [vmem:[#allocation3 + $0x78] sm:$0xff]
      %v2262 = vld [vmem:[#allocation3 + $0x80] sm:$0xff]
      %v2263 = vld [vmem:[#allocation3 + $0x88] sm:$0xff]
      %v2264 = vld [vmem:[#allocation3 + $0x90] sm:$0xff]
      %v2265 = vld [vmem:[#allocation3 + $0x98] sm:$0xff]
      %v2266 = vld [vmem:[#allocation3 + $0xa0] sm:$0xff]
      %v2267 = vld [vmem:[#allocation3 + $0xa8] sm:$0xff]
      %v2268 = vld [vmem:[#allocation3 + $0xb0] sm:$0xff]
      %v2269 = vld [vmem:[#allocation3 + $0xb8] sm:$0xff]
      %v2270 = vld [vmem:[#allocation3 + $0xc0] sm:$0xff]
      %v2271 = vld [vmem:[#allocation3 + $0xc8] sm:$0xff]
      %v2272 = vld [vmem:[#allocation3 + $0xd0] sm:$0xff]
      %v2273 = vld [vmem:[#allocation3 + $0xd8] sm:$0xff]
      %v2274 = vld [vmem:[#allocation3 + $0xe0] sm:$0xff]
      %v2275 = vld [vmem:[#allocation3 + $0xe8] sm:$0xff]
      %v2276 = vld [vmem:[#allocation3 + $0xf0] sm:$0xff]
      %v2277 = vld [vmem:[#allocation3 + $0xf8] sm:$0xff]
      %2278 = vmatprep.subr.bf16.mxu0 0
      %2279 = vmatpush1.bf16.xpose.msra.mxu0 %v2246
      %2280 = vmatprep.subr.bf16.mxu0 0
      %2281 = vmatpush1.bf16.xpose.msra.mxu0 %v2247
      %2282 = vmatprep.subr.bf16.mxu0 0
      %2283 = vmatpush1.bf16.xpose.msra.mxu0 %v2248
      %2284 = vmatprep.subr.bf16.mxu0 0
      %2285 = vmatpush1.bf16.xpose.msra.mxu0 %v2249
      %2286 = vmatprep.subr.bf16.mxu0 0
      %2287 = vmatpush1.bf16.xpose.msra.mxu0 %v2250
      %2288 = vmatprep.subr.bf16.mxu0 0
      %2289 = vmatpush1.bf16.xpose.msra.mxu0 %v2251
      %2290 = vmatprep.subr.bf16.mxu0 0
      %2291 = vmatpush1.bf16.xpose.msra.mxu0 %v2252
      %2292 = vmatprep.subr.bf16.mxu0 0
      %2293 = vmatpush1.bf16.xpose.msra.mxu0 %v2253
      %2294 = vmatprep.subr.bf16.mxu0 0
      %2295 = vmatpush1.bf16.xpose.msra.mxu0 %v2254
      %2296 = vmatprep.subr.bf16.mxu0 0
      %2297 = vmatpush1.bf16.xpose.msra.mxu0 %v2255
      %2298 = vmatprep.subr.bf16.mxu0 0
      %2299 = vmatpush1.bf16.xpose.msra.mxu0 %v2256
      %2300 = vmatprep.subr.bf16.mxu0 0
      %2301 = vmatpush1.bf16.xpose.msra.mxu0 %v2257
      %2302 = vmatprep.subr.bf16.mxu0 0
      %2303 = vmatpush1.bf16.xpose.msra.mxu0 %v2258
      %2304 = vmatprep.subr.bf16.mxu0 0
      %2305 = vmatpush1.bf16.xpose.msra.mxu0 %v2259
      %2306 = vmatprep.subr.bf16.mxu0 0
      %2307 = vmatpush1.bf16.xpose.msra.mxu0 %v2260
      %2308 = vmatprep.subr.bf16.mxu0 0
      %2309 = vmatpush1.bf16.xpose.msra.mxu0 %v2261
      %2310 = vmatprep.mubr.bf16.mxu0 0
      %2311 = vmatmul.mubr.bf16.gmra.mrb[0].mxu0 %v2230
      %v2312 = vpop.f32.mrb[0].mxu0
      %v2313 = vadd.f32 0.0, %v2312
      %v2314 = vpop.f32.mrb[0].mxu0
      %v2315 = vadd.f32 0.0, %v2314
      %v2316 = vpop.f32.mrb[0].mxu0
      %v2317 = vadd.f32 0.0, %v2316
      %v2318 = vpop.f32.mrb[0].mxu0
      %v2319 = vadd.f32 0.0, %v2318
      %2320 = vmatprep.mubr.bf16.mxu0 0
      %2321 = vmatmul.mubr.bf16.gmra.mrb[0].mxu0 %v2231
      %v2322 = vpop.f32.mrb[0].mxu0
      %v2323 = vadd.f32 0.0, %v2322
      %v2324 = vpop.f32.mrb[0].mxu0
      %v2325 = vadd.f32 0.0, %v2324
      %v2326 = vpop.f32.mrb[0].mxu0
      %v2327 = vadd.f32 0.0, %v2326
      %v2328 = vpop.f32.mrb[0].mxu0
      %v2329 = vadd.f32 0.0, %v2328
      %2330 = vmatprep.mubr.bf16.mxu0 0
      %2331 = vmatmul.mubr.bf16.gmra.mrb[0].mxu0 %v2232
      %v2332 = vpop.f32.mrb[0].mxu0
      %v2333 = vadd.f32 0.0, %v2332
      %v2334 = vpop.f32.mrb[0].mxu0
      %v2335 = vadd.f32 0.0, %v2334
      %v2336 = vpop.f32.mrb[0].mxu0
      %v2337 = vadd.f32 0.0, %v2336
      %v2338 = vpop.f32.mrb[0].mxu0
      %v2339 = vadd.f32 0.0, %v2338
      %2340 = vmatprep.mubr.bf16.mxu0 0
      %2341 = vmatmul.mubr.bf16.gmra.mrb[0].mxu0 %v2233
      %v2342 = vpop.f32.mrb[0].mxu0
      %v2343 = vadd.f32 0.0, %v2342
      %v2344 = vpop.f32.mrb[0].mxu0
      %v2345 = vadd.f32 0.0, %v2344
      %v2346 = vpop.f32.mrb[0].mxu0
      %v2347 = vadd.f32 0.0, %v2346
      %v2348 = vpop.f32.mrb[0].mxu0
      %v2349 = vadd.f32 0.0, %v2348
      %2350 = vmatprep.mubr.bf16.mxu0 0
      %2351 = vmatmul.mubr.bf16.gmra.mrb[0].mxu0 %v2234
      %v2352 = vpop.f32.mrb[0].mxu0
      %v2353 = vadd.f32 0.0, %v2352
      %v2354 = vpop.f32.mrb[0].mxu0
      %v2355 = vadd.f32 0.0, %v2354
      %v2356 = vpop.f32.mrb[0].mxu0
      %v2357 = vadd.f32 0.0, %v2356
      %v2358 = vpop.f32.mrb[0].mxu0
      %v2359 = vadd.f32 0.0, %v2358
      %2360 = vmatprep.mubr.bf16.mxu0 0
      %2361 = vmatmul.mubr.bf16.gmra.mrb[0].mxu0 %v2235
      %v2362 = vpop.f32.mrb[0].mxu0
      %v2363 = vadd.f32 0.0, %v2362
      %v2364 = vpop.f32.mrb[0].mxu0
      %v2365 = vadd.f32 0.0, %v2364
      %v2366 = vpop.f32.mrb[0].mxu0
      %v2367 = vadd.f32 0.0, %v2366
      %v2368 = vpop.f32.mrb[0].mxu0
      %v2369 = vadd.f32 0.0, %v2368
      %2370 = vmatprep.mubr.bf16.mxu0 0
      %2371 = vmatmul.mubr.bf16.gmra.mrb[0].mxu0 %v2236
      %v2372 = vpop.f32.mrb[0].mxu0
      %v2373 = vadd.f32 0.0, %v2372
      %v2374 = vpop.f32.mrb[0].mxu0
      %v2375 = vadd.f32 0.0, %v2374
      %v2376 = vpop.f32.mrb[0].mxu0
      %v2377 = vadd.f32 0.0, %v2376
      %v2378 = vpop.f32.mrb[0].mxu0
      %v2379 = vadd.f32 0.0, %v2378
      %2380 = vmatprep.mubr.bf16.mxu0 0
      %2381 = vmatmul.mubr.bf16.gmra.mrb[0].mxu0 %v2237
      %v2382 = vpop.f32.mrb[0].mxu0
      %v2383 = vadd.f32 0.0, %v2382
      %v2384 = vpop.f32.mrb[0].mxu0
      %v2385 = vadd.f32 0.0, %v2384
      %v2386 = vpop.f32.mrb[0].mxu0
      %v2387 = vadd.f32 0.0, %v2386
      %v2388 = vpop.f32.mrb[0].mxu0
      %v2389 = vadd.f32 0.0, %v2388
      %2390 = vmatprep.mubr.bf16.mxu0 0
      %2391 = vmatmul.mubr.bf16.gmra.mrb[0].mxu0 %v2238
      %v2392 = vpop.f32.mrb[0].mxu0
      %v2393 = vadd.f32 0.0, %v2392
      %v2394 = vpop.f32.mrb[0].mxu0
      %v2395 = vadd.f32 0.0, %v2394
      %v2396 = vpop.f32.mrb[0].mxu0
      %v2397 = vadd.f32 0.0, %v2396
      %v2398 = vpop.f32.mrb[0].mxu0
      %v2399 = vadd.f32 0.0, %v2398
      %2400 = vmatprep.mubr.bf16.mxu0 0
      %2401 = vmatmul.mubr.bf16.gmra.mrb[0].mxu0 %v2239
      %v2402 = vpop.f32.mrb[0].mxu0
      %v2403 = vadd.f32 0.0, %v2402
      %v2404 = vpop.f32.mrb[0].mxu0
      %v2405 = vadd.f32 0.0, %v2404
      %v2406 = vpop.f32.mrb[0].mxu0
      %v2407 = vadd.f32 0.0, %v2406
      %v2408 = vpop.f32.mrb[0].mxu0
      %v2409 = vadd.f32 0.0, %v2408
      %2410 = vmatprep.mubr.bf16.mxu0 0
      %2411 = vmatmul.mubr.bf16.gmra.mrb[0].mxu0 %v2240
      %v2412 = vpop.f32.mrb[0].mxu0
      %v2413 = vadd.f32 0.0, %v2412
      %v2414 = vpop.f32.mrb[0].mxu0
      %v2415 = vadd.f32 0.0, %v2414
      %v2416 = vpop.f32.mrb[0].mxu0
      %v2417 = vadd.f32 0.0, %v2416
      %v2418 = vpop.f32.mrb[0].mxu0
      %v2419 = vadd.f32 0.0, %v2418
      %2420 = vmatprep.mubr.bf16.mxu0 0
      %2421 = vmatmul.mubr.bf16.gmra.mrb[0].mxu0 %v2241
      %v2422 = vpop.f32.mrb[0].mxu0
      %v2423 = vadd.f32 0.0, %v2422
      %v2424 = vpop.f32.mrb[0].mxu0
      %v2425 = vadd.f32 0.0, %v2424
      %v2426 = vpop.f32.mrb[0].mxu0
      %v2427 = vadd.f32 0.0, %v2426
      %v2428 = vpop.f32.mrb[0].mxu0
      %v2429 = vadd.f32 0.0, %v2428
      %2430 = vmatprep.mubr.bf16.mxu0 0
      %2431 = vmatmul.mubr.bf16.gmra.mrb[0].mxu0 %v2242
      %v2432 = vpop.f32.mrb[0].mxu0
      %v2433 = vadd.f32 0.0, %v2432
      %v2434 = vpop.f32.mrb[0].mxu0
      %v2435 = vadd.f32 0.0, %v2434
      %v2436 = vpop.f32.mrb[0].mxu0
      %v2437 = vadd.f32 0.0, %v2436
      %v2438 = vpop.f32.mrb[0].mxu0
      %v2439 = vadd.f32 0.0, %v2438
      %2440 = vmatprep.mubr.bf16.mxu0 0
      %2441 = vmatmul.mubr.bf16.gmra.mrb[0].mxu0 %v2243
      %v2442 = vpop.f32.mrb[0].mxu0
      %v2443 = vadd.f32 0.0, %v2442
      %v2444 = vpop.f32.mrb[0].mxu0
      %v2445 = vadd.f32 0.0, %v2444
      %v2446 = vpop.f32.mrb[0].mxu0
      %v2447 = vadd.f32 0.0, %v2446
      %v2448 = vpop.f32.mrb[0].mxu0
      %v2449 = vadd.f32 0.0, %v2448
      %2450 = vmatprep.mubr.bf16.mxu0 0
      %2451 = vmatmul.mubr.bf16.gmra.mrb[0].mxu0 %v2244
      %v2452 = vpop.f32.mrb[0].mxu0
      %v2453 = vadd.f32 0.0, %v2452
      %v2454 = vpop.f32.mrb[0].mxu0
      %v2455 = vadd.f32 0.0, %v2454
      %v2456 = vpop.f32.mrb[0].mxu0
      %v2457 = vadd.f32 0.0, %v2456
      %v2458 = vpop.f32.mrb[0].mxu0
      %v2459 = vadd.f32 0.0, %v2458
      %2460 = vmatprep.mubr.bf16.mxu0 0
      %2461 = vmatmul.mubr.bf16.gmra.mrb[0].mxu0 %v2245
      %v2462 = vpop.f32.mrb[0].mxu0
      %v2463 = vadd.f32 0.0, %v2462
      %v2464 = vpop.f32.mrb[0].mxu0
      %v2465 = vadd.f32 0.0, %v2464
      %v2466 = vpop.f32.mrb[0].mxu0
      %v2467 = vadd.f32 0.0, %v2466
      %v2468 = vpop.f32.mrb[0].mxu0
      %v2469 = vadd.f32 0.0, %v2468
      %2470 = vdwg.mxu0
      %2471 = vmatprep.subr.bf16.mxu0 0
      %2472 = vmatpush1.bf16.xpose.msra.mxu0 %v2262
      %2473 = vmatprep.subr.bf16.mxu0 0
      %2474 = vmatpush1.bf16.xpose.msra.mxu0 %v2263
      %2475 = vmatprep.subr.bf16.mxu0 0
      %2476 = vmatpush1.bf16.xpose.msra.mxu0 %v2264
      %2477 = vmatprep.subr.bf16.mxu0 0
      %2478 = vmatpush1.bf16.xpose.msra.mxu0 %v2265
      %2479 = vmatprep.subr.bf16.mxu0 0
      %2480 = vmatpush1.bf16.xpose.msra.mxu0 %v2266
      %2481 = vmatprep.subr.bf16.mxu0 0
      %2482 = vmatpush1.bf16.xpose.msra.mxu0 %v2267
      %2483 = vmatprep.subr.bf16.mxu0 0
      %2484 = vmatpush1.bf16.xpose.msra.mxu0 %v2268
      %2485 = vmatprep.subr.bf16.mxu0 0
      %2486 = vmatpush1.bf16.xpose.msra.mxu0 %v2269
      %2487 = vmatprep.subr.bf16.mxu0 0
      %2488 = vmatpush1.bf16.xpose.msra.mxu0 %v2270
      %2489 = vmatprep.subr.bf16.mxu0 0
      %2490 = vmatpush1.bf16.xpose.msra.mxu0 %v2271
      %2491 = vmatprep.subr.bf16.mxu0 0
      %2492 = vmatpush1.bf16.xpose.msra.mxu0 %v2272
      %2493 = vmatprep.subr.bf16.mxu0 0
      %2494 = vmatpush1.bf16.xpose.msra.mxu0 %v2273
      %2495 = vmatprep.subr.bf16.mxu0 0
      %2496 = vmatpush1.bf16.xpose.msra.mxu0 %v2274
      %2497 = vmatprep.subr.bf16.mxu0 0
      %2498 = vmatpush1.bf16.xpose.msra.mxu0 %v2275
      %2499 = vmatprep.subr.bf16.mxu0 0
      %2500 = vmatpush1.bf16.xpose.msra.mxu0 %v2276
      %2501 = vmatprep.subr.bf16.mxu0 0
      %2502 = vmatpush1.bf16.xpose.msra.mxu0 %v2277
      %2503 = vmatprep.mubr.bf16.mxu0 0
      %2504 = vmatmul.mubr.bf16.gmra.mrb[0].mxu0 %v2230
      %v2505 = vpop.f32.mrb[0].mxu0
      %v2506 = vadd.f32 0.0, %v2505
      %v2507 = vpop.f32.mrb[0].mxu0
      %v2508 = vadd.f32 0.0, %v2507
      %v2509 = vpop.f32.mrb[0].mxu0
      %v2510 = vadd.f32 0.0, %v2509
      %v2511 = vpop.f32.mrb[0].mxu0
      %v2512 = vadd.f32 0.0, %v2511
      %2513 = vmatprep.mubr.bf16.mxu0 0
      %2514 = vmatmul.mubr.bf16.gmra.mrb[0].mxu0 %v2231
      %v2515 = vpop.f32.mrb[0].mxu0
      %v2516 = vadd.f32 0.0, %v2515
      %v2517 = vpop.f32.mrb[0].mxu0
      %v2518 = vadd.f32 0.0, %v2517
      %v2519 = vpop.f32.mrb[0].mxu0
      %v2520 = vadd.f32 0.0, %v2519
      %v2521 = vpop.f32.mrb[0].mxu0
      %v2522 = vadd.f32 0.0, %v2521
      %2523 = vmatprep.mubr.bf16.mxu0 0
      %2524 = vmatmul.mubr.bf16.gmra.mrb[0].mxu0 %v2232
      %v2525 = vpop.f32.mrb[0].mxu0
      %v2526 = vadd.f32 0.0, %v2525
      %v2527 = vpop.f32.mrb[0].mxu0
      %v2528 = vadd.f32 0.0, %v2527
      %v2529 = vpop.f32.mrb[0].mxu0
      %v2530 = vadd.f32 0.0, %v2529
      %v2531 = vpop.f32.mrb[0].mxu0
      %v2532 = vadd.f32 0.0, %v2531
      %2533 = vmatprep.mubr.bf16.mxu0 0
      %2534 = vmatmul.mubr.bf16.gmra.mrb[0].mxu0 %v2233
      %v2535 = vpop.f32.mrb[0].mxu0
      %v2536 = vadd.f32 0.0, %v2535
      %v2537 = vpop.f32.mrb[0].mxu0
      %v2538 = vadd.f32 0.0, %v2537
      %v2539 = vpop.f32.mrb[0].mxu0
      %v2540 = vadd.f32 0.0, %v2539
      %v2541 = vpop.f32.mrb[0].mxu0
      %v2542 = vadd.f32 0.0, %v2541
      %2543 = vmatprep.mubr.bf16.mxu0 0
      %2544 = vmatmul.mubr.bf16.gmra.mrb[0].mxu0 %v2234
      %v2545 = vpop.f32.mrb[0].mxu0
      %v2546 = vadd.f32 0.0, %v2545
      %v2547 = vpop.f32.mrb[0].mxu0
      %v2548 = vadd.f32 0.0, %v2547
      %v2549 = vpop.f32.mrb[0].mxu0
      %v2550 = vadd.f32 0.0, %v2549
      %v2551 = vpop.f32.mrb[0].mxu0
      %v2552 = vadd.f32 0.0, %v2551
      %2553 = vmatprep.mubr.bf16.mxu0 0
      %2554 = vmatmul.mubr.bf16.gmra.mrb[0].mxu0 %v2235
      %v2555 = vpop.f32.mrb[0].mxu0
      %v2556 = vadd.f32 0.0, %v2555
      %v2557 = vpop.f32.mrb[0].mxu0
      %v2558 = vadd.f32 0.0, %v2557
      %v2559 = vpop.f32.mrb[0].mxu0
      %v2560 = vadd.f32 0.0, %v2559
      %v2561 = vpop.f32.mrb[0].mxu0
      %v2562 = vadd.f32 0.0, %v2561
      %2563 = vmatprep.mubr.bf16.mxu0 0
      %2564 = vmatmul.mubr.bf16.gmra.mrb[0].mxu0 %v2236
      %v2565 = vpop.f32.mrb[0].mxu0
      %v2566 = vadd.f32 0.0, %v2565
      %v2567 = vpop.f32.mrb[0].mxu0
      %v2568 = vadd.f32 0.0, %v2567
      %v2569 = vpop.f32.mrb[0].mxu0
      %v2570 = vadd.f32 0.0, %v2569
      %v2571 = vpop.f32.mrb[0].mxu0
      %v2572 = vadd.f32 0.0, %v2571
      %2573 = vmatprep.mubr.bf16.mxu0 0
      %2574 = vmatmul.mubr.bf16.gmra.mrb[0].mxu0 %v2237
      %v2575 = vpop.f32.mrb[0].mxu0
      %v2576 = vadd.f32 0.0, %v2575
      %v2577 = vpop.f32.mrb[0].mxu0
      %v2578 = vadd.f32 0.0, %v2577
      %v2579 = vpop.f32.mrb[0].mxu0
      %v2580 = vadd.f32 0.0, %v2579
      %v2581 = vpop.f32.mrb[0].mxu0
      %v2582 = vadd.f32 0.0, %v2581
      %2583 = vmatprep.mubr.bf16.mxu0 0
      %2584 = vmatmul.mubr.bf16.gmra.mrb[0].mxu0 %v2238
      %v2585 = vpop.f32.mrb[0].mxu0
      %v2586 = vadd.f32 0.0, %v2585
      %v2587 = vpop.f32.mrb[0].mxu0
      %v2588 = vadd.f32 0.0, %v2587
      %v2589 = vpop.f32.mrb[0].mxu0
      %v2590 = vadd.f32 0.0, %v2589
      %v2591 = vpop.f32.mrb[0].mxu0
      %v2592 = vadd.f32 0.0, %v2591
      %2593 = vmatprep.mubr.bf16.mxu0 0
      %2594 = vmatmul.mubr.bf16.gmra.mrb[0].mxu0 %v2239
      %v2595 = vpop.f32.mrb[0].mxu0
      %v2596 = vadd.f32 0.0, %v2595
      %v2597 = vpop.f32.mrb[0].mxu0
      %v2598 = vadd.f32 0.0, %v2597
      %v2599 = vpop.f32.mrb[0].mxu0
      %v2600 = vadd.f32 0.0, %v2599
      %v2601 = vpop.f32.mrb[0].mxu0
      %v2602 = vadd.f32 0.0, %v2601
      %2603 = vmatprep.mubr.bf16.mxu0 0
      %2604 = vmatmul.mubr.bf16.gmra.mrb[0].mxu0 %v2240
      %v2605 = vpop.f32.mrb[0].mxu0
      %v2606 = vadd.f32 0.0, %v2605
      %v2607 = vpop.f32.mrb[0].mxu0
      %v2608 = vadd.f32 0.0, %v2607
      %v2609 = vpop.f32.mrb[0].mxu0
      %v2610 = vadd.f32 0.0, %v2609
      %v2611 = vpop.f32.mrb[0].mxu0
      %v2612 = vadd.f32 0.0, %v2611
      %2613 = vmatprep.mubr.bf16.mxu0 0
      %2614 = vmatmul.mubr.bf16.gmra.mrb[0].mxu0 %v2241
      %v2615 = vpop.f32.mrb[0].mxu0
      %v2616 = vadd.f32 0.0, %v2615
      %v2617 = vpop.f32.mrb[0].mxu0
      %v2618 = vadd.f32 0.0, %v2617
      %v2619 = vpop.f32.mrb[0].mxu0
      %v2620 = vadd.f32 0.0, %v2619
      %v2621 = vpop.f32.mrb[0].mxu0
      %v2622 = vadd.f32 0.0, %v2621
      %2623 = vmatprep.mubr.bf16.mxu0 0
      %2624 = vmatmul.mubr.bf16.gmra.mrb[0].mxu0 %v2242
      %v2625 = vpop.f32.mrb[0].mxu0
      %v2626 = vadd.f32 0.0, %v2625
      %v2627 = vpop.f32.mrb[0].mxu0
      %v2628 = vadd.f32 0.0, %v2627
      %v2629 = vpop.f32.mrb[0].mxu0
      %v2630 = vadd.f32 0.0, %v2629
      %v2631 = vpop.f32.mrb[0].mxu0
      %v2632 = vadd.f32 0.0, %v2631
      %2633 = vmatprep.mubr.bf16.mxu0 0
      %2634 = vmatmul.mubr.bf16.gmra.mrb[0].mxu0 %v2243
      %v2635 = vpop.f32.mrb[0].mxu0
      %v2636 = vadd.f32 0.0, %v2635
      %v2637 = vpop.f32.mrb[0].mxu0
      %v2638 = vadd.f32 0.0, %v2637
      %v2639 = vpop.f32.mrb[0].mxu0
      %v2640 = vadd.f32 0.0, %v2639
      %v2641 = vpop.f32.mrb[0].mxu0
      %v2642 = vadd.f32 0.0, %v2641
      %2643 = vmatprep.mubr.bf16.mxu0 0
      %2644 = vmatmul.mubr.bf16.gmra.mrb[0].mxu0 %v2244
      %v2645 = vpop.f32.mrb[0].mxu0
      %v2646 = vadd.f32 0.0, %v2645
      %v2647 = vpop.f32.mrb[0].mxu0
      %v2648 = vadd.f32 0.0, %v2647
      %v2649 = vpop.f32.mrb[0].mxu0
      %v2650 = vadd.f32 0.0, %v2649
      %v2651 = vpop.f32.mrb[0].mxu0
      %v2652 = vadd.f32 0.0, %v2651
      %2653 = vmatprep.mubr.bf16.mxu0 0
      %2654 = vmatmul.mubr.bf16.gmra.mrb[0].mxu0 %v2245
      %v2655 = vpop.f32.mrb[0].mxu0
      %v2656 = vadd.f32 0.0, %v2655
      %v2657 = vpop.f32.mrb[0].mxu0
      %v2658 = vadd.f32 0.0, %v2657
      %v2659 = vpop.f32.mrb[0].mxu0
      %v2660 = vadd.f32 0.0, %v2659
      %v2661 = vpop.f32.mrb[0].mxu0
      %v2662 = vadd.f32 0.0, %v2661
      %2663 = vdwg.mxu0
      %v2664 = vmax.f32 %v2313, %v2315
      %v2665 = vmax.f32 %v2664, %v2506
      %v2666 = vmax.f32 %v2665, %v2508
      %2667 = vmax.xlane.f32.xlu0 %v2666
      %v2668 = vpop.xlane.xlu0 %2667
      %v2669 = vmax.f32 %v2317, %v2319
      %v2670 = vmax.f32 %v2669, %v2510
      %v2671 = vmax.f32 %v2670, %v2512
      %2672 = vmax.xlane.f32.xlu0 %v2671
      %v2673 = vpop.xlane.xlu0 %2672
      %v2674 = vmax.f32 %v2323, %v2325
      %v2675 = vmax.f32 %v2674, %v2516
      %v2676 = vmax.f32 %v2675, %v2518
      %2677 = vmax.xlane.f32.xlu0 %v2676
      %v2678 = vpop.xlane.xlu0 %2677
      %v2679 = vmax.f32 %v2327, %v2329
      %v2680 = vmax.f32 %v2679, %v2520
      %v2681 = vmax.f32 %v2680, %v2522
      %2682 = vmax.xlane.f32.xlu0 %v2681
      %v2683 = vpop.xlane.xlu0 %2682
      %v2684 = vmax.f32 %v2333, %v2335
      %v2685 = vmax.f32 %v2684, %v2526
      %v2686 = vmax.f32 %v2685, %v2528
      %2687 = vmax.xlane.f32.xlu0 %v2686
      %v2688 = vpop.xlane.xlu0 %2687
      %v2689 = vmax.f32 %v2337, %v2339
      %v2690 = vmax.f32 %v2689, %v2530
      %v2691 = vmax.f32 %v2690, %v2532
      %2692 = vmax.xlane.f32.xlu0 %v2691
      %v2693 = vpop.xlane.xlu0 %2692
      %v2694 = vmax.f32 %v2343, %v2345
      %v2695 = vmax.f32 %v2694, %v2536
      %v2696 = vmax.f32 %v2695, %v2538
      %2697 = vmax.xlane.f32.xlu0 %v2696
      %v2698 = vpop.xlane.xlu0 %2697
      %v2699 = vmax.f32 %v2347, %v2349
      %v2700 = vmax.f32 %v2699, %v2540
      %v2701 = vmax.f32 %v2700, %v2542
      %2702 = vmax.xlane.f32.xlu0 %v2701
      %v2703 = vpop.xlane.xlu0 %2702
      %v2704 = vmax.f32 %v2353, %v2355
      %v2705 = vmax.f32 %v2704, %v2546
      %v2706 = vmax.f32 %v2705, %v2548
      %2707 = vmax.xlane.f32.xlu0 %v2706
      %v2708 = vpop.xlane.xlu0 %2707
      %v2709 = vmax.f32 %v2357, %v2359
      %v2710 = vmax.f32 %v2709, %v2550
      %v2711 = vmax.f32 %v2710, %v2552
      %2712 = vmax.xlane.f32.xlu0 %v2711
      %v2713 = vpop.xlane.xlu0 %2712
      %v2714 = vmax.f32 %v2363, %v2365
      %v2715 = vmax.f32 %v2714, %v2556
      %v2716 = vmax.f32 %v2715, %v2558
      %2717 = vmax.xlane.f32.xlu0 %v2716
      %v2718 = vpop.xlane.xlu0 %2717
      %v2719 = vmax.f32 %v2367, %v2369
      %v2720 = vmax.f32 %v2719, %v2560
      %v2721 = vmax.f32 %v2720, %v2562
      %2722 = vmax.xlane.f32.xlu0 %v2721
      %v2723 = vpop.xlane.xlu0 %2722
      %v2724 = vmax.f32 %v2373, %v2375
      %v2725 = vmax.f32 %v2724, %v2566
      %v2726 = vmax.f32 %v2725, %v2568
      %2727 = vmax.xlane.f32.xlu0 %v2726
      %v2728 = vpop.xlane.xlu0 %2727
      %v2729 = vmax.f32 %v2377, %v2379
      %v2730 = vmax.f32 %v2729, %v2570
      %v2731 = vmax.f32 %v2730, %v2572
      %2732 = vmax.xlane.f32.xlu0 %v2731
      %v2733 = vpop.xlane.xlu0 %2732
      %v2734 = vmax.f32 %v2383, %v2385
      %v2735 = vmax.f32 %v2734, %v2576
      %v2736 = vmax.f32 %v2735, %v2578
      %2737 = vmax.xlane.f32.xlu0 %v2736
      %v2738 = vpop.xlane.xlu0 %2737
      %v2739 = vmax.f32 %v2387, %v2389
      %v2740 = vmax.f32 %v2739, %v2580
      %v2741 = vmax.f32 %v2740, %v2582
      %2742 = vmax.xlane.f32.xlu0 %v2741
      %v2743 = vpop.xlane.xlu0 %2742
      %v2744 = vmax.f32 %v2393, %v2395
      %v2745 = vmax.f32 %v2744, %v2586
      %v2746 = vmax.f32 %v2745, %v2588
      %2747 = vmax.xlane.f32.xlu0 %v2746
      %v2748 = vpop.xlane.xlu0 %2747
      %v2749 = vmax.f32 %v2397, %v2399
      %v2750 = vmax.f32 %v2749, %v2590
      %v2751 = vmax.f32 %v2750, %v2592
      %2752 = vmax.xlane.f32.xlu0 %v2751
      %v2753 = vpop.xlane.xlu0 %2752
      %v2754 = vmax.f32 %v2403, %v2405
      %v2755 = vmax.f32 %v2754, %v2596
      %v2756 = vmax.f32 %v2755, %v2598
      %2757 = vmax.xlane.f32.xlu0 %v2756
      %v2758 = vpop.xlane.xlu0 %2757
      %v2759 = vmax.f32 %v2407, %v2409
      %v2760 = vmax.f32 %v2759, %v2600
      %v2761 = vmax.f32 %v2760, %v2602
      %2762 = vmax.xlane.f32.xlu0 %v2761
      %v2763 = vpop.xlane.xlu0 %2762
      %v2764 = vmax.f32 %v2413, %v2415
      %v2765 = vmax.f32 %v2764, %v2606
      %v2766 = vmax.f32 %v2765, %v2608
      %2767 = vmax.xlane.f32.xlu0 %v2766
      %v2768 = vpop.xlane.xlu0 %2767
      %v2769 = vmax.f32 %v2417, %v2419
      %v2770 = vmax.f32 %v2769, %v2610
      %v2771 = vmax.f32 %v2770, %v2612
      %2772 = vmax.xlane.f32.xlu0 %v2771
      %v2773 = vpop.xlane.xlu0 %2772
      %v2774 = vmax.f32 %v2423, %v2425
      %v2775 = vmax.f32 %v2774, %v2616
      %v2776 = vmax.f32 %v2775, %v2618
      %2777 = vmax.xlane.f32.xlu0 %v2776
      %v2778 = vpop.xlane.xlu0 %2777
      %v2779 = vmax.f32 %v2427, %v2429
      %v2780 = vmax.f32 %v2779, %v2620
      %v2781 = vmax.f32 %v2780, %v2622
      %2782 = vmax.xlane.f32.xlu0 %v2781
      %v2783 = vpop.xlane.xlu0 %2782
      %v2784 = vmax.f32 %v2433, %v2435
      %v2785 = vmax.f32 %v2784, %v2626
      %v2786 = vmax.f32 %v2785, %v2628
      %2787 = vmax.xlane.f32.xlu0 %v2786
      %v2788 = vpop.xlane.xlu0 %2787
      %v2789 = vmax.f32 %v2437, %v2439
      %v2790 = vmax.f32 %v2789, %v2630
      %v2791 = vmax.f32 %v2790, %v2632
      %2792 = vmax.xlane.f32.xlu0 %v2791
      %v2793 = vpop.xlane.xlu0 %2792
      %v2794 = vmax.f32 %v2443, %v2445
      %v2795 = vmax.f32 %v2794, %v2636
      %v2796 = vmax.f32 %v2795, %v2638
      %2797 = vmax.xlane.f32.xlu0 %v2796
      %v2798 = vpop.xlane.xlu0 %2797
      %v2799 = vmax.f32 %v2447, %v2449
      %v2800 = vmax.f32 %v2799, %v2640
      %v2801 = vmax.f32 %v2800, %v2642
      %2802 = vmax.xlane.f32.xlu0 %v2801
      %v2803 = vpop.xlane.xlu0 %2802
      %v2804 = vmax.f32 %v2453, %v2455
      %v2805 = vmax.f32 %v2804, %v2646
      %v2806 = vmax.f32 %v2805, %v2648
      %2807 = vmax.xlane.f32.xlu0 %v2806
      %v2808 = vpop.xlane.xlu0 %2807
      %v2809 = vmax.f32 %v2457, %v2459
      %v2810 = vmax.f32 %v2809, %v2650
      %v2811 = vmax.f32 %v2810, %v2652
      %2812 = vmax.xlane.f32.xlu0 %v2811
      %v2813 = vpop.xlane.xlu0 %2812
      %v2814 = vmax.f32 %v2463, %v2465
      %v2815 = vmax.f32 %v2814, %v2656
      %v2816 = vmax.f32 %v2815, %v2658
      %2817 = vmax.xlane.f32.xlu0 %v2816
      %v2818 = vpop.xlane.xlu0 %2817
      %v2819 = vmax.f32 %v2467, %v2469
      %v2820 = vmax.f32 %v2819, %v2660
      %v2821 = vmax.f32 %v2820, %v2662
      %2822 = vmax.xlane.f32.xlu0 %v2821
      %v2823 = vpop.xlane.xlu0 %2822
      %v2824 = vsub.f32 %v2313, %v2668
      %v2825 = vsub.f32 %v2315, %v2668
      %v2826 = vsub.f32 %v2506, %v2668
      %v2827 = vsub.f32 %v2508, %v2668
      %v2828 = vsub.f32 %v2317, %v2673
      %v2829 = vsub.f32 %v2319, %v2673
      %v2830 = vsub.f32 %v2510, %v2673
      %v2831 = vsub.f32 %v2512, %v2673
      %v2832 = vsub.f32 %v2323, %v2678
      %v2833 = vsub.f32 %v2325, %v2678
      %v2834 = vsub.f32 %v2516, %v2678
      %v2835 = vsub.f32 %v2518, %v2678
      %v2836 = vsub.f32 %v2327, %v2683
      %v2837 = vsub.f32 %v2329, %v2683
      %v2838 = vsub.f32 %v2520, %v2683
      %v2839 = vsub.f32 %v2522, %v2683
      %v2840 = vsub.f32 %v2333, %v2688
      %v2841 = vsub.f32 %v2335, %v2688
      %v2842 = vsub.f32 %v2526, %v2688
      %v2843 = vsub.f32 %v2528, %v2688
      %v2844 = vsub.f32 %v2337, %v2693
      %v2845 = vsub.f32 %v2339, %v2693
      %v2846 = vsub.f32 %v2530, %v2693
      %v2847 = vsub.f32 %v2532, %v2693
      %v2848 = vsub.f32 %v2343, %v2698
      %v2849 = vsub.f32 %v2345, %v2698
      %v2850 = vsub.f32 %v2536, %v2698
      %v2851 = vsub.f32 %v2538, %v2698
      %v2852 = vsub.f32 %v2347, %v2703
      %v2853 = vsub.f32 %v2349, %v2703
      %v2854 = vsub.f32 %v2540, %v2703
      %v2855 = vsub.f32 %v2542, %v2703
      %v2856 = vsub.f32 %v2353, %v2708
      %v2857 = vsub.f32 %v2355, %v2708
      %v2858 = vsub.f32 %v2546, %v2708
      %v2859 = vsub.f32 %v2548, %v2708
      %v2860 = vsub.f32 %v2357, %v2713
      %v2861 = vsub.f32 %v2359, %v2713
      %v2862 = vsub.f32 %v2550, %v2713
      %v2863 = vsub.f32 %v2552, %v2713
      %v2864 = vsub.f32 %v2363, %v2718
      %v2865 = vsub.f32 %v2365, %v2718
      %v2866 = vsub.f32 %v2556, %v2718
      %v2867 = vsub.f32 %v2558, %v2718
      %v2868 = vsub.f32 %v2367, %v2723
      %v2869 = vsub.f32 %v2369, %v2723
      %v2870 = vsub.f32 %v2560, %v2723
      %v2871 = vsub.f32 %v2562, %v2723
      %v2872 = vsub.f32 %v2373, %v2728
      %v2873 = vsub.f32 %v2375, %v2728
      %v2874 = vsub.f32 %v2566, %v2728
      %v2875 = vsub.f32 %v2568, %v2728
      %v2876 = vsub.f32 %v2377, %v2733
      %v2877 = vsub.f32 %v2379, %v2733
      %v2878 = vsub.f32 %v2570, %v2733
      %v2879 = vsub.f32 %v2572, %v2733
      %v2880 = vsub.f32 %v2383, %v2738
      %v2881 = vsub.f32 %v2385, %v2738
      %v2882 = vsub.f32 %v2576, %v2738
      %v2883 = vsub.f32 %v2578, %v2738
      %v2884 = vsub.f32 %v2387, %v2743
      %v2885 = vsub.f32 %v2389, %v2743
      %v2886 = vsub.f32 %v2580, %v2743
      %v2887 = vsub.f32 %v2582, %v2743
      %v2888 = vsub.f32 %v2393, %v2748
      %v2889 = vsub.f32 %v2395, %v2748
      %v2890 = vsub.f32 %v2586, %v2748
      %v2891 = vsub.f32 %v2588, %v2748
      %v2892 = vsub.f32 %v2397, %v2753
      %v2893 = vsub.f32 %v2399, %v2753
      %v2894 = vsub.f32 %v2590, %v2753
      %v2895 = vsub.f32 %v2592, %v2753
      %v2896 = vsub.f32 %v2403, %v2758
      %v2897 = vsub.f32 %v2405, %v2758
      %v2898 = vsub.f32 %v2596, %v2758
      %v2899 = vsub.f32 %v2598, %v2758
      %v2900 = vsub.f32 %v2407, %v2763
      %v2901 = vsub.f32 %v2409, %v2763
      %v2902 = vsub.f32 %v2600, %v2763
      %v2903 = vsub.f32 %v2602, %v2763
      %v2904 = vsub.f32 %v2413, %v2768
      %v2905 = vsub.f32 %v2415, %v2768
      %v2906 = vsub.f32 %v2606, %v2768
      %v2907 = vsub.f32 %v2608, %v2768
      %v2908 = vsub.f32 %v2417, %v2773
      %v2909 = vsub.f32 %v2419, %v2773
      %v2910 = vsub.f32 %v2610, %v2773
      %v2911 = vsub.f32 %v2612, %v2773
      %v2912 = vsub.f32 %v2423, %v2778
      %v2913 = vsub.f32 %v2425, %v2778
      %v2914 = vsub.f32 %v2616, %v2778
      %v2915 = vsub.f32 %v2618, %v2778
      %v2916 = vsub.f32 %v2427, %v2783
      %v2917 = vsub.f32 %v2429, %v2783
      %v2918 = vsub.f32 %v2620, %v2783
      %v2919 = vsub.f32 %v2622, %v2783
      %v2920 = vsub.f32 %v2433, %v2788
      %v2921 = vsub.f32 %v2435, %v2788
      %v2922 = vsub.f32 %v2626, %v2788
      %v2923 = vsub.f32 %v2628, %v2788
      %v2924 = vsub.f32 %v2437, %v2793
      %v2925 = vsub.f32 %v2439, %v2793
      %v2926 = vsub.f32 %v2630, %v2793
      %v2927 = vsub.f32 %v2632, %v2793
      %v2928 = vsub.f32 %v2443, %v2798
      %v2929 = vsub.f32 %v2445, %v2798
      %v2930 = vsub.f32 %v2636, %v2798
      %v2931 = vsub.f32 %v2638, %v2798
      %v2932 = vsub.f32 %v2447, %v2803
      %v2933 = vsub.f32 %v2449, %v2803
      %v2934 = vsub.f32 %v2640, %v2803
      %v2935 = vsub.f32 %v2642, %v2803
      %v2936 = vsub.f32 %v2453, %v2808
      %v2937 = vsub.f32 %v2455, %v2808
      %v2938 = vsub.f32 %v2646, %v2808
      %v2939 = vsub.f32 %v2648, %v2808
      %v2940 = vsub.f32 %v2457, %v2813
      %v2941 = vsub.f32 %v2459, %v2813
      %v2942 = vsub.f32 %v2650, %v2813
      %v2943 = vsub.f32 %v2652, %v2813
      %v2944 = vsub.f32 %v2463, %v2818
      %v2945 = vsub.f32 %v2465, %v2818
      %v2946 = vsub.f32 %v2656, %v2818
      %v2947 = vsub.f32 %v2658, %v2818
      %v2948 = vsub.f32 %v2467, %v2823
      %v2949 = vsub.f32 %v2469, %v2823
      %v2950 = vsub.f32 %v2660, %v2823
      %v2951 = vsub.f32 %v2662, %v2823
      %v2952 = vmul.f32 %v2824, 1.442695
      %v2953 = vpow.pop %v2952
      %v2954 = vmul.f32 %v2825, 1.442695
      %v2955 = vpow.pop %v2954
      %v2956 = vmul.f32 %v2826, 1.442695
      %v2957 = vpow.pop %v2956
      %v2958 = vmul.f32 %v2827, 1.442695
      %v2959 = vpow.pop %v2958
      %v2960 = vmul.f32 %v2828, 1.442695
      %v2961 = vpow.pop %v2960
      %v2962 = vmul.f32 %v2829, 1.442695
      %v2963 = vpow.pop %v2962
      %v2964 = vmul.f32 %v2830, 1.442695
      %v2965 = vpow.pop %v2964
      %v2966 = vmul.f32 %v2831, 1.442695
      %v2967 = vpow.pop %v2966
      %v2968 = vmul.f32 %v2832, 1.442695
      %v2969 = vpow.pop %v2968
      %v2970 = vmul.f32 %v2833, 1.442695
      %v2971 = vpow.pop %v2970
      %v2972 = vmul.f32 %v2834, 1.442695
      %v2973 = vpow.pop %v2972
      %v2974 = vmul.f32 %v2835, 1.442695
      %v2975 = vpow.pop %v2974
      %v2976 = vmul.f32 %v2836, 1.442695
      %v2977 = vpow.pop %v2976
      %v2978 = vmul.f32 %v2837, 1.442695
      %v2979 = vpow.pop %v2978
      %v2980 = vmul.f32 %v2838, 1.442695
      %v2981 = vpow.pop %v2980
      %v2982 = vmul.f32 %v2839, 1.442695
      %v2983 = vpow.pop %v2982
      %v2984 = vmul.f32 %v2840, 1.442695
      %v2985 = vpow.pop %v2984
      %v2986 = vmul.f32 %v2841, 1.442695
      %v2987 = vpow.pop %v2986
      %v2988 = vmul.f32 %v2842, 1.442695
      %v2989 = vpow.pop %v2988
      %v2990 = vmul.f32 %v2843, 1.442695
      %v2991 = vpow.pop %v2990
      %v2992 = vmul.f32 %v2844, 1.442695
      %v2993 = vpow.pop %v2992
      %v2994 = vmul.f32 %v2845, 1.442695
      %v2995 = vpow.pop %v2994
      %v2996 = vmul.f32 %v2846, 1.442695
      %v2997 = vpow.pop %v2996
      %v2998 = vmul.f32 %v2847, 1.442695
      %v2999 = vpow.pop %v2998
      %v3000 = vmul.f32 %v2848, 1.442695
      %v3001 = vpow.pop %v3000
      %v3002 = vmul.f32 %v2849, 1.442695
      %v3003 = vpow.pop %v3002
      %v3004 = vmul.f32 %v2850, 1.442695
      %v3005 = vpow.pop %v3004
      %v3006 = vmul.f32 %v2851, 1.442695
      %v3007 = vpow.pop %v3006
      %v3008 = vmul.f32 %v2852, 1.442695
      %v3009 = vpow.pop %v3008
      %v3010 = vmul.f32 %v2853, 1.442695
      %v3011 = vpow.pop %v3010
      %v3012 = vmul.f32 %v2854, 1.442695
      %v3013 = vpow.pop %v3012
      %v3014 = vmul.f32 %v2855, 1.442695
      %v3015 = vpow.pop %v3014
      %v3016 = vmul.f32 %v2856, 1.442695
      %v3017 = vpow.pop %v3016
      %v3018 = vmul.f32 %v2857, 1.442695
      %v3019 = vpow.pop %v3018
      %v3020 = vmul.f32 %v2858, 1.442695
      %v3021 = vpow.pop %v3020
      %v3022 = vmul.f32 %v2859, 1.442695
      %v3023 = vpow.pop %v3022
      %v3024 = vmul.f32 %v2860, 1.442695
      %v3025 = vpow.pop %v3024
      %v3026 = vmul.f32 %v2861, 1.442695
      %v3027 = vpow.pop %v3026
      %v3028 = vmul.f32 %v2862, 1.442695
      %v3029 = vpow.pop %v3028
      %v3030 = vmul.f32 %v2863, 1.442695
      %v3031 = vpow.pop %v3030
      %v3032 = vmul.f32 %v2864, 1.442695
      %v3033 = vpow.pop %v3032
      %v3034 = vmul.f32 %v2865, 1.442695
      %v3035 = vpow.pop %v3034
      %v3036 = vmul.f32 %v2866, 1.442695
      %v3037 = vpow.pop %v3036
      %v3038 = vmul.f32 %v2867, 1.442695
      %v3039 = vpow.pop %v3038
      %v3040 = vmul.f32 %v2868, 1.442695
      %v3041 = vpow.pop %v3040
      %v3042 = vmul.f32 %v2869, 1.442695
      %v3043 = vpow.pop %v3042
      %v3044 = vmul.f32 %v2870, 1.442695
      %v3045 = vpow.pop %v3044
      %v3046 = vmul.f32 %v2871, 1.442695
      %v3047 = vpow.pop %v3046
      %v3048 = vmul.f32 %v2872, 1.442695
      %v3049 = vpow.pop %v3048
      %v3050 = vmul.f32 %v2873, 1.442695
      %v3051 = vpow.pop %v3050
      %v3052 = vmul.f32 %v2874, 1.442695
      %v3053 = vpow.pop %v3052
      %v3054 = vmul.f32 %v2875, 1.442695
      %v3055 = vpow.pop %v3054
      %v3056 = vmul.f32 %v2876, 1.442695
      %v3057 = vpow.pop %v3056
      %v3058 = vmul.f32 %v2877, 1.442695
      %v3059 = vpow.pop %v3058
      %v3060 = vmul.f32 %v2878, 1.442695
      %v3061 = vpow.pop %v3060
      %v3062 = vmul.f32 %v2879, 1.442695
      %v3063 = vpow.pop %v3062
      %v3064 = vmul.f32 %v2880, 1.442695
      %v3065 = vpow.pop %v3064
      %v3066 = vmul.f32 %v2881, 1.442695
      %v3067 = vpow.pop %v3066
      %v3068 = vmul.f32 %v2882, 1.442695
      %v3069 = vpow.pop %v3068
      %v3070 = vmul.f32 %v2883, 1.442695
      %v3071 = vpow.pop %v3070
      %v3072 = vmul.f32 %v2884, 1.442695
      %v3073 = vpow.pop %v3072
      %v3074 = vmul.f32 %v2885, 1.442695
      %v3075 = vpow.pop %v3074
      %v3076 = vmul.f32 %v2886, 1.442695
      %v3077 = vpow.pop %v3076
      %v3078 = vmul.f32 %v2887, 1.442695
      %v3079 = vpow.pop %v3078
      %v3080 = vmul.f32 %v2888, 1.442695
      %v3081 = vpow.pop %v3080
      %v3082 = vmul.f32 %v2889, 1.442695
      %v3083 = vpow.pop %v3082
      %v3084 = vmul.f32 %v2890, 1.442695
      %v3085 = vpow.pop %v3084
      %v3086 = vmul.f32 %v2891, 1.442695
      %v3087 = vpow.pop %v3086
      %v3088 = vmul.f32 %v2892, 1.442695
      %v3089 = vpow.pop %v3088
      %v3090 = vmul.f32 %v2893, 1.442695
      %v3091 = vpow.pop %v3090
      %v3092 = vmul.f32 %v2894, 1.442695
      %v3093 = vpow.pop %v3092
      %v3094 = vmul.f32 %v2895, 1.442695
      %v3095 = vpow.pop %v3094
      %v3096 = vmul.f32 %v2896, 1.442695
      %v3097 = vpow.pop %v3096
      %v3098 = vmul.f32 %v2897, 1.442695
      %v3099 = vpow.pop %v3098
      %v3100 = vmul.f32 %v2898, 1.442695
      %v3101 = vpow.pop %v3100
      %v3102 = vmul.f32 %v2899, 1.442695
      %v3103 = vpow.pop %v3102
      %v3104 = vmul.f32 %v2900, 1.442695
      %v3105 = vpow.pop %v3104
      %v3106 = vmul.f32 %v2901, 1.442695
      %v3107 = vpow.pop %v3106
      %v3108 = vmul.f32 %v2902, 1.442695
      %v3109 = vpow.pop %v3108
      %v3110 = vmul.f32 %v2903, 1.442695
      %v3111 = vpow.pop %v3110
      %v3112 = vmul.f32 %v2904, 1.442695
      %v3113 = vpow.pop %v3112
      %v3114 = vmul.f32 %v2905, 1.442695
      %v3115 = vpow.pop %v3114
      %v3116 = vmul.f32 %v2906, 1.442695
      %v3117 = vpow.pop %v3116
      %v3118 = vmul.f32 %v2907, 1.442695
      %v3119 = vpow.pop %v3118
      %v3120 = vmul.f32 %v2908, 1.442695
      %v3121 = vpow.pop %v3120
      %v3122 = vmul.f32 %v2909, 1.442695
      %v3123 = vpow.pop %v3122
      %v3124 = vmul.f32 %v2910, 1.442695
      %v3125 = vpow.pop %v3124
      %v3126 = vmul.f32 %v2911, 1.442695
      %v3127 = vpow.pop %v3126
      %v3128 = vmul.f32 %v2912, 1.442695
      %v3129 = vpow.pop %v3128
      %v3130 = vmul.f32 %v2913, 1.442695
      %v3131 = vpow.pop %v3130
      %v3132 = vmul.f32 %v2914, 1.442695
      %v3133 = vpow.pop %v3132
      %v3134 = vmul.f32 %v2915, 1.442695
      %v3135 = vpow.pop %v3134
      %v3136 = vmul.f32 %v2916, 1.442695
      %v3137 = vpow.pop %v3136
      %v3138 = vmul.f32 %v2917, 1.442695
      %v3139 = vpow.pop %v3138
      %v3140 = vmul.f32 %v2918, 1.442695
      %v3141 = vpow.pop %v3140
      %v3142 = vmul.f32 %v2919, 1.442695
      %v3143 = vpow.pop %v3142
      %v3144 = vmul.f32 %v2920, 1.442695
      %v3145 = vpow.pop %v3144
      %v3146 = vmul.f32 %v2921, 1.442695
      %v3147 = vpow.pop %v3146
      %v3148 = vmul.f32 %v2922, 1.442695
      %v3149 = vpow.pop %v3148
      %v3150 = vmul.f32 %v2923, 1.442695
      %v3151 = vpow.pop %v3150
      %v3152 = vmul.f32 %v2924, 1.442695
      %v3153 = vpow.pop %v3152
      %v3154 = vmul.f32 %v2925, 1.442695
      %v3155 = vpow.pop %v3154
      %v3156 = vmul.f32 %v2926, 1.442695
      %v3157 = vpow.pop %v3156
      %v3158 = vmul.f32 %v2927, 1.442695
      %v3159 = vpow.pop %v3158
      %v3160 = vmul.f32 %v2928, 1.442695
      %v3161 = vpow.pop %v3160
      %v3162 = vmul.f32 %v2929, 1.442695
      %v3163 = vpow.pop %v3162
      %v3164 = vmul.f32 %v2930, 1.442695
      %v3165 = vpow.pop %v3164
      %v3166 = vmul.f32 %v2931, 1.442695
      %v3167 = vpow.pop %v3166
      %v3168 = vmul.f32 %v2932, 1.442695
      %v3169 = vpow.pop %v3168
      %v3170 = vmul.f32 %v2933, 1.442695
      %v3171 = vpow.pop %v3170
      %v3172 = vmul.f32 %v2934, 1.442695
      %v3173 = vpow.pop %v3172
      %v3174 = vmul.f32 %v2935, 1.442695
      %v3175 = vpow.pop %v3174
      %v3176 = vmul.f32 %v2936, 1.442695
      %v3177 = vpow.pop %v3176
      %v3178 = vmul.f32 %v2937, 1.442695
      %v3179 = vpow.pop %v3178
      %v3180 = vmul.f32 %v2938, 1.442695
      %v3181 = vpow.pop %v3180
      %v3182 = vmul.f32 %v2939, 1.442695
      %v3183 = vpow.pop %v3182
      %v3184 = vmul.f32 %v2940, 1.442695
      %v3185 = vpow.pop %v3184
      %v3186 = vmul.f32 %v2941, 1.442695
      %v3187 = vpow.pop %v3186
      %v3188 = vmul.f32 %v2942, 1.442695
      %v3189 = vpow.pop %v3188
      %v3190 = vmul.f32 %v2943, 1.442695
      %v3191 = vpow.pop %v3190
      %v3192 = vmul.f32 %v2944, 1.442695
      %v3193 = vpow.pop %v3192
      %v3194 = vmul.f32 %v2945, 1.442695
      %v3195 = vpow.pop %v3194
      %v3196 = vmul.f32 %v2946, 1.442695
      %v3197 = vpow.pop %v3196
      %v3198 = vmul.f32 %v2947, 1.442695
      %v3199 = vpow.pop %v3198
      %v3200 = vmul.f32 %v2948, 1.442695
      %v3201 = vpow.pop %v3200
      %v3202 = vmul.f32 %v2949, 1.442695
      %v3203 = vpow.pop %v3202
      %v3204 = vmul.f32 %v2950, 1.442695
      %v3205 = vpow.pop %v3204
      %v3206 = vmul.f32 %v2951, 1.442695
      %v3207 = vpow.pop %v3206
      %v3208 = vadd.f32 %v2953, %v2955
      %v3209 = vadd.f32 %v3208, %v2957
      %v3210 = vadd.f32 %v3209, %v2959
      %3211 = vadd.xlane.f32.xlu0 %v3210
      %v3212 = vpop.xlane.xlu0 %3211
      %v3213 = vadd.f32 %v2961, %v2963
      %v3214 = vadd.f32 %v3213, %v2965
      %v3215 = vadd.f32 %v3214, %v2967
      %3216 = vadd.xlane.f32.xlu0 %v3215
      %v3217 = vpop.xlane.xlu0 %3216
      %v3218 = vadd.f32 %v2969, %v2971
      %v3219 = vadd.f32 %v3218, %v2973
      %v3220 = vadd.f32 %v3219, %v2975
      %3221 = vadd.xlane.f32.xlu0 %v3220
      %v3222 = vpop.xlane.xlu0 %3221
      %v3223 = vadd.f32 %v2977, %v2979
      %v3224 = vadd.f32 %v3223, %v2981
      %v3225 = vadd.f32 %v3224, %v2983
      %3226 = vadd.xlane.f32.xlu0 %v3225
      %v3227 = vpop.xlane.xlu0 %3226
      %v3228 = vadd.f32 %v2985, %v2987
      %v3229 = vadd.f32 %v3228, %v2989
      %v3230 = vadd.f32 %v3229, %v2991
      %3231 = vadd.xlane.f32.xlu0 %v3230
      %v3232 = vpop.xlane.xlu0 %3231
      %v3233 = vadd.f32 %v2993, %v2995
      %v3234 = vadd.f32 %v3233, %v2997
      %v3235 = vadd.f32 %v3234, %v2999
      %3236 = vadd.xlane.f32.xlu0 %v3235
      %v3237 = vpop.xlane.xlu0 %3236
      %v3238 = vadd.f32 %v3001, %v3003
      %v3239 = vadd.f32 %v3238, %v3005
      %v3240 = vadd.f32 %v3239, %v3007
      %3241 = vadd.xlane.f32.xlu0 %v3240
      %v3242 = vpop.xlane.xlu0 %3241
      %v3243 = vadd.f32 %v3009, %v3011
      %v3244 = vadd.f32 %v3243, %v3013
      %v3245 = vadd.f32 %v3244, %v3015
      %3246 = vadd.xlane.f32.xlu0 %v3245
      %v3247 = vpop.xlane.xlu0 %3246
      %v3248 = vadd.f32 %v3017, %v3019
      %v3249 = vadd.f32 %v3248, %v3021
      %v3250 = vadd.f32 %v3249, %v3023
      %3251 = vadd.xlane.f32.xlu0 %v3250
      %v3252 = vpop.xlane.xlu0 %3251
      %v3253 = vadd.f32 %v3025, %v3027
      %v3254 = vadd.f32 %v3253, %v3029
      %v3255 = vadd.f32 %v3254, %v3031
      %3256 = vadd.xlane.f32.xlu0 %v3255
      %v3257 = vpop.xlane.xlu0 %3256
      %v3258 = vadd.f32 %v3033, %v3035
      %v3259 = vadd.f32 %v3258, %v3037
      %v3260 = vadd.f32 %v3259, %v3039
      %3261 = vadd.xlane.f32.xlu0 %v3260
      %v3262 = vpop.xlane.xlu0 %3261
      %v3263 = vadd.f32 %v3041, %v3043
      %v3264 = vadd.f32 %v3263, %v3045
      %v3265 = vadd.f32 %v3264, %v3047
      %3266 = vadd.xlane.f32.xlu0 %v3265
      %v3267 = vpop.xlane.xlu0 %3266
      %v3268 = vadd.f32 %v3049, %v3051
      %v3269 = vadd.f32 %v3268, %v3053
      %v3270 = vadd.f32 %v3269, %v3055
      %3271 = vadd.xlane.f32.xlu0 %v3270
      %v3272 = vpop.xlane.xlu0 %3271
      %v3273 = vadd.f32 %v3057, %v3059
      %v3274 = vadd.f32 %v3273, %v3061
      %v3275 = vadd.f32 %v3274, %v3063
      %3276 = vadd.xlane.f32.xlu0 %v3275
      %v3277 = vpop.xlane.xlu0 %3276
      %v3278 = vadd.f32 %v3065, %v3067
      %v3279 = vadd.f32 %v3278, %v3069
      %v3280 = vadd.f32 %v3279, %v3071
      %3281 = vadd.xlane.f32.xlu0 %v3280
      %v3282 = vpop.xlane.xlu0 %3281
      %v3283 = vadd.f32 %v3073, %v3075
      %v3284 = vadd.f32 %v3283, %v3077
      %v3285 = vadd.f32 %v3284, %v3079
      %3286 = vadd.xlane.f32.xlu0 %v3285
      %v3287 = vpop.xlane.xlu0 %3286
      %v3288 = vadd.f32 %v3081, %v3083
      %v3289 = vadd.f32 %v3288, %v3085
      %v3290 = vadd.f32 %v3289, %v3087
      %3291 = vadd.xlane.f32.xlu0 %v3290
      %v3292 = vpop.xlane.xlu0 %3291
      %v3293 = vadd.f32 %v3089, %v3091
      %v3294 = vadd.f32 %v3293, %v3093
      %v3295 = vadd.f32 %v3294, %v3095
      %3296 = vadd.xlane.f32.xlu0 %v3295
      %v3297 = vpop.xlane.xlu0 %3296
      %v3298 = vadd.f32 %v3097, %v3099
      %v3299 = vadd.f32 %v3298, %v3101
      %v3300 = vadd.f32 %v3299, %v3103
      %3301 = vadd.xlane.f32.xlu0 %v3300
      %v3302 = vpop.xlane.xlu0 %3301
      %v3303 = vadd.f32 %v3105, %v3107
      %v3304 = vadd.f32 %v3303, %v3109
      %v3305 = vadd.f32 %v3304, %v3111
      %3306 = vadd.xlane.f32.xlu0 %v3305
      %v3307 = vpop.xlane.xlu0 %3306
      %v3308 = vadd.f32 %v3113, %v3115
      %v3309 = vadd.f32 %v3308, %v3117
      %v3310 = vadd.f32 %v3309, %v3119
      %3311 = vadd.xlane.f32.xlu0 %v3310
      %v3312 = vpop.xlane.xlu0 %3311
      %v3313 = vadd.f32 %v3121, %v3123
      %v3314 = vadd.f32 %v3313, %v3125
      %v3315 = vadd.f32 %v3314, %v3127
      %3316 = vadd.xlane.f32.xlu0 %v3315
      %v3317 = vpop.xlane.xlu0 %3316
      %v3318 = vadd.f32 %v3129, %v3131
      %v3319 = vadd.f32 %v3318, %v3133
      %v3320 = vadd.f32 %v3319, %v3135
      %3321 = vadd.xlane.f32.xlu0 %v3320
      %v3322 = vpop.xlane.xlu0 %3321
      %v3323 = vadd.f32 %v3137, %v3139
      %v3324 = vadd.f32 %v3323, %v3141
      %v3325 = vadd.f32 %v3324, %v3143
      %3326 = vadd.xlane.f32.xlu0 %v3325
      %v3327 = vpop.xlane.xlu0 %3326
      %v3328 = vadd.f32 %v3145, %v3147
      %v3329 = vadd.f32 %v3328, %v3149
      %v3330 = vadd.f32 %v3329, %v3151
      %3331 = vadd.xlane.f32.xlu0 %v3330
      %v3332 = vpop.xlane.xlu0 %3331
      %v3333 = vadd.f32 %v3153, %v3155
      %v3334 = vadd.f32 %v3333, %v3157
      %v3335 = vadd.f32 %v3334, %v3159
      %3336 = vadd.xlane.f32.xlu0 %v3335
      %v3337 = vpop.xlane.xlu0 %3336
      %v3338 = vadd.f32 %v3161, %v3163
      %v3339 = vadd.f32 %v3338, %v3165
      %v3340 = vadd.f32 %v3339, %v3167
      %3341 = vadd.xlane.f32.xlu0 %v3340
      %v3342 = vpop.xlane.xlu0 %3341
      %v3343 = vadd.f32 %v3169, %v3171
      %v3344 = vadd.f32 %v3343, %v3173
      %v3345 = vadd.f32 %v3344, %v3175
      %3346 = vadd.xlane.f32.xlu0 %v3345
      %v3347 = vpop.xlane.xlu0 %3346
      %v3348 = vadd.f32 %v3177, %v3179
      %v3349 = vadd.f32 %v3348, %v3181
      %v3350 = vadd.f32 %v3349, %v3183
      %3351 = vadd.xlane.f32.xlu0 %v3350
      %v3352 = vpop.xlane.xlu0 %3351
      %v3353 = vadd.f32 %v3185, %v3187
      %v3354 = vadd.f32 %v3353, %v3189
      %v3355 = vadd.f32 %v3354, %v3191
      %3356 = vadd.xlane.f32.xlu0 %v3355
      %v3357 = vpop.xlane.xlu0 %3356
      %v3358 = vadd.f32 %v3193, %v3195
      %v3359 = vadd.f32 %v3358, %v3197
      %v3360 = vadd.f32 %v3359, %v3199
      %3361 = vadd.xlane.f32.xlu0 %v3360
      %v3362 = vpop.xlane.xlu0 %3361
      %v3363 = vadd.f32 %v3201, %v3203
      %v3364 = vadd.f32 %v3363, %v3205
      %v3365 = vadd.f32 %v3364, %v3207
      %3366 = vadd.xlane.f32.xlu0 %v3365
      %v3367 = vpop.xlane.xlu0 %3366
      %v3368 = vpack.c.bf16 %v2961, %v2953
      %v3369 = vpack.c.bf16 %v2963, %v2955
      %v3370 = vpack.c.bf16 %v2965, %v2957
      %v3371 = vpack.c.bf16 %v2967, %v2959
      %v3372 = vpack.c.bf16 %v2977, %v2969
      %v3373 = vpack.c.bf16 %v2979, %v2971
      %v3374 = vpack.c.bf16 %v2981, %v2973
      %v3375 = vpack.c.bf16 %v2983, %v2975
      %v3376 = vpack.c.bf16 %v2993, %v2985
      %v3377 = vpack.c.bf16 %v2995, %v2987
      %v3378 = vpack.c.bf16 %v2997, %v2989
      %v3379 = vpack.c.bf16 %v2999, %v2991
      %v3380 = vpack.c.bf16 %v3009, %v3001
      %v3381 = vpack.c.bf16 %v3011, %v3003
      %v3382 = vpack.c.bf16 %v3013, %v3005
      %v3383 = vpack.c.bf16 %v3015, %v3007
      %v3384 = vpack.c.bf16 %v3025, %v3017
      %v3385 = vpack.c.bf16 %v3027, %v3019
      %v3386 = vpack.c.bf16 %v3029, %v3021
      %v3387 = vpack.c.bf16 %v3031, %v3023
      %v3388 = vpack.c.bf16 %v3041, %v3033
      %v3389 = vpack.c.bf16 %v3043, %v3035
      %v3390 = vpack.c.bf16 %v3045, %v3037
      %v3391 = vpack.c.bf16 %v3047, %v3039
      %v3392 = vpack.c.bf16 %v3057, %v3049
      %v3393 = vpack.c.bf16 %v3059, %v3051
      %v3394 = vpack.c.bf16 %v3061, %v3053
      %v3395 = vpack.c.bf16 %v3063, %v3055
      %v3396 = vpack.c.bf16 %v3073, %v3065
      %v3397 = vpack.c.bf16 %v3075, %v3067
      %v3398 = vpack.c.bf16 %v3077, %v3069
      %v3399 = vpack.c.bf16 %v3079, %v3071
      %v3400 = vpack.c.bf16 %v3089, %v3081
      %v3401 = vpack.c.bf16 %v3091, %v3083
      %v3402 = vpack.c.bf16 %v3093, %v3085
      %v3403 = vpack.c.bf16 %v3095, %v3087
      %v3404 = vpack.c.bf16 %v3105, %v3097
      %v3405 = vpack.c.bf16 %v3107, %v3099
      %v3406 = vpack.c.bf16 %v3109, %v3101
      %v3407 = vpack.c.bf16 %v3111, %v3103
      %v3408 = vpack.c.bf16 %v3121, %v3113
      %v3409 = vpack.c.bf16 %v3123, %v3115
      %v3410 = vpack.c.bf16 %v3125, %v3117
      %v3411 = vpack.c.bf16 %v3127, %v3119
      %v3412 = vpack.c.bf16 %v3137, %v3129
      %v3413 = vpack.c.bf16 %v3139, %v3131
      %v3414 = vpack.c.bf16 %v3141, %v3133
      %v3415 = vpack.c.bf16 %v3143, %v3135
      %v3416 = vpack.c.bf16 %v3153, %v3145
      %v3417 = vpack.c.bf16 %v3155, %v3147
      %v3418 = vpack.c.bf16 %v3157, %v3149
      %v3419 = vpack.c.bf16 %v3159, %v3151
      %v3420 = vpack.c.bf16 %v3169, %v3161
      %v3421 = vpack.c.bf16 %v3171, %v3163
      %v3422 = vpack.c.bf16 %v3173, %v3165
      %v3423 = vpack.c.bf16 %v3175, %v3167
      %v3424 = vpack.c.bf16 %v3185, %v3177
      %v3425 = vpack.c.bf16 %v3187, %v3179
      %v3426 = vpack.c.bf16 %v3189, %v3181
      %v3427 = vpack.c.bf16 %v3191, %v3183
      %v3428 = vpack.c.bf16 %v3201, %v3193
      %v3429 = vpack.c.bf16 %v3203, %v3195
      %v3430 = vpack.c.bf16 %v3205, %v3197
      %v3431 = vpack.c.bf16 %v3207, %v3199
      %v3432 = vld [vmem:[#allocation4] sm:$0xff]
      %v3433 = vld [vmem:[#allocation4 + $0x8] sm:$0xff]
      %v3434 = vld [vmem:[#allocation4 + $0x10] sm:$0xff]
      %v3435 = vld [vmem:[#allocation4 + $0x18] sm:$0xff]
      %v3436 = vld [vmem:[#allocation4 + $0x20] sm:$0xff]
      %v3437 = vld [vmem:[#allocation4 + $0x28] sm:$0xff]
      %v3438 = vld [vmem:[#allocation4 + $0x30] sm:$0xff]
      %v3439 = vld [vmem:[#allocation4 + $0x38] sm:$0xff]
      %v3440 = vld [vmem:[#allocation4 + $0x40] sm:$0xff]
      %v3441 = vld [vmem:[#allocation4 + $0x48] sm:$0xff]
      %v3442 = vld [vmem:[#allocation4 + $0x50] sm:$0xff]
      %v3443 = vld [vmem:[#allocation4 + $0x58] sm:$0xff]
      %v3444 = vld [vmem:[#allocation4 + $0x60] sm:$0xff]
      %v3445 = vld [vmem:[#allocation4 + $0x68] sm:$0xff]
      %v3446 = vld [vmem:[#allocation4 + $0x70] sm:$0xff]
      %v3447 = vld [vmem:[#allocation4 + $0x78] sm:$0xff]
      %v3448 = vld [vmem:[#allocation4 + $0x80] sm:$0xff]
      %v3449 = vld [vmem:[#allocation4 + $0x88] sm:$0xff]
      %v3450 = vld [vmem:[#allocation4 + $0x90] sm:$0xff]
      %v3451 = vld [vmem:[#allocation4 + $0x98] sm:$0xff]
      %v3452 = vld [vmem:[#allocation4 + $0xa0] sm:$0xff]
      %v3453 = vld [vmem:[#allocation4 + $0xa8] sm:$0xff]
      %v3454 = vld [vmem:[#allocation4 + $0xb0] sm:$0xff]
      %v3455 = vld [vmem:[#allocation4 + $0xb8] sm:$0xff]
      %v3456 = vld [vmem:[#allocation4 + $0xc0] sm:$0xff]
      %v3457 = vld [vmem:[#allocation4 + $0xc8] sm:$0xff]
      %v3458 = vld [vmem:[#allocation4 + $0xd0] sm:$0xff]
      %v3459 = vld [vmem:[#allocation4 + $0xd8] sm:$0xff]
      %v3460 = vld [vmem:[#allocation4 + $0xe0] sm:$0xff]
      %v3461 = vld [vmem:[#allocation4 + $0xe8] sm:$0xff]
      %v3462 = vld [vmem:[#allocation4 + $0xf0] sm:$0xff]
      %v3463 = vld [vmem:[#allocation4 + $0xf8] sm:$0xff]
      %3464 = vmatprep.subr.bf16.mxu0 0
      %3465 = vmatpush1.bf16.msra.mxu0 %v3432
      %3466 = vmatprep.subr.bf16.mxu0 0
      %3467 = vmatpush1.bf16.msra.mxu0 %v3433
      %3468 = vmatprep.subr.bf16.mxu0 0
      %3469 = vmatpush1.bf16.msra.mxu0 %v3434
      %3470 = vmatprep.subr.bf16.mxu0 0
      %3471 = vmatpush1.bf16.msra.mxu0 %v3435
      %3472 = vmatprep.subr.bf16.mxu0 0
      %3473 = vmatpush1.bf16.msra.mxu0 %v3436
      %3474 = vmatprep.subr.bf16.mxu0 0
      %3475 = vmatpush1.bf16.msra.mxu0 %v3437
      %3476 = vmatprep.subr.bf16.mxu0 0
      %3477 = vmatpush1.bf16.msra.mxu0 %v3438
      %3478 = vmatprep.subr.bf16.mxu0 0
      %3479 = vmatpush1.bf16.msra.mxu0 %v3439
      %3480 = vmatprep.subr.bf16.mxu0 0
      %3481 = vmatpush1.bf16.msra.mxu0 %v3440
      %3482 = vmatprep.subr.bf16.mxu0 0
      %3483 = vmatpush1.bf16.msra.mxu0 %v3441
      %3484 = vmatprep.subr.bf16.mxu0 0
      %3485 = vmatpush1.bf16.msra.mxu0 %v3442
      %3486 = vmatprep.subr.bf16.mxu0 0
      %3487 = vmatpush1.bf16.msra.mxu0 %v3443
      %3488 = vmatprep.subr.bf16.mxu0 0
      %3489 = vmatpush1.bf16.msra.mxu0 %v3444
      %3490 = vmatprep.subr.bf16.mxu0 0
      %3491 = vmatpush1.bf16.msra.mxu0 %v3445
      %3492 = vmatprep.subr.bf16.mxu0 0
      %3493 = vmatpush1.bf16.msra.mxu0 %v3446
      %3494 = vmatprep.subr.bf16.mxu0 0
      %3495 = vmatpush1.bf16.msra.mxu0 %v3447
      %3496 = vmatprep.mubr.bf16.mxu0 %v3369
      %3497 = vmatmul.mubr.bf16.gmra.mrb[0].mxu0 %v3368
      %v3498 = vpop.f32.mrb[0].mxu0
      %v3499 = vadd.f32 0.0, %v3498
      %v3500 = vpop.f32.mrb[0].mxu0
      %v3501 = vpop.f32.mrb[0].mxu0
      %v3502 = vadd.f32 0.0, %v3501
      %v3503 = vpop.f32.mrb[0].mxu0
      %3504 = vmatprep.mubr.bf16.mxu0 %v3373
      %3505 = vmatmul.mubr.bf16.gmra.mrb[0].mxu0 %v3372
      %v3506 = vpop.f32.mrb[0].mxu0
      %v3507 = vadd.f32 0.0, %v3506
      %v3508 = vpop.f32.mrb[0].mxu0
      %v3509 = vpop.f32.mrb[0].mxu0
      %v3510 = vadd.f32 0.0, %v3509
      %v3511 = vpop.f32.mrb[0].mxu0
      %3512 = vmatprep.mubr.bf16.mxu0 %v3377
      %3513 = vmatmul.mubr.bf16.gmra.mrb[0].mxu0 %v3376
      %v3514 = vpop.f32.mrb[0].mxu0
      %v3515 = vadd.f32 0.0, %v3514
      %v3516 = vpop.f32.mrb[0].mxu0
      %v3517 = vpop.f32.mrb[0].mxu0
      %v3518 = vadd.f32 0.0, %v3517
      %v3519 = vpop.f32.mrb[0].mxu0
      %3520 = vmatprep.mubr.bf16.mxu0 %v3381
      %3521 = vmatmul.mubr.bf16.gmra.mrb[0].mxu0 %v3380
      %v3522 = vpop.f32.mrb[0].mxu0
      %v3523 = vadd.f32 0.0, %v3522
      %v3524 = vpop.f32.mrb[0].mxu0
      %v3525 = vpop.f32.mrb[0].mxu0
      %v3526 = vadd.f32 0.0, %v3525
      %v3527 = vpop.f32.mrb[0].mxu0
      %3528 = vmatprep.mubr.bf16.mxu0 %v3385
      %3529 = vmatmul.mubr.bf16.gmra.mrb[0].mxu0 %v3384
      %v3530 = vpop.f32.mrb[0].mxu0
      %v3531 = vadd.f32 0.0, %v3530
      %v3532 = vpop.f32.mrb[0].mxu0
      %v3533 = vpop.f32.mrb[0].mxu0
      %v3534 = vadd.f32 0.0, %v3533
      %v3535 = vpop.f32.mrb[0].mxu0
      %3536 = vmatprep.mubr.bf16.mxu0 %v3389
      %3537 = vmatmul.mubr.bf16.gmra.mrb[0].mxu0 %v3388
      %v3538 = vpop.f32.mrb[0].mxu0
      %v3539 = vadd.f32 0.0, %v3538
      %v3540 = vpop.f32.mrb[0].mxu0
      %v3541 = vpop.f32.mrb[0].mxu0
      %v3542 = vadd.f32 0.0, %v3541
      %v3543 = vpop.f32.mrb[0].mxu0
      %3544 = vmatprep.mubr.bf16.mxu0 %v3393
      %3545 = vmatmul.mubr.bf16.gmra.mrb[0].mxu0 %v3392
      %v3546 = vpop.f32.mrb[0].mxu0
      %v3547 = vadd.f32 0.0, %v3546
      %v3548 = vpop.f32.mrb[0].mxu0
      %v3549 = vpop.f32.mrb[0].mxu0
      %v3550 = vadd.f32 0.0, %v3549
      %v3551 = vpop.f32.mrb[0].mxu0
      %3552 = vmatprep.mubr.bf16.mxu0 %v3397
      %3553 = vmatmul.mubr.bf16.gmra.mrb[0].mxu0 %v3396
      %v3554 = vpop.f32.mrb[0].mxu0
      %v3555 = vadd.f32 0.0, %v3554
      %v3556 = vpop.f32.mrb[0].mxu0
      %v3557 = vpop.f32.mrb[0].mxu0
      %v3558 = vadd.f32 0.0, %v3557
      %v3559 = vpop.f32.mrb[0].mxu0
      %3560 = vmatprep.mubr.bf16.mxu0 %v3401
      %3561 = vmatmul.mubr.bf16.gmra.mrb[0].mxu0 %v3400
      %v3562 = vpop.f32.mrb[0].mxu0
      %v3563 = vadd.f32 0.0, %v3562
      %v3564 = vpop.f32.mrb[0].mxu0
      %v3565 = vpop.f32.mrb[0].mxu0
      %v3566 = vadd.f32 0.0, %v3565
      %v3567 = vpop.f32.mrb[0].mxu0
      %3568 = vmatprep.mubr.bf16.mxu0 %v3405
      %3569 = vmatmul.mubr.bf16.gmra.mrb[0].mxu0 %v3404
      %v3570 = vpop.f32.mrb[0].mxu0
      %v3571 = vadd.f32 0.0, %v3570
      %v3572 = vpop.f32.mrb[0].mxu0
      %v3573 = vpop.f32.mrb[0].mxu0
      %v3574 = vadd.f32 0.0, %v3573
      %v3575 = vpop.f32.mrb[0].mxu0
      %3576 = vmatprep.mubr.bf16.mxu0 %v3409
      %3577 = vmatmul.mubr.bf16.gmra.mrb[0].mxu0 %v3408
      %v3578 = vpop.f32.mrb[0].mxu0
      %v3579 = vadd.f32 0.0, %v3578
      %v3580 = vpop.f32.mrb[0].mxu0
      %v3581 = vpop.f32.mrb[0].mxu0
      %v3582 = vadd.f32 0.0, %v3581
      %v3583 = vpop.f32.mrb[0].mxu0
      %3584 = vmatprep.mubr.bf16.mxu0 %v3413
      %3585 = vmatmul.mubr.bf16.gmra.mrb[0].mxu0 %v3412
      %v3586 = vpop.f32.mrb[0].mxu0
      %v3587 = vadd.f32 0.0, %v3586
      %v3588 = vpop.f32.mrb[0].mxu0
      %v3589 = vpop.f32.mrb[0].mxu0
      %v3590 = vadd.f32 0.0, %v3589
      %v3591 = vpop.f32.mrb[0].mxu0
      %3592 = vmatprep.mubr.bf16.mxu0 %v3417
      %3593 = vmatmul.mubr.bf16.gmra.mrb[0].mxu0 %v3416
      %v3594 = vpop.f32.mrb[0].mxu0
      %v3595 = vadd.f32 0.0, %v3594
      %v3596 = vpop.f32.mrb[0].mxu0
      %v3597 = vpop.f32.mrb[0].mxu0
      %v3598 = vadd.f32 0.0, %v3597
      %v3599 = vpop.f32.mrb[0].mxu0
      %3600 = vmatprep.mubr.bf16.mxu0 %v3421
      %3601 = vmatmul.mubr.bf16.gmra.mrb[0].mxu0 %v3420
      %v3602 = vpop.f32.mrb[0].mxu0
      %v3603 = vadd.f32 0.0, %v3602
      %v3604 = vpop.f32.mrb[0].mxu0
      %v3605 = vpop.f32.mrb[0].mxu0
      %v3606 = vadd.f32 0.0, %v3605
      %v3607 = vpop.f32.mrb[0].mxu0
      %3608 = vmatprep.mubr.bf16.mxu0 %v3425
      %3609 = vmatmul.mubr.bf16.gmra.mrb[0].mxu0 %v3424
      %v3610 = vpop.f32.mrb[0].mxu0
      %v3611 = vadd.f32 0.0, %v3610
      %v3612 = vpop.f32.mrb[0].mxu0
      %v3613 = vpop.f32.mrb[0].mxu0
      %v3614 = vadd.f32 0.0, %v3613
      %v3615 = vpop.f32.mrb[0].mxu0
      %3616 = vmatprep.mubr.bf16.mxu0 %v3429
      %3617 = vmatmul.mubr.bf16.gmra.mrb[0].mxu0 %v3428
      %v3618 = vpop.f32.mrb[0].mxu0
      %v3619 = vadd.f32 0.0, %v3618
      %v3620 = vpop.f32.mrb[0].mxu0
      %v3621 = vpop.f32.mrb[0].mxu0
      %v3622 = vadd.f32 0.0, %v3621
      %v3623 = vpop.f32.mrb[0].mxu0
      %3624 = vdwg.mxu0
      %3625 = vmatprep.subr.bf16.mxu0 0
      %3626 = vmatpush1.bf16.msra.mxu0 %v3448
      %3627 = vmatprep.subr.bf16.mxu0 0
      %3628 = vmatpush1.bf16.msra.mxu0 %v3449
      %3629 = vmatprep.subr.bf16.mxu0 0
      %3630 = vmatpush1.bf16.msra.mxu0 %v3450
      %3631 = vmatprep.subr.bf16.mxu0 0
      %3632 = vmatpush1.bf16.msra.mxu0 %v3451
      %3633 = vmatprep.subr.bf16.mxu0 0
      %3634 = vmatpush1.bf16.msra.mxu0 %v3452
      %3635 = vmatprep.subr.bf16.mxu0 0
      %3636 = vmatpush1.bf16.msra.mxu0 %v3453
      %3637 = vmatprep.subr.bf16.mxu0 0
      %3638 = vmatpush1.bf16.msra.mxu0 %v3454
      %3639 = vmatprep.subr.bf16.mxu0 0
      %3640 = vmatpush1.bf16.msra.mxu0 %v3455
      %3641 = vmatprep.subr.bf16.mxu0 0
      %3642 = vmatpush1.bf16.msra.mxu0 %v3456
      %3643 = vmatprep.subr.bf16.mxu0 0
      %3644 = vmatpush1.bf16.msra.mxu0 %v3457
      %3645 = vmatprep.subr.bf16.mxu0 0
      %3646 = vmatpush1.bf16.msra.mxu0 %v3458
      %3647 = vmatprep.subr.bf16.mxu0 0
      %3648 = vmatpush1.bf16.msra.mxu0 %v3459
      %3649 = vmatprep.subr.bf16.mxu0 0
      %3650 = vmatpush1.bf16.msra.mxu0 %v3460
      %3651 = vmatprep.subr.bf16.mxu0 0
      %3652 = vmatpush1.bf16.msra.mxu0 %v3461
      %3653 = vmatprep.subr.bf16.mxu0 0
      %3654 = vmatpush1.bf16.msra.mxu0 %v3462
      %3655 = vmatprep.subr.bf16.mxu0 0
      %3656 = vmatpush1.bf16.msra.mxu0 %v3463
      %3657 = vmatprep.mubr.bf16.mxu0 %v3371
      %3658 = vmatmul.mubr.bf16.gmra.mrb[0].mxu0 %v3370
      %v3659 = vpop.f32.mrb[0].mxu0
      %v3660 = vadd.f32 %v3499, %v3659
      %v3661 = vpop.f32.mrb[0].mxu0
      %v3662 = vpop.f32.mrb[0].mxu0
      %v3663 = vadd.f32 %v3502, %v3662
      %v3664 = vpop.f32.mrb[0].mxu0
      %3665 = vmatprep.mubr.bf16.mxu0 %v3375
      %3666 = vmatmul.mubr.bf16.gmra.mrb[0].mxu0 %v3374
      %v3667 = vpop.f32.mrb[0].mxu0
      %v3668 = vadd.f32 %v3507, %v3667
      %v3669 = vpop.f32.mrb[0].mxu0
      %v3670 = vpop.f32.mrb[0].mxu0
      %v3671 = vadd.f32 %v3510, %v3670
      %v3672 = vpop.f32.mrb[0].mxu0
      %3673 = vmatprep.mubr.bf16.mxu0 %v3379
      %3674 = vmatmul.mubr.bf16.gmra.mrb[0].mxu0 %v3378
      %v3675 = vpop.f32.mrb[0].mxu0
      %v3676 = vadd.f32 %v3515, %v3675
      %v3677 = vpop.f32.mrb[0].mxu0
      %v3678 = vpop.f32.mrb[0].mxu0
      %v3679 = vadd.f32 %v3518, %v3678
      %v3680 = vpop.f32.mrb[0].mxu0
      %3681 = vmatprep.mubr.bf16.mxu0 %v3383
      %3682 = vmatmul.mubr.bf16.gmra.mrb[0].mxu0 %v3382
      %v3683 = vpop.f32.mrb[0].mxu0
      %v3684 = vadd.f32 %v3523, %v3683
      %v3685 = vpop.f32.mrb[0].mxu0
      %v3686 = vpop.f32.mrb[0].mxu0
      %v3687 = vadd.f32 %v3526, %v3686
      %v3688 = vpop.f32.mrb[0].mxu0
      %3689 = vmatprep.mubr.bf16.mxu0 %v3387
      %3690 = vmatmul.mubr.bf16.gmra.mrb[0].mxu0 %v3386
      %v3691 = vpop.f32.mrb[0].mxu0
      %v3692 = vadd.f32 %v3531, %v3691
      %v3693 = vpop.f32.mrb[0].mxu0
      %v3694 = vpop.f32.mrb[0].mxu0
      %v3695 = vadd.f32 %v3534, %v3694
      %v3696 = vpop.f32.mrb[0].mxu0
      %3697 = vmatprep.mubr.bf16.mxu0 %v3391
      %3698 = vmatmul.mubr.bf16.gmra.mrb[0].mxu0 %v3390
      %v3699 = vpop.f32.mrb[0].mxu0
      %v3700 = vadd.f32 %v3539, %v3699
      %v3701 = vpop.f32.mrb[0].mxu0
      %v3702 = vpop.f32.mrb[0].mxu0
      %v3703 = vadd.f32 %v3542, %v3702
      %v3704 = vpop.f32.mrb[0].mxu0
      %3705 = vmatprep.mubr.bf16.mxu0 %v3395
      %3706 = vmatmul.mubr.bf16.gmra.mrb[0].mxu0 %v3394
      %v3707 = vpop.f32.mrb[0].mxu0
      %v3708 = vadd.f32 %v3547, %v3707
      %v3709 = vpop.f32.mrb[0].mxu0
      %v3710 = vpop.f32.mrb[0].mxu0
      %v3711 = vadd.f32 %v3550, %v3710
      %v3712 = vpop.f32.mrb[0].mxu0
      %3713 = vmatprep.mubr.bf16.mxu0 %v3399
      %3714 = vmatmul.mubr.bf16.gmra.mrb[0].mxu0 %v3398
      %v3715 = vpop.f32.mrb[0].mxu0
      %v3716 = vadd.f32 %v3555, %v3715
      %v3717 = vpop.f32.mrb[0].mxu0
      %v3718 = vpop.f32.mrb[0].mxu0
      %v3719 = vadd.f32 %v3558, %v3718
      %v3720 = vpop.f32.mrb[0].mxu0
      %3721 = vmatprep.mubr.bf16.mxu0 %v3403
      %3722 = vmatmul.mubr.bf16.gmra.mrb[0].mxu0 %v3402
      %v3723 = vpop.f32.mrb[0].mxu0
      %v3724 = vadd.f32 %v3563, %v3723
      %v3725 = vpop.f32.mrb[0].mxu0
      %v3726 = vpop.f32.mrb[0].mxu0
      %v3727 = vadd.f32 %v3566, %v3726
      %v3728 = vpop.f32.mrb[0].mxu0
      %3729 = vmatprep.mubr.bf16.mxu0 %v3407
      %3730 = vmatmul.mubr.bf16.gmra.mrb[0].mxu0 %v3406
      %v3731 = vpop.f32.mrb[0].mxu0
      %v3732 = vadd.f32 %v3571, %v3731
      %v3733 = vpop.f32.mrb[0].mxu0
      %v3734 = vpop.f32.mrb[0].mxu0
      %v3735 = vadd.f32 %v3574, %v3734
      %v3736 = vpop.f32.mrb[0].mxu0
      %3737 = vmatprep.mubr.bf16.mxu0 %v3411
      %3738 = vmatmul.mubr.bf16.gmra.mrb[0].mxu0 %v3410
      %v3739 = vpop.f32.mrb[0].mxu0
      %v3740 = vadd.f32 %v3579, %v3739
      %v3741 = vpop.f32.mrb[0].mxu0
      %v3742 = vpop.f32.mrb[0].mxu0
      %v3743 = vadd.f32 %v3582, %v3742
      %v3744 = vpop.f32.mrb[0].mxu0
      %3745 = vmatprep.mubr.bf16.mxu0 %v3415
      %3746 = vmatmul.mubr.bf16.gmra.mrb[0].mxu0 %v3414
      %v3747 = vpop.f32.mrb[0].mxu0
      %v3748 = vadd.f32 %v3587, %v3747
      %v3749 = vpop.f32.mrb[0].mxu0
      %v3750 = vpop.f32.mrb[0].mxu0
      %v3751 = vadd.f32 %v3590, %v3750
      %v3752 = vpop.f32.mrb[0].mxu0
      %3753 = vmatprep.mubr.bf16.mxu0 %v3419
      %3754 = vmatmul.mubr.bf16.gmra.mrb[0].mxu0 %v3418
      %v3755 = vpop.f32.mrb[0].mxu0
      %v3756 = vadd.f32 %v3595, %v3755
      %v3757 = vpop.f32.mrb[0].mxu0
      %v3758 = vpop.f32.mrb[0].mxu0
      %v3759 = vadd.f32 %v3598, %v3758
      %v3760 = vpop.f32.mrb[0].mxu0
      %3761 = vmatprep.mubr.bf16.mxu0 %v3423
      %3762 = vmatmul.mubr.bf16.gmra.mrb[0].mxu0 %v3422
      %v3763 = vpop.f32.mrb[0].mxu0
      %v3764 = vadd.f32 %v3603, %v3763
      %v3765 = vpop.f32.mrb[0].mxu0
      %v3766 = vpop.f32.mrb[0].mxu0
      %v3767 = vadd.f32 %v3606, %v3766
      %v3768 = vpop.f32.mrb[0].mxu0
      %3769 = vmatprep.mubr.bf16.mxu0 %v3427
      %3770 = vmatmul.mubr.bf16.gmra.mrb[0].mxu0 %v3426
      %v3771 = vpop.f32.mrb[0].mxu0
      %v3772 = vadd.f32 %v3611, %v3771
      %v3773 = vpop.f32.mrb[0].mxu0
      %v3774 = vpop.f32.mrb[0].mxu0
      %v3775 = vadd.f32 %v3614, %v3774
      %v3776 = vpop.f32.mrb[0].mxu0
      %3777 = vmatprep.mubr.bf16.mxu0 %v3431
      %3778 = vmatmul.mubr.bf16.gmra.mrb[0].mxu0 %v3430
      %v3779 = vpop.f32.mrb[0].mxu0
      %v3780 = vadd.f32 %v3619, %v3779
      %v3781 = vpop.f32.mrb[0].mxu0
      %v3782 = vpop.f32.mrb[0].mxu0
      %v3783 = vadd.f32 %v3622, %v3782
      %v3784 = vpop.f32.mrb[0].mxu0
      %3785 = vdwg.mxu0
      %v3786 = vrcp.pop %v3212
      %v3787 = vmul.f32 1.0, %v3786
      %v3788 = vrcp.pop %v3217
      %v3789 = vmul.f32 1.0, %v3788
      %v3790 = vrcp.pop %v3222
      %v3791 = vmul.f32 1.0, %v3790
      %v3792 = vrcp.pop %v3227
      %v3793 = vmul.f32 1.0, %v3792
      %v3794 = vrcp.pop %v3232
      %v3795 = vmul.f32 1.0, %v3794
      %v3796 = vrcp.pop %v3237
      %v3797 = vmul.f32 1.0, %v3796
      %v3798 = vrcp.pop %v3242
      %v3799 = vmul.f32 1.0, %v3798
      %v3800 = vrcp.pop %v3247
      %v3801 = vmul.f32 1.0, %v3800
      %v3802 = vrcp.pop %v3252
      %v3803 = vmul.f32 1.0, %v3802
      %v3804 = vrcp.pop %v3257
      %v3805 = vmul.f32 1.0, %v3804
      %v3806 = vrcp.pop %v3262
      %v3807 = vmul.f32 1.0, %v3806
      %v3808 = vrcp.pop %v3267
      %v3809 = vmul.f32 1.0, %v3808
      %v3810 = vrcp.pop %v3272
      %v3811 = vmul.f32 1.0, %v3810
      %v3812 = vrcp.pop %v3277
      %v3813 = vmul.f32 1.0, %v3812
      %v3814 = vrcp.pop %v3282
      %v3815 = vmul.f32 1.0, %v3814
      %v3816 = vrcp.pop %v3287
      %v3817 = vmul.f32 1.0, %v3816
      %v3818 = vrcp.pop %v3292
      %v3819 = vmul.f32 1.0, %v3818
      %v3820 = vrcp.pop %v3297
      %v3821 = vmul.f32 1.0, %v3820
      %v3822 = vrcp.pop %v3302
      %v3823 = vmul.f32 1.0, %v3822
      %v3824 = vrcp.pop %v3307
      %v3825 = vmul.f32 1.0, %v3824
      %v3826 = vrcp.pop %v3312
      %v3827 = vmul.f32 1.0, %v3826
      %v3828 = vrcp.pop %v3317
      %v3829 = vmul.f32 1.0, %v3828
      %v3830 = vrcp.pop %v3322
      %v3831 = vmul.f32 1.0, %v3830
      %v3832 = vrcp.pop %v3327
      %v3833 = vmul.f32 1.0, %v3832
      %v3834 = vrcp.pop %v3332
      %v3835 = vmul.f32 1.0, %v3834
      %v3836 = vrcp.pop %v3337
      %v3837 = vmul.f32 1.0, %v3836
      %v3838 = vrcp.pop %v3342
      %v3839 = vmul.f32 1.0, %v3838
      %v3840 = vrcp.pop %v3347
      %v3841 = vmul.f32 1.0, %v3840
      %v3842 = vrcp.pop %v3352
      %v3843 = vmul.f32 1.0, %v3842
      %v3844 = vrcp.pop %v3357
      %v3845 = vmul.f32 1.0, %v3844
      %v3846 = vrcp.pop %v3362
      %v3847 = vmul.f32 1.0, %v3846
      %v3848 = vrcp.pop %v3367
      %v3849 = vmul.f32 1.0, %v3848
      %v3850 = vmul.f32 %v3660, %v3787
      %v3851 = vmul.f32 %v3663, %v3789
      %v3852 = vmul.f32 %v3668, %v3791
      %v3853 = vmul.f32 %v3671, %v3793
      %v3854 = vmul.f32 %v3676, %v3795
      %v3855 = vmul.f32 %v3679, %v3797
      %v3856 = vmul.f32 %v3684, %v3799
      %v3857 = vmul.f32 %v3687, %v3801
      %v3858 = vmul.f32 %v3692, %v3803
      %v3859 = vmul.f32 %v3695, %v3805
      %v3860 = vmul.f32 %v3700, %v3807
      %v3861 = vmul.f32 %v3703, %v3809
      %v3862 = vmul.f32 %v3708, %v3811
      %v3863 = vmul.f32 %v3711, %v3813
      %v3864 = vmul.f32 %v3716, %v3815
      %v3865 = vmul.f32 %v3719, %v3817
      %v3866 = vmul.f32 %v3724, %v3819
      %v3867 = vmul.f32 %v3727, %v3821
      %v3868 = vmul.f32 %v3732, %v3823
      %v3869 = vmul.f32 %v3735, %v3825
      %v3870 = vmul.f32 %v3740, %v3827
      %v3871 = vmul.f32 %v3743, %v3829
      %v3872 = vmul.f32 %v3748, %v3831
      %v3873 = vmul.f32 %v3751, %v3833
      %v3874 = vmul.f32 %v3756, %v3835
      %v3875 = vmul.f32 %v3759, %v3837
      %v3876 = vmul.f32 %v3764, %v3839
      %v3877 = vmul.f32 %v3767, %v3841
      %v3878 = vmul.f32 %v3772, %v3843
      %v3879 = vmul.f32 %v3775, %v3845
      %v3880 = vmul.f32 %v3780, %v3847
      %v3881 = vmul.f32 %v3783, %v3849
      %v3882 = vpack.c.bf16 %v3851, %v3850
      %v3883 = vpack.c.bf16 %v3853, %v3852
      %v3884 = vpack.c.bf16 %v3855, %v3854
      %v3885 = vpack.c.bf16 %v3857, %v3856
      %v3886 = vpack.c.bf16 %v3859, %v3858
      %v3887 = vpack.c.bf16 %v3861, %v3860
      %v3888 = vpack.c.bf16 %v3863, %v3862
      %v3889 = vpack.c.bf16 %v3865, %v3864
      %v3890 = vpack.c.bf16 %v3867, %v3866
      %v3891 = vpack.c.bf16 %v3869, %v3868
      %v3892 = vpack.c.bf16 %v3871, %v3870
      %v3893 = vpack.c.bf16 %v3873, %v3872
      %v3894 = vpack.c.bf16 %v3875, %v3874
      %v3895 = vpack.c.bf16 %v3877, %v3876
      %v3896 = vpack.c.bf16 %v3879, %v3878
      %v3897 = vpack.c.bf16 %v3881, %v3880
      %v3898 = vld [vmem:[%s9] sm:$0xf]
      %v3899 = vld [vmem:[%s9 + $0x4] sm:$0xf]
      %v3900 = vld [vmem:[%s9 + $0x8] sm:$0xf]
      %v3901 = vld [vmem:[%s9 + $0xc] sm:$0xf]
      %v3902 = vld [vmem:[%s9 + $0x10] sm:$0xf]
      %v3903 = vld [vmem:[%s9 + $0x14] sm:$0xf]
      %v3904 = vld [vmem:[%s9 + $0x18] sm:$0xf]
      %v3905 = vld [vmem:[%s9 + $0x1c] sm:$0xf]
      %v3906 = vld [vmem:[%s9 + $0x20] sm:$0xf]
      %v3907 = vld [vmem:[%s9 + $0x24] sm:$0xf]
      %v3908 = vld [vmem:[%s9 + $0x28] sm:$0xf]
      %v3909 = vld [vmem:[%s9 + $0x2c] sm:$0xf]
      %v3910 = vld [vmem:[%s9 + $0x30] sm:$0xf]
      %v3911 = vld [vmem:[%s9 + $0x34] sm:$0xf]
      %v3912 = vld [vmem:[%s9 + $0x38] sm:$0xf]
      %v3913 = vld [vmem:[%s9 + $0x3c] sm:$0xf]
      %v3914 = vld [vmem:[%s10] sm:$0x1]
      %v3916 = vlaneseq
      %v3917 = vshrl.u32 %v3916, 7
      %v3918 = vsub.s32 0, %v3917
      %v3919 = vrot.slane %v3914, %v3918
      %v3937 = vunpack.c.l.b16 %v3898
      %v3938 = vunpack.c.l.b16 %v3899
      %v3939 = vunpack.c.l.b16 %v3900
      %v3940 = vunpack.c.l.b16 %v3901
      %v3941 = vunpack.c.l.b16 %v3902
      %v3942 = vunpack.c.l.b16 %v3903
      %v3943 = vunpack.c.l.b16 %v3904
      %v3944 = vunpack.c.l.b16 %v3905
      %v3945 = vunpack.c.l.b16 %v3906
      %v3946 = vunpack.c.l.b16 %v3907
      %v3947 = vunpack.c.l.b16 %v3908
      %v3948 = vunpack.c.l.b16 %v3909
      %v3949 = vunpack.c.l.b16 %v3910
      %v3950 = vunpack.c.l.b16 %v3911
      %v3951 = vunpack.c.l.b16 %v3912
      %v3952 = vunpack.c.l.b16 %v3913
      %v3953 = vpack.c.b16 %v3938, %v3937
      %v3954 = vpack.c.b16 %v3940, %v3939
      %v3955 = vpack.c.b16 %v3942, %v3941
      %v3956 = vpack.c.b16 %v3944, %v3943
      %v3957 = vpack.c.b16 %v3946, %v3945
      %v3958 = vpack.c.b16 %v3948, %v3947
      %v3959 = vpack.c.b16 %v3950, %v3949
      %v3960 = vpack.c.b16 %v3952, %v3951
      %3969 = vmatprep.subr.bf16.mxu0 0
      %3970 = vmatpush1.bf16.msra.mxu0 %v3953
      %3971 = vmatprep.subr.bf16.mxu0 0
      %3972 = vmatpush1.bf16.msra.mxu0 %v3954
      %3973 = vmatprep.subr.bf16.mxu0 0
      %3974 = vmatpush1.bf16.msra.mxu0 %v3955
      %3975 = vmatprep.subr.bf16.mxu0 0
      %3976 = vmatpush1.bf16.msra.mxu0 %v3956
      %3977 = vmatprep.subr.bf16.mxu0 0
      %3978 = vmatpush1.bf16.msra.mxu0 %v3957
      %3979 = vmatprep.subr.bf16.mxu0 0
      %3980 = vmatpush1.bf16.msra.mxu0 %v3958
      %3981 = vmatprep.subr.bf16.mxu0 0
      %3982 = vmatpush1.bf16.msra.mxu0 %v3959
      %3983 = vmatprep.subr.bf16.mxu0 0
      %3984 = vmatpush1.bf16.msra.mxu0 %v3960
      %3985 = vmatprep.subr.bf16.mxu0 0
      %3986 = vmatpush1.bf16.msra.mxu0 0
      %3987 = vmatprep.subr.bf16.mxu0 0
      %3988 = vmatpush1.bf16.msra.mxu0 0
      %3989 = vmatprep.subr.bf16.mxu0 0
      %3990 = vmatpush1.bf16.msra.mxu0 0
      %3991 = vmatprep.subr.bf16.mxu0 0
      %3992 = vmatpush1.bf16.msra.mxu0 0
      %3993 = vmatprep.subr.bf16.mxu0 0
      %3994 = vmatpush1.bf16.msra.mxu0 0
      %3995 = vmatprep.subr.bf16.mxu0 0
      %3996 = vmatpush1.bf16.msra.mxu0 0
      %3997 = vmatprep.subr.bf16.mxu0 0
      %3998 = vmatpush1.bf16.msra.mxu0 0
      %3999 = vmatprep.subr.bf16.mxu0 0
      %4000 = vmatpush1.bf16.msra.mxu0 0
      %4001 = vmatprep.mubr.bf16.mxu0 0
      %4002 = vmatmul.mubr.bf16.gmra.mrb[0].mxu0 %v3882
      %v4003 = vpop.f32.mrb[0].mxu0
      %v4004 = vadd.f32 %v3919, %v4003
      %v4005 = vpop.f32.mrb[0].mxu0
      %v4006 = vpop.f32.mrb[0].mxu0
      %v4007 = vadd.f32 %v3919, %v4006
      %v4008 = vpop.f32.mrb[0].mxu0
      %4009 = vmatprep.mubr.bf16.mxu0 0
      %4010 = vmatmul.mubr.bf16.gmra.mrb[0].mxu0 %v3883
      %v4011 = vpop.f32.mrb[0].mxu0
      %v4012 = vadd.f32 %v3919, %v4011
      %v4013 = vpop.f32.mrb[0].mxu0
      %v4014 = vpop.f32.mrb[0].mxu0
      %v4015 = vadd.f32 %v3919, %v4014
      %v4016 = vpop.f32.mrb[0].mxu0
      %4017 = vmatprep.mubr.bf16.mxu0 0
      %4018 = vmatmul.mubr.bf16.gmra.mrb[0].mxu0 %v3884
      %v4019 = vpop.f32.mrb[0].mxu0
      %v4020 = vadd.f32 %v3919, %v4019
      %v4021 = vpop.f32.mrb[0].mxu0
      %v4022 = vpop.f32.mrb[0].mxu0
      %v4023 = vadd.f32 %v3919, %v4022
      %v4024 = vpop.f32.mrb[0].mxu0
      %4025 = vmatprep.mubr.bf16.mxu0 0
      %4026 = vmatmul.mubr.bf16.gmra.mrb[0].mxu0 %v3885
      %v4027 = vpop.f32.mrb[0].mxu0
      %v4028 = vadd.f32 %v3919, %v4027
      %v4029 = vpop.f32.mrb[0].mxu0
      %v4030 = vpop.f32.mrb[0].mxu0
      %v4031 = vadd.f32 %v3919, %v4030
      %v4032 = vpop.f32.mrb[0].mxu0
      %4033 = vmatprep.mubr.bf16.mxu0 0
      %4034 = vmatmul.mubr.bf16.gmra.mrb[0].mxu0 %v3886
      %v4035 = vpop.f32.mrb[0].mxu0
      %v4036 = vadd.f32 %v3919, %v4035
      %v4037 = vpop.f32.mrb[0].mxu0
      %v4038 = vpop.f32.mrb[0].mxu0
      %v4039 = vadd.f32 %v3919, %v4038
      %v4040 = vpop.f32.mrb[0].mxu0
      %4041 = vmatprep.mubr.bf16.mxu0 0
      %4042 = vmatmul.mubr.bf16.gmra.mrb[0].mxu0 %v3887
      %v4043 = vpop.f32.mrb[0].mxu0
      %v4044 = vadd.f32 %v3919, %v4043
      %v4045 = vpop.f32.mrb[0].mxu0
      %v4046 = vpop.f32.mrb[0].mxu0
      %v4047 = vadd.f32 %v3919, %v4046
      %v4048 = vpop.f32.mrb[0].mxu0
      %4049 = vmatprep.mubr.bf16.mxu0 0
      %4050 = vmatmul.mubr.bf16.gmra.mrb[0].mxu0 %v3888
      %v4051 = vpop.f32.mrb[0].mxu0
      %v4052 = vadd.f32 %v3919, %v4051
      %v4053 = vpop.f32.mrb[0].mxu0
      %v4054 = vpop.f32.mrb[0].mxu0
      %v4055 = vadd.f32 %v3919, %v4054
      %v4056 = vpop.f32.mrb[0].mxu0
      %4057 = vmatprep.mubr.bf16.mxu0 0
      %4058 = vmatmul.mubr.bf16.gmra.mrb[0].mxu0 %v3889
      %v4059 = vpop.f32.mrb[0].mxu0
      %v4060 = vadd.f32 %v3919, %v4059
      %v4061 = vpop.f32.mrb[0].mxu0
      %v4062 = vpop.f32.mrb[0].mxu0
      %v4063 = vadd.f32 %v3919, %v4062
      %v4064 = vpop.f32.mrb[0].mxu0
      %4065 = vmatprep.mubr.bf16.mxu0 0
      %4066 = vmatmul.mubr.bf16.gmra.mrb[0].mxu0 %v3890
      %v4067 = vpop.f32.mrb[0].mxu0
      %v4068 = vadd.f32 %v3919, %v4067
      %v4069 = vpop.f32.mrb[0].mxu0
      %v4070 = vpop.f32.mrb[0].mxu0
      %v4071 = vadd.f32 %v3919, %v4070
      %v4072 = vpop.f32.mrb[0].mxu0
      %4073 = vmatprep.mubr.bf16.mxu0 0
      %4074 = vmatmul.mubr.bf16.gmra.mrb[0].mxu0 %v3891
      %v4075 = vpop.f32.mrb[0].mxu0
      %v4076 = vadd.f32 %v3919, %v4075
      %v4077 = vpop.f32.mrb[0].mxu0
      %v4078 = vpop.f32.mrb[0].mxu0
      %v4079 = vadd.f32 %v3919, %v4078
      %v4080 = vpop.f32.mrb[0].mxu0
      %4081 = vmatprep.mubr.bf16.mxu0 0
      %4082 = vmatmul.mubr.bf16.gmra.mrb[0].mxu0 %v3892
      %v4083 = vpop.f32.mrb[0].mxu0
      %v4084 = vadd.f32 %v3919, %v4083
      %v4085 = vpop.f32.mrb[0].mxu0
      %v4086 = vpop.f32.mrb[0].mxu0
      %v4087 = vadd.f32 %v3919, %v4086
      %v4088 = vpop.f32.mrb[0].mxu0
      %4089 = vmatprep.mubr.bf16.mxu0 0
      %4090 = vmatmul.mubr.bf16.gmra.mrb[0].mxu0 %v3893
      %v4091 = vpop.f32.mrb[0].mxu0
      %v4092 = vadd.f32 %v3919, %v4091
      %v4093 = vpop.f32.mrb[0].mxu0
      %v4094 = vpop.f32.mrb[0].mxu0
      %v4095 = vadd.f32 %v3919, %v4094
      %v4096 = vpop.f32.mrb[0].mxu0
      %4097 = vmatprep.mubr.bf16.mxu0 0
      %4098 = vmatmul.mubr.bf16.gmra.mrb[0].mxu0 %v3894
      %v4099 = vpop.f32.mrb[0].mxu0
      %v4100 = vadd.f32 %v3919, %v4099
      %v4101 = vpop.f32.mrb[0].mxu0
      %v4102 = vpop.f32.mrb[0].mxu0
      %v4103 = vadd.f32 %v3919, %v4102
      %v4104 = vpop.f32.mrb[0].mxu0
      %4105 = vmatprep.mubr.bf16.mxu0 0
      %4106 = vmatmul.mubr.bf16.gmra.mrb[0].mxu0 %v3895
      %v4107 = vpop.f32.mrb[0].mxu0
      %v4108 = vadd.f32 %v3919, %v4107
      %v4109 = vpop.f32.mrb[0].mxu0
      %v4110 = vpop.f32.mrb[0].mxu0
      %v4111 = vadd.f32 %v3919, %v4110
      %v4112 = vpop.f32.mrb[0].mxu0
      %4113 = vmatprep.mubr.bf16.mxu0 0
      %4114 = vmatmul.mubr.bf16.gmra.mrb[0].mxu0 %v3896
      %v4115 = vpop.f32.mrb[0].mxu0
      %v4116 = vadd.f32 %v3919, %v4115
      %v4117 = vpop.f32.mrb[0].mxu0
      %v4118 = vpop.f32.mrb[0].mxu0
      %v4119 = vadd.f32 %v3919, %v4118
      %v4120 = vpop.f32.mrb[0].mxu0
      %4121 = vmatprep.mubr.bf16.mxu0 0
      %4122 = vmatmul.mubr.bf16.gmra.mrb[0].mxu0 %v3897
      %v4123 = vpop.f32.mrb[0].mxu0
      %v4124 = vadd.f32 %v3919, %v4123
      %v4125 = vpop.f32.mrb[0].mxu0
      %v4126 = vpop.f32.mrb[0].mxu0
      %v4127 = vadd.f32 %v3919, %v4126
      %v4128 = vpop.f32.mrb[0].mxu0
      %4129 = vdwg.mxu0
      %s4130 = scalar_lea.vmem %s399, %s1987
      %v4131 = vld [vmem:[%s4130] sm:$0xff]
      %v4132 = vld [vmem:[%s4130 + $0x8] sm:$0xff]
      %v4133 = vld [vmem:[%s4130 + $0x10] sm:$0xff]
      %v4134 = vld [vmem:[%s4130 + $0x18] sm:$0xff]
      %v4135 = vld [vmem:[%s4130 + $0x20] sm:$0xff]
      %v4136 = vld [vmem:[%s4130 + $0x28] sm:$0xff]
      %v4137 = vld [vmem:[%s4130 + $0x30] sm:$0xff]
      %v4138 = vld [vmem:[%s4130 + $0x38] sm:$0xff]
      %v4139 = vld [vmem:[%s4130 + $0x40] sm:$0xff]
      %v4140 = vld [vmem:[%s4130 + $0x48] sm:$0xff]
      %v4141 = vld [vmem:[%s4130 + $0x50] sm:$0xff]
      %v4142 = vld [vmem:[%s4130 + $0x58] sm:$0xff]
      %v4143 = vld [vmem:[%s4130 + $0x60] sm:$0xff]
      %v4144 = vld [vmem:[%s4130 + $0x68] sm:$0xff]
      %v4145 = vld [vmem:[%s4130 + $0x70] sm:$0xff]
      %v4146 = vld [vmem:[%s4130 + $0x78] sm:$0xff]
      %v4147 = vld [vmem:[%s4130 + $0x80] sm:$0xff]
      %v4148 = vld [vmem:[%s4130 + $0x88] sm:$0xff]
      %v4149 = vld [vmem:[%s4130 + $0x90] sm:$0xff]
      %v4150 = vld [vmem:[%s4130 + $0x98] sm:$0xff]
      %v4151 = vld [vmem:[%s4130 + $0xa0] sm:$0xff]
      %v4152 = vld [vmem:[%s4130 + $0xa8] sm:$0xff]
      %v4153 = vld [vmem:[%s4130 + $0xb0] sm:$0xff]
      %v4154 = vld [vmem:[%s4130 + $0xb8] sm:$0xff]
      %v4155 = vld [vmem:[%s4130 + $0xc0] sm:$0xff]
      %v4156 = vld [vmem:[%s4130 + $0xc8] sm:$0xff]
      %v4157 = vld [vmem:[%s4130 + $0xd0] sm:$0xff]
      %v4158 = vld [vmem:[%s4130 + $0xd8] sm:$0xff]
      %v4159 = vld [vmem:[%s4130 + $0xe0] sm:$0xff]
      %v4160 = vld [vmem:[%s4130 + $0xe8] sm:$0xff]
      %v4161 = vld [vmem:[%s4130 + $0xf0] sm:$0xff]
      %v4162 = vld [vmem:[%s4130 + $0xf8] sm:$0xff]
      %v4163 = vadd.f32 %v4131, %v4004
      %v4164 = vadd.f32 %v4132, %v4007
      %v4165 = vadd.f32 %v4133, %v4012
      %v4166 = vadd.f32 %v4134, %v4015
      %v4167 = vadd.f32 %v4135, %v4020
      %v4168 = vadd.f32 %v4136, %v4023
      %v4169 = vadd.f32 %v4137, %v4028
      %v4170 = vadd.f32 %v4138, %v4031
      %v4171 = vadd.f32 %v4139, %v4036
      %v4172 = vadd.f32 %v4140, %v4039
      %v4173 = vadd.f32 %v4141, %v4044
      %v4174 = vadd.f32 %v4142, %v4047
      %v4175 = vadd.f32 %v4143, %v4052
      %v4176 = vadd.f32 %v4144, %v4055
      %v4177 = vadd.f32 %v4145, %v4060
      %v4178 = vadd.f32 %v4146, %v4063
      %v4179 = vadd.f32 %v4147, %v4068
      %v4180 = vadd.f32 %v4148, %v4071
      %v4181 = vadd.f32 %v4149, %v4076
      %v4182 = vadd.f32 %v4150, %v4079
      %v4183 = vadd.f32 %v4151, %v4084
      %v4184 = vadd.f32 %v4152, %v4087
      %v4185 = vadd.f32 %v4153, %v4092
      %v4186 = vadd.f32 %v4154, %v4095
      %v4187 = vadd.f32 %v4155, %v4100
      %v4188 = vadd.f32 %v4156, %v4103
      %v4189 = vadd.f32 %v4157, %v4108
      %v4190 = vadd.f32 %v4158, %v4111
      %v4191 = vadd.f32 %v4159, %v4116
      %v4192 = vadd.f32 %v4160, %v4119
      %v4193 = vadd.f32 %v4161, %v4124
      %v4194 = vadd.f32 %v4162, %v4127
      %4195 = vst.msk [vmem:[%s408] sm:$0xff] %vm2016, %v4163
      %4196 = vst.msk [vmem:[%s408 + $0x8] sm:$0xff] %vm2016, %v4164
      %4197 = vst.msk [vmem:[%s408 + $0x10] sm:$0xff] %vm2016, %v4165
      %4198 = vst.msk [vmem:[%s408 + $0x18] sm:$0xff] %vm2016, %v4166
      %4199 = vst.msk [vmem:[%s408 + $0x20] sm:$0xff] %vm2016, %v4167
      %4200 = vst.msk [vmem:[%s408 + $0x28] sm:$0xff] %vm2016, %v4168
      %4201 = vst.msk [vmem:[%s408 + $0x30] sm:$0xff] %vm2016, %v4169
      %4202 = vst.msk [vmem:[%s408 + $0x38] sm:$0xff] %vm2016, %v4170
      %4203 = vst.msk [vmem:[%s408 + $0x40] sm:$0xff] %vm2016, %v4171
      %4204 = vst.msk [vmem:[%s408 + $0x48] sm:$0xff] %vm2016, %v4172
      %4205 = vst.msk [vmem:[%s408 + $0x50] sm:$0xff] %vm2016, %v4173
      %4206 = vst.msk [vmem:[%s408 + $0x58] sm:$0xff] %vm2016, %v4174
      %4207 = vst.msk [vmem:[%s408 + $0x60] sm:$0xff] %vm2016, %v4175
      %4208 = vst.msk [vmem:[%s408 + $0x68] sm:$0xff] %vm2016, %v4176
      %4209 = vst.msk [vmem:[%s408 + $0x70] sm:$0xff] %vm2016, %v4177
      %4210 = vst.msk [vmem:[%s408 + $0x78] sm:$0xff] %vm2016, %v4178
      %4211 = vst.msk [vmem:[%s408 + $0x80] sm:$0xff] %vm2016, %v4179
      %4212 = vst.msk [vmem:[%s408 + $0x88] sm:$0xff] %vm2016, %v4180
      %4213 = vst.msk [vmem:[%s408 + $0x90] sm:$0xff] %vm2016, %v4181
      %4214 = vst.msk [vmem:[%s408 + $0x98] sm:$0xff] %vm2016, %v4182
      %4215 = vst.msk [vmem:[%s408 + $0xa0] sm:$0xff] %vm2016, %v4183
      %4216 = vst.msk [vmem:[%s408 + $0xa8] sm:$0xff] %vm2016, %v4184
      %4217 = vst.msk [vmem:[%s408 + $0xb0] sm:$0xff] %vm2016, %v4185
      %4218 = vst.msk [vmem:[%s408 + $0xb8] sm:$0xff] %vm2016, %v4186
      %4219 = vst.msk [vmem:[%s408 + $0xc0] sm:$0xff] %vm2016, %v4187
      %4220 = vst.msk [vmem:[%s408 + $0xc8] sm:$0xff] %vm2016, %v4188
      %4221 = vst.msk [vmem:[%s408 + $0xd0] sm:$0xff] %vm2016, %v4189
      %4222 = vst.msk [vmem:[%s408 + $0xd8] sm:$0xff] %vm2016, %v4190
      %4223 = vst.msk [vmem:[%s408 + $0xe0] sm:$0xff] %vm2016, %v4191
      %4224 = vst.msk [vmem:[%s408 + $0xe8] sm:$0xff] %vm2016, %v4192
      %4225 = vst.msk [vmem:[%s408 + $0xf0] sm:$0xff] %vm2016, %v4193
      %4226 = vst.msk [vmem:[%s408 + $0xf8] sm:$0xff] %vm2016, %v4194
      %s4227 = smul.u32 32, %s27
      %p4228 = scmp.lt.s32.totalorder %s26, 1
      %s4229 = scalar_select %p4228, %s26, 1
      %p4230 = scmp.lt.s32.totalorder %s4227, 63
      %s4231 = scalar_select %p4230, %s4227, 63
      %s4232 = smul.addr %s4229, 64
      %s4233 = sadd.s32 %s4231, %s4232
      %s4234 = smul.addr %s4233, 8
      %s4235 = scalar_lea.vmem %s11, %s4234
      // Predicated region
      $region69: #{tpu_custom_call.1} parent=63 // pred_check
        %p4236 = pneg %p290
      $region70: #{tpu_custom_call.1} parent=63 // pred_check_branch
        %4238 = sbr.rel (%p4236) target = $region72
      $region71: #{tpu_custom_call.1} parent=63 // pred_region
        %s4239 = smul.u32 32, %s27
      $region72: #{tpu_custom_call.1} parent=63 // pred_fallthru
        _
    $region64: #{tpu_custom_call.1} parent=5 // pred_fallthru
      _
    %p4240 = scmp.le.s32.totalorder 2, %s17
    // Predicated region
    $region73: #{tpu_custom_call.1} parent=5 // pred_check
      %p4241 = pneg %p4240
    $region74: #{tpu_custom_call.1} parent=5 // pred_check_branch
      %4243 = sbr.rel (%p4241) target = $region76
    $region75: #{tpu_custom_call.1} parent=5 // pred_region
      %s4244 = ssub.s32 %s17, 2
      // Predicated region
      $region77: #{tpu_custom_call.1} parent=75 // pred_check
        %p4245 = pneg %p296
      $region78: #{tpu_custom_call.1} parent=75 // pred_check_branch
        %4247 = sbr.rel (%p4245) target = $region80
      $region79: #{tpu_custom_call.1} parent=75 // pred_region
        %s4248 = smul.u32 32, %s29
        %p4249 = scmp.lt.s32.totalorder %s28, 1
        %s4250 = scalar_select %p4249, %s28, 1
        %p4251 = scmp.lt.s32.totalorder %s4248, 63
        %s4252 = scalar_select %p4251, %s4248, 63
        %s4253 = smul.addr %s4250, 64
        %s4254 = sadd.s32 %s4252, %s4253
        %s4255 = smul.addr %s4254, 8
        %s4256 = scalar_lea.vmem %s11, %s4255
      $region80: #{tpu_custom_call.1} parent=75 // pred_fallthru
        _
    $region76: #{tpu_custom_call.1} parent=5 // pred_fallthru
      _
  $region6: #{tpu_custom_call.1} parent=0 // loop_footer
    %s21 = sadd.s32 1, %s17
  $region7: #{tpu_custom_call.1} parent=0 // loop_footer_branch
    %16 = sbr.rel target = $region3
  $region8: #{tpu_custom_call.1} parent=0 // loop_exit
    _

</llo_original>
